<compile_context>
chip_gen: v6e
topology: v6e:2x2x1
jax: 0.10.0
libtpu: 0.0.40
codegen_flags: <defaults>
</compile_context>

<pallas_src>
import functools

import jax
import jax.numpy as jnp
import numpy as np
from jax import lax
from jax.experimental import pallas as pl
from jax.experimental.pallas import tpu as pltpu

BN_EPS = 1e-5
DROPOUT_RATE = 0.1                       # unused: eval-mode forward (dropout = identity)
REF_PREC = jax.lax.Precision.HIGHEST     # reference path only


def _elu(t):
    # ELU(alpha=1): x if x > 0 else exp(x) - 1
    return jnp.where(t > 0, t, jnp.exp(jnp.minimum(t, 0.0)) - 1.0)


# ---------------------------------------------------------------------------
# Pallas kernel: whole block forward for ONE image per grid step.
#
# p_ref  : SMEM (n_params,) f32 — BN-folded weights/biases, packed as
#          [w_head(Cin,Cout), b_head(Cout), w_dw(9,Cout), b_dw(Cout),
#           w_in(Cout,Cout),  b_in(Cout),   w_id(Cin,Cout), b_id(Cout)]
# x_ref  : VMEM (1, 7*Cin, H4, W4) — stride-4 phase planes, channel-major.
#          Plane index p*Cin + c with phase p:
#            0..3   = x[4i+a, 4j+b] for (a,b) in (0,0),(0,2),(2,0),(2,2)  (head inputs)
#            0,4,5,6 = (0,0),(0,1),(1,0),(1,1)          (2x2 max-pool members kept
#                                                         by the stride-2 identity conv)
# out_ref: VMEM (1, Cout, H4, W4) — NCHW-ready output block.
# m2_ref : VMEM scratch (Cout, H4, W4) — depthwise output at the even positions.
# ---------------------------------------------------------------------------
def _rmnet_block_kernel(p_ref, x_ref, out_ref, m2_ref, *, cin, cout, h4, w4):
    f32 = jnp.float32

    # Packed-parameter offsets (all static Python ints).
    o_wh = 0
    o_bh = o_wh + cin * cout
    o_wd = o_bh + cout
    o_bd = o_wd + 9 * cout
    o_wi = o_bd + cout
    o_bi = o_wi + cout * cout
    o_wq = o_bi + cout
    o_bq = o_wq + cin * cout

    wh = lambda c, co: p_ref[o_wh + c * cout + co]       # headconv1x1 (BN folded)
    bh = lambda co: p_ref[o_bh + co]
    wd = lambda t, co: p_ref[o_wd + t * cout + co]       # conv3x3dw, tap-major
    bd = lambda co: p_ref[o_bd + co]
    wi = lambda ci, co: p_ref[o_wi + ci * cout + co]     # insideconv1x1
    bi = lambda co: p_ref[o_bi + co]
    wq = lambda c, co: p_ref[o_wq + c * cout + co]       # identityconv1x1
    bq = lambda co: p_ref[o_bq + co]

    xplane = lambda p, c: x_ref[0, p * cin + c]          # (h4, w4) spatial plane

    zrow = jnp.zeros((1, w4), f32)
    zcol = jnp.zeros((h4, 1), f32)

    def shift_down(t):   # out[i, j] = t[i-1, j], zero-filled at i == 0 ('same' pad)
        return jnp.concatenate([zrow, t[:-1, :]], axis=0)

    def shift_right(t):  # out[i, j] = t[i, j-1], zero-filled at j == 0 ('same' pad)
        return jnp.concatenate([zcol, t[:, :-1]], axis=1)

    # ---- main path: headconv1x1 (stride 2) + BN + ELU, then conv3x3dw + BN + ELU.
    # conv3x3dw is depthwise, so channel ci of the inside-conv input needs only
    # channel ci of the head output: the full head activation is never materialized.
    for ci in range(cout):
        heads = []
        for p in range(4):                               # m[2i,2j], m[2i,2j+1], m[2i+1,2j], m[2i+1,2j+1]
            acc = xplane(p, 0) * wh(0, ci)
            for c in range(1, cin):
                acc = acc + xplane(p, c) * wh(c, ci)
            heads.append(_elu(acc + bh(ci)))
        me0, me1, mo0, mo1 = heads

        # 9 depthwise taps, evaluated only at the even positions insideconv keeps.
        # Tap t = 3*ky + kx has spatial offset (ky-1, kx-1).
        dw = wd(4, ci) * me0                             # m[2i,   2j  ]
        dw = dw + wd(5, ci) * me1                        # m[2i,   2j+1]
        dw = dw + wd(3, ci) * shift_right(me1)           # m[2i,   2j-1]
        dw = dw + wd(7, ci) * mo0                        # m[2i+1, 2j  ]
        dw = dw + wd(1, ci) * shift_down(mo0)            # m[2i-1, 2j  ]
        dw = dw + wd(8, ci) * mo1                        # m[2i+1, 2j+1]
        dw = dw + wd(6, ci) * shift_right(mo1)           # m[2i+1, 2j-1]
        mo1_i = shift_down(mo1)                          # m[2i-1, 2j+1]
        dw = dw + wd(2, ci) * mo1_i
        dw = dw + wd(0, ci) * shift_right(mo1_i)         # m[2i-1, 2j-1]
        m2_ref[ci] = _elu(dw + bd(ci))

    # ---- identity path: MaxPool2d(2,2) members that survive the stride-2 conv.
    pooled = [jnp.maximum(jnp.maximum(xplane(0, c), xplane(4, c)),
                          jnp.maximum(xplane(5, c), xplane(6, c)))
              for c in range(cin)]

    # ---- insideconv1x1 (+BN) + identityconv1x1 (+BN), final ELU.
    # TODO(synk): nn.Dropout is identity in eval mode; training-mode RNG mask not implemented.
    for co in range(cout):
        acc = m2_ref[0] * wi(0, co)
        for ci in range(1, cout):
            acc = acc + m2_ref[ci] * wi(ci, co)
        for c in range(cin):
            acc = acc + pooled[c] * wq(c, co)
        out_ref[0, co] = _elu(acc + (bi(co) + bq(co))).astype(out_ref.dtype)


# ---------------------------------------------------------------------------
# Wrapper (NCHW in / NCHW out).
# ---------------------------------------------------------------------------
def spatial_reduction_rmnet_block(x_nchw, params):
    N, Cin, H, W = x_nchw.shape
    Cout = params["w_head"].shape[1]
    assert H % 4 == 0 and W % 4 == 0, "spatial dims must be divisible by 4"
    H4, W4 = H // 4, W // 4
    f32 = jnp.float32

    # ---- fold eval-mode BatchNorm (one shared bn, as in the module) into every conv ----
    scale = (params["gamma"] * lax.rsqrt(params["var"] + BN_EPS)).astype(f32)   # (1, Cout)
    shift = (params["beta"] - params["mean"] * scale).astype(f32)               # (1, Cout)

    def fold(w, b):
        return (w * scale).astype(f32), (b * scale + shift).astype(f32)

    w_head, b_head = fold(params["w_head"], params["b_head"])
    w_dw, b_dw = fold(params["w_dw"], params["b_dw"])
    w_in, b_in = fold(params["w_in"], params["b_in"])
    w_id, b_id = fold(params["w_id"], params["b_id"])
    packed = jnp.concatenate([w_head.reshape(-1), b_head.reshape(-1),
                              w_dw.reshape(-1), b_dw.reshape(-1),
                              w_in.reshape(-1), b_in.reshape(-1),
                              w_id.reshape(-1), b_id.reshape(-1)]).astype(f32)

    # ---- channel-major stride-4 space-to-depth, straight from NCHW (no layout
    # transpose): x7[n, p*Cin + c, i, j] = x[n, c, 4i + a_p, 4j + b_p].
    # Only the 7 phase planes the block actually reads are materialized.
    xs = x_nchw.astype(f32).reshape(N, Cin, H4, 4, W4, 4)
    plane = lambda a, b: xs[:, :, :, a, :, b]                              # (N, Cin, H4, W4)
    x7 = jnp.stack([plane(0, 0), plane(0, 2), plane(2, 0), plane(2, 2),    # head inputs
                    plane(0, 1), plane(1, 0), plane(1, 1)],                # pool members
                   axis=1).reshape(N, 7 * Cin, H4, W4)

    kernel = functools.partial(_rmnet_block_kernel, cin=Cin, cout=Cout, h4=H4, w4=W4)

    out = pl.pallas_call(
        kernel,
        out_shape=jax.ShapeDtypeStruct((N, Cout, H4, W4), f32),
        grid=(N,),
        in_specs=[pl.BlockSpec(memory_space=pltpu.MemorySpace.SMEM),       # packed params
                  pl.BlockSpec((1, 7 * Cin, H4, W4), lambda n: (n, 0, 0, 0))],
        out_specs=pl.BlockSpec((1, Cout, H4, W4), lambda n: (n, 0, 0, 0)),
        scratch_shapes=[pltpu.VMEM((Cout, H4, W4), f32)],
        compiler_params=pltpu.CompilerParams(dimension_semantics=("parallel",)),
    )(packed, x7)

    return out                                  # already NCHW: (N, Cout, H/4, W/4)


# ---------------------------------------------------------------------------
# Pure-JAX reference (eval-mode semantics) for verification.
# ---------------------------------------------------------------------------
def ref_forward(x_nchw, p):
    x = jnp.transpose(x_nchw, (0, 2, 3, 1))  # NHWC

    def bn(t):
        scale = p["gamma"][0] * lax.rsqrt(p["var"][0] + BN_EPS)
        return (t - p["mean"][0]) * scale + p["beta"][0]

    def conv1x1_s2(t, w, b):
        return jnp.einsum("nhwc,cd->nhwd", t[:, ::2, ::2, :], w,
                          precision=REF_PREC) + b[0]

    def dwconv3x3_same(t, wdw, bdw):
        n, h, w, c = t.shape
        tp = jnp.pad(t, ((0, 0), (1, 1), (1, 1), (0, 0)))
        out = jnp.zeros_like(t)
        for dy in range(3):
            for dx in range(3):
                out = out + tp[:, dy:dy + h, dx:dx + w, :] * wdw[3 * dy + dx]
        return out + bdw[0]

    def maxpool2(t):
        n, h, w, c = t.shape
        return t.reshape(n, h // 2, 2, w // 2, 2, c).max(axis=(2, 4))

    m = _elu(bn(conv1x1_s2(x, p["w_head"], p["b_head"])))
    m = _elu(bn(dwconv3x3_same(m, p["w_dw"], p["b_dw"])))
    main = bn(conv1x1_s2(m, p["w_in"], p["b_in"]))
    ident = bn(conv1x1_s2(maxpool2(x), p["w_id"], p["b_id"]))
    out = _elu(main + ident)
    return jnp.transpose(out, (0, 3, 1, 2))


if __name__ == "__main__":
    N, Cin, Cout, H, W = 2, 4, 8, 16, 16
    key = jax.random.PRNGKey(0)
    ks = jax.random.split(key, 16)

    def nrm(k, shape, s=0.3):
        return jax.random.normal(k, shape, jnp.float32) * s

    params = {
        "w_head": nrm(ks[0], (Cin, Cout)),          # 1x1 conv weight, (Cin, Cout)
        "b_head": nrm(ks[1], (1, Cout), 0.1),
        "w_dw":   nrm(ks[2], (9, Cout)),            # depthwise 3x3, tap-major (9, Cout)
        "b_dw":   nrm(ks[3], (1, Cout), 0.1),
        "w_in":   nrm(ks[4], (Cout, Cout)),
        "b_in":   nrm(ks[5], (1, Cout), 0.1),
        "w_id":   nrm(ks[6], (Cin, Cout)),
        "b_id":   nrm(ks[7], (1, Cout), 0.1),
        "gamma":  jax.random.uniform(ks[8], (1, Cout), jnp.float32, 0.8, 1.2),
        "beta":   nrm(ks[9], (1, Cout), 0.1),
        "mean":   nrm(ks[10], (1, Cout), 0.1),
        "var":    jax.random.uniform(ks[11], (1, Cout), jnp.float32, 0.5, 1.5),
    }
    x = jax.random.normal(ks[12], (N, Cin, H, W), jnp.float32)

    out = spatial_reduction_rmnet_block(x, params)
    out = jax.block_until_ready(out)

    ref = ref_forward(x, params)
    assert out.shape == (N, Cout, H // 4, W // 4), out.shape
    np.testing.assert_allclose(np.asarray(out), np.asarray(ref), rtol=5e-3, atol=5e-3)

    print("KERNEL_OK")
</pallas_src>

<mosaic_0001>
module attributes {stable_mosaic.version = 11 : i64} {
  func.func @_rmnet_block_kernel(%arg0: i32, %arg1: memref<232xf32, #tpu.memory_space<smem>>, %arg2: memref<1x28x4x4xf32, #tpu.memory_space<vmem>>, %arg3: memref<1x8x4x4xf32, #tpu.memory_space<vmem>>, %arg4: memref<8x4x4xf32, #tpu.memory_space<vmem>>) attributes {dimension_semantics = [#tpu.dimension_semantics<parallel>], iteration_bounds = array<i64: 2>, scalar_prefetch = 0 : i64, scratch_operands = 1 : i64, tpu.core_type = #tpu.core_type<tc>, window_params = [{transform_indices = @transform_0, window_bounds = array<i64: 232>}, {transform_indices = @transform_1, window_bounds = array<i64: 1, 28, 4, 4>}, {transform_indices = @transform_2, window_bounds = array<i64: 1, 8, 4, 4>}]} {
    %cst = arith.constant 0.000000e+00 : f32
    %0 = vector.broadcast %cst : f32 to vector<1x4xf32>
    %cst_0 = arith.constant 0.000000e+00 : f32
    %1 = vector.broadcast %cst_0 : f32 to vector<4x1xf32>
    %c0 = arith.constant 0 : index
    %c0_1 = arith.constant 0 : index
    %c0_2 = arith.constant 0 : index
    %c0_3 = arith.constant 0 : index
    %2 = vector.load %arg2[%c0, %c0_1, %c0_2, %c0_3] : memref<1x28x4x4xf32, #tpu.memory_space<vmem>>, vector<1x1x4x4xf32>
    %3 = vector.shape_cast %2 : vector<1x1x4x4xf32> to vector<4x4xf32>
    %c0_4 = arith.constant 0 : index
    %4 = memref.load %arg1[%c0_4] : memref<232xf32, #tpu.memory_space<smem>>
    %5 = vector.broadcast %4 : f32 to vector<4x4xf32>
    %6 = arith.mulf %3, %5 : vector<4x4xf32>
    %c0_5 = arith.constant 0 : index
    %c1 = arith.constant 1 : index
    %c0_6 = arith.constant 0 : index
    %c0_7 = arith.constant 0 : index
    %7 = vector.load %arg2[%c0_5, %c1, %c0_6, %c0_7] : memref<1x28x4x4xf32, #tpu.memory_space<vmem>>, vector<1x1x4x4xf32>
    %8 = vector.shape_cast %7 : vector<1x1x4x4xf32> to vector<4x4xf32>
    %c8 = arith.constant 8 : index
    %9 = memref.load %arg1[%c8] : memref<232xf32, #tpu.memory_space<smem>>
    %10 = vector.broadcast %9 : f32 to vector<4x4xf32>
    %11 = arith.mulf %8, %10 : vector<4x4xf32>
    %12 = arith.addf %6, %11 : vector<4x4xf32>
    %c0_8 = arith.constant 0 : index
    %c2 = arith.constant 2 : index
    %c0_9 = arith.constant 0 : index
    %c0_10 = arith.constant 0 : index
    %13 = vector.load %arg2[%c0_8, %c2, %c0_9, %c0_10] : memref<1x28x4x4xf32, #tpu.memory_space<vmem>>, vector<1x1x4x4xf32>
    %14 = vector.shape_cast %13 : vector<1x1x4x4xf32> to vector<4x4xf32>
    %c16 = arith.constant 16 : index
    %15 = memref.load %arg1[%c16] : memref<232xf32, #tpu.memory_space<smem>>
    %16 = vector.broadcast %15 : f32 to vector<4x4xf32>
    %17 = arith.mulf %14, %16 : vector<4x4xf32>
    %18 = arith.addf %12, %17 : vector<4x4xf32>
    %c0_11 = arith.constant 0 : index
    %c3 = arith.constant 3 : index
    %c0_12 = arith.constant 0 : index
    %c0_13 = arith.constant 0 : index
    %19 = vector.load %arg2[%c0_11, %c3, %c0_12, %c0_13] : memref<1x28x4x4xf32, #tpu.memory_space<vmem>>, vector<1x1x4x4xf32>
    %20 = vector.shape_cast %19 : vector<1x1x4x4xf32> to vector<4x4xf32>
    %c24 = arith.constant 24 : index
    %21 = memref.load %arg1[%c24] : memref<232xf32, #tpu.memory_space<smem>>
    %22 = vector.broadcast %21 : f32 to vector<4x4xf32>
    %23 = arith.mulf %20, %22 : vector<4x4xf32>
    %24 = arith.addf %18, %23 : vector<4x4xf32>
    %c32 = arith.constant 32 : index
    %25 = memref.load %arg1[%c32] : memref<232xf32, #tpu.memory_space<smem>>
    %26 = vector.broadcast %25 : f32 to vector<4x4xf32>
    %27 = arith.addf %24, %26 : vector<4x4xf32>
    %cst_14 = arith.constant 0.000000e+00 : f32
    %28 = vector.broadcast %cst_14 : f32 to vector<4x4xf32>
    %29 = arith.cmpf ogt, %27, %28 : vector<4x4xf32>
    %cst_15 = arith.constant 0.000000e+00 : f32
    %30 = vector.broadcast %cst_15 : f32 to vector<4x4xf32>
    %31 = arith.minimumf %27, %30 : vector<4x4xf32>
    %32 = math.exp %31 : vector<4x4xf32>
    %cst_16 = arith.constant 1.000000e+00 : f32
    %33 = vector.broadcast %cst_16 : f32 to vector<4x4xf32>
    %34 = arith.subf %32, %33 : vector<4x4xf32>
    %35 = arith.select %29, %27, %34 : vector<4x4xi1>, vector<4x4xf32>
    %c0_17 = arith.constant 0 : index
    %c4 = arith.constant 4 : index
    %c0_18 = arith.constant 0 : index
    %c0_19 = arith.constant 0 : index
    %36 = vector.load %arg2[%c0_17, %c4, %c0_18, %c0_19] : memref<1x28x4x4xf32, #tpu.memory_space<vmem>>, vector<1x1x4x4xf32>
    %37 = vector.shape_cast %36 : vector<1x1x4x4xf32> to vector<4x4xf32>
    %c0_20 = arith.constant 0 : index
    %38 = memref.load %arg1[%c0_20] : memref<232xf32, #tpu.memory_space<smem>>
    %39 = vector.broadcast %38 : f32 to vector<4x4xf32>
    %40 = arith.mulf %37, %39 : vector<4x4xf32>
    %c0_21 = arith.constant 0 : index
    %c5 = arith.constant 5 : index
    %c0_22 = arith.constant 0 : index
    %c0_23 = arith.constant 0 : index
    %41 = vector.load %arg2[%c0_21, %c5, %c0_22, %c0_23] : memref<1x28x4x4xf32, #tpu.memory_space<vmem>>, vector<1x1x4x4xf32>
    %42 = vector.shape_cast %41 : vector<1x1x4x4xf32> to vector<4x4xf32>
    %c8_24 = arith.constant 8 : index
    %43 = memref.load %arg1[%c8_24] : memref<232xf32, #tpu.memory_space<smem>>
    %44 = vector.broadcast %43 : f32 to vector<4x4xf32>
    %45 = arith.mulf %42, %44 : vector<4x4xf32>
    %46 = arith.addf %40, %45 : vector<4x4xf32>
    %c0_25 = arith.constant 0 : index
    %c6 = arith.constant 6 : index
    %c0_26 = arith.constant 0 : index
    %c0_27 = arith.constant 0 : index
    %47 = vector.load %arg2[%c0_25, %c6, %c0_26, %c0_27] : memref<1x28x4x4xf32, #tpu.memory_space<vmem>>, vector<1x1x4x4xf32>
    %48 = vector.shape_cast %47 : vector<1x1x4x4xf32> to vector<4x4xf32>
    %c16_28 = arith.constant 16 : index
    %49 = memref.load %arg1[%c16_28] : memref<232xf32, #tpu.memory_space<smem>>
    %50 = vector.broadcast %49 : f32 to vector<4x4xf32>
    %51 = arith.mulf %48, %50 : vector<4x4xf32>
    %52 = arith.addf %46, %51 : vector<4x4xf32>
    %c0_29 = arith.constant 0 : index
    %c7 = arith.constant 7 : index
    %c0_30 = arith.constant 0 : index
    %c0_31 = arith.constant 0 : index
    %53 = vector.load %arg2[%c0_29, %c7, %c0_30, %c0_31] : memref<1x28x4x4xf32, #tpu.memory_space<vmem>>, vector<1x1x4x4xf32>
    %54 = vector.shape_cast %53 : vector<1x1x4x4xf32> to vector<4x4xf32>
    %c24_32 = arith.constant 24 : index
    %55 = memref.load %arg1[%c24_32] : memref<232xf32, #tpu.memory_space<smem>>
    %56 = vector.broadcast %55 : f32 to vector<4x4xf32>
    %57 = arith.mulf %54, %56 : vector<4x4xf32>
    %58 = arith.addf %52, %57 : vector<4x4xf32>
    %c32_33 = arith.constant 32 : index
    %59 = memref.load %arg1[%c32_33] : memref<232xf32, #tpu.memory_space<smem>>
    %60 = vector.broadcast %59 : f32 to vector<4x4xf32>
    %61 = arith.addf %58, %60 : vector<4x4xf32>
    %cst_34 = arith.constant 0.000000e+00 : f32
    %62 = vector.broadcast %cst_34 : f32 to vector<4x4xf32>
    %63 = arith.cmpf ogt, %61, %62 : vector<4x4xf32>
    %cst_35 = arith.constant 0.000000e+00 : f32
    %64 = vector.broadcast %cst_35 : f32 to vector<4x4xf32>
    %65 = arith.minimumf %61, %64 : vector<4x4xf32>
    %66 = math.exp %65 : vector<4x4xf32>
    %cst_36 = arith.constant 1.000000e+00 : f32
    %67 = vector.broadcast %cst_36 : f32 to vector<4x4xf32>
    %68 = arith.subf %66, %67 : vector<4x4xf32>
    %69 = arith.select %63, %61, %68 : vector<4x4xi1>, vector<4x4xf32>
    %c0_37 = arith.constant 0 : index
    %c8_38 = arith.constant 8 : index
    %c0_39 = arith.constant 0 : index
    %c0_40 = arith.constant 0 : index
    %70 = vector.load %arg2[%c0_37, %c8_38, %c0_39, %c0_40] : memref<1x28x4x4xf32, #tpu.memory_space<vmem>>, vector<1x1x4x4xf32>
    %71 = vector.shape_cast %70 : vector<1x1x4x4xf32> to vector<4x4xf32>
    %c0_41 = arith.constant 0 : index
    %72 = memref.load %arg1[%c0_41] : memref<232xf32, #tpu.memory_space<smem>>
    %73 = vector.broadcast %72 : f32 to vector<4x4xf32>
    %74 = arith.mulf %71, %73 : vector<4x4xf32>
    %c0_42 = arith.constant 0 : index
    %c9 = arith.constant 9 : index
    %c0_43 = arith.constant 0 : index
    %c0_44 = arith.constant 0 : index
    %75 = vector.load %arg2[%c0_42, %c9, %c0_43, %c0_44] : memref<1x28x4x4xf32, #tpu.memory_space<vmem>>, vector<1x1x4x4xf32>
    %76 = vector.shape_cast %75 : vector<1x1x4x4xf32> to vector<4x4xf32>
    %c8_45 = arith.constant 8 : index
    %77 = memref.load %arg1[%c8_45] : memref<232xf32, #tpu.memory_space<smem>>
    %78 = vector.broadcast %77 : f32 to vector<4x4xf32>
    %79 = arith.mulf %76, %78 : vector<4x4xf32>
    %80 = arith.addf %74, %79 : vector<4x4xf32>
    %c0_46 = arith.constant 0 : index
    %c10 = arith.constant 10 : index
    %c0_47 = arith.constant 0 : index
    %c0_48 = arith.constant 0 : index
    %81 = vector.load %arg2[%c0_46, %c10, %c0_47, %c0_48] : memref<1x28x4x4xf32, #tpu.memory_space<vmem>>, vector<1x1x4x4xf32>
    %82 = vector.shape_cast %81 : vector<1x1x4x4xf32> to vector<4x4xf32>
    %c16_49 = arith.constant 16 : index
    %83 = memref.load %arg1[%c16_49] : memref<232xf32, #tpu.memory_space<smem>>
    %84 = vector.broadcast %83 : f32 to vector<4x4xf32>
    %85 = arith.mulf %82, %84 : vector<4x4xf32>
    %86 = arith.addf %80, %85 : vector<4x4xf32>
    %c0_50 = arith.constant 0 : index
    %c11 = arith.constant 11 : index
    %c0_51 = arith.constant 0 : index
    %c0_52 = arith.constant 0 : index
    %87 = vector.load %arg2[%c0_50, %c11, %c0_51, %c0_52] : memref<1x28x4x4xf32, #tpu.memory_space<vmem>>, vector<1x1x4x4xf32>
    %88 = vector.shape_cast %87 : vector<1x1x4x4xf32> to vector<4x4xf32>
    %c24_53 = arith.constant 24 : index
    %89 = memref.load %arg1[%c24_53] : memref<232xf32, #tpu.memory_space<smem>>
    %90 = vector.broadcast %89 : f32 to vector<4x4xf32>
    %91 = arith.mulf %88, %90 : vector<4x4xf32>
    %92 = arith.addf %86, %91 : vector<4x4xf32>
    %c32_54 = arith.constant 32 : index
    %93 = memref.load %arg1[%c32_54] : memref<232xf32, #tpu.memory_space<smem>>
    %94 = vector.broadcast %93 : f32 to vector<4x4xf32>
    %95 = arith.addf %92, %94 : vector<4x4xf32>
    %cst_55 = arith.constant 0.000000e+00 : f32
    %96 = vector.broadcast %cst_55 : f32 to vector<4x4xf32>
    %97 = arith.cmpf ogt, %95, %96 : vector<4x4xf32>
    %cst_56 = arith.constant 0.000000e+00 : f32
    %98 = vector.broadcast %cst_56 : f32 to vector<4x4xf32>
    %99 = arith.minimumf %95, %98 : vector<4x4xf32>
    %100 = math.exp %99 : vector<4x4xf32>
    %cst_57 = arith.constant 1.000000e+00 : f32
    %101 = vector.broadcast %cst_57 : f32 to vector<4x4xf32>
    %102 = arith.subf %100, %101 : vector<4x4xf32>
    %103 = arith.select %97, %95, %102 : vector<4x4xi1>, vector<4x4xf32>
    %c0_58 = arith.constant 0 : index
    %c12 = arith.constant 12 : index
    %c0_59 = arith.constant 0 : index
    %c0_60 = arith.constant 0 : index
    %104 = vector.load %arg2[%c0_58, %c12, %c0_59, %c0_60] : memref<1x28x4x4xf32, #tpu.memory_space<vmem>>, vector<1x1x4x4xf32>
    %105 = vector.shape_cast %104 : vector<1x1x4x4xf32> to vector<4x4xf32>
    %c0_61 = arith.constant 0 : index
    %106 = memref.load %arg1[%c0_61] : memref<232xf32, #tpu.memory_space<smem>>
    %107 = vector.broadcast %106 : f32 to vector<4x4xf32>
    %108 = arith.mulf %105, %107 : vector<4x4xf32>
    %c0_62 = arith.constant 0 : index
    %c13 = arith.constant 13 : index
    %c0_63 = arith.constant 0 : index
    %c0_64 = arith.constant 0 : index
    %109 = vector.load %arg2[%c0_62, %c13, %c0_63, %c0_64] : memref<1x28x4x4xf32, #tpu.memory_space<vmem>>, vector<1x1x4x4xf32>
    %110 = vector.shape_cast %109 : vector<1x1x4x4xf32> to vector<4x4xf32>
    %c8_65 = arith.constant 8 : index
    %111 = memref.load %arg1[%c8_65] : memref<232xf32, #tpu.memory_space<smem>>
    %112 = vector.broadcast %111 : f32 to vector<4x4xf32>
    %113 = arith.mulf %110, %112 : vector<4x4xf32>
    %114 = arith.addf %108, %113 : vector<4x4xf32>
    %c0_66 = arith.constant 0 : index
    %c14 = arith.constant 14 : index
    %c0_67 = arith.constant 0 : index
    %c0_68 = arith.constant 0 : index
    %115 = vector.load %arg2[%c0_66, %c14, %c0_67, %c0_68] : memref<1x28x4x4xf32, #tpu.memory_space<vmem>>, vector<1x1x4x4xf32>
    %116 = vector.shape_cast %115 : vector<1x1x4x4xf32> to vector<4x4xf32>
    %c16_69 = arith.constant 16 : index
    %117 = memref.load %arg1[%c16_69] : memref<232xf32, #tpu.memory_space<smem>>
    %118 = vector.broadcast %117 : f32 to vector<4x4xf32>
    %119 = arith.mulf %116, %118 : vector<4x4xf32>
    %120 = arith.addf %114, %119 : vector<4x4xf32>
    %c0_70 = arith.constant 0 : index
    %c15 = arith.constant 15 : index
    %c0_71 = arith.constant 0 : index
    %c0_72 = arith.constant 0 : index
    %121 = vector.load %arg2[%c0_70, %c15, %c0_71, %c0_72] : memref<1x28x4x4xf32, #tpu.memory_space<vmem>>, vector<1x1x4x4xf32>
    %122 = vector.shape_cast %121 : vector<1x1x4x4xf32> to vector<4x4xf32>
    %c24_73 = arith.constant 24 : index
    %123 = memref.load %arg1[%c24_73] : memref<232xf32, #tpu.memory_space<smem>>
    %124 = vector.broadcast %123 : f32 to vector<4x4xf32>
    %125 = arith.mulf %122, %124 : vector<4x4xf32>
    %126 = arith.addf %120, %125 : vector<4x4xf32>
    %c32_74 = arith.constant 32 : index
    %127 = memref.load %arg1[%c32_74] : memref<232xf32, #tpu.memory_space<smem>>
    %128 = vector.broadcast %127 : f32 to vector<4x4xf32>
    %129 = arith.addf %126, %128 : vector<4x4xf32>
    %cst_75 = arith.constant 0.000000e+00 : f32
    %130 = vector.broadcast %cst_75 : f32 to vector<4x4xf32>
    %131 = arith.cmpf ogt, %129, %130 : vector<4x4xf32>
    %cst_76 = arith.constant 0.000000e+00 : f32
    %132 = vector.broadcast %cst_76 : f32 to vector<4x4xf32>
    %133 = arith.minimumf %129, %132 : vector<4x4xf32>
    %134 = math.exp %133 : vector<4x4xf32>
    %cst_77 = arith.constant 1.000000e+00 : f32
    %135 = vector.broadcast %cst_77 : f32 to vector<4x4xf32>
    %136 = arith.subf %134, %135 : vector<4x4xf32>
    %137 = arith.select %131, %129, %136 : vector<4x4xi1>, vector<4x4xf32>
    %c72 = arith.constant 72 : index
    %138 = memref.load %arg1[%c72] : memref<232xf32, #tpu.memory_space<smem>>
    %139 = vector.broadcast %138 : f32 to vector<4x4xf32>
    %140 = arith.mulf %139, %35 : vector<4x4xf32>
    %c80 = arith.constant 80 : index
    %141 = memref.load %arg1[%c80] : memref<232xf32, #tpu.memory_space<smem>>
    %142 = vector.broadcast %141 : f32 to vector<4x4xf32>
    %143 = arith.mulf %142, %69 : vector<4x4xf32>
    %144 = arith.addf %140, %143 : vector<4x4xf32>
    %c64 = arith.constant 64 : index
    %145 = memref.load %arg1[%c64] : memref<232xf32, #tpu.memory_space<smem>>
    %146 = vector.extract_strided_slice %69 {offsets = [0, 0], sizes = [4, 3], strides = [1, 1]} : vector<4x4xf32> to vector<4x3xf32>
    %147 = tpu.concatenate %1, %146 in 1 : vector<4x1xf32>, vector<4x3xf32> -> vector<4x4xf32>
    %148 = vector.broadcast %145 : f32 to vector<4x4xf32>
    %149 = arith.mulf %148, %147 : vector<4x4xf32>
    %150 = arith.addf %144, %149 : vector<4x4xf32>
    %c96 = arith.constant 96 : index
    %151 = memref.load %arg1[%c96] : memref<232xf32, #tpu.memory_space<smem>>
    %152 = vector.broadcast %151 : f32 to vector<4x4xf32>
    %153 = arith.mulf %152, %103 : vector<4x4xf32>
    %154 = arith.addf %150, %153 : vector<4x4xf32>
    %c48 = arith.constant 48 : index
    %155 = memref.load %arg1[%c48] : memref<232xf32, #tpu.memory_space<smem>>
    %156 = vector.extract_strided_slice %103 {offsets = [0, 0], sizes = [3, 4], strides = [1, 1]} : vector<4x4xf32> to vector<3x4xf32>
    %157 = tpu.concatenate %0, %156 in 0 : vector<1x4xf32>, vector<3x4xf32> -> vector<4x4xf32>
    %158 = vector.broadcast %155 : f32 to vector<4x4xf32>
    %159 = arith.mulf %158, %157 : vector<4x4xf32>
    %160 = arith.addf %154, %159 : vector<4x4xf32>
    %c104 = arith.constant 104 : index
    %161 = memref.load %arg1[%c104] : memref<232xf32, #tpu.memory_space<smem>>
    %162 = vector.broadcast %161 : f32 to vector<4x4xf32>
    %163 = arith.mulf %162, %137 : vector<4x4xf32>
    %164 = arith.addf %160, %163 : vector<4x4xf32>
    %c88 = arith.constant 88 : index
    %165 = memref.load %arg1[%c88] : memref<232xf32, #tpu.memory_space<smem>>
    %166 = vector.extract_strided_slice %137 {offsets = [0, 0], sizes = [4, 3], strides = [1, 1]} : vector<4x4xf32> to vector<4x3xf32>
    %167 = tpu.concatenate %1, %166 in 1 : vector<4x1xf32>, vector<4x3xf32> -> vector<4x4xf32>
    %168 = vector.broadcast %165 : f32 to vector<4x4xf32>
    %169 = arith.mulf %168, %167 : vector<4x4xf32>
    %170 = arith.addf %164, %169 : vector<4x4xf32>
    %171 = vector.extract_strided_slice %137 {offsets = [0, 0], sizes = [3, 4], strides = [1, 1]} : vector<4x4xf32> to vector<3x4xf32>
    %172 = tpu.concatenate %0, %171 in 0 : vector<1x4xf32>, vector<3x4xf32> -> vector<4x4xf32>
    %c56 = arith.constant 56 : index
    %173 = memref.load %arg1[%c56] : memref<232xf32, #tpu.memory_space<smem>>
    %174 = vector.broadcast %173 : f32 to vector<4x4xf32>
    %175 = arith.mulf %174, %172 : vector<4x4xf32>
    %176 = arith.addf %170, %175 : vector<4x4xf32>
    %c40 = arith.constant 40 : index
    %177 = memref.load %arg1[%c40] : memref<232xf32, #tpu.memory_space<smem>>
    %178 = vector.extract_strided_slice %172 {offsets = [0, 0], sizes = [4, 3], strides = [1, 1]} : vector<4x4xf32> to vector<4x3xf32>
    %179 = tpu.concatenate %1, %178 in 1 : vector<4x1xf32>, vector<4x3xf32> -> vector<4x4xf32>
    %180 = vector.broadcast %177 : f32 to vector<4x4xf32>
    %181 = arith.mulf %180, %179 : vector<4x4xf32>
    %182 = arith.addf %176, %181 : vector<4x4xf32>
    %c112 = arith.constant 112 : index
    %183 = memref.load %arg1[%c112] : memref<232xf32, #tpu.memory_space<smem>>
    %184 = vector.broadcast %183 : f32 to vector<4x4xf32>
    %185 = arith.addf %182, %184 : vector<4x4xf32>
    %cst_78 = arith.constant 0.000000e+00 : f32
    %186 = vector.broadcast %cst_78 : f32 to vector<4x4xf32>
    %187 = arith.cmpf ogt, %185, %186 : vector<4x4xf32>
    %cst_79 = arith.constant 0.000000e+00 : f32
    %188 = vector.broadcast %cst_79 : f32 to vector<4x4xf32>
    %189 = arith.minimumf %185, %188 : vector<4x4xf32>
    %190 = math.exp %189 : vector<4x4xf32>
    %cst_80 = arith.constant 1.000000e+00 : f32
    %191 = vector.broadcast %cst_80 : f32 to vector<4x4xf32>
    %192 = arith.subf %190, %191 : vector<4x4xf32>
    %193 = arith.select %187, %185, %192 : vector<4x4xi1>, vector<4x4xf32>
    %c0_81 = arith.constant 0 : index
    %c0_82 = arith.constant 0 : index
    %c0_83 = arith.constant 0 : index
    %194 = vector.load %arg4[%c0_81, %c0_82, %c0_83] : memref<8x4x4xf32, #tpu.memory_space<vmem>>, vector<1x4x4xf32>
    %195 = vector.shape_cast %194 : vector<1x4x4xf32> to vector<4x4xf32>
    %196 = vector.shape_cast %193 : vector<4x4xf32> to vector<1x4x4xf32>
    tpu.vector_store %arg4[%c0_81, %c0_82, %c0_83], %196 {strides = array<i32>} : memref<8x4x4xf32, #tpu.memory_space<vmem>>, vector<1x4x4xf32>,
    %c0_84 = arith.constant 0 : index
    %c0_85 = arith.constant 0 : index
    %c0_86 = arith.constant 0 : index
    %c0_87 = arith.constant 0 : index
    %197 = vector.load %arg2[%c0_84, %c0_85, %c0_86, %c0_87] : memref<1x28x4x4xf32, #tpu.memory_space<vmem>>, vector<1x1x4x4xf32>
    %198 = vector.shape_cast %197 : vector<1x1x4x4xf32> to vector<4x4xf32>
    %c1_88 = arith.constant 1 : index
    %199 = memref.load %arg1[%c1_88] : memref<232xf32, #tpu.memory_space<smem>>
    %200 = vector.broadcast %199 : f32 to vector<4x4xf32>
    %201 = arith.mulf %198, %200 : vector<4x4xf32>
    %c0_89 = arith.constant 0 : index
    %c1_90 = arith.constant 1 : index
    %c0_91 = arith.constant 0 : index
    %c0_92 = arith.constant 0 : index
    %202 = vector.load %arg2[%c0_89, %c1_90, %c0_91, %c0_92] : memref<1x28x4x4xf32, #tpu.memory_space<vmem>>, vector<1x1x4x4xf32>
    %203 = vector.shape_cast %202 : vector<1x1x4x4xf32> to vector<4x4xf32>
    %c9_93 = arith.constant 9 : index
    %204 = memref.load %arg1[%c9_93] : memref<232xf32, #tpu.memory_space<smem>>
    %205 = vector.broadcast %204 : f32 to vector<4x4xf32>
    %206 = arith.mulf %203, %205 : vector<4x4xf32>
    %207 = arith.addf %201, %206 : vector<4x4xf32>
    %c0_94 = arith.constant 0 : index
    %c2_95 = arith.constant 2 : index
    %c0_96 = arith.constant 0 : index
    %c0_97 = arith.constant 0 : index
    %208 = vector.load %arg2[%c0_94, %c2_95, %c0_96, %c0_97] : memref<1x28x4x4xf32, #tpu.memory_space<vmem>>, vector<1x1x4x4xf32>
    %209 = vector.shape_cast %208 : vector<1x1x4x4xf32> to vector<4x4xf32>
    %c17 = arith.constant 17 : index
    %210 = memref.load %arg1[%c17] : memref<232xf32, #tpu.memory_space<smem>>
    %211 = vector.broadcast %210 : f32 to vector<4x4xf32>
    %212 = arith.mulf %209, %211 : vector<4x4xf32>
    %213 = arith.addf %207, %212 : vector<4x4xf32>
    %c0_98 = arith.constant 0 : index
    %c3_99 = arith.constant 3 : index
    %c0_100 = arith.constant 0 : index
    %c0_101 = arith.constant 0 : index
    %214 = vector.load %arg2[%c0_98, %c3_99, %c0_100, %c0_101] : memref<1x28x4x4xf32, #tpu.memory_space<vmem>>, vector<1x1x4x4xf32>
    %215 = vector.shape_cast %214 : vector<1x1x4x4xf32> to vector<4x4xf32>
    %c25 = arith.constant 25 : index
    %216 = memref.load %arg1[%c25] : memref<232xf32, #tpu.memory_space<smem>>
    %217 = vector.broadcast %216 : f32 to vector<4x4xf32>
    %218 = arith.mulf %215, %217 : vector<4x4xf32>
    %219 = arith.addf %213, %218 : vector<4x4xf32>
    %c33 = arith.constant 33 : index
    %220 = memref.load %arg1[%c33] : memref<232xf32, #tpu.memory_space<smem>>
    %221 = vector.broadcast %220 : f32 to vector<4x4xf32>
    %222 = arith.addf %219, %221 : vector<4x4xf32>
    %cst_102 = arith.constant 0.000000e+00 : f32
    %223 = vector.broadcast %cst_102 : f32 to vector<4x4xf32>
    %224 = arith.cmpf ogt, %222, %223 : vector<4x4xf32>
    %cst_103 = arith.constant 0.000000e+00 : f32
    %225 = vector.broadcast %cst_103 : f32 to vector<4x4xf32>
    %226 = arith.minimumf %222, %225 : vector<4x4xf32>
    %227 = math.exp %226 : vector<4x4xf32>
    %cst_104 = arith.constant 1.000000e+00 : f32
    %228 = vector.broadcast %cst_104 : f32 to vector<4x4xf32>
    %229 = arith.subf %227, %228 : vector<4x4xf32>
    %230 = arith.select %224, %222, %229 : vector<4x4xi1>, vector<4x4xf32>
    %c0_105 = arith.constant 0 : index
    %c4_106 = arith.constant 4 : index
    %c0_107 = arith.constant 0 : index
    %c0_108 = arith.constant 0 : index
    %231 = vector.load %arg2[%c0_105, %c4_106, %c0_107, %c0_108] : memref<1x28x4x4xf32, #tpu.memory_space<vmem>>, vector<1x1x4x4xf32>
    %232 = vector.shape_cast %231 : vector<1x1x4x4xf32> to vector<4x4xf32>
    %c1_109 = arith.constant 1 : index
    %233 = memref.load %arg1[%c1_109] : memref<232xf32, #tpu.memory_space<smem>>
    %234 = vector.broadcast %233 : f32 to vector<4x4xf32>
    %235 = arith.mulf %232, %234 : vector<4x4xf32>
    %c0_110 = arith.constant 0 : index
    %c5_111 = arith.constant 5 : index
    %c0_112 = arith.constant 0 : index
    %c0_113 = arith.constant 0 : index
    %236 = vector.load %arg2[%c0_110, %c5_111, %c0_112, %c0_113] : memref<1x28x4x4xf32, #tpu.memory_space<vmem>>, vector<1x1x4x4xf32>
    %237 = vector.shape_cast %236 : vector<1x1x4x4xf32> to vector<4x4xf32>
    %c9_114 = arith.constant 9 : index
    %238 = memref.load %arg1[%c9_114] : memref<232xf32, #tpu.memory_space<smem>>
    %239 = vector.broadcast %238 : f32 to vector<4x4xf32>
    %240 = arith.mulf %237, %239 : vector<4x4xf32>
    %241 = arith.addf %235, %240 : vector<4x4xf32>
    %c0_115 = arith.constant 0 : index
    %c6_116 = arith.constant 6 : index
    %c0_117 = arith.constant 0 : index
    %c0_118 = arith.constant 0 : index
    %242 = vector.load %arg2[%c0_115, %c6_116, %c0_117, %c0_118] : memref<1x28x4x4xf32, #tpu.memory_space<vmem>>, vector<1x1x4x4xf32>
    %243 = vector.shape_cast %242 : vector<1x1x4x4xf32> to vector<4x4xf32>
    %c17_119 = arith.constant 17 : index
    %244 = memref.load %arg1[%c17_119] : memref<232xf32, #tpu.memory_space<smem>>
    %245 = vector.broadcast %244 : f32 to vector<4x4xf32>
    %246 = arith.mulf %243, %245 : vector<4x4xf32>
    %247 = arith.addf %241, %246 : vector<4x4xf32>
    %c0_120 = arith.constant 0 : index
    %c7_121 = arith.constant 7 : index
    %c0_122 = arith.constant 0 : index
    %c0_123 = arith.constant 0 : index
    %248 = vector.load %arg2[%c0_120, %c7_121, %c0_122, %c0_123] : memref<1x28x4x4xf32, #tpu.memory_space<vmem>>, vector<1x1x4x4xf32>
    %249 = vector.shape_cast %248 : vector<1x1x4x4xf32> to vector<4x4xf32>
    %c25_124 = arith.constant 25 : index
    %250 = memref.load %arg1[%c25_124] : memref<232xf32, #tpu.memory_space<smem>>
    %251 = vector.broadcast %250 : f32 to vector<4x4xf32>
    %252 = arith.mulf %249, %251 : vector<4x4xf32>
    %253 = arith.addf %247, %252 : vector<4x4xf32>
    %c33_125 = arith.constant 33 : index
    %254 = memref.load %arg1[%c33_125] : memref<232xf32, #tpu.memory_space<smem>>
    %255 = vector.broadcast %254 : f32 to vector<4x4xf32>
    %256 = arith.addf %253, %255 : vector<4x4xf32>
    %cst_126 = arith.constant 0.000000e+00 : f32
    %257 = vector.broadcast %cst_126 : f32 to vector<4x4xf32>
    %258 = arith.cmpf ogt, %256, %257 : vector<4x4xf32>
    %cst_127 = arith.constant 0.000000e+00 : f32
    %259 = vector.broadcast %cst_127 : f32 to vector<4x4xf32>
    %260 = arith.minimumf %256, %259 : vector<4x4xf32>
    %261 = math.exp %260 : vector<4x4xf32>
    %cst_128 = arith.constant 1.000000e+00 : f32
    %262 = vector.broadcast %cst_128 : f32 to vector<4x4xf32>
    %263 = arith.subf %261, %262 : vector<4x4xf32>
    %264 = arith.select %258, %256, %263 : vector<4x4xi1>, vector<4x4xf32>
    %c0_129 = arith.constant 0 : index
    %c8_130 = arith.constant 8 : index
    %c0_131 = arith.constant 0 : index
    %c0_132 = arith.constant 0 : index
    %265 = vector.load %arg2[%c0_129, %c8_130, %c0_131, %c0_132] : memref<1x28x4x4xf32, #tpu.memory_space<vmem>>, vector<1x1x4x4xf32>
    %266 = vector.shape_cast %265 : vector<1x1x4x4xf32> to vector<4x4xf32>
    %c1_133 = arith.constant 1 : index
    %267 = memref.load %arg1[%c1_133] : memref<232xf32, #tpu.memory_space<smem>>
    %268 = vector.broadcast %267 : f32 to vector<4x4xf32>
    %269 = arith.mulf %266, %268 : vector<4x4xf32>
    %c0_134 = arith.constant 0 : index
    %c9_135 = arith.constant 9 : index
    %c0_136 = arith.constant 0 : index
    %c0_137 = arith.constant 0 : index
    %270 = vector.load %arg2[%c0_134, %c9_135, %c0_136, %c0_137] : memref<1x28x4x4xf32, #tpu.memory_space<vmem>>, vector<1x1x4x4xf32>
    %271 = vector.shape_cast %270 : vector<1x1x4x4xf32> to vector<4x4xf32>
    %c9_138 = arith.constant 9 : index
    %272 = memref.load %arg1[%c9_138] : memref<232xf32, #tpu.memory_space<smem>>
    %273 = vector.broadcast %272 : f32 to vector<4x4xf32>
    %274 = arith.mulf %271, %273 : vector<4x4xf32>
    %275 = arith.addf %269, %274 : vector<4x4xf32>
    %c0_139 = arith.constant 0 : index
    %c10_140 = arith.constant 10 : index
    %c0_141 = arith.constant 0 : index
    %c0_142 = arith.constant 0 : index
    %276 = vector.load %arg2[%c0_139, %c10_140, %c0_141, %c0_142] : memref<1x28x4x4xf32, #tpu.memory_space<vmem>>, vector<1x1x4x4xf32>
    %277 = vector.shape_cast %276 : vector<1x1x4x4xf32> to vector<4x4xf32>
    %c17_143 = arith.constant 17 : index
    %278 = memref.load %arg1[%c17_143] : memref<232xf32, #tpu.memory_space<smem>>
    %279 = vector.broadcast %278 : f32 to vector<4x4xf32>
    %280 = arith.mulf %277, %279 : vector<4x4xf32>
    %281 = arith.addf %275, %280 : vector<4x4xf32>
    %c0_144 = arith.constant 0 : index
    %c11_145 = arith.constant 11 : index
    %c0_146 = arith.constant 0 : index
    %c0_147 = arith.constant 0 : index
    %282 = vector.load %arg2[%c0_144, %c11_145, %c0_146, %c0_147] : memref<1x28x4x4xf32, #tpu.memory_space<vmem>>, vector<1x1x4x4xf32>
    %283 = vector.shape_cast %282 : vector<1x1x4x4xf32> to vector<4x4xf32>
    %c25_148 = arith.constant 25 : index
    %284 = memref.load %arg1[%c25_148] : memref<232xf32, #tpu.memory_space<smem>>
    %285 = vector.broadcast %284 : f32 to vector<4x4xf32>
    %286 = arith.mulf %283, %285 : vector<4x4xf32>
    %287 = arith.addf %281, %286 : vector<4x4xf32>
    %c33_149 = arith.constant 33 : index
    %288 = memref.load %arg1[%c33_149] : memref<232xf32, #tpu.memory_space<smem>>
    %289 = vector.broadcast %288 : f32 to vector<4x4xf32>
    %290 = arith.addf %287, %289 : vector<4x4xf32>
    %cst_150 = arith.constant 0.000000e+00 : f32
    %291 = vector.broadcast %cst_150 : f32 to vector<4x4xf32>
    %292 = arith.cmpf ogt, %290, %291 : vector<4x4xf32>
    %cst_151 = arith.constant 0.000000e+00 : f32
    %293 = vector.broadcast %cst_151 : f32 to vector<4x4xf32>
    %294 = arith.minimumf %290, %293 : vector<4x4xf32>
    %295 = math.exp %294 : vector<4x4xf32>
    %cst_152 = arith.constant 1.000000e+00 : f32
    %296 = vector.broadcast %cst_152 : f32 to vector<4x4xf32>
    %297 = arith.subf %295, %296 : vector<4x4xf32>
    %298 = arith.select %292, %290, %297 : vector<4x4xi1>, vector<4x4xf32>
    %c0_153 = arith.constant 0 : index
    %c12_154 = arith.constant 12 : index
    %c0_155 = arith.constant 0 : index
    %c0_156 = arith.constant 0 : index
    %299 = vector.load %arg2[%c0_153, %c12_154, %c0_155, %c0_156] : memref<1x28x4x4xf32, #tpu.memory_space<vmem>>, vector<1x1x4x4xf32>
    %300 = vector.shape_cast %299 : vector<1x1x4x4xf32> to vector<4x4xf32>
    %c1_157 = arith.constant 1 : index
    %301 = memref.load %arg1[%c1_157] : memref<232xf32, #tpu.memory_space<smem>>
    %302 = vector.broadcast %301 : f32 to vector<4x4xf32>
    %303 = arith.mulf %300, %302 : vector<4x4xf32>
    %c0_158 = arith.constant 0 : index
    %c13_159 = arith.constant 13 : index
    %c0_160 = arith.constant 0 : index
    %c0_161 = arith.constant 0 : index
    %304 = vector.load %arg2[%c0_158, %c13_159, %c0_160, %c0_161] : memref<1x28x4x4xf32, #tpu.memory_space<vmem>>, vector<1x1x4x4xf32>
    %305 = vector.shape_cast %304 : vector<1x1x4x4xf32> to vector<4x4xf32>
    %c9_162 = arith.constant 9 : index
    %306 = memref.load %arg1[%c9_162] : memref<232xf32, #tpu.memory_space<smem>>
    %307 = vector.broadcast %306 : f32 to vector<4x4xf32>
    %308 = arith.mulf %305, %307 : vector<4x4xf32>
    %309 = arith.addf %303, %308 : vector<4x4xf32>
    %c0_163 = arith.constant 0 : index
    %c14_164 = arith.constant 14 : index
    %c0_165 = arith.constant 0 : index
    %c0_166 = arith.constant 0 : index
    %310 = vector.load %arg2[%c0_163, %c14_164, %c0_165, %c0_166] : memref<1x28x4x4xf32, #tpu.memory_space<vmem>>, vector<1x1x4x4xf32>
    %311 = vector.shape_cast %310 : vector<1x1x4x4xf32> to vector<4x4xf32>
    %c17_167 = arith.constant 17 : index
    %312 = memref.load %arg1[%c17_167] : memref<232xf32, #tpu.memory_space<smem>>
    %313 = vector.broadcast %312 : f32 to vector<4x4xf32>
    %314 = arith.mulf %311, %313 : vector<4x4xf32>
    %315 = arith.addf %309, %314 : vector<4x4xf32>
    %c0_168 = arith.constant 0 : index
    %c15_169 = arith.constant 15 : index
    %c0_170 = arith.constant 0 : index
    %c0_171 = arith.constant 0 : index
    %316 = vector.load %arg2[%c0_168, %c15_169, %c0_170, %c0_171] : memref<1x28x4x4xf32, #tpu.memory_space<vmem>>, vector<1x1x4x4xf32>
    %317 = vector.shape_cast %316 : vector<1x1x4x4xf32> to vector<4x4xf32>
    %c25_172 = arith.constant 25 : index
    %318 = memref.load %arg1[%c25_172] : memref<232xf32, #tpu.memory_space<smem>>
    %319 = vector.broadcast %318 : f32 to vector<4x4xf32>
    %320 = arith.mulf %317, %319 : vector<4x4xf32>
    %321 = arith.addf %315, %320 : vector<4x4xf32>
    %c33_173 = arith.constant 33 : index
    %322 = memref.load %arg1[%c33_173] : memref<232xf32, #tpu.memory_space<smem>>
    %323 = vector.broadcast %322 : f32 to vector<4x4xf32>
    %324 = arith.addf %321, %323 : vector<4x4xf32>
    %cst_174 = arith.constant 0.000000e+00 : f32
    %325 = vector.broadcast %cst_174 : f32 to vector<4x4xf32>
    %326 = arith.cmpf ogt, %324, %325 : vector<4x4xf32>
    %cst_175 = arith.constant 0.000000e+00 : f32
    %327 = vector.broadcast %cst_175 : f32 to vector<4x4xf32>
    %328 = arith.minimumf %324, %327 : vector<4x4xf32>
    %329 = math.exp %328 : vector<4x4xf32>
    %cst_176 = arith.constant 1.000000e+00 : f32
    %330 = vector.broadcast %cst_176 : f32 to vector<4x4xf32>
    %331 = arith.subf %329, %330 : vector<4x4xf32>
    %332 = arith.select %326, %324, %331 : vector<4x4xi1>, vector<4x4xf32>
    %c73 = arith.constant 73 : index
    %333 = memref.load %arg1[%c73] : memref<232xf32, #tpu.memory_space<smem>>
    %334 = vector.broadcast %333 : f32 to vector<4x4xf32>
    %335 = arith.mulf %334, %230 : vector<4x4xf32>
    %c81 = arith.constant 81 : index
    %336 = memref.load %arg1[%c81] : memref<232xf32, #tpu.memory_space<smem>>
    %337 = vector.broadcast %336 : f32 to vector<4x4xf32>
    %338 = arith.mulf %337, %264 : vector<4x4xf32>
    %339 = arith.addf %335, %338 : vector<4x4xf32>
    %c65 = arith.constant 65 : index
    %340 = memref.load %arg1[%c65] : memref<232xf32, #tpu.memory_space<smem>>
    %341 = vector.extract_strided_slice %264 {offsets = [0, 0], sizes = [4, 3], strides = [1, 1]} : vector<4x4xf32> to vector<4x3xf32>
    %342 = tpu.concatenate %1, %341 in 1 : vector<4x1xf32>, vector<4x3xf32> -> vector<4x4xf32>
    %343 = vector.broadcast %340 : f32 to vector<4x4xf32>
    %344 = arith.mulf %343, %342 : vector<4x4xf32>
    %345 = arith.addf %339, %344 : vector<4x4xf32>
    %c97 = arith.constant 97 : index
    %346 = memref.load %arg1[%c97] : memref<232xf32, #tpu.memory_space<smem>>
    %347 = vector.broadcast %346 : f32 to vector<4x4xf32>
    %348 = arith.mulf %347, %298 : vector<4x4xf32>
    %349 = arith.addf %345, %348 : vector<4x4xf32>
    %c49 = arith.constant 49 : index
    %350 = memref.load %arg1[%c49] : memref<232xf32, #tpu.memory_space<smem>>
    %351 = vector.extract_strided_slice %298 {offsets = [0, 0], sizes = [3, 4], strides = [1, 1]} : vector<4x4xf32> to vector<3x4xf32>
    %352 = tpu.concatenate %0, %351 in 0 : vector<1x4xf32>, vector<3x4xf32> -> vector<4x4xf32>
    %353 = vector.broadcast %350 : f32 to vector<4x4xf32>
    %354 = arith.mulf %353, %352 : vector<4x4xf32>
    %355 = arith.addf %349, %354 : vector<4x4xf32>
    %c105 = arith.constant 105 : index
    %356 = memref.load %arg1[%c105] : memref<232xf32, #tpu.memory_space<smem>>
    %357 = vector.broadcast %356 : f32 to vector<4x4xf32>
    %358 = arith.mulf %357, %332 : vector<4x4xf32>
    %359 = arith.addf %355, %358 : vector<4x4xf32>
    %c89 = arith.constant 89 : index
    %360 = memref.load %arg1[%c89] : memref<232xf32, #tpu.memory_space<smem>>
    %361 = vector.extract_strided_slice %332 {offsets = [0, 0], sizes = [4, 3], strides = [1, 1]} : vector<4x4xf32> to vector<4x3xf32>
    %362 = tpu.concatenate %1, %361 in 1 : vector<4x1xf32>, vector<4x3xf32> -> vector<4x4xf32>
    %363 = vector.broadcast %360 : f32 to vector<4x4xf32>
    %364 = arith.mulf %363, %362 : vector<4x4xf32>
    %365 = arith.addf %359, %364 : vector<4x4xf32>
    %366 = vector.extract_strided_slice %332 {offsets = [0, 0], sizes = [3, 4], strides = [1, 1]} : vector<4x4xf32> to vector<3x4xf32>
    %367 = tpu.concatenate %0, %366 in 0 : vector<1x4xf32>, vector<3x4xf32> -> vector<4x4xf32>
    %c57 = arith.constant 57 : index
    %368 = memref.load %arg1[%c57] : memref<232xf32, #tpu.memory_space<smem>>
    %369 = vector.broadcast %368 : f32 to vector<4x4xf32>
    %370 = arith.mulf %369, %367 : vector<4x4xf32>
    %371 = arith.addf %365, %370 : vector<4x4xf32>
    %c41 = arith.constant 41 : index
    %372 = memref.load %arg1[%c41] : memref<232xf32, #tpu.memory_space<smem>>
    %373 = vector.extract_strided_slice %367 {offsets = [0, 0], sizes = [4, 3], strides = [1, 1]} : vector<4x4xf32> to vector<4x3xf32>
    %374 = tpu.concatenate %1, %373 in 1 : vector<4x1xf32>, vector<4x3xf32> -> vector<4x4xf32>
    %375 = vector.broadcast %372 : f32 to vector<4x4xf32>
    %376 = arith.mulf %375, %374 : vector<4x4xf32>
    %377 = arith.addf %371, %376 : vector<4x4xf32>
    %c113 = arith.constant 113 : index
    %378 = memref.load %arg1[%c113] : memref<232xf32, #tpu.memory_space<smem>>
    %379 = vector.broadcast %378 : f32 to vector<4x4xf32>
    %380 = arith.addf %377, %379 : vector<4x4xf32>
    %cst_177 = arith.constant 0.000000e+00 : f32
    %381 = vector.broadcast %cst_177 : f32 to vector<4x4xf32>
    %382 = arith.cmpf ogt, %380, %381 : vector<4x4xf32>
    %cst_178 = arith.constant 0.000000e+00 : f32
    %383 = vector.broadcast %cst_178 : f32 to vector<4x4xf32>
    %384 = arith.minimumf %380, %383 : vector<4x4xf32>
    %385 = math.exp %384 : vector<4x4xf32>
    %cst_179 = arith.constant 1.000000e+00 : f32
    %386 = vector.broadcast %cst_179 : f32 to vector<4x4xf32>
    %387 = arith.subf %385, %386 : vector<4x4xf32>
    %388 = arith.select %382, %380, %387 : vector<4x4xi1>, vector<4x4xf32>
    %c1_180 = arith.constant 1 : index
    %c0_181 = arith.constant 0 : index
    %c0_182 = arith.constant 0 : index
    %389 = vector.load %arg4[%c1_180, %c0_181, %c0_182] : memref<8x4x4xf32, #tpu.memory_space<vmem>>, vector<1x4x4xf32>
    %390 = vector.shape_cast %389 : vector<1x4x4xf32> to vector<4x4xf32>
    %391 = vector.shape_cast %388 : vector<4x4xf32> to vector<1x4x4xf32>
    tpu.vector_store %arg4[%c1_180, %c0_181, %c0_182], %391 {strides = array<i32>} : memref<8x4x4xf32, #tpu.memory_space<vmem>>, vector<1x4x4xf32>,
    %c0_183 = arith.constant 0 : index
    %c0_184 = arith.constant 0 : index
    %c0_185 = arith.constant 0 : index
    %c0_186 = arith.constant 0 : index
    %392 = vector.load %arg2[%c0_183, %c0_184, %c0_185, %c0_186] : memref<1x28x4x4xf32, #tpu.memory_space<vmem>>, vector<1x1x4x4xf32>
    %393 = vector.shape_cast %392 : vector<1x1x4x4xf32> to vector<4x4xf32>
    %c2_187 = arith.constant 2 : index
    %394 = memref.load %arg1[%c2_187] : memref<232xf32, #tpu.memory_space<smem>>
    %395 = vector.broadcast %394 : f32 to vector<4x4xf32>
    %396 = arith.mulf %393, %395 : vector<4x4xf32>
    %c0_188 = arith.constant 0 : index
    %c1_189 = arith.constant 1 : index
    %c0_190 = arith.constant 0 : index
    %c0_191 = arith.constant 0 : index
    %397 = vector.load %arg2[%c0_188, %c1_189, %c0_190, %c0_191] : memref<1x28x4x4xf32, #tpu.memory_space<vmem>>, vector<1x1x4x4xf32>
    %398 = vector.shape_cast %397 : vector<1x1x4x4xf32> to vector<4x4xf32>
    %c10_192 = arith.constant 10 : index
    %399 = memref.load %arg1[%c10_192] : memref<232xf32, #tpu.memory_space<smem>>
    %400 = vector.broadcast %399 : f32 to vector<4x4xf32>
    %401 = arith.mulf %398, %400 : vector<4x4xf32>
    %402 = arith.addf %396, %401 : vector<4x4xf32>
    %c0_193 = arith.constant 0 : index
    %c2_194 = arith.constant 2 : index
    %c0_195 = arith.constant 0 : index
    %c0_196 = arith.constant 0 : index
    %403 = vector.load %arg2[%c0_193, %c2_194, %c0_195, %c0_196] : memref<1x28x4x4xf32, #tpu.memory_space<vmem>>, vector<1x1x4x4xf32>
    %404 = vector.shape_cast %403 : vector<1x1x4x4xf32> to vector<4x4xf32>
    %c18 = arith.constant 18 : index
    %405 = memref.load %arg1[%c18] : memref<232xf32, #tpu.memory_space<smem>>
    %406 = vector.broadcast %405 : f32 to vector<4x4xf32>
    %407 = arith.mulf %404, %406 : vector<4x4xf32>
    %408 = arith.addf %402, %407 : vector<4x4xf32>
    %c0_197 = arith.constant 0 : index
    %c3_198 = arith.constant 3 : index
    %c0_199 = arith.constant 0 : index
    %c0_200 = arith.constant 0 : index
    %409 = vector.load %arg2[%c0_197, %c3_198, %c0_199, %c0_200] : memref<1x28x4x4xf32, #tpu.memory_space<vmem>>, vector<1x1x4x4xf32>
    %410 = vector.shape_cast %409 : vector<1x1x4x4xf32> to vector<4x4xf32>
    %c26 = arith.constant 26 : index
    %411 = memref.load %arg1[%c26] : memref<232xf32, #tpu.memory_space<smem>>
    %412 = vector.broadcast %411 : f32 to vector<4x4xf32>
    %413 = arith.mulf %410, %412 : vector<4x4xf32>
    %414 = arith.addf %408, %413 : vector<4x4xf32>
    %c34 = arith.constant 34 : index
    %415 = memref.load %arg1[%c34] : memref<232xf32, #tpu.memory_space<smem>>
    %416 = vector.broadcast %415 : f32 to vector<4x4xf32>
    %417 = arith.addf %414, %416 : vector<4x4xf32>
    %cst_201 = arith.constant 0.000000e+00 : f32
    %418 = vector.broadcast %cst_201 : f32 to vector<4x4xf32>
    %419 = arith.cmpf ogt, %417, %418 : vector<4x4xf32>
    %cst_202 = arith.constant 0.000000e+00 : f32
    %420 = vector.broadcast %cst_202 : f32 to vector<4x4xf32>
    %421 = arith.minimumf %417, %420 : vector<4x4xf32>
    %422 = math.exp %421 : vector<4x4xf32>
    %cst_203 = arith.constant 1.000000e+00 : f32
    %423 = vector.broadcast %cst_203 : f32 to vector<4x4xf32>
    %424 = arith.subf %422, %423 : vector<4x4xf32>
    %425 = arith.select %419, %417, %424 : vector<4x4xi1>, vector<4x4xf32>
    %c0_204 = arith.constant 0 : index
    %c4_205 = arith.constant 4 : index
    %c0_206 = arith.constant 0 : index
    %c0_207 = arith.constant 0 : index
    %426 = vector.load %arg2[%c0_204, %c4_205, %c0_206, %c0_207] : memref<1x28x4x4xf32, #tpu.memory_space<vmem>>, vector<1x1x4x4xf32>
    %427 = vector.shape_cast %426 : vector<1x1x4x4xf32> to vector<4x4xf32>
    %c2_208 = arith.constant 2 : index
    %428 = memref.load %arg1[%c2_208] : memref<232xf32, #tpu.memory_space<smem>>
    %429 = vector.broadcast %428 : f32 to vector<4x4xf32>
    %430 = arith.mulf %427, %429 : vector<4x4xf32>
    %c0_209 = arith.constant 0 : index
    %c5_210 = arith.constant 5 : index
    %c0_211 = arith.constant 0 : index
    %c0_212 = arith.constant 0 : index
    %431 = vector.load %arg2[%c0_209, %c5_210, %c0_211, %c0_212] : memref<1x28x4x4xf32, #tpu.memory_space<vmem>>, vector<1x1x4x4xf32>
    %432 = vector.shape_cast %431 : vector<1x1x4x4xf32> to vector<4x4xf32>
    %c10_213 = arith.constant 10 : index
    %433 = memref.load %arg1[%c10_213] : memref<232xf32, #tpu.memory_space<smem>>
    %434 = vector.broadcast %433 : f32 to vector<4x4xf32>
    %435 = arith.mulf %432, %434 : vector<4x4xf32>
    %436 = arith.addf %430, %435 : vector<4x4xf32>
    %c0_214 = arith.constant 0 : index
    %c6_215 = arith.constant 6 : index
    %c0_216 = arith.constant 0 : index
    %c0_217 = arith.constant 0 : index
    %437 = vector.load %arg2[%c0_214, %c6_215, %c0_216, %c0_217] : memref<1x28x4x4xf32, #tpu.memory_space<vmem>>, vector<1x1x4x4xf32>
    %438 = vector.shape_cast %437 : vector<1x1x4x4xf32> to vector<4x4xf32>
    %c18_218 = arith.constant 18 : index
    %439 = memref.load %arg1[%c18_218] : memref<232xf32, #tpu.memory_space<smem>>
    %440 = vector.broadcast %439 : f32 to vector<4x4xf32>
    %441 = arith.mulf %438, %440 : vector<4x4xf32>
    %442 = arith.addf %436, %441 : vector<4x4xf32>
    %c0_219 = arith.constant 0 : index
    %c7_220 = arith.constant 7 : index
    %c0_221 = arith.constant 0 : index
    %c0_222 = arith.constant 0 : index
    %443 = vector.load %arg2[%c0_219, %c7_220, %c0_221, %c0_222] : memref<1x28x4x4xf32, #tpu.memory_space<vmem>>, vector<1x1x4x4xf32>
    %444 = vector.shape_cast %443 : vector<1x1x4x4xf32> to vector<4x4xf32>
    %c26_223 = arith.constant 26 : index
    %445 = memref.load %arg1[%c26_223] : memref<232xf32, #tpu.memory_space<smem>>
    %446 = vector.broadcast %445 : f32 to vector<4x4xf32>
    %447 = arith.mulf %444, %446 : vector<4x4xf32>
    %448 = arith.addf %442, %447 : vector<4x4xf32>
    %c34_224 = arith.constant 34 : index
    %449 = memref.load %arg1[%c34_224] : memref<232xf32, #tpu.memory_space<smem>>
    %450 = vector.broadcast %449 : f32 to vector<4x4xf32>
    %451 = arith.addf %448, %450 : vector<4x4xf32>
    %cst_225 = arith.constant 0.000000e+00 : f32
    %452 = vector.broadcast %cst_225 : f32 to vector<4x4xf32>
    %453 = arith.cmpf ogt, %451, %452 : vector<4x4xf32>
    %cst_226 = arith.constant 0.000000e+00 : f32
    %454 = vector.broadcast %cst_226 : f32 to vector<4x4xf32>
    %455 = arith.minimumf %451, %454 : vector<4x4xf32>
    %456 = math.exp %455 : vector<4x4xf32>
    %cst_227 = arith.constant 1.000000e+00 : f32
    %457 = vector.broadcast %cst_227 : f32 to vector<4x4xf32>
    %458 = arith.subf %456, %457 : vector<4x4xf32>
    %459 = arith.select %453, %451, %458 : vector<4x4xi1>, vector<4x4xf32>
    %c0_228 = arith.constant 0 : index
    %c8_229 = arith.constant 8 : index
    %c0_230 = arith.constant 0 : index
    %c0_231 = arith.constant 0 : index
    %460 = vector.load %arg2[%c0_228, %c8_229, %c0_230, %c0_231] : memref<1x28x4x4xf32, #tpu.memory_space<vmem>>, vector<1x1x4x4xf32>
    %461 = vector.shape_cast %460 : vector<1x1x4x4xf32> to vector<4x4xf32>
    %c2_232 = arith.constant 2 : index
    %462 = memref.load %arg1[%c2_232] : memref<232xf32, #tpu.memory_space<smem>>
    %463 = vector.broadcast %462 : f32 to vector<4x4xf32>
    %464 = arith.mulf %461, %463 : vector<4x4xf32>
    %c0_233 = arith.constant 0 : index
    %c9_234 = arith.constant 9 : index
    %c0_235 = arith.constant 0 : index
    %c0_236 = arith.constant 0 : index
    %465 = vector.load %arg2[%c0_233, %c9_234, %c0_235, %c0_236] : memref<1x28x4x4xf32, #tpu.memory_space<vmem>>, vector<1x1x4x4xf32>
    %466 = vector.shape_cast %465 : vector<1x1x4x4xf32> to vector<4x4xf32>
    %c10_237 = arith.constant 10 : index
    %467 = memref.load %arg1[%c10_237] : memref<232xf32, #tpu.memory_space<smem>>
    %468 = vector.broadcast %467 : f32 to vector<4x4xf32>
    %469 = arith.mulf %466, %468 : vector<4x4xf32>
    %470 = arith.addf %464, %469 : vector<4x4xf32>
    %c0_238 = arith.constant 0 : index
    %c10_239 = arith.constant 10 : index
    %c0_240 = arith.constant 0 : index
    %c0_241 = arith.constant 0 : index
    %471 = vector.load %arg2[%c0_238, %c10_239, %c0_240, %c0_241] : memref<1x28x4x4xf32, #tpu.memory_space<vmem>>, vector<1x1x4x4xf32>
    %472 = vector.shape_cast %471 : vector<1x1x4x4xf32> to vector<4x4xf32>
    %c18_242 = arith.constant 18 : index
    %473 = memref.load %arg1[%c18_242] : memref<232xf32, #tpu.memory_space<smem>>
    %474 = vector.broadcast %473 : f32 to vector<4x4xf32>
    %475 = arith.mulf %472, %474 : vector<4x4xf32>
    %476 = arith.addf %470, %475 : vector<4x4xf32>
    %c0_243 = arith.constant 0 : index
    %c11_244 = arith.constant 11 : index
    %c0_245 = arith.constant 0 : index
    %c0_246 = arith.constant 0 : index
    %477 = vector.load %arg2[%c0_243, %c11_244, %c0_245, %c0_246] : memref<1x28x4x4xf32, #tpu.memory_space<vmem>>, vector<1x1x4x4xf32>
    %478 = vector.shape_cast %477 : vector<1x1x4x4xf32> to vector<4x4xf32>
    %c26_247 = arith.constant 26 : index
    %479 = memref.load %arg1[%c26_247] : memref<232xf32, #tpu.memory_space<smem>>
    %480 = vector.broadcast %479 : f32 to vector<4x4xf32>
    %481 = arith.mulf %478, %480 : vector<4x4xf32>
    %482 = arith.addf %476, %481 : vector<4x4xf32>
    %c34_248 = arith.constant 34 : index
    %483 = memref.load %arg1[%c34_248] : memref<232xf32, #tpu.memory_space<smem>>
    %484 = vector.broadcast %483 : f32 to vector<4x4xf32>
    %485 = arith.addf %482, %484 : vector<4x4xf32>
    %cst_249 = arith.constant 0.000000e+00 : f32
    %486 = vector.broadcast %cst_249 : f32 to vector<4x4xf32>
    %487 = arith.cmpf ogt, %485, %486 : vector<4x4xf32>
    %cst_250 = arith.constant 0.000000e+00 : f32
    %488 = vector.broadcast %cst_250 : f32 to vector<4x4xf32>
    %489 = arith.minimumf %485, %488 : vector<4x4xf32>
    %490 = math.exp %489 : vector<4x4xf32>
    %cst_251 = arith.constant 1.000000e+00 : f32
    %491 = vector.broadcast %cst_251 : f32 to vector<4x4xf32>
    %492 = arith.subf %490, %491 : vector<4x4xf32>
    %493 = arith.select %487, %485, %492 : vector<4x4xi1>, vector<4x4xf32>
    %c0_252 = arith.constant 0 : index
    %c12_253 = arith.constant 12 : index
    %c0_254 = arith.constant 0 : index
    %c0_255 = arith.constant 0 : index
    %494 = vector.load %arg2[%c0_252, %c12_253, %c0_254, %c0_255] : memref<1x28x4x4xf32, #tpu.memory_space<vmem>>, vector<1x1x4x4xf32>
    %495 = vector.shape_cast %494 : vector<1x1x4x4xf32> to vector<4x4xf32>
    %c2_256 = arith.constant 2 : index
    %496 = memref.load %arg1[%c2_256] : memref<232xf32, #tpu.memory_space<smem>>
    %497 = vector.broadcast %496 : f32 to vector<4x4xf32>
    %498 = arith.mulf %495, %497 : vector<4x4xf32>
    %c0_257 = arith.constant 0 : index
    %c13_258 = arith.constant 13 : index
    %c0_259 = arith.constant 0 : index
    %c0_260 = arith.constant 0 : index
    %499 = vector.load %arg2[%c0_257, %c13_258, %c0_259, %c0_260] : memref<1x28x4x4xf32, #tpu.memory_space<vmem>>, vector<1x1x4x4xf32>
    %500 = vector.shape_cast %499 : vector<1x1x4x4xf32> to vector<4x4xf32>
    %c10_261 = arith.constant 10 : index
    %501 = memref.load %arg1[%c10_261] : memref<232xf32, #tpu.memory_space<smem>>
    %502 = vector.broadcast %501 : f32 to vector<4x4xf32>
    %503 = arith.mulf %500, %502 : vector<4x4xf32>
    %504 = arith.addf %498, %503 : vector<4x4xf32>
    %c0_262 = arith.constant 0 : index
    %c14_263 = arith.constant 14 : index
    %c0_264 = arith.constant 0 : index
    %c0_265 = arith.constant 0 : index
    %505 = vector.load %arg2[%c0_262, %c14_263, %c0_264, %c0_265] : memref<1x28x4x4xf32, #tpu.memory_space<vmem>>, vector<1x1x4x4xf32>
    %506 = vector.shape_cast %505 : vector<1x1x4x4xf32> to vector<4x4xf32>
    %c18_266 = arith.constant 18 : index
    %507 = memref.load %arg1[%c18_266] : memref<232xf32, #tpu.memory_space<smem>>
    %508 = vector.broadcast %507 : f32 to vector<4x4xf32>
    %509 = arith.mulf %506, %508 : vector<4x4xf32>
    %510 = arith.addf %504, %509 : vector<4x4xf32>
    %c0_267 = arith.constant 0 : index
    %c15_268 = arith.constant 15 : index
    %c0_269 = arith.constant 0 : index
    %c0_270 = arith.constant 0 : index
    %511 = vector.load %arg2[%c0_267, %c15_268, %c0_269, %c0_270] : memref<1x28x4x4xf32, #tpu.memory_space<vmem>>, vector<1x1x4x4xf32>
    %512 = vector.shape_cast %511 : vector<1x1x4x4xf32> to vector<4x4xf32>
    %c26_271 = arith.constant 26 : index
    %513 = memref.load %arg1[%c26_271] : memref<232xf32, #tpu.memory_space<smem>>
    %514 = vector.broadcast %513 : f32 to vector<4x4xf32>
    %515 = arith.mulf %512, %514 : vector<4x4xf32>
    %516 = arith.addf %510, %515 : vector<4x4xf32>
    %c34_272 = arith.constant 34 : index
    %517 = memref.load %arg1[%c34_272] : memref<232xf32, #tpu.memory_space<smem>>
    %518 = vector.broadcast %517 : f32 to vector<4x4xf32>
    %519 = arith.addf %516, %518 : vector<4x4xf32>
    %cst_273 = arith.constant 0.000000e+00 : f32
    %520 = vector.broadcast %cst_273 : f32 to vector<4x4xf32>
    %521 = arith.cmpf ogt, %519, %520 : vector<4x4xf32>
    %cst_274 = arith.constant 0.000000e+00 : f32
    %522 = vector.broadcast %cst_274 : f32 to vector<4x4xf32>
    %523 = arith.minimumf %519, %522 : vector<4x4xf32>
    %524 = math.exp %523 : vector<4x4xf32>
    %cst_275 = arith.constant 1.000000e+00 : f32
    %525 = vector.broadcast %cst_275 : f32 to vector<4x4xf32>
    %526 = arith.subf %524, %525 : vector<4x4xf32>
    %527 = arith.select %521, %519, %526 : vector<4x4xi1>, vector<4x4xf32>
    %c74 = arith.constant 74 : index
    %528 = memref.load %arg1[%c74] : memref<232xf32, #tpu.memory_space<smem>>
    %529 = vector.broadcast %528 : f32 to vector<4x4xf32>
    %530 = arith.mulf %529, %425 : vector<4x4xf32>
    %c82 = arith.constant 82 : index
    %531 = memref.load %arg1[%c82] : memref<232xf32, #tpu.memory_space<smem>>
    %532 = vector.broadcast %531 : f32 to vector<4x4xf32>
    %533 = arith.mulf %532, %459 : vector<4x4xf32>
    %534 = arith.addf %530, %533 : vector<4x4xf32>
    %c66 = arith.constant 66 : index
    %535 = memref.load %arg1[%c66] : memref<232xf32, #tpu.memory_space<smem>>
    %536 = vector.extract_strided_slice %459 {offsets = [0, 0], sizes = [4, 3], strides = [1, 1]} : vector<4x4xf32> to vector<4x3xf32>
    %537 = tpu.concatenate %1, %536 in 1 : vector<4x1xf32>, vector<4x3xf32> -> vector<4x4xf32>
    %538 = vector.broadcast %535 : f32 to vector<4x4xf32>
    %539 = arith.mulf %538, %537 : vector<4x4xf32>
    %540 = arith.addf %534, %539 : vector<4x4xf32>
    %c98 = arith.constant 98 : index
    %541 = memref.load %arg1[%c98] : memref<232xf32, #tpu.memory_space<smem>>
    %542 = vector.broadcast %541 : f32 to vector<4x4xf32>
    %543 = arith.mulf %542, %493 : vector<4x4xf32>
    %544 = arith.addf %540, %543 : vector<4x4xf32>
    %c50 = arith.constant 50 : index
    %545 = memref.load %arg1[%c50] : memref<232xf32, #tpu.memory_space<smem>>
    %546 = vector.extract_strided_slice %493 {offsets = [0, 0], sizes = [3, 4], strides = [1, 1]} : vector<4x4xf32> to vector<3x4xf32>
    %547 = tpu.concatenate %0, %546 in 0 : vector<1x4xf32>, vector<3x4xf32> -> vector<4x4xf32>
    %548 = vector.broadcast %545 : f32 to vector<4x4xf32>
    %549 = arith.mulf %548, %547 : vector<4x4xf32>
    %550 = arith.addf %544, %549 : vector<4x4xf32>
    %c106 = arith.constant 106 : index
    %551 = memref.load %arg1[%c106] : memref<232xf32, #tpu.memory_space<smem>>
    %552 = vector.broadcast %551 : f32 to vector<4x4xf32>
    %553 = arith.mulf %552, %527 : vector<4x4xf32>
    %554 = arith.addf %550, %553 : vector<4x4xf32>
    %c90 = arith.constant 90 : index
    %555 = memref.load %arg1[%c90] : memref<232xf32, #tpu.memory_space<smem>>
    %556 = vector.extract_strided_slice %527 {offsets = [0, 0], sizes = [4, 3], strides = [1, 1]} : vector<4x4xf32> to vector<4x3xf32>
    %557 = tpu.concatenate %1, %556 in 1 : vector<4x1xf32>, vector<4x3xf32> -> vector<4x4xf32>
    %558 = vector.broadcast %555 : f32 to vector<4x4xf32>
    %559 = arith.mulf %558, %557 : vector<4x4xf32>
    %560 = arith.addf %554, %559 : vector<4x4xf32>
    %561 = vector.extract_strided_slice %527 {offsets = [0, 0], sizes = [3, 4], strides = [1, 1]} : vector<4x4xf32> to vector<3x4xf32>
    %562 = tpu.concatenate %0, %561 in 0 : vector<1x4xf32>, vector<3x4xf32> -> vector<4x4xf32>
    %c58 = arith.constant 58 : index
    %563 = memref.load %arg1[%c58] : memref<232xf32, #tpu.memory_space<smem>>
    %564 = vector.broadcast %563 : f32 to vector<4x4xf32>
    %565 = arith.mulf %564, %562 : vector<4x4xf32>
    %566 = arith.addf %560, %565 : vector<4x4xf32>
    %c42 = arith.constant 42 : index
    %567 = memref.load %arg1[%c42] : memref<232xf32, #tpu.memory_space<smem>>
    %568 = vector.extract_strided_slice %562 {offsets = [0, 0], sizes = [4, 3], strides = [1, 1]} : vector<4x4xf32> to vector<4x3xf32>
    %569 = tpu.concatenate %1, %568 in 1 : vector<4x1xf32>, vector<4x3xf32> -> vector<4x4xf32>
    %570 = vector.broadcast %567 : f32 to vector<4x4xf32>
    %571 = arith.mulf %570, %569 : vector<4x4xf32>
    %572 = arith.addf %566, %571 : vector<4x4xf32>
    %c114 = arith.constant 114 : index
    %573 = memref.load %arg1[%c114] : memref<232xf32, #tpu.memory_space<smem>>
    %574 = vector.broadcast %573 : f32 to vector<4x4xf32>
    %575 = arith.addf %572, %574 : vector<4x4xf32>
    %cst_276 = arith.constant 0.000000e+00 : f32
    %576 = vector.broadcast %cst_276 : f32 to vector<4x4xf32>
    %577 = arith.cmpf ogt, %575, %576 : vector<4x4xf32>
    %cst_277 = arith.constant 0.000000e+00 : f32
    %578 = vector.broadcast %cst_277 : f32 to vector<4x4xf32>
    %579 = arith.minimumf %575, %578 : vector<4x4xf32>
    %580 = math.exp %579 : vector<4x4xf32>
    %cst_278 = arith.constant 1.000000e+00 : f32
    %581 = vector.broadcast %cst_278 : f32 to vector<4x4xf32>
    %582 = arith.subf %580, %581 : vector<4x4xf32>
    %583 = arith.select %577, %575, %582 : vector<4x4xi1>, vector<4x4xf32>
    %c2_279 = arith.constant 2 : index
    %c0_280 = arith.constant 0 : index
    %c0_281 = arith.constant 0 : index
    %584 = vector.load %arg4[%c2_279, %c0_280, %c0_281] : memref<8x4x4xf32, #tpu.memory_space<vmem>>, vector<1x4x4xf32>
    %585 = vector.shape_cast %584 : vector<1x4x4xf32> to vector<4x4xf32>
    %586 = vector.shape_cast %583 : vector<4x4xf32> to vector<1x4x4xf32>
    tpu.vector_store %arg4[%c2_279, %c0_280, %c0_281], %586 {strides = array<i32>} : memref<8x4x4xf32, #tpu.memory_space<vmem>>, vector<1x4x4xf32>,
    %c0_282 = arith.constant 0 : index
    %c0_283 = arith.constant 0 : index
    %c0_284 = arith.constant 0 : index
    %c0_285 = arith.constant 0 : index
    %587 = vector.load %arg2[%c0_282, %c0_283, %c0_284, %c0_285] : memref<1x28x4x4xf32, #tpu.memory_space<vmem>>, vector<1x1x4x4xf32>
    %588 = vector.shape_cast %587 : vector<1x1x4x4xf32> to vector<4x4xf32>
    %c3_286 = arith.constant 3 : index
    %589 = memref.load %arg1[%c3_286] : memref<232xf32, #tpu.memory_space<smem>>
    %590 = vector.broadcast %589 : f32 to vector<4x4xf32>
    %591 = arith.mulf %588, %590 : vector<4x4xf32>
    %c0_287 = arith.constant 0 : index
    %c1_288 = arith.constant 1 : index
    %c0_289 = arith.constant 0 : index
    %c0_290 = arith.constant 0 : index
    %592 = vector.load %arg2[%c0_287, %c1_288, %c0_289, %c0_290] : memref<1x28x4x4xf32, #tpu.memory_space<vmem>>, vector<1x1x4x4xf32>
    %593 = vector.shape_cast %592 : vector<1x1x4x4xf32> to vector<4x4xf32>
    %c11_291 = arith.constant 11 : index
    %594 = memref.load %arg1[%c11_291] : memref<232xf32, #tpu.memory_space<smem>>
    %595 = vector.broadcast %594 : f32 to vector<4x4xf32>
    %596 = arith.mulf %593, %595 : vector<4x4xf32>
    %597 = arith.addf %591, %596 : vector<4x4xf32>
    %c0_292 = arith.constant 0 : index
    %c2_293 = arith.constant 2 : index
    %c0_294 = arith.constant 0 : index
    %c0_295 = arith.constant 0 : index
    %598 = vector.load %arg2[%c0_292, %c2_293, %c0_294, %c0_295] : memref<1x28x4x4xf32, #tpu.memory_space<vmem>>, vector<1x1x4x4xf32>
    %599 = vector.shape_cast %598 : vector<1x1x4x4xf32> to vector<4x4xf32>
    %c19 = arith.constant 19 : index
    %600 = memref.load %arg1[%c19] : memref<232xf32, #tpu.memory_space<smem>>
    %601 = vector.broadcast %600 : f32 to vector<4x4xf32>
    %602 = arith.mulf %599, %601 : vector<4x4xf32>
    %603 = arith.addf %597, %602 : vector<4x4xf32>
    %c0_296 = arith.constant 0 : index
    %c3_297 = arith.constant 3 : index
    %c0_298 = arith.constant 0 : index
    %c0_299 = arith.constant 0 : index
    %604 = vector.load %arg2[%c0_296, %c3_297, %c0_298, %c0_299] : memref<1x28x4x4xf32, #tpu.memory_space<vmem>>, vector<1x1x4x4xf32>
    %605 = vector.shape_cast %604 : vector<1x1x4x4xf32> to vector<4x4xf32>
    %c27 = arith.constant 27 : index
    %606 = memref.load %arg1[%c27] : memref<232xf32, #tpu.memory_space<smem>>
    %607 = vector.broadcast %606 : f32 to vector<4x4xf32>
    %608 = arith.mulf %605, %607 : vector<4x4xf32>
    %609 = arith.addf %603, %608 : vector<4x4xf32>
    %c35 = arith.constant 35 : index
    %610 = memref.load %arg1[%c35] : memref<232xf32, #tpu.memory_space<smem>>
    %611 = vector.broadcast %610 : f32 to vector<4x4xf32>
    %612 = arith.addf %609, %611 : vector<4x4xf32>
    %cst_300 = arith.constant 0.000000e+00 : f32
    %613 = vector.broadcast %cst_300 : f32 to vector<4x4xf32>
    %614 = arith.cmpf ogt, %612, %613 : vector<4x4xf32>
    %cst_301 = arith.constant 0.000000e+00 : f32
    %615 = vector.broadcast %cst_301 : f32 to vector<4x4xf32>
    %616 = arith.minimumf %612, %615 : vector<4x4xf32>
    %617 = math.exp %616 : vector<4x4xf32>
    %cst_302 = arith.constant 1.000000e+00 : f32
    %618 = vector.broadcast %cst_302 : f32 to vector<4x4xf32>
    %619 = arith.subf %617, %618 : vector<4x4xf32>
    %620 = arith.select %614, %612, %619 : vector<4x4xi1>, vector<4x4xf32>
    %c0_303 = arith.constant 0 : index
    %c4_304 = arith.constant 4 : index
    %c0_305 = arith.constant 0 : index
    %c0_306 = arith.constant 0 : index
    %621 = vector.load %arg2[%c0_303, %c4_304, %c0_305, %c0_306] : memref<1x28x4x4xf32, #tpu.memory_space<vmem>>, vector<1x1x4x4xf32>
    %622 = vector.shape_cast %621 : vector<1x1x4x4xf32> to vector<4x4xf32>
    %c3_307 = arith.constant 3 : index
    %623 = memref.load %arg1[%c3_307] : memref<232xf32, #tpu.memory_space<smem>>
    %624 = vector.broadcast %623 : f32 to vector<4x4xf32>
    %625 = arith.mulf %622, %624 : vector<4x4xf32>
    %c0_308 = arith.constant 0 : index
    %c5_309 = arith.constant 5 : index
    %c0_310 = arith.constant 0 : index
    %c0_311 = arith.constant 0 : index
    %626 = vector.load %arg2[%c0_308, %c5_309, %c0_310, %c0_311] : memref<1x28x4x4xf32, #tpu.memory_space<vmem>>, vector<1x1x4x4xf32>
    %627 = vector.shape_cast %626 : vector<1x1x4x4xf32> to vector<4x4xf32>
    %c11_312 = arith.constant 11 : index
    %628 = memref.load %arg1[%c11_312] : memref<232xf32, #tpu.memory_space<smem>>
    %629 = vector.broadcast %628 : f32 to vector<4x4xf32>
    %630 = arith.mulf %627, %629 : vector<4x4xf32>
    %631 = arith.addf %625, %630 : vector<4x4xf32>
    %c0_313 = arith.constant 0 : index
    %c6_314 = arith.constant 6 : index
    %c0_315 = arith.constant 0 : index
    %c0_316 = arith.constant 0 : index
    %632 = vector.load %arg2[%c0_313, %c6_314, %c0_315, %c0_316] : memref<1x28x4x4xf32, #tpu.memory_space<vmem>>, vector<1x1x4x4xf32>
    %633 = vector.shape_cast %632 : vector<1x1x4x4xf32> to vector<4x4xf32>
    %c19_317 = arith.constant 19 : index
    %634 = memref.load %arg1[%c19_317] : memref<232xf32, #tpu.memory_space<smem>>
    %635 = vector.broadcast %634 : f32 to vector<4x4xf32>
    %636 = arith.mulf %633, %635 : vector<4x4xf32>
    %637 = arith.addf %631, %636 : vector<4x4xf32>
    %c0_318 = arith.constant 0 : index
    %c7_319 = arith.constant 7 : index
    %c0_320 = arith.constant 0 : index
    %c0_321 = arith.constant 0 : index
    %638 = vector.load %arg2[%c0_318, %c7_319, %c0_320, %c0_321] : memref<1x28x4x4xf32, #tpu.memory_space<vmem>>, vector<1x1x4x4xf32>
    %639 = vector.shape_cast %638 : vector<1x1x4x4xf32> to vector<4x4xf32>
    %c27_322 = arith.constant 27 : index
    %640 = memref.load %arg1[%c27_322] : memref<232xf32, #tpu.memory_space<smem>>
    %641 = vector.broadcast %640 : f32 to vector<4x4xf32>
    %642 = arith.mulf %639, %641 : vector<4x4xf32>
    %643 = arith.addf %637, %642 : vector<4x4xf32>
    %c35_323 = arith.constant 35 : index
    %644 = memref.load %arg1[%c35_323] : memref<232xf32, #tpu.memory_space<smem>>
    %645 = vector.broadcast %644 : f32 to vector<4x4xf32>
    %646 = arith.addf %643, %645 : vector<4x4xf32>
    %cst_324 = arith.constant 0.000000e+00 : f32
    %647 = vector.broadcast %cst_324 : f32 to vector<4x4xf32>
    %648 = arith.cmpf ogt, %646, %647 : vector<4x4xf32>
    %cst_325 = arith.constant 0.000000e+00 : f32
    %649 = vector.broadcast %cst_325 : f32 to vector<4x4xf32>
    %650 = arith.minimumf %646, %649 : vector<4x4xf32>
    %651 = math.exp %650 : vector<4x4xf32>
    %cst_326 = arith.constant 1.000000e+00 : f32
    %652 = vector.broadcast %cst_326 : f32 to vector<4x4xf32>
    %653 = arith.subf %651, %652 : vector<4x4xf32>
    %654 = arith.select %648, %646, %653 : vector<4x4xi1>, vector<4x4xf32>
    %c0_327 = arith.constant 0 : index
    %c8_328 = arith.constant 8 : index
    %c0_329 = arith.constant 0 : index
    %c0_330 = arith.constant 0 : index
    %655 = vector.load %arg2[%c0_327, %c8_328, %c0_329, %c0_330] : memref<1x28x4x4xf32, #tpu.memory_space<vmem>>, vector<1x1x4x4xf32>
    %656 = vector.shape_cast %655 : vector<1x1x4x4xf32> to vector<4x4xf32>
    %c3_331 = arith.constant 3 : index
    %657 = memref.load %arg1[%c3_331] : memref<232xf32, #tpu.memory_space<smem>>
    %658 = vector.broadcast %657 : f32 to vector<4x4xf32>
    %659 = arith.mulf %656, %658 : vector<4x4xf32>
    %c0_332 = arith.constant 0 : index
    %c9_333 = arith.constant 9 : index
    %c0_334 = arith.constant 0 : index
    %c0_335 = arith.constant 0 : index
    %660 = vector.load %arg2[%c0_332, %c9_333, %c0_334, %c0_335] : memref<1x28x4x4xf32, #tpu.memory_space<vmem>>, vector<1x1x4x4xf32>
    %661 = vector.shape_cast %660 : vector<1x1x4x4xf32> to vector<4x4xf32>
    %c11_336 = arith.constant 11 : index
    %662 = memref.load %arg1[%c11_336] : memref<232xf32, #tpu.memory_space<smem>>
    %663 = vector.broadcast %662 : f32 to vector<4x4xf32>
    %664 = arith.mulf %661, %663 : vector<4x4xf32>
    %665 = arith.addf %659, %664 : vector<4x4xf32>
    %c0_337 = arith.constant 0 : index
    %c10_338 = arith.constant 10 : index
    %c0_339 = arith.constant 0 : index
    %c0_340 = arith.constant 0 : index
    %666 = vector.load %arg2[%c0_337, %c10_338, %c0_339, %c0_340] : memref<1x28x4x4xf32, #tpu.memory_space<vmem>>, vector<1x1x4x4xf32>
    %667 = vector.shape_cast %666 : vector<1x1x4x4xf32> to vector<4x4xf32>
    %c19_341 = arith.constant 19 : index
    %668 = memref.load %arg1[%c19_341] : memref<232xf32, #tpu.memory_space<smem>>
    %669 = vector.broadcast %668 : f32 to vector<4x4xf32>
    %670 = arith.mulf %667, %669 : vector<4x4xf32>
    %671 = arith.addf %665, %670 : vector<4x4xf32>
    %c0_342 = arith.constant 0 : index
    %c11_343 = arith.constant 11 : index
    %c0_344 = arith.constant 0 : index
    %c0_345 = arith.constant 0 : index
    %672 = vector.load %arg2[%c0_342, %c11_343, %c0_344, %c0_345] : memref<1x28x4x4xf32, #tpu.memory_space<vmem>>, vector<1x1x4x4xf32>
    %673 = vector.shape_cast %672 : vector<1x1x4x4xf32> to vector<4x4xf32>
    %c27_346 = arith.constant 27 : index
    %674 = memref.load %arg1[%c27_346] : memref<232xf32, #tpu.memory_space<smem>>
    %675 = vector.broadcast %674 : f32 to vector<4x4xf32>
    %676 = arith.mulf %673, %675 : vector<4x4xf32>
    %677 = arith.addf %671, %676 : vector<4x4xf32>
    %c35_347 = arith.constant 35 : index
    %678 = memref.load %arg1[%c35_347] : memref<232xf32, #tpu.memory_space<smem>>
    %679 = vector.broadcast %678 : f32 to vector<4x4xf32>
    %680 = arith.addf %677, %679 : vector<4x4xf32>
    %cst_348 = arith.constant 0.000000e+00 : f32
    %681 = vector.broadcast %cst_348 : f32 to vector<4x4xf32>
    %682 = arith.cmpf ogt, %680, %681 : vector<4x4xf32>
    %cst_349 = arith.constant 0.000000e+00 : f32
    %683 = vector.broadcast %cst_349 : f32 to vector<4x4xf32>
    %684 = arith.minimumf %680, %683 : vector<4x4xf32>
    %685 = math.exp %684 : vector<4x4xf32>
    %cst_350 = arith.constant 1.000000e+00 : f32
    %686 = vector.broadcast %cst_350 : f32 to vector<4x4xf32>
    %687 = arith.subf %685, %686 : vector<4x4xf32>
    %688 = arith.select %682, %680, %687 : vector<4x4xi1>, vector<4x4xf32>
    %c0_351 = arith.constant 0 : index
    %c12_352 = arith.constant 12 : index
    %c0_353 = arith.constant 0 : index
    %c0_354 = arith.constant 0 : index
    %689 = vector.load %arg2[%c0_351, %c12_352, %c0_353, %c0_354] : memref<1x28x4x4xf32, #tpu.memory_space<vmem>>, vector<1x1x4x4xf32>
    %690 = vector.shape_cast %689 : vector<1x1x4x4xf32> to vector<4x4xf32>
    %c3_355 = arith.constant 3 : index
    %691 = memref.load %arg1[%c3_355] : memref<232xf32, #tpu.memory_space<smem>>
    %692 = vector.broadcast %691 : f32 to vector<4x4xf32>
    %693 = arith.mulf %690, %692 : vector<4x4xf32>
    %c0_356 = arith.constant 0 : index
    %c13_357 = arith.constant 13 : index
    %c0_358 = arith.constant 0 : index
    %c0_359 = arith.constant 0 : index
    %694 = vector.load %arg2[%c0_356, %c13_357, %c0_358, %c0_359] : memref<1x28x4x4xf32, #tpu.memory_space<vmem>>, vector<1x1x4x4xf32>
    %695 = vector.shape_cast %694 : vector<1x1x4x4xf32> to vector<4x4xf32>
    %c11_360 = arith.constant 11 : index
    %696 = memref.load %arg1[%c11_360] : memref<232xf32, #tpu.memory_space<smem>>
    %697 = vector.broadcast %696 : f32 to vector<4x4xf32>
    %698 = arith.mulf %695, %697 : vector<4x4xf32>
    %699 = arith.addf %693, %698 : vector<4x4xf32>
    %c0_361 = arith.constant 0 : index
    %c14_362 = arith.constant 14 : index
    %c0_363 = arith.constant 0 : index
    %c0_364 = arith.constant 0 : index
    %700 = vector.load %arg2[%c0_361, %c14_362, %c0_363, %c0_364] : memref<1x28x4x4xf32, #tpu.memory_space<vmem>>, vector<1x1x4x4xf32>
    %701 = vector.shape_cast %700 : vector<1x1x4x4xf32> to vector<4x4xf32>
    %c19_365 = arith.constant 19 : index
    %702 = memref.load %arg1[%c19_365] : memref<232xf32, #tpu.memory_space<smem>>
    %703 = vector.broadcast %702 : f32 to vector<4x4xf32>
    %704 = arith.mulf %701, %703 : vector<4x4xf32>
    %705 = arith.addf %699, %704 : vector<4x4xf32>
    %c0_366 = arith.constant 0 : index
    %c15_367 = arith.constant 15 : index
    %c0_368 = arith.constant 0 : index
    %c0_369 = arith.constant 0 : index
    %706 = vector.load %arg2[%c0_366, %c15_367, %c0_368, %c0_369] : memref<1x28x4x4xf32, #tpu.memory_space<vmem>>, vector<1x1x4x4xf32>
    %707 = vector.shape_cast %706 : vector<1x1x4x4xf32> to vector<4x4xf32>
    %c27_370 = arith.constant 27 : index
    %708 = memref.load %arg1[%c27_370] : memref<232xf32, #tpu.memory_space<smem>>
    %709 = vector.broadcast %708 : f32 to vector<4x4xf32>
    %710 = arith.mulf %707, %709 : vector<4x4xf32>
    %711 = arith.addf %705, %710 : vector<4x4xf32>
    %c35_371 = arith.constant 35 : index
    %712 = memref.load %arg1[%c35_371] : memref<232xf32, #tpu.memory_space<smem>>
    %713 = vector.broadcast %712 : f32 to vector<4x4xf32>
    %714 = arith.addf %711, %713 : vector<4x4xf32>
    %cst_372 = arith.constant 0.000000e+00 : f32
    %715 = vector.broadcast %cst_372 : f32 to vector<4x4xf32>
    %716 = arith.cmpf ogt, %714, %715 : vector<4x4xf32>
    %cst_373 = arith.constant 0.000000e+00 : f32
    %717 = vector.broadcast %cst_373 : f32 to vector<4x4xf32>
    %718 = arith.minimumf %714, %717 : vector<4x4xf32>
    %719 = math.exp %718 : vector<4x4xf32>
    %cst_374 = arith.constant 1.000000e+00 : f32
    %720 = vector.broadcast %cst_374 : f32 to vector<4x4xf32>
    %721 = arith.subf %719, %720 : vector<4x4xf32>
    %722 = arith.select %716, %714, %721 : vector<4x4xi1>, vector<4x4xf32>
    %c75 = arith.constant 75 : index
    %723 = memref.load %arg1[%c75] : memref<232xf32, #tpu.memory_space<smem>>
    %724 = vector.broadcast %723 : f32 to vector<4x4xf32>
    %725 = arith.mulf %724, %620 : vector<4x4xf32>
    %c83 = arith.constant 83 : index
    %726 = memref.load %arg1[%c83] : memref<232xf32, #tpu.memory_space<smem>>
    %727 = vector.broadcast %726 : f32 to vector<4x4xf32>
    %728 = arith.mulf %727, %654 : vector<4x4xf32>
    %729 = arith.addf %725, %728 : vector<4x4xf32>
    %c67 = arith.constant 67 : index
    %730 = memref.load %arg1[%c67] : memref<232xf32, #tpu.memory_space<smem>>
    %731 = vector.extract_strided_slice %654 {offsets = [0, 0], sizes = [4, 3], strides = [1, 1]} : vector<4x4xf32> to vector<4x3xf32>
    %732 = tpu.concatenate %1, %731 in 1 : vector<4x1xf32>, vector<4x3xf32> -> vector<4x4xf32>
    %733 = vector.broadcast %730 : f32 to vector<4x4xf32>
    %734 = arith.mulf %733, %732 : vector<4x4xf32>
    %735 = arith.addf %729, %734 : vector<4x4xf32>
    %c99 = arith.constant 99 : index
    %736 = memref.load %arg1[%c99] : memref<232xf32, #tpu.memory_space<smem>>
    %737 = vector.broadcast %736 : f32 to vector<4x4xf32>
    %738 = arith.mulf %737, %688 : vector<4x4xf32>
    %739 = arith.addf %735, %738 : vector<4x4xf32>
    %c51 = arith.constant 51 : index
    %740 = memref.load %arg1[%c51] : memref<232xf32, #tpu.memory_space<smem>>
    %741 = vector.extract_strided_slice %688 {offsets = [0, 0], sizes = [3, 4], strides = [1, 1]} : vector<4x4xf32> to vector<3x4xf32>
    %742 = tpu.concatenate %0, %741 in 0 : vector<1x4xf32>, vector<3x4xf32> -> vector<4x4xf32>
    %743 = vector.broadcast %740 : f32 to vector<4x4xf32>
    %744 = arith.mulf %743, %742 : vector<4x4xf32>
    %745 = arith.addf %739, %744 : vector<4x4xf32>
    %c107 = arith.constant 107 : index
    %746 = memref.load %arg1[%c107] : memref<232xf32, #tpu.memory_space<smem>>
    %747 = vector.broadcast %746 : f32 to vector<4x4xf32>
    %748 = arith.mulf %747, %722 : vector<4x4xf32>
    %749 = arith.addf %745, %748 : vector<4x4xf32>
    %c91 = arith.constant 91 : index
    %750 = memref.load %arg1[%c91] : memref<232xf32, #tpu.memory_space<smem>>
    %751 = vector.extract_strided_slice %722 {offsets = [0, 0], sizes = [4, 3], strides = [1, 1]} : vector<4x4xf32> to vector<4x3xf32>
    %752 = tpu.concatenate %1, %751 in 1 : vector<4x1xf32>, vector<4x3xf32> -> vector<4x4xf32>
    %753 = vector.broadcast %750 : f32 to vector<4x4xf32>
    %754 = arith.mulf %753, %752 : vector<4x4xf32>
    %755 = arith.addf %749, %754 : vector<4x4xf32>
    %756 = vector.extract_strided_slice %722 {offsets = [0, 0], sizes = [3, 4], strides = [1, 1]} : vector<4x4xf32> to vector<3x4xf32>
    %757 = tpu.concatenate %0, %756 in 0 : vector<1x4xf32>, vector<3x4xf32> -> vector<4x4xf32>
    %c59 = arith.constant 59 : index
    %758 = memref.load %arg1[%c59] : memref<232xf32, #tpu.memory_space<smem>>
    %759 = vector.broadcast %758 : f32 to vector<4x4xf32>
    %760 = arith.mulf %759, %757 : vector<4x4xf32>
    %761 = arith.addf %755, %760 : vector<4x4xf32>
    %c43 = arith.constant 43 : index
    %762 = memref.load %arg1[%c43] : memref<232xf32, #tpu.memory_space<smem>>
    %763 = vector.extract_strided_slice %757 {offsets = [0, 0], sizes = [4, 3], strides = [1, 1]} : vector<4x4xf32> to vector<4x3xf32>
    %764 = tpu.concatenate %1, %763 in 1 : vector<4x1xf32>, vector<4x3xf32> -> vector<4x4xf32>
    %765 = vector.broadcast %762 : f32 to vector<4x4xf32>
    %766 = arith.mulf %765, %764 : vector<4x4xf32>
    %767 = arith.addf %761, %766 : vector<4x4xf32>
    %c115 = arith.constant 115 : index
    %768 = memref.load %arg1[%c115] : memref<232xf32, #tpu.memory_space<smem>>
    %769 = vector.broadcast %768 : f32 to vector<4x4xf32>
    %770 = arith.addf %767, %769 : vector<4x4xf32>
    %cst_375 = arith.constant 0.000000e+00 : f32
    %771 = vector.broadcast %cst_375 : f32 to vector<4x4xf32>
    %772 = arith.cmpf ogt, %770, %771 : vector<4x4xf32>
    %cst_376 = arith.constant 0.000000e+00 : f32
    %773 = vector.broadcast %cst_376 : f32 to vector<4x4xf32>
    %774 = arith.minimumf %770, %773 : vector<4x4xf32>
    %775 = math.exp %774 : vector<4x4xf32>
    %cst_377 = arith.constant 1.000000e+00 : f32
    %776 = vector.broadcast %cst_377 : f32 to vector<4x4xf32>
    %777 = arith.subf %775, %776 : vector<4x4xf32>
    %778 = arith.select %772, %770, %777 : vector<4x4xi1>, vector<4x4xf32>
    %c3_378 = arith.constant 3 : index
    %c0_379 = arith.constant 0 : index
    %c0_380 = arith.constant 0 : index
    %779 = vector.load %arg4[%c3_378, %c0_379, %c0_380] : memref<8x4x4xf32, #tpu.memory_space<vmem>>, vector<1x4x4xf32>
    %780 = vector.shape_cast %779 : vector<1x4x4xf32> to vector<4x4xf32>
    %781 = vector.shape_cast %778 : vector<4x4xf32> to vector<1x4x4xf32>
    tpu.vector_store %arg4[%c3_378, %c0_379, %c0_380], %781 {strides = array<i32>} : memref<8x4x4xf32, #tpu.memory_space<vmem>>, vector<1x4x4xf32>,
    %c0_381 = arith.constant 0 : index
    %c0_382 = arith.constant 0 : index
    %c0_383 = arith.constant 0 : index
    %c0_384 = arith.constant 0 : index
    %782 = vector.load %arg2[%c0_381, %c0_382, %c0_383, %c0_384] : memref<1x28x4x4xf32, #tpu.memory_space<vmem>>, vector<1x1x4x4xf32>
    %783 = vector.shape_cast %782 : vector<1x1x4x4xf32> to vector<4x4xf32>
    %c4_385 = arith.constant 4 : index
    %784 = memref.load %arg1[%c4_385] : memref<232xf32, #tpu.memory_space<smem>>
    %785 = vector.broadcast %784 : f32 to vector<4x4xf32>
    %786 = arith.mulf %783, %785 : vector<4x4xf32>
    %c0_386 = arith.constant 0 : index
    %c1_387 = arith.constant 1 : index
    %c0_388 = arith.constant 0 : index
    %c0_389 = arith.constant 0 : index
    %787 = vector.load %arg2[%c0_386, %c1_387, %c0_388, %c0_389] : memref<1x28x4x4xf32, #tpu.memory_space<vmem>>, vector<1x1x4x4xf32>
    %788 = vector.shape_cast %787 : vector<1x1x4x4xf32> to vector<4x4xf32>
    %c12_390 = arith.constant 12 : index
    %789 = memref.load %arg1[%c12_390] : memref<232xf32, #tpu.memory_space<smem>>
    %790 = vector.broadcast %789 : f32 to vector<4x4xf32>
    %791 = arith.mulf %788, %790 : vector<4x4xf32>
    %792 = arith.addf %786, %791 : vector<4x4xf32>
    %c0_391 = arith.constant 0 : index
    %c2_392 = arith.constant 2 : index
    %c0_393 = arith.constant 0 : index
    %c0_394 = arith.constant 0 : index
    %793 = vector.load %arg2[%c0_391, %c2_392, %c0_393, %c0_394] : memref<1x28x4x4xf32, #tpu.memory_space<vmem>>, vector<1x1x4x4xf32>
    %794 = vector.shape_cast %793 : vector<1x1x4x4xf32> to vector<4x4xf32>
    %c20 = arith.constant 20 : index
    %795 = memref.load %arg1[%c20] : memref<232xf32, #tpu.memory_space<smem>>
    %796 = vector.broadcast %795 : f32 to vector<4x4xf32>
    %797 = arith.mulf %794, %796 : vector<4x4xf32>
    %798 = arith.addf %792, %797 : vector<4x4xf32>
    %c0_395 = arith.constant 0 : index
    %c3_396 = arith.constant 3 : index
    %c0_397 = arith.constant 0 : index
    %c0_398 = arith.constant 0 : index
    %799 = vector.load %arg2[%c0_395, %c3_396, %c0_397, %c0_398] : memref<1x28x4x4xf32, #tpu.memory_space<vmem>>, vector<1x1x4x4xf32>
    %800 = vector.shape_cast %799 : vector<1x1x4x4xf32> to vector<4x4xf32>
    %c28 = arith.constant 28 : index
    %801 = memref.load %arg1[%c28] : memref<232xf32, #tpu.memory_space<smem>>
    %802 = vector.broadcast %801 : f32 to vector<4x4xf32>
    %803 = arith.mulf %800, %802 : vector<4x4xf32>
    %804 = arith.addf %798, %803 : vector<4x4xf32>
    %c36 = arith.constant 36 : index
    %805 = memref.load %arg1[%c36] : memref<232xf32, #tpu.memory_space<smem>>
    %806 = vector.broadcast %805 : f32 to vector<4x4xf32>
    %807 = arith.addf %804, %806 : vector<4x4xf32>
    %cst_399 = arith.constant 0.000000e+00 : f32
    %808 = vector.broadcast %cst_399 : f32 to vector<4x4xf32>
    %809 = arith.cmpf ogt, %807, %808 : vector<4x4xf32>
    %cst_400 = arith.constant 0.000000e+00 : f32
    %810 = vector.broadcast %cst_400 : f32 to vector<4x4xf32>
    %811 = arith.minimumf %807, %810 : vector<4x4xf32>
    %812 = math.exp %811 : vector<4x4xf32>
    %cst_401 = arith.constant 1.000000e+00 : f32
    %813 = vector.broadcast %cst_401 : f32 to vector<4x4xf32>
    %814 = arith.subf %812, %813 : vector<4x4xf32>
    %815 = arith.select %809, %807, %814 : vector<4x4xi1>, vector<4x4xf32>
    %c0_402 = arith.constant 0 : index
    %c4_403 = arith.constant 4 : index
    %c0_404 = arith.constant 0 : index
    %c0_405 = arith.constant 0 : index
    %816 = vector.load %arg2[%c0_402, %c4_403, %c0_404, %c0_405] : memref<1x28x4x4xf32, #tpu.memory_space<vmem>>, vector<1x1x4x4xf32>
    %817 = vector.shape_cast %816 : vector<1x1x4x4xf32> to vector<4x4xf32>
    %c4_406 = arith.constant 4 : index
    %818 = memref.load %arg1[%c4_406] : memref<232xf32, #tpu.memory_space<smem>>
    %819 = vector.broadcast %818 : f32 to vector<4x4xf32>
    %820 = arith.mulf %817, %819 : vector<4x4xf32>
    %c0_407 = arith.constant 0 : index
    %c5_408 = arith.constant 5 : index
    %c0_409 = arith.constant 0 : index
    %c0_410 = arith.constant 0 : index
    %821 = vector.load %arg2[%c0_407, %c5_408, %c0_409, %c0_410] : memref<1x28x4x4xf32, #tpu.memory_space<vmem>>, vector<1x1x4x4xf32>
    %822 = vector.shape_cast %821 : vector<1x1x4x4xf32> to vector<4x4xf32>
    %c12_411 = arith.constant 12 : index
    %823 = memref.load %arg1[%c12_411] : memref<232xf32, #tpu.memory_space<smem>>
    %824 = vector.broadcast %823 : f32 to vector<4x4xf32>
    %825 = arith.mulf %822, %824 : vector<4x4xf32>
    %826 = arith.addf %820, %825 : vector<4x4xf32>
    %c0_412 = arith.constant 0 : index
    %c6_413 = arith.constant 6 : index
    %c0_414 = arith.constant 0 : index
    %c0_415 = arith.constant 0 : index
    %827 = vector.load %arg2[%c0_412, %c6_413, %c0_414, %c0_415] : memref<1x28x4x4xf32, #tpu.memory_space<vmem>>, vector<1x1x4x4xf32>
    %828 = vector.shape_cast %827 : vector<1x1x4x4xf32> to vector<4x4xf32>
    %c20_416 = arith.constant 20 : index
    %829 = memref.load %arg1[%c20_416] : memref<232xf32, #tpu.memory_space<smem>>
    %830 = vector.broadcast %829 : f32 to vector<4x4xf32>
    %831 = arith.mulf %828, %830 : vector<4x4xf32>
    %832 = arith.addf %826, %831 : vector<4x4xf32>
    %c0_417 = arith.constant 0 : index
    %c7_418 = arith.constant 7 : index
    %c0_419 = arith.constant 0 : index
    %c0_420 = arith.constant 0 : index
    %833 = vector.load %arg2[%c0_417, %c7_418, %c0_419, %c0_420] : memref<1x28x4x4xf32, #tpu.memory_space<vmem>>, vector<1x1x4x4xf32>
    %834 = vector.shape_cast %833 : vector<1x1x4x4xf32> to vector<4x4xf32>
    %c28_421 = arith.constant 28 : index
    %835 = memref.load %arg1[%c28_421] : memref<232xf32, #tpu.memory_space<smem>>
    %836 = vector.broadcast %835 : f32 to vector<4x4xf32>
    %837 = arith.mulf %834, %836 : vector<4x4xf32>
    %838 = arith.addf %832, %837 : vector<4x4xf32>
    %c36_422 = arith.constant 36 : index
    %839 = memref.load %arg1[%c36_422] : memref<232xf32, #tpu.memory_space<smem>>
    %840 = vector.broadcast %839 : f32 to vector<4x4xf32>
    %841 = arith.addf %838, %840 : vector<4x4xf32>
    %cst_423 = arith.constant 0.000000e+00 : f32
    %842 = vector.broadcast %cst_423 : f32 to vector<4x4xf32>
    %843 = arith.cmpf ogt, %841, %842 : vector<4x4xf32>
    %cst_424 = arith.constant 0.000000e+00 : f32
    %844 = vector.broadcast %cst_424 : f32 to vector<4x4xf32>
    %845 = arith.minimumf %841, %844 : vector<4x4xf32>
    %846 = math.exp %845 : vector<4x4xf32>
    %cst_425 = arith.constant 1.000000e+00 : f32
    %847 = vector.broadcast %cst_425 : f32 to vector<4x4xf32>
    %848 = arith.subf %846, %847 : vector<4x4xf32>
    %849 = arith.select %843, %841, %848 : vector<4x4xi1>, vector<4x4xf32>
    %c0_426 = arith.constant 0 : index
    %c8_427 = arith.constant 8 : index
    %c0_428 = arith.constant 0 : index
    %c0_429 = arith.constant 0 : index
    %850 = vector.load %arg2[%c0_426, %c8_427, %c0_428, %c0_429] : memref<1x28x4x4xf32, #tpu.memory_space<vmem>>, vector<1x1x4x4xf32>
    %851 = vector.shape_cast %850 : vector<1x1x4x4xf32> to vector<4x4xf32>
    %c4_430 = arith.constant 4 : index
    %852 = memref.load %arg1[%c4_430] : memref<232xf32, #tpu.memory_space<smem>>
    %853 = vector.broadcast %852 : f32 to vector<4x4xf32>
    %854 = arith.mulf %851, %853 : vector<4x4xf32>
    %c0_431 = arith.constant 0 : index
    %c9_432 = arith.constant 9 : index
    %c0_433 = arith.constant 0 : index
    %c0_434 = arith.constant 0 : index
    %855 = vector.load %arg2[%c0_431, %c9_432, %c0_433, %c0_434] : memref<1x28x4x4xf32, #tpu.memory_space<vmem>>, vector<1x1x4x4xf32>
    %856 = vector.shape_cast %855 : vector<1x1x4x4xf32> to vector<4x4xf32>
    %c12_435 = arith.constant 12 : index
    %857 = memref.load %arg1[%c12_435] : memref<232xf32, #tpu.memory_space<smem>>
    %858 = vector.broadcast %857 : f32 to vector<4x4xf32>
    %859 = arith.mulf %856, %858 : vector<4x4xf32>
    %860 = arith.addf %854, %859 : vector<4x4xf32>
    %c0_436 = arith.constant 0 : index
    %c10_437 = arith.constant 10 : index
    %c0_438 = arith.constant 0 : index
    %c0_439 = arith.constant 0 : index
    %861 = vector.load %arg2[%c0_436, %c10_437, %c0_438, %c0_439] : memref<1x28x4x4xf32, #tpu.memory_space<vmem>>, vector<1x1x4x4xf32>
    %862 = vector.shape_cast %861 : vector<1x1x4x4xf32> to vector<4x4xf32>
    %c20_440 = arith.constant 20 : index
    %863 = memref.load %arg1[%c20_440] : memref<232xf32, #tpu.memory_space<smem>>
    %864 = vector.broadcast %863 : f32 to vector<4x4xf32>
    %865 = arith.mulf %862, %864 : vector<4x4xf32>
    %866 = arith.addf %860, %865 : vector<4x4xf32>
    %c0_441 = arith.constant 0 : index
    %c11_442 = arith.constant 11 : index
    %c0_443 = arith.constant 0 : index
    %c0_444 = arith.constant 0 : index
    %867 = vector.load %arg2[%c0_441, %c11_442, %c0_443, %c0_444] : memref<1x28x4x4xf32, #tpu.memory_space<vmem>>, vector<1x1x4x4xf32>
    %868 = vector.shape_cast %867 : vector<1x1x4x4xf32> to vector<4x4xf32>
    %c28_445 = arith.constant 28 : index
    %869 = memref.load %arg1[%c28_445] : memref<232xf32, #tpu.memory_space<smem>>
    %870 = vector.broadcast %869 : f32 to vector<4x4xf32>
    %871 = arith.mulf %868, %870 : vector<4x4xf32>
    %872 = arith.addf %866, %871 : vector<4x4xf32>
    %c36_446 = arith.constant 36 : index
    %873 = memref.load %arg1[%c36_446] : memref<232xf32, #tpu.memory_space<smem>>
    %874 = vector.broadcast %873 : f32 to vector<4x4xf32>
    %875 = arith.addf %872, %874 : vector<4x4xf32>
    %cst_447 = arith.constant 0.000000e+00 : f32
    %876 = vector.broadcast %cst_447 : f32 to vector<4x4xf32>
    %877 = arith.cmpf ogt, %875, %876 : vector<4x4xf32>
    %cst_448 = arith.constant 0.000000e+00 : f32
    %878 = vector.broadcast %cst_448 : f32 to vector<4x4xf32>
    %879 = arith.minimumf %875, %878 : vector<4x4xf32>
    %880 = math.exp %879 : vector<4x4xf32>
    %cst_449 = arith.constant 1.000000e+00 : f32
    %881 = vector.broadcast %cst_449 : f32 to vector<4x4xf32>
    %882 = arith.subf %880, %881 : vector<4x4xf32>
    %883 = arith.select %877, %875, %882 : vector<4x4xi1>, vector<4x4xf32>
    %c0_450 = arith.constant 0 : index
    %c12_451 = arith.constant 12 : index
    %c0_452 = arith.constant 0 : index
    %c0_453 = arith.constant 0 : index
    %884 = vector.load %arg2[%c0_450, %c12_451, %c0_452, %c0_453] : memref<1x28x4x4xf32, #tpu.memory_space<vmem>>, vector<1x1x4x4xf32>
    %885 = vector.shape_cast %884 : vector<1x1x4x4xf32> to vector<4x4xf32>
    %c4_454 = arith.constant 4 : index
    %886 = memref.load %arg1[%c4_454] : memref<232xf32, #tpu.memory_space<smem>>
    %887 = vector.broadcast %886 : f32 to vector<4x4xf32>
    %888 = arith.mulf %885, %887 : vector<4x4xf32>
    %c0_455 = arith.constant 0 : index
    %c13_456 = arith.constant 13 : index
    %c0_457 = arith.constant 0 : index
    %c0_458 = arith.constant 0 : index
    %889 = vector.load %arg2[%c0_455, %c13_456, %c0_457, %c0_458] : memref<1x28x4x4xf32, #tpu.memory_space<vmem>>, vector<1x1x4x4xf32>
    %890 = vector.shape_cast %889 : vector<1x1x4x4xf32> to vector<4x4xf32>
    %c12_459 = arith.constant 12 : index
    %891 = memref.load %arg1[%c12_459] : memref<232xf32, #tpu.memory_space<smem>>
    %892 = vector.broadcast %891 : f32 to vector<4x4xf32>
    %893 = arith.mulf %890, %892 : vector<4x4xf32>
    %894 = arith.addf %888, %893 : vector<4x4xf32>
    %c0_460 = arith.constant 0 : index
    %c14_461 = arith.constant 14 : index
    %c0_462 = arith.constant 0 : index
    %c0_463 = arith.constant 0 : index
    %895 = vector.load %arg2[%c0_460, %c14_461, %c0_462, %c0_463] : memref<1x28x4x4xf32, #tpu.memory_space<vmem>>, vector<1x1x4x4xf32>
    %896 = vector.shape_cast %895 : vector<1x1x4x4xf32> to vector<4x4xf32>
    %c20_464 = arith.constant 20 : index
    %897 = memref.load %arg1[%c20_464] : memref<232xf32, #tpu.memory_space<smem>>
    %898 = vector.broadcast %897 : f32 to vector<4x4xf32>
    %899 = arith.mulf %896, %898 : vector<4x4xf32>
    %900 = arith.addf %894, %899 : vector<4x4xf32>
    %c0_465 = arith.constant 0 : index
    %c15_466 = arith.constant 15 : index
    %c0_467 = arith.constant 0 : index
    %c0_468 = arith.constant 0 : index
    %901 = vector.load %arg2[%c0_465, %c15_466, %c0_467, %c0_468] : memref<1x28x4x4xf32, #tpu.memory_space<vmem>>, vector<1x1x4x4xf32>
    %902 = vector.shape_cast %901 : vector<1x1x4x4xf32> to vector<4x4xf32>
    %c28_469 = arith.constant 28 : index
    %903 = memref.load %arg1[%c28_469] : memref<232xf32, #tpu.memory_space<smem>>
    %904 = vector.broadcast %903 : f32 to vector<4x4xf32>
    %905 = arith.mulf %902, %904 : vector<4x4xf32>
    %906 = arith.addf %900, %905 : vector<4x4xf32>
    %c36_470 = arith.constant 36 : index
    %907 = memref.load %arg1[%c36_470] : memref<232xf32, #tpu.memory_space<smem>>
    %908 = vector.broadcast %907 : f32 to vector<4x4xf32>
    %909 = arith.addf %906, %908 : vector<4x4xf32>
    %cst_471 = arith.constant 0.000000e+00 : f32
    %910 = vector.broadcast %cst_471 : f32 to vector<4x4xf32>
    %911 = arith.cmpf ogt, %909, %910 : vector<4x4xf32>
    %cst_472 = arith.constant 0.000000e+00 : f32
    %912 = vector.broadcast %cst_472 : f32 to vector<4x4xf32>
    %913 = arith.minimumf %909, %912 : vector<4x4xf32>
    %914 = math.exp %913 : vector<4x4xf32>
    %cst_473 = arith.constant 1.000000e+00 : f32
    %915 = vector.broadcast %cst_473 : f32 to vector<4x4xf32>
    %916 = arith.subf %914, %915 : vector<4x4xf32>
    %917 = arith.select %911, %909, %916 : vector<4x4xi1>, vector<4x4xf32>
    %c76 = arith.constant 76 : index
    %918 = memref.load %arg1[%c76] : memref<232xf32, #tpu.memory_space<smem>>
    %919 = vector.broadcast %918 : f32 to vector<4x4xf32>
    %920 = arith.mulf %919, %815 : vector<4x4xf32>
    %c84 = arith.constant 84 : index
    %921 = memref.load %arg1[%c84] : memref<232xf32, #tpu.memory_space<smem>>
    %922 = vector.broadcast %921 : f32 to vector<4x4xf32>
    %923 = arith.mulf %922, %849 : vector<4x4xf32>
    %924 = arith.addf %920, %923 : vector<4x4xf32>
    %c68 = arith.constant 68 : index
    %925 = memref.load %arg1[%c68] : memref<232xf32, #tpu.memory_space<smem>>
    %926 = vector.extract_strided_slice %849 {offsets = [0, 0], sizes = [4, 3], strides = [1, 1]} : vector<4x4xf32> to vector<4x3xf32>
    %927 = tpu.concatenate %1, %926 in 1 : vector<4x1xf32>, vector<4x3xf32> -> vector<4x4xf32>
    %928 = vector.broadcast %925 : f32 to vector<4x4xf32>
    %929 = arith.mulf %928, %927 : vector<4x4xf32>
    %930 = arith.addf %924, %929 : vector<4x4xf32>
    %c100 = arith.constant 100 : index
    %931 = memref.load %arg1[%c100] : memref<232xf32, #tpu.memory_space<smem>>
    %932 = vector.broadcast %931 : f32 to vector<4x4xf32>
    %933 = arith.mulf %932, %883 : vector<4x4xf32>
    %934 = arith.addf %930, %933 : vector<4x4xf32>
    %c52 = arith.constant 52 : index
    %935 = memref.load %arg1[%c52] : memref<232xf32, #tpu.memory_space<smem>>
    %936 = vector.extract_strided_slice %883 {offsets = [0, 0], sizes = [3, 4], strides = [1, 1]} : vector<4x4xf32> to vector<3x4xf32>
    %937 = tpu.concatenate %0, %936 in 0 : vector<1x4xf32>, vector<3x4xf32> -> vector<4x4xf32>
    %938 = vector.broadcast %935 : f32 to vector<4x4xf32>
    %939 = arith.mulf %938, %937 : vector<4x4xf32>
    %940 = arith.addf %934, %939 : vector<4x4xf32>
    %c108 = arith.constant 108 : index
    %941 = memref.load %arg1[%c108] : memref<232xf32, #tpu.memory_space<smem>>
    %942 = vector.broadcast %941 : f32 to vector<4x4xf32>
    %943 = arith.mulf %942, %917 : vector<4x4xf32>
    %944 = arith.addf %940, %943 : vector<4x4xf32>
    %c92 = arith.constant 92 : index
    %945 = memref.load %arg1[%c92] : memref<232xf32, #tpu.memory_space<smem>>
    %946 = vector.extract_strided_slice %917 {offsets = [0, 0], sizes = [4, 3], strides = [1, 1]} : vector<4x4xf32> to vector<4x3xf32>
    %947 = tpu.concatenate %1, %946 in 1 : vector<4x1xf32>, vector<4x3xf32> -> vector<4x4xf32>
    %948 = vector.broadcast %945 : f32 to vector<4x4xf32>
    %949 = arith.mulf %948, %947 : vector<4x4xf32>
    %950 = arith.addf %944, %949 : vector<4x4xf32>
    %951 = vector.extract_strided_slice %917 {offsets = [0, 0], sizes = [3, 4], strides = [1, 1]} : vector<4x4xf32> to vector<3x4xf32>
    %952 = tpu.concatenate %0, %951 in 0 : vector<1x4xf32>, vector<3x4xf32> -> vector<4x4xf32>
    %c60 = arith.constant 60 : index
    %953 = memref.load %arg1[%c60] : memref<232xf32, #tpu.memory_space<smem>>
    %954 = vector.broadcast %953 : f32 to vector<4x4xf32>
    %955 = arith.mulf %954, %952 : vector<4x4xf32>
    %956 = arith.addf %950, %955 : vector<4x4xf32>
    %c44 = arith.constant 44 : index
    %957 = memref.load %arg1[%c44] : memref<232xf32, #tpu.memory_space<smem>>
    %958 = vector.extract_strided_slice %952 {offsets = [0, 0], sizes = [4, 3], strides = [1, 1]} : vector<4x4xf32> to vector<4x3xf32>
    %959 = tpu.concatenate %1, %958 in 1 : vector<4x1xf32>, vector<4x3xf32> -> vector<4x4xf32>
    %960 = vector.broadcast %957 : f32 to vector<4x4xf32>
    %961 = arith.mulf %960, %959 : vector<4x4xf32>
    %962 = arith.addf %956, %961 : vector<4x4xf32>
    %c116 = arith.constant 116 : index
    %963 = memref.load %arg1[%c116] : memref<232xf32, #tpu.memory_space<smem>>
    %964 = vector.broadcast %963 : f32 to vector<4x4xf32>
    %965 = arith.addf %962, %964 : vector<4x4xf32>
    %cst_474 = arith.constant 0.000000e+00 : f32
    %966 = vector.broadcast %cst_474 : f32 to vector<4x4xf32>
    %967 = arith.cmpf ogt, %965, %966 : vector<4x4xf32>
    %cst_475 = arith.constant 0.000000e+00 : f32
    %968 = vector.broadcast %cst_475 : f32 to vector<4x4xf32>
    %969 = arith.minimumf %965, %968 : vector<4x4xf32>
    %970 = math.exp %969 : vector<4x4xf32>
    %cst_476 = arith.constant 1.000000e+00 : f32
    %971 = vector.broadcast %cst_476 : f32 to vector<4x4xf32>
    %972 = arith.subf %970, %971 : vector<4x4xf32>
    %973 = arith.select %967, %965, %972 : vector<4x4xi1>, vector<4x4xf32>
    %c4_477 = arith.constant 4 : index
    %c0_478 = arith.constant 0 : index
    %c0_479 = arith.constant 0 : index
    %974 = vector.load %arg4[%c4_477, %c0_478, %c0_479] : memref<8x4x4xf32, #tpu.memory_space<vmem>>, vector<1x4x4xf32>
    %975 = vector.shape_cast %974 : vector<1x4x4xf32> to vector<4x4xf32>
    %976 = vector.shape_cast %973 : vector<4x4xf32> to vector<1x4x4xf32>
    tpu.vector_store %arg4[%c4_477, %c0_478, %c0_479], %976 {strides = array<i32>} : memref<8x4x4xf32, #tpu.memory_space<vmem>>, vector<1x4x4xf32>,
    %c0_480 = arith.constant 0 : index
    %c0_481 = arith.constant 0 : index
    %c0_482 = arith.constant 0 : index
    %c0_483 = arith.constant 0 : index
    %977 = vector.load %arg2[%c0_480, %c0_481, %c0_482, %c0_483] : memref<1x28x4x4xf32, #tpu.memory_space<vmem>>, vector<1x1x4x4xf32>
    %978 = vector.shape_cast %977 : vector<1x1x4x4xf32> to vector<4x4xf32>
    %c5_484 = arith.constant 5 : index
    %979 = memref.load %arg1[%c5_484] : memref<232xf32, #tpu.memory_space<smem>>
    %980 = vector.broadcast %979 : f32 to vector<4x4xf32>
    %981 = arith.mulf %978, %980 : vector<4x4xf32>
    %c0_485 = arith.constant 0 : index
    %c1_486 = arith.constant 1 : index
    %c0_487 = arith.constant 0 : index
    %c0_488 = arith.constant 0 : index
    %982 = vector.load %arg2[%c0_485, %c1_486, %c0_487, %c0_488] : memref<1x28x4x4xf32, #tpu.memory_space<vmem>>, vector<1x1x4x4xf32>
    %983 = vector.shape_cast %982 : vector<1x1x4x4xf32> to vector<4x4xf32>
    %c13_489 = arith.constant 13 : index
    %984 = memref.load %arg1[%c13_489] : memref<232xf32, #tpu.memory_space<smem>>
    %985 = vector.broadcast %984 : f32 to vector<4x4xf32>
    %986 = arith.mulf %983, %985 : vector<4x4xf32>
    %987 = arith.addf %981, %986 : vector<4x4xf32>
    %c0_490 = arith.constant 0 : index
    %c2_491 = arith.constant 2 : index
    %c0_492 = arith.constant 0 : index
    %c0_493 = arith.constant 0 : index
    %988 = vector.load %arg2[%c0_490, %c2_491, %c0_492, %c0_493] : memref<1x28x4x4xf32, #tpu.memory_space<vmem>>, vector<1x1x4x4xf32>
    %989 = vector.shape_cast %988 : vector<1x1x4x4xf32> to vector<4x4xf32>
    %c21 = arith.constant 21 : index
    %990 = memref.load %arg1[%c21] : memref<232xf32, #tpu.memory_space<smem>>
    %991 = vector.broadcast %990 : f32 to vector<4x4xf32>
    %992 = arith.mulf %989, %991 : vector<4x4xf32>
    %993 = arith.addf %987, %992 : vector<4x4xf32>
    %c0_494 = arith.constant 0 : index
    %c3_495 = arith.constant 3 : index
    %c0_496 = arith.constant 0 : index
    %c0_497 = arith.constant 0 : index
    %994 = vector.load %arg2[%c0_494, %c3_495, %c0_496, %c0_497] : memref<1x28x4x4xf32, #tpu.memory_space<vmem>>, vector<1x1x4x4xf32>
    %995 = vector.shape_cast %994 : vector<1x1x4x4xf32> to vector<4x4xf32>
    %c29 = arith.constant 29 : index
    %996 = memref.load %arg1[%c29] : memref<232xf32, #tpu.memory_space<smem>>
    %997 = vector.broadcast %996 : f32 to vector<4x4xf32>
    %998 = arith.mulf %995, %997 : vector<4x4xf32>
    %999 = arith.addf %993, %998 : vector<4x4xf32>
    %c37 = arith.constant 37 : index
    %1000 = memref.load %arg1[%c37] : memref<232xf32, #tpu.memory_space<smem>>
    %1001 = vector.broadcast %1000 : f32 to vector<4x4xf32>
    %1002 = arith.addf %999, %1001 : vector<4x4xf32>
    %cst_498 = arith.constant 0.000000e+00 : f32
    %1003 = vector.broadcast %cst_498 : f32 to vector<4x4xf32>
    %1004 = arith.cmpf ogt, %1002, %1003 : vector<4x4xf32>
    %cst_499 = arith.constant 0.000000e+00 : f32
    %1005 = vector.broadcast %cst_499 : f32 to vector<4x4xf32>
    %1006 = arith.minimumf %1002, %1005 : vector<4x4xf32>
    %1007 = math.exp %1006 : vector<4x4xf32>
    %cst_500 = arith.constant 1.000000e+00 : f32
    %1008 = vector.broadcast %cst_500 : f32 to vector<4x4xf32>
    %1009 = arith.subf %1007, %1008 : vector<4x4xf32>
    %1010 = arith.select %1004, %1002, %1009 : vector<4x4xi1>, vector<4x4xf32>
    %c0_501 = arith.constant 0 : index
    %c4_502 = arith.constant 4 : index
    %c0_503 = arith.constant 0 : index
    %c0_504 = arith.constant 0 : index
    %1011 = vector.load %arg2[%c0_501, %c4_502, %c0_503, %c0_504] : memref<1x28x4x4xf32, #tpu.memory_space<vmem>>, vector<1x1x4x4xf32>
    %1012 = vector.shape_cast %1011 : vector<1x1x4x4xf32> to vector<4x4xf32>
    %c5_505 = arith.constant 5 : index
    %1013 = memref.load %arg1[%c5_505] : memref<232xf32, #tpu.memory_space<smem>>
    %1014 = vector.broadcast %1013 : f32 to vector<4x4xf32>
    %1015 = arith.mulf %1012, %1014 : vector<4x4xf32>
    %c0_506 = arith.constant 0 : index
    %c5_507 = arith.constant 5 : index
    %c0_508 = arith.constant 0 : index
    %c0_509 = arith.constant 0 : index
    %1016 = vector.load %arg2[%c0_506, %c5_507, %c0_508, %c0_509] : memref<1x28x4x4xf32, #tpu.memory_space<vmem>>, vector<1x1x4x4xf32>
    %1017 = vector.shape_cast %1016 : vector<1x1x4x4xf32> to vector<4x4xf32>
    %c13_510 = arith.constant 13 : index
    %1018 = memref.load %arg1[%c13_510] : memref<232xf32, #tpu.memory_space<smem>>
    %1019 = vector.broadcast %1018 : f32 to vector<4x4xf32>
    %1020 = arith.mulf %1017, %1019 : vector<4x4xf32>
    %1021 = arith.addf %1015, %1020 : vector<4x4xf32>
    %c0_511 = arith.constant 0 : index
    %c6_512 = arith.constant 6 : index
    %c0_513 = arith.constant 0 : index
    %c0_514 = arith.constant 0 : index
    %1022 = vector.load %arg2[%c0_511, %c6_512, %c0_513, %c0_514] : memref<1x28x4x4xf32, #tpu.memory_space<vmem>>, vector<1x1x4x4xf32>
    %1023 = vector.shape_cast %1022 : vector<1x1x4x4xf32> to vector<4x4xf32>
    %c21_515 = arith.constant 21 : index
    %1024 = memref.load %arg1[%c21_515] : memref<232xf32, #tpu.memory_space<smem>>
    %1025 = vector.broadcast %1024 : f32 to vector<4x4xf32>
    %1026 = arith.mulf %1023, %1025 : vector<4x4xf32>
    %1027 = arith.addf %1021, %1026 : vector<4x4xf32>
    %c0_516 = arith.constant 0 : index
    %c7_517 = arith.constant 7 : index
    %c0_518 = arith.constant 0 : index
    %c0_519 = arith.constant 0 : index
    %1028 = vector.load %arg2[%c0_516, %c7_517, %c0_518, %c0_519] : memref<1x28x4x4xf32, #tpu.memory_space<vmem>>, vector<1x1x4x4xf32>
    %1029 = vector.shape_cast %1028 : vector<1x1x4x4xf32> to vector<4x4xf32>
    %c29_520 = arith.constant 29 : index
    %1030 = memref.load %arg1[%c29_520] : memref<232xf32, #tpu.memory_space<smem>>
    %1031 = vector.broadcast %1030 : f32 to vector<4x4xf32>
    %1032 = arith.mulf %1029, %1031 : vector<4x4xf32>
    %1033 = arith.addf %1027, %1032 : vector<4x4xf32>
    %c37_521 = arith.constant 37 : index
    %1034 = memref.load %arg1[%c37_521] : memref<232xf32, #tpu.memory_space<smem>>
    %1035 = vector.broadcast %1034 : f32 to vector<4x4xf32>
    %1036 = arith.addf %1033, %1035 : vector<4x4xf32>
    %cst_522 = arith.constant 0.000000e+00 : f32
    %1037 = vector.broadcast %cst_522 : f32 to vector<4x4xf32>
    %1038 = arith.cmpf ogt, %1036, %1037 : vector<4x4xf32>
    %cst_523 = arith.constant 0.000000e+00 : f32
    %1039 = vector.broadcast %cst_523 : f32 to vector<4x4xf32>
    %1040 = arith.minimumf %1036, %1039 : vector<4x4xf32>
    %1041 = math.exp %1040 : vector<4x4xf32>
    %cst_524 = arith.constant 1.000000e+00 : f32
    %1042 = vector.broadcast %cst_524 : f32 to vector<4x4xf32>
    %1043 = arith.subf %1041, %1042 : vector<4x4xf32>
    %1044 = arith.select %1038, %1036, %1043 : vector<4x4xi1>, vector<4x4xf32>
    %c0_525 = arith.constant 0 : index
    %c8_526 = arith.constant 8 : index
    %c0_527 = arith.constant 0 : index
    %c0_528 = arith.constant 0 : index
    %1045 = vector.load %arg2[%c0_525, %c8_526, %c0_527, %c0_528] : memref<1x28x4x4xf32, #tpu.memory_space<vmem>>, vector<1x1x4x4xf32>
    %1046 = vector.shape_cast %1045 : vector<1x1x4x4xf32> to vector<4x4xf32>
    %c5_529 = arith.constant 5 : index
    %1047 = memref.load %arg1[%c5_529] : memref<232xf32, #tpu.memory_space<smem>>
    %1048 = vector.broadcast %1047 : f32 to vector<4x4xf32>
    %1049 = arith.mulf %1046, %1048 : vector<4x4xf32>
    %c0_530 = arith.constant 0 : index
    %c9_531 = arith.constant 9 : index
    %c0_532 = arith.constant 0 : index
    %c0_533 = arith.constant 0 : index
    %1050 = vector.load %arg2[%c0_530, %c9_531, %c0_532, %c0_533] : memref<1x28x4x4xf32, #tpu.memory_space<vmem>>, vector<1x1x4x4xf32>
    %1051 = vector.shape_cast %1050 : vector<1x1x4x4xf32> to vector<4x4xf32>
    %c13_534 = arith.constant 13 : index
    %1052 = memref.load %arg1[%c13_534] : memref<232xf32, #tpu.memory_space<smem>>
    %1053 = vector.broadcast %1052 : f32 to vector<4x4xf32>
    %1054 = arith.mulf %1051, %1053 : vector<4x4xf32>
    %1055 = arith.addf %1049, %1054 : vector<4x4xf32>
    %c0_535 = arith.constant 0 : index
    %c10_536 = arith.constant 10 : index
    %c0_537 = arith.constant 0 : index
    %c0_538 = arith.constant 0 : index
    %1056 = vector.load %arg2[%c0_535, %c10_536, %c0_537, %c0_538] : memref<1x28x4x4xf32, #tpu.memory_space<vmem>>, vector<1x1x4x4xf32>
    %1057 = vector.shape_cast %1056 : vector<1x1x4x4xf32> to vector<4x4xf32>
    %c21_539 = arith.constant 21 : index
    %1058 = memref.load %arg1[%c21_539] : memref<232xf32, #tpu.memory_space<smem>>
    %1059 = vector.broadcast %1058 : f32 to vector<4x4xf32>
    %1060 = arith.mulf %1057, %1059 : vector<4x4xf32>
    %1061 = arith.addf %1055, %1060 : vector<4x4xf32>
    %c0_540 = arith.constant 0 : index
    %c11_541 = arith.constant 11 : index
    %c0_542 = arith.constant 0 : index
    %c0_543 = arith.constant 0 : index
    %1062 = vector.load %arg2[%c0_540, %c11_541, %c0_542, %c0_543] : memref<1x28x4x4xf32, #tpu.memory_space<vmem>>, vector<1x1x4x4xf32>
    %1063 = vector.shape_cast %1062 : vector<1x1x4x4xf32> to vector<4x4xf32>
    %c29_544 = arith.constant 29 : index
    %1064 = memref.load %arg1[%c29_544] : memref<232xf32, #tpu.memory_space<smem>>
    %1065 = vector.broadcast %1064 : f32 to vector<4x4xf32>
    %1066 = arith.mulf %1063, %1065 : vector<4x4xf32>
    %1067 = arith.addf %1061, %1066 : vector<4x4xf32>
    %c37_545 = arith.constant 37 : index
    %1068 = memref.load %arg1[%c37_545] : memref<232xf32, #tpu.memory_space<smem>>
    %1069 = vector.broadcast %1068 : f32 to vector<4x4xf32>
    %1070 = arith.addf %1067, %1069 : vector<4x4xf32>
    %cst_546 = arith.constant 0.000000e+00 : f32
    %1071 = vector.broadcast %cst_546 : f32 to vector<4x4xf32>
    %1072 = arith.cmpf ogt, %1070, %1071 : vector<4x4xf32>
    %cst_547 = arith.constant 0.000000e+00 : f32
    %1073 = vector.broadcast %cst_547 : f32 to vector<4x4xf32>
    %1074 = arith.minimumf %1070, %1073 : vector<4x4xf32>
    %1075 = math.exp %1074 : vector<4x4xf32>
    %cst_548 = arith.constant 1.000000e+00 : f32
    %1076 = vector.broadcast %cst_548 : f32 to vector<4x4xf32>
    %1077 = arith.subf %1075, %1076 : vector<4x4xf32>
    %1078 = arith.select %1072, %1070, %1077 : vector<4x4xi1>, vector<4x4xf32>
    %c0_549 = arith.constant 0 : index
    %c12_550 = arith.constant 12 : index
    %c0_551 = arith.constant 0 : index
    %c0_552 = arith.constant 0 : index
    %1079 = vector.load %arg2[%c0_549, %c12_550, %c0_551, %c0_552] : memref<1x28x4x4xf32, #tpu.memory_space<vmem>>, vector<1x1x4x4xf32>
    %1080 = vector.shape_cast %1079 : vector<1x1x4x4xf32> to vector<4x4xf32>
    %c5_553 = arith.constant 5 : index
    %1081 = memref.load %arg1[%c5_553] : memref<232xf32, #tpu.memory_space<smem>>
    %1082 = vector.broadcast %1081 : f32 to vector<4x4xf32>
    %1083 = arith.mulf %1080, %1082 : vector<4x4xf32>
    %c0_554 = arith.constant 0 : index
    %c13_555 = arith.constant 13 : index
    %c0_556 = arith.constant 0 : index
    %c0_557 = arith.constant 0 : index
    %1084 = vector.load %arg2[%c0_554, %c13_555, %c0_556, %c0_557] : memref<1x28x4x4xf32, #tpu.memory_space<vmem>>, vector<1x1x4x4xf32>
    %1085 = vector.shape_cast %1084 : vector<1x1x4x4xf32> to vector<4x4xf32>
    %c13_558 = arith.constant 13 : index
    %1086 = memref.load %arg1[%c13_558] : memref<232xf32, #tpu.memory_space<smem>>
    %1087 = vector.broadcast %1086 : f32 to vector<4x4xf32>
    %1088 = arith.mulf %1085, %1087 : vector<4x4xf32>
    %1089 = arith.addf %1083, %1088 : vector<4x4xf32>
    %c0_559 = arith.constant 0 : index
    %c14_560 = arith.constant 14 : index
    %c0_561 = arith.constant 0 : index
    %c0_562 = arith.constant 0 : index
    %1090 = vector.load %arg2[%c0_559, %c14_560, %c0_561, %c0_562] : memref<1x28x4x4xf32, #tpu.memory_space<vmem>>, vector<1x1x4x4xf32>
    %1091 = vector.shape_cast %1090 : vector<1x1x4x4xf32> to vector<4x4xf32>
    %c21_563 = arith.constant 21 : index
    %1092 = memref.load %arg1[%c21_563] : memref<232xf32, #tpu.memory_space<smem>>
    %1093 = vector.broadcast %1092 : f32 to vector<4x4xf32>
    %1094 = arith.mulf %1091, %1093 : vector<4x4xf32>
    %1095 = arith.addf %1089, %1094 : vector<4x4xf32>
    %c0_564 = arith.constant 0 : index
    %c15_565 = arith.constant 15 : index
    %c0_566 = arith.constant 0 : index
    %c0_567 = arith.constant 0 : index
    %1096 = vector.load %arg2[%c0_564, %c15_565, %c0_566, %c0_567] : memref<1x28x4x4xf32, #tpu.memory_space<vmem>>, vector<1x1x4x4xf32>
    %1097 = vector.shape_cast %1096 : vector<1x1x4x4xf32> to vector<4x4xf32>
    %c29_568 = arith.constant 29 : index
    %1098 = memref.load %arg1[%c29_568] : memref<232xf32, #tpu.memory_space<smem>>
    %1099 = vector.broadcast %1098 : f32 to vector<4x4xf32>
    %1100 = arith.mulf %1097, %1099 : vector<4x4xf32>
    %1101 = arith.addf %1095, %1100 : vector<4x4xf32>
    %c37_569 = arith.constant 37 : index
    %1102 = memref.load %arg1[%c37_569] : memref<232xf32, #tpu.memory_space<smem>>
    %1103 = vector.broadcast %1102 : f32 to vector<4x4xf32>
    %1104 = arith.addf %1101, %1103 : vector<4x4xf32>
    %cst_570 = arith.constant 0.000000e+00 : f32
    %1105 = vector.broadcast %cst_570 : f32 to vector<4x4xf32>
    %1106 = arith.cmpf ogt, %1104, %1105 : vector<4x4xf32>
    %cst_571 = arith.constant 0.000000e+00 : f32
    %1107 = vector.broadcast %cst_571 : f32 to vector<4x4xf32>
    %1108 = arith.minimumf %1104, %1107 : vector<4x4xf32>
    %1109 = math.exp %1108 : vector<4x4xf32>
    %cst_572 = arith.constant 1.000000e+00 : f32
    %1110 = vector.broadcast %cst_572 : f32 to vector<4x4xf32>
    %1111 = arith.subf %1109, %1110 : vector<4x4xf32>
    %1112 = arith.select %1106, %1104, %1111 : vector<4x4xi1>, vector<4x4xf32>
    %c77 = arith.constant 77 : index
    %1113 = memref.load %arg1[%c77] : memref<232xf32, #tpu.memory_space<smem>>
    %1114 = vector.broadcast %1113 : f32 to vector<4x4xf32>
    %1115 = arith.mulf %1114, %1010 : vector<4x4xf32>
    %c85 = arith.constant 85 : index
    %1116 = memref.load %arg1[%c85] : memref<232xf32, #tpu.memory_space<smem>>
    %1117 = vector.broadcast %1116 : f32 to vector<4x4xf32>
    %1118 = arith.mulf %1117, %1044 : vector<4x4xf32>
    %1119 = arith.addf %1115, %1118 : vector<4x4xf32>
    %c69 = arith.constant 69 : index
    %1120 = memref.load %arg1[%c69] : memref<232xf32, #tpu.memory_space<smem>>
    %1121 = vector.extract_strided_slice %1044 {offsets = [0, 0], sizes = [4, 3], strides = [1, 1]} : vector<4x4xf32> to vector<4x3xf32>
    %1122 = tpu.concatenate %1, %1121 in 1 : vector<4x1xf32>, vector<4x3xf32> -> vector<4x4xf32>
    %1123 = vector.broadcast %1120 : f32 to vector<4x4xf32>
    %1124 = arith.mulf %1123, %1122 : vector<4x4xf32>
    %1125 = arith.addf %1119, %1124 : vector<4x4xf32>
    %c101 = arith.constant 101 : index
    %1126 = memref.load %arg1[%c101] : memref<232xf32, #tpu.memory_space<smem>>
    %1127 = vector.broadcast %1126 : f32 to vector<4x4xf32>
    %1128 = arith.mulf %1127, %1078 : vector<4x4xf32>
    %1129 = arith.addf %1125, %1128 : vector<4x4xf32>
    %c53 = arith.constant 53 : index
    %1130 = memref.load %arg1[%c53] : memref<232xf32, #tpu.memory_space<smem>>
    %1131 = vector.extract_strided_slice %1078 {offsets = [0, 0], sizes = [3, 4], strides = [1, 1]} : vector<4x4xf32> to vector<3x4xf32>
    %1132 = tpu.concatenate %0, %1131 in 0 : vector<1x4xf32>, vector<3x4xf32> -> vector<4x4xf32>
    %1133 = vector.broadcast %1130 : f32 to vector<4x4xf32>
    %1134 = arith.mulf %1133, %1132 : vector<4x4xf32>
    %1135 = arith.addf %1129, %1134 : vector<4x4xf32>
    %c109 = arith.constant 109 : index
    %1136 = memref.load %arg1[%c109] : memref<232xf32, #tpu.memory_space<smem>>
    %1137 = vector.broadcast %1136 : f32 to vector<4x4xf32>
    %1138 = arith.mulf %1137, %1112 : vector<4x4xf32>
    %1139 = arith.addf %1135, %1138 : vector<4x4xf32>
    %c93 = arith.constant 93 : index
    %1140 = memref.load %arg1[%c93] : memref<232xf32, #tpu.memory_space<smem>>
    %1141 = vector.extract_strided_slice %1112 {offsets = [0, 0], sizes = [4, 3], strides = [1, 1]} : vector<4x4xf32> to vector<4x3xf32>
    %1142 = tpu.concatenate %1, %1141 in 1 : vector<4x1xf32>, vector<4x3xf32> -> vector<4x4xf32>
    %1143 = vector.broadcast %1140 : f32 to vector<4x4xf32>
    %1144 = arith.mulf %1143, %1142 : vector<4x4xf32>
    %1145 = arith.addf %1139, %1144 : vector<4x4xf32>
    %1146 = vector.extract_strided_slice %1112 {offsets = [0, 0], sizes = [3, 4], strides = [1, 1]} : vector<4x4xf32> to vector<3x4xf32>
    %1147 = tpu.concatenate %0, %1146 in 0 : vector<1x4xf32>, vector<3x4xf32> -> vector<4x4xf32>
    %c61 = arith.constant 61 : index
    %1148 = memref.load %arg1[%c61] : memref<232xf32, #tpu.memory_space<smem>>
    %1149 = vector.broadcast %1148 : f32 to vector<4x4xf32>
    %1150 = arith.mulf %1149, %1147 : vector<4x4xf32>
    %1151 = arith.addf %1145, %1150 : vector<4x4xf32>
    %c45 = arith.constant 45 : index
    %1152 = memref.load %arg1[%c45] : memref<232xf32, #tpu.memory_space<smem>>
    %1153 = vector.extract_strided_slice %1147 {offsets = [0, 0], sizes = [4, 3], strides = [1, 1]} : vector<4x4xf32> to vector<4x3xf32>
    %1154 = tpu.concatenate %1, %1153 in 1 : vector<4x1xf32>, vector<4x3xf32> -> vector<4x4xf32>
    %1155 = vector.broadcast %1152 : f32 to vector<4x4xf32>
    %1156 = arith.mulf %1155, %1154 : vector<4x4xf32>
    %1157 = arith.addf %1151, %1156 : vector<4x4xf32>
    %c117 = arith.constant 117 : index
    %1158 = memref.load %arg1[%c117] : memref<232xf32, #tpu.memory_space<smem>>
    %1159 = vector.broadcast %1158 : f32 to vector<4x4xf32>
    %1160 = arith.addf %1157, %1159 : vector<4x4xf32>
    %cst_573 = arith.constant 0.000000e+00 : f32
    %1161 = vector.broadcast %cst_573 : f32 to vector<4x4xf32>
    %1162 = arith.cmpf ogt, %1160, %1161 : vector<4x4xf32>
    %cst_574 = arith.constant 0.000000e+00 : f32
    %1163 = vector.broadcast %cst_574 : f32 to vector<4x4xf32>
    %1164 = arith.minimumf %1160, %1163 : vector<4x4xf32>
    %1165 = math.exp %1164 : vector<4x4xf32>
    %cst_575 = arith.constant 1.000000e+00 : f32
    %1166 = vector.broadcast %cst_575 : f32 to vector<4x4xf32>
    %1167 = arith.subf %1165, %1166 : vector<4x4xf32>
    %1168 = arith.select %1162, %1160, %1167 : vector<4x4xi1>, vector<4x4xf32>
    %c5_576 = arith.constant 5 : index
    %c0_577 = arith.constant 0 : index
    %c0_578 = arith.constant 0 : index
    %1169 = vector.load %arg4[%c5_576, %c0_577, %c0_578] : memref<8x4x4xf32, #tpu.memory_space<vmem>>, vector<1x4x4xf32>
    %1170 = vector.shape_cast %1169 : vector<1x4x4xf32> to vector<4x4xf32>
    %1171 = vector.shape_cast %1168 : vector<4x4xf32> to vector<1x4x4xf32>
    tpu.vector_store %arg4[%c5_576, %c0_577, %c0_578], %1171 {strides = array<i32>} : memref<8x4x4xf32, #tpu.memory_space<vmem>>, vector<1x4x4xf32>,
    %c0_579 = arith.constant 0 : index
    %c0_580 = arith.constant 0 : index
    %c0_581 = arith.constant 0 : index
    %c0_582 = arith.constant 0 : index
    %1172 = vector.load %arg2[%c0_579, %c0_580, %c0_581, %c0_582] : memref<1x28x4x4xf32, #tpu.memory_space<vmem>>, vector<1x1x4x4xf32>
    %1173 = vector.shape_cast %1172 : vector<1x1x4x4xf32> to vector<4x4xf32>
    %c6_583 = arith.constant 6 : index
    %1174 = memref.load %arg1[%c6_583] : memref<232xf32, #tpu.memory_space<smem>>
    %1175 = vector.broadcast %1174 : f32 to vector<4x4xf32>
    %1176 = arith.mulf %1173, %1175 : vector<4x4xf32>
    %c0_584 = arith.constant 0 : index
    %c1_585 = arith.constant 1 : index
    %c0_586 = arith.constant 0 : index
    %c0_587 = arith.constant 0 : index
    %1177 = vector.load %arg2[%c0_584, %c1_585, %c0_586, %c0_587] : memref<1x28x4x4xf32, #tpu.memory_space<vmem>>, vector<1x1x4x4xf32>
    %1178 = vector.shape_cast %1177 : vector<1x1x4x4xf32> to vector<4x4xf32>
    %c14_588 = arith.constant 14 : index
    %1179 = memref.load %arg1[%c14_588] : memref<232xf32, #tpu.memory_space<smem>>
    %1180 = vector.broadcast %1179 : f32 to vector<4x4xf32>
    %1181 = arith.mulf %1178, %1180 : vector<4x4xf32>
    %1182 = arith.addf %1176, %1181 : vector<4x4xf32>
    %c0_589 = arith.constant 0 : index
    %c2_590 = arith.constant 2 : index
    %c0_591 = arith.constant 0 : index
    %c0_592 = arith.constant 0 : index
    %1183 = vector.load %arg2[%c0_589, %c2_590, %c0_591, %c0_592] : memref<1x28x4x4xf32, #tpu.memory_space<vmem>>, vector<1x1x4x4xf32>
    %1184 = vector.shape_cast %1183 : vector<1x1x4x4xf32> to vector<4x4xf32>
    %c22 = arith.constant 22 : index
    %1185 = memref.load %arg1[%c22] : memref<232xf32, #tpu.memory_space<smem>>
    %1186 = vector.broadcast %1185 : f32 to vector<4x4xf32>
    %1187 = arith.mulf %1184, %1186 : vector<4x4xf32>
    %1188 = arith.addf %1182, %1187 : vector<4x4xf32>
    %c0_593 = arith.constant 0 : index
    %c3_594 = arith.constant 3 : index
    %c0_595 = arith.constant 0 : index
    %c0_596 = arith.constant 0 : index
    %1189 = vector.load %arg2[%c0_593, %c3_594, %c0_595, %c0_596] : memref<1x28x4x4xf32, #tpu.memory_space<vmem>>, vector<1x1x4x4xf32>
    %1190 = vector.shape_cast %1189 : vector<1x1x4x4xf32> to vector<4x4xf32>
    %c30 = arith.constant 30 : index
    %1191 = memref.load %arg1[%c30] : memref<232xf32, #tpu.memory_space<smem>>
    %1192 = vector.broadcast %1191 : f32 to vector<4x4xf32>
    %1193 = arith.mulf %1190, %1192 : vector<4x4xf32>
    %1194 = arith.addf %1188, %1193 : vector<4x4xf32>
    %c38 = arith.constant 38 : index
    %1195 = memref.load %arg1[%c38] : memref<232xf32, #tpu.memory_space<smem>>
    %1196 = vector.broadcast %1195 : f32 to vector<4x4xf32>
    %1197 = arith.addf %1194, %1196 : vector<4x4xf32>
    %cst_597 = arith.constant 0.000000e+00 : f32
    %1198 = vector.broadcast %cst_597 : f32 to vector<4x4xf32>
    %1199 = arith.cmpf ogt, %1197, %1198 : vector<4x4xf32>
    %cst_598 = arith.constant 0.000000e+00 : f32
    %1200 = vector.broadcast %cst_598 : f32 to vector<4x4xf32>
    %1201 = arith.minimumf %1197, %1200 : vector<4x4xf32>
    %1202 = math.exp %1201 : vector<4x4xf32>
    %cst_599 = arith.constant 1.000000e+00 : f32
    %1203 = vector.broadcast %cst_599 : f32 to vector<4x4xf32>
    %1204 = arith.subf %1202, %1203 : vector<4x4xf32>
    %1205 = arith.select %1199, %1197, %1204 : vector<4x4xi1>, vector<4x4xf32>
    %c0_600 = arith.constant 0 : index
    %c4_601 = arith.constant 4 : index
    %c0_602 = arith.constant 0 : index
    %c0_603 = arith.constant 0 : index
    %1206 = vector.load %arg2[%c0_600, %c4_601, %c0_602, %c0_603] : memref<1x28x4x4xf32, #tpu.memory_space<vmem>>, vector<1x1x4x4xf32>
    %1207 = vector.shape_cast %1206 : vector<1x1x4x4xf32> to vector<4x4xf32>
    %c6_604 = arith.constant 6 : index
    %1208 = memref.load %arg1[%c6_604] : memref<232xf32, #tpu.memory_space<smem>>
    %1209 = vector.broadcast %1208 : f32 to vector<4x4xf32>
    %1210 = arith.mulf %1207, %1209 : vector<4x4xf32>
    %c0_605 = arith.constant 0 : index
    %c5_606 = arith.constant 5 : index
    %c0_607 = arith.constant 0 : index
    %c0_608 = arith.constant 0 : index
    %1211 = vector.load %arg2[%c0_605, %c5_606, %c0_607, %c0_608] : memref<1x28x4x4xf32, #tpu.memory_space<vmem>>, vector<1x1x4x4xf32>
    %1212 = vector.shape_cast %1211 : vector<1x1x4x4xf32> to vector<4x4xf32>
    %c14_609 = arith.constant 14 : index
    %1213 = memref.load %arg1[%c14_609] : memref<232xf32, #tpu.memory_space<smem>>
    %1214 = vector.broadcast %1213 : f32 to vector<4x4xf32>
    %1215 = arith.mulf %1212, %1214 : vector<4x4xf32>
    %1216 = arith.addf %1210, %1215 : vector<4x4xf32>
    %c0_610 = arith.constant 0 : index
    %c6_611 = arith.constant 6 : index
    %c0_612 = arith.constant 0 : index
    %c0_613 = arith.constant 0 : index
    %1217 = vector.load %arg2[%c0_610, %c6_611, %c0_612, %c0_613] : memref<1x28x4x4xf32, #tpu.memory_space<vmem>>, vector<1x1x4x4xf32>
    %1218 = vector.shape_cast %1217 : vector<1x1x4x4xf32> to vector<4x4xf32>
    %c22_614 = arith.constant 22 : index
    %1219 = memref.load %arg1[%c22_614] : memref<232xf32, #tpu.memory_space<smem>>
    %1220 = vector.broadcast %1219 : f32 to vector<4x4xf32>
    %1221 = arith.mulf %1218, %1220 : vector<4x4xf32>
    %1222 = arith.addf %1216, %1221 : vector<4x4xf32>
    %c0_615 = arith.constant 0 : index
    %c7_616 = arith.constant 7 : index
    %c0_617 = arith.constant 0 : index
    %c0_618 = arith.constant 0 : index
    %1223 = vector.load %arg2[%c0_615, %c7_616, %c0_617, %c0_618] : memref<1x28x4x4xf32, #tpu.memory_space<vmem>>, vector<1x1x4x4xf32>
    %1224 = vector.shape_cast %1223 : vector<1x1x4x4xf32> to vector<4x4xf32>
    %c30_619 = arith.constant 30 : index
    %1225 = memref.load %arg1[%c30_619] : memref<232xf32, #tpu.memory_space<smem>>
    %1226 = vector.broadcast %1225 : f32 to vector<4x4xf32>
    %1227 = arith.mulf %1224, %1226 : vector<4x4xf32>
    %1228 = arith.addf %1222, %1227 : vector<4x4xf32>
    %c38_620 = arith.constant 38 : index
    %1229 = memref.load %arg1[%c38_620] : memref<232xf32, #tpu.memory_space<smem>>
    %1230 = vector.broadcast %1229 : f32 to vector<4x4xf32>
    %1231 = arith.addf %1228, %1230 : vector<4x4xf32>
    %cst_621 = arith.constant 0.000000e+00 : f32
    %1232 = vector.broadcast %cst_621 : f32 to vector<4x4xf32>
    %1233 = arith.cmpf ogt, %1231, %1232 : vector<4x4xf32>
    %cst_622 = arith.constant 0.000000e+00 : f32
    %1234 = vector.broadcast %cst_622 : f32 to vector<4x4xf32>
    %1235 = arith.minimumf %1231, %1234 : vector<4x4xf32>
    %1236 = math.exp %1235 : vector<4x4xf32>
    %cst_623 = arith.constant 1.000000e+00 : f32
    %1237 = vector.broadcast %cst_623 : f32 to vector<4x4xf32>
    %1238 = arith.subf %1236, %1237 : vector<4x4xf32>
    %1239 = arith.select %1233, %1231, %1238 : vector<4x4xi1>, vector<4x4xf32>
    %c0_624 = arith.constant 0 : index
    %c8_625 = arith.constant 8 : index
    %c0_626 = arith.constant 0 : index
    %c0_627 = arith.constant 0 : index
    %1240 = vector.load %arg2[%c0_624, %c8_625, %c0_626, %c0_627] : memref<1x28x4x4xf32, #tpu.memory_space<vmem>>, vector<1x1x4x4xf32>
    %1241 = vector.shape_cast %1240 : vector<1x1x4x4xf32> to vector<4x4xf32>
    %c6_628 = arith.constant 6 : index
    %1242 = memref.load %arg1[%c6_628] : memref<232xf32, #tpu.memory_space<smem>>
    %1243 = vector.broadcast %1242 : f32 to vector<4x4xf32>
    %1244 = arith.mulf %1241, %1243 : vector<4x4xf32>
    %c0_629 = arith.constant 0 : index
    %c9_630 = arith.constant 9 : index
    %c0_631 = arith.constant 0 : index
    %c0_632 = arith.constant 0 : index
    %1245 = vector.load %arg2[%c0_629, %c9_630, %c0_631, %c0_632] : memref<1x28x4x4xf32, #tpu.memory_space<vmem>>, vector<1x1x4x4xf32>
    %1246 = vector.shape_cast %1245 : vector<1x1x4x4xf32> to vector<4x4xf32>
    %c14_633 = arith.constant 14 : index
    %1247 = memref.load %arg1[%c14_633] : memref<232xf32, #tpu.memory_space<smem>>
    %1248 = vector.broadcast %1247 : f32 to vector<4x4xf32>
    %1249 = arith.mulf %1246, %1248 : vector<4x4xf32>
    %1250 = arith.addf %1244, %1249 : vector<4x4xf32>
    %c0_634 = arith.constant 0 : index
    %c10_635 = arith.constant 10 : index
    %c0_636 = arith.constant 0 : index
    %c0_637 = arith.constant 0 : index
    %1251 = vector.load %arg2[%c0_634, %c10_635, %c0_636, %c0_637] : memref<1x28x4x4xf32, #tpu.memory_space<vmem>>, vector<1x1x4x4xf32>
    %1252 = vector.shape_cast %1251 : vector<1x1x4x4xf32> to vector<4x4xf32>
    %c22_638 = arith.constant 22 : index
    %1253 = memref.load %arg1[%c22_638] : memref<232xf32, #tpu.memory_space<smem>>
    %1254 = vector.broadcast %1253 : f32 to vector<4x4xf32>
    %1255 = arith.mulf %1252, %1254 : vector<4x4xf32>
    %1256 = arith.addf %1250, %1255 : vector<4x4xf32>
    %c0_639 = arith.constant 0 : index
    %c11_640 = arith.constant 11 : index
    %c0_641 = arith.constant 0 : index
    %c0_642 = arith.constant 0 : index
    %1257 = vector.load %arg2[%c0_639, %c11_640, %c0_641, %c0_642] : memref<1x28x4x4xf32, #tpu.memory_space<vmem>>, vector<1x1x4x4xf32>
    %1258 = vector.shape_cast %1257 : vector<1x1x4x4xf32> to vector<4x4xf32>
    %c30_643 = arith.constant 30 : index
    %1259 = memref.load %arg1[%c30_643] : memref<232xf32, #tpu.memory_space<smem>>
    %1260 = vector.broadcast %1259 : f32 to vector<4x4xf32>
    %1261 = arith.mulf %1258, %1260 : vector<4x4xf32>
    %1262 = arith.addf %1256, %1261 : vector<4x4xf32>
    %c38_644 = arith.constant 38 : index
    %1263 = memref.load %arg1[%c38_644] : memref<232xf32, #tpu.memory_space<smem>>
    %1264 = vector.broadcast %1263 : f32 to vector<4x4xf32>
    %1265 = arith.addf %1262, %1264 : vector<4x4xf32>
    %cst_645 = arith.constant 0.000000e+00 : f32
    %1266 = vector.broadcast %cst_645 : f32 to vector<4x4xf32>
    %1267 = arith.cmpf ogt, %1265, %1266 : vector<4x4xf32>
    %cst_646 = arith.constant 0.000000e+00 : f32
    %1268 = vector.broadcast %cst_646 : f32 to vector<4x4xf32>
    %1269 = arith.minimumf %1265, %1268 : vector<4x4xf32>
    %1270 = math.exp %1269 : vector<4x4xf32>
    %cst_647 = arith.constant 1.000000e+00 : f32
    %1271 = vector.broadcast %cst_647 : f32 to vector<4x4xf32>
    %1272 = arith.subf %1270, %1271 : vector<4x4xf32>
    %1273 = arith.select %1267, %1265, %1272 : vector<4x4xi1>, vector<4x4xf32>
    %c0_648 = arith.constant 0 : index
    %c12_649 = arith.constant 12 : index
    %c0_650 = arith.constant 0 : index
    %c0_651 = arith.constant 0 : index
    %1274 = vector.load %arg2[%c0_648, %c12_649, %c0_650, %c0_651] : memref<1x28x4x4xf32, #tpu.memory_space<vmem>>, vector<1x1x4x4xf32>
    %1275 = vector.shape_cast %1274 : vector<1x1x4x4xf32> to vector<4x4xf32>
    %c6_652 = arith.constant 6 : index
    %1276 = memref.load %arg1[%c6_652] : memref<232xf32, #tpu.memory_space<smem>>
    %1277 = vector.broadcast %1276 : f32 to vector<4x4xf32>
    %1278 = arith.mulf %1275, %1277 : vector<4x4xf32>
    %c0_653 = arith.constant 0 : index
    %c13_654 = arith.constant 13 : index
    %c0_655 = arith.constant 0 : index
    %c0_656 = arith.constant 0 : index
    %1279 = vector.load %arg2[%c0_653, %c13_654, %c0_655, %c0_656] : memref<1x28x4x4xf32, #tpu.memory_space<vmem>>, vector<1x1x4x4xf32>
    %1280 = vector.shape_cast %1279 : vector<1x1x4x4xf32> to vector<4x4xf32>
    %c14_657 = arith.constant 14 : index
    %1281 = memref.load %arg1[%c14_657] : memref<232xf32, #tpu.memory_space<smem>>
    %1282 = vector.broadcast %1281 : f32 to vector<4x4xf32>
    %1283 = arith.mulf %1280, %1282 : vector<4x4xf32>
    %1284 = arith.addf %1278, %1283 : vector<4x4xf32>
    %c0_658 = arith.constant 0 : index
    %c14_659 = arith.constant 14 : index
    %c0_660 = arith.constant 0 : index
    %c0_661 = arith.constant 0 : index
    %1285 = vector.load %arg2[%c0_658, %c14_659, %c0_660, %c0_661] : memref<1x28x4x4xf32, #tpu.memory_space<vmem>>, vector<1x1x4x4xf32>
    %1286 = vector.shape_cast %1285 : vector<1x1x4x4xf32> to vector<4x4xf32>
    %c22_662 = arith.constant 22 : index
    %1287 = memref.load %arg1[%c22_662] : memref<232xf32, #tpu.memory_space<smem>>
    %1288 = vector.broadcast %1287 : f32 to vector<4x4xf32>
    %1289 = arith.mulf %1286, %1288 : vector<4x4xf32>
    %1290 = arith.addf %1284, %1289 : vector<4x4xf32>
    %c0_663 = arith.constant 0 : index
    %c15_664 = arith.constant 15 : index
    %c0_665 = arith.constant 0 : index
    %c0_666 = arith.constant 0 : index
    %1291 = vector.load %arg2[%c0_663, %c15_664, %c0_665, %c0_666] : memref<1x28x4x4xf32, #tpu.memory_space<vmem>>, vector<1x1x4x4xf32>
    %1292 = vector.shape_cast %1291 : vector<1x1x4x4xf32> to vector<4x4xf32>
    %c30_667 = arith.constant 30 : index
    %1293 = memref.load %arg1[%c30_667] : memref<232xf32, #tpu.memory_space<smem>>
    %1294 = vector.broadcast %1293 : f32 to vector<4x4xf32>
    %1295 = arith.mulf %1292, %1294 : vector<4x4xf32>
    %1296 = arith.addf %1290, %1295 : vector<4x4xf32>
    %c38_668 = arith.constant 38 : index
    %1297 = memref.load %arg1[%c38_668] : memref<232xf32, #tpu.memory_space<smem>>
    %1298 = vector.broadcast %1297 : f32 to vector<4x4xf32>
    %1299 = arith.addf %1296, %1298 : vector<4x4xf32>
    %cst_669 = arith.constant 0.000000e+00 : f32
    %1300 = vector.broadcast %cst_669 : f32 to vector<4x4xf32>
    %1301 = arith.cmpf ogt, %1299, %1300 : vector<4x4xf32>
    %cst_670 = arith.constant 0.000000e+00 : f32
    %1302 = vector.broadcast %cst_670 : f32 to vector<4x4xf32>
    %1303 = arith.minimumf %1299, %1302 : vector<4x4xf32>
    %1304 = math.exp %1303 : vector<4x4xf32>
    %cst_671 = arith.constant 1.000000e+00 : f32
    %1305 = vector.broadcast %cst_671 : f32 to vector<4x4xf32>
    %1306 = arith.subf %1304, %1305 : vector<4x4xf32>
    %1307 = arith.select %1301, %1299, %1306 : vector<4x4xi1>, vector<4x4xf32>
    %c78 = arith.constant 78 : index
    %1308 = memref.load %arg1[%c78] : memref<232xf32, #tpu.memory_space<smem>>
    %1309 = vector.broadcast %1308 : f32 to vector<4x4xf32>
    %1310 = arith.mulf %1309, %1205 : vector<4x4xf32>
    %c86 = arith.constant 86 : index
    %1311 = memref.load %arg1[%c86] : memref<232xf32, #tpu.memory_space<smem>>
    %1312 = vector.broadcast %1311 : f32 to vector<4x4xf32>
    %1313 = arith.mulf %1312, %1239 : vector<4x4xf32>
    %1314 = arith.addf %1310, %1313 : vector<4x4xf32>
    %c70 = arith.constant 70 : index
    %1315 = memref.load %arg1[%c70] : memref<232xf32, #tpu.memory_space<smem>>
    %1316 = vector.extract_strided_slice %1239 {offsets = [0, 0], sizes = [4, 3], strides = [1, 1]} : vector<4x4xf32> to vector<4x3xf32>
    %1317 = tpu.concatenate %1, %1316 in 1 : vector<4x1xf32>, vector<4x3xf32> -> vector<4x4xf32>
    %1318 = vector.broadcast %1315 : f32 to vector<4x4xf32>
    %1319 = arith.mulf %1318, %1317 : vector<4x4xf32>
    %1320 = arith.addf %1314, %1319 : vector<4x4xf32>
    %c102 = arith.constant 102 : index
    %1321 = memref.load %arg1[%c102] : memref<232xf32, #tpu.memory_space<smem>>
    %1322 = vector.broadcast %1321 : f32 to vector<4x4xf32>
    %1323 = arith.mulf %1322, %1273 : vector<4x4xf32>
    %1324 = arith.addf %1320, %1323 : vector<4x4xf32>
    %c54 = arith.constant 54 : index
    %1325 = memref.load %arg1[%c54] : memref<232xf32, #tpu.memory_space<smem>>
    %1326 = vector.extract_strided_slice %1273 {offsets = [0, 0], sizes = [3, 4], strides = [1, 1]} : vector<4x4xf32> to vector<3x4xf32>
    %1327 = tpu.concatenate %0, %1326 in 0 : vector<1x4xf32>, vector<3x4xf32> -> vector<4x4xf32>
    %1328 = vector.broadcast %1325 : f32 to vector<4x4xf32>
    %1329 = arith.mulf %1328, %1327 : vector<4x4xf32>
    %1330 = arith.addf %1324, %1329 : vector<4x4xf32>
    %c110 = arith.constant 110 : index
    %1331 = memref.load %arg1[%c110] : memref<232xf32, #tpu.memory_space<smem>>
    %1332 = vector.broadcast %1331 : f32 to vector<4x4xf32>
    %1333 = arith.mulf %1332, %1307 : vector<4x4xf32>
    %1334 = arith.addf %1330, %1333 : vector<4x4xf32>
    %c94 = arith.constant 94 : index
    %1335 = memref.load %arg1[%c94] : memref<232xf32, #tpu.memory_space<smem>>
    %1336 = vector.extract_strided_slice %1307 {offsets = [0, 0], sizes = [4, 3], strides = [1, 1]} : vector<4x4xf32> to vector<4x3xf32>
    %1337 = tpu.concatenate %1, %1336 in 1 : vector<4x1xf32>, vector<4x3xf32> -> vector<4x4xf32>
    %1338 = vector.broadcast %1335 : f32 to vector<4x4xf32>
    %1339 = arith.mulf %1338, %1337 : vector<4x4xf32>
    %1340 = arith.addf %1334, %1339 : vector<4x4xf32>
    %1341 = vector.extract_strided_slice %1307 {offsets = [0, 0], sizes = [3, 4], strides = [1, 1]} : vector<4x4xf32> to vector<3x4xf32>
    %1342 = tpu.concatenate %0, %1341 in 0 : vector<1x4xf32>, vector<3x4xf32> -> vector<4x4xf32>
    %c62 = arith.constant 62 : index
    %1343 = memref.load %arg1[%c62] : memref<232xf32, #tpu.memory_space<smem>>
    %1344 = vector.broadcast %1343 : f32 to vector<4x4xf32>
    %1345 = arith.mulf %1344, %1342 : vector<4x4xf32>
    %1346 = arith.addf %1340, %1345 : vector<4x4xf32>
    %c46 = arith.constant 46 : index
    %1347 = memref.load %arg1[%c46] : memref<232xf32, #tpu.memory_space<smem>>
    %1348 = vector.extract_strided_slice %1342 {offsets = [0, 0], sizes = [4, 3], strides = [1, 1]} : vector<4x4xf32> to vector<4x3xf32>
    %1349 = tpu.concatenate %1, %1348 in 1 : vector<4x1xf32>, vector<4x3xf32> -> vector<4x4xf32>
    %1350 = vector.broadcast %1347 : f32 to vector<4x4xf32>
    %1351 = arith.mulf %1350, %1349 : vector<4x4xf32>
    %1352 = arith.addf %1346, %1351 : vector<4x4xf32>
    %c118 = arith.constant 118 : index
    %1353 = memref.load %arg1[%c118] : memref<232xf32, #tpu.memory_space<smem>>
    %1354 = vector.broadcast %1353 : f32 to vector<4x4xf32>
    %1355 = arith.addf %1352, %1354 : vector<4x4xf32>
    %cst_672 = arith.constant 0.000000e+00 : f32
    %1356 = vector.broadcast %cst_672 : f32 to vector<4x4xf32>
    %1357 = arith.cmpf ogt, %1355, %1356 : vector<4x4xf32>
    %cst_673 = arith.constant 0.000000e+00 : f32
    %1358 = vector.broadcast %cst_673 : f32 to vector<4x4xf32>
    %1359 = arith.minimumf %1355, %1358 : vector<4x4xf32>
    %1360 = math.exp %1359 : vector<4x4xf32>
    %cst_674 = arith.constant 1.000000e+00 : f32
    %1361 = vector.broadcast %cst_674 : f32 to vector<4x4xf32>
    %1362 = arith.subf %1360, %1361 : vector<4x4xf32>
    %1363 = arith.select %1357, %1355, %1362 : vector<4x4xi1>, vector<4x4xf32>
    %c6_675 = arith.constant 6 : index
    %c0_676 = arith.constant 0 : index
    %c0_677 = arith.constant 0 : index
    %1364 = vector.load %arg4[%c6_675, %c0_676, %c0_677] : memref<8x4x4xf32, #tpu.memory_space<vmem>>, vector<1x4x4xf32>
    %1365 = vector.shape_cast %1364 : vector<1x4x4xf32> to vector<4x4xf32>
    %1366 = vector.shape_cast %1363 : vector<4x4xf32> to vector<1x4x4xf32>
    tpu.vector_store %arg4[%c6_675, %c0_676, %c0_677], %1366 {strides = array<i32>} : memref<8x4x4xf32, #tpu.memory_space<vmem>>, vector<1x4x4xf32>,
    %c0_678 = arith.constant 0 : index
    %c0_679 = arith.constant 0 : index
    %c0_680 = arith.constant 0 : index
    %c0_681 = arith.constant 0 : index
    %1367 = vector.load %arg2[%c0_678, %c0_679, %c0_680, %c0_681] : memref<1x28x4x4xf32, #tpu.memory_space<vmem>>, vector<1x1x4x4xf32>
    %1368 = vector.shape_cast %1367 : vector<1x1x4x4xf32> to vector<4x4xf32>
    %c7_682 = arith.constant 7 : index
    %1369 = memref.load %arg1[%c7_682] : memref<232xf32, #tpu.memory_space<smem>>
    %1370 = vector.broadcast %1369 : f32 to vector<4x4xf32>
    %1371 = arith.mulf %1368, %1370 : vector<4x4xf32>
    %c0_683 = arith.constant 0 : index
    %c1_684 = arith.constant 1 : index
    %c0_685 = arith.constant 0 : index
    %c0_686 = arith.constant 0 : index
    %1372 = vector.load %arg2[%c0_683, %c1_684, %c0_685, %c0_686] : memref<1x28x4x4xf32, #tpu.memory_space<vmem>>, vector<1x1x4x4xf32>
    %1373 = vector.shape_cast %1372 : vector<1x1x4x4xf32> to vector<4x4xf32>
    %c15_687 = arith.constant 15 : index
    %1374 = memref.load %arg1[%c15_687] : memref<232xf32, #tpu.memory_space<smem>>
    %1375 = vector.broadcast %1374 : f32 to vector<4x4xf32>
    %1376 = arith.mulf %1373, %1375 : vector<4x4xf32>
    %1377 = arith.addf %1371, %1376 : vector<4x4xf32>
    %c0_688 = arith.constant 0 : index
    %c2_689 = arith.constant 2 : index
    %c0_690 = arith.constant 0 : index
    %c0_691 = arith.constant 0 : index
    %1378 = vector.load %arg2[%c0_688, %c2_689, %c0_690, %c0_691] : memref<1x28x4x4xf32, #tpu.memory_space<vmem>>, vector<1x1x4x4xf32>
    %1379 = vector.shape_cast %1378 : vector<1x1x4x4xf32> to vector<4x4xf32>
    %c23 = arith.constant 23 : index
    %1380 = memref.load %arg1[%c23] : memref<232xf32, #tpu.memory_space<smem>>
    %1381 = vector.broadcast %1380 : f32 to vector<4x4xf32>
    %1382 = arith.mulf %1379, %1381 : vector<4x4xf32>
    %1383 = arith.addf %1377, %1382 : vector<4x4xf32>
    %c0_692 = arith.constant 0 : index
    %c3_693 = arith.constant 3 : index
    %c0_694 = arith.constant 0 : index
    %c0_695 = arith.constant 0 : index
    %1384 = vector.load %arg2[%c0_692, %c3_693, %c0_694, %c0_695] : memref<1x28x4x4xf32, #tpu.memory_space<vmem>>, vector<1x1x4x4xf32>
    %1385 = vector.shape_cast %1384 : vector<1x1x4x4xf32> to vector<4x4xf32>
    %c31 = arith.constant 31 : index
    %1386 = memref.load %arg1[%c31] : memref<232xf32, #tpu.memory_space<smem>>
    %1387 = vector.broadcast %1386 : f32 to vector<4x4xf32>
    %1388 = arith.mulf %1385, %1387 : vector<4x4xf32>
    %1389 = arith.addf %1383, %1388 : vector<4x4xf32>
    %c39 = arith.constant 39 : index
    %1390 = memref.load %arg1[%c39] : memref<232xf32, #tpu.memory_space<smem>>
    %1391 = vector.broadcast %1390 : f32 to vector<4x4xf32>
    %1392 = arith.addf %1389, %1391 : vector<4x4xf32>
    %cst_696 = arith.constant 0.000000e+00 : f32
    %1393 = vector.broadcast %cst_696 : f32 to vector<4x4xf32>
    %1394 = arith.cmpf ogt, %1392, %1393 : vector<4x4xf32>
    %cst_697 = arith.constant 0.000000e+00 : f32
    %1395 = vector.broadcast %cst_697 : f32 to vector<4x4xf32>
    %1396 = arith.minimumf %1392, %1395 : vector<4x4xf32>
    %1397 = math.exp %1396 : vector<4x4xf32>
    %cst_698 = arith.constant 1.000000e+00 : f32
    %1398 = vector.broadcast %cst_698 : f32 to vector<4x4xf32>
    %1399 = arith.subf %1397, %1398 : vector<4x4xf32>
    %1400 = arith.select %1394, %1392, %1399 : vector<4x4xi1>, vector<4x4xf32>
    %c0_699 = arith.constant 0 : index
    %c4_700 = arith.constant 4 : index
    %c0_701 = arith.constant 0 : index
    %c0_702 = arith.constant 0 : index
    %1401 = vector.load %arg2[%c0_699, %c4_700, %c0_701, %c0_702] : memref<1x28x4x4xf32, #tpu.memory_space<vmem>>, vector<1x1x4x4xf32>
    %1402 = vector.shape_cast %1401 : vector<1x1x4x4xf32> to vector<4x4xf32>
    %c7_703 = arith.constant 7 : index
    %1403 = memref.load %arg1[%c7_703] : memref<232xf32, #tpu.memory_space<smem>>
    %1404 = vector.broadcast %1403 : f32 to vector<4x4xf32>
    %1405 = arith.mulf %1402, %1404 : vector<4x4xf32>
    %c0_704 = arith.constant 0 : index
    %c5_705 = arith.constant 5 : index
    %c0_706 = arith.constant 0 : index
    %c0_707 = arith.constant 0 : index
    %1406 = vector.load %arg2[%c0_704, %c5_705, %c0_706, %c0_707] : memref<1x28x4x4xf32, #tpu.memory_space<vmem>>, vector<1x1x4x4xf32>
    %1407 = vector.shape_cast %1406 : vector<1x1x4x4xf32> to vector<4x4xf32>
    %c15_708 = arith.constant 15 : index
    %1408 = memref.load %arg1[%c15_708] : memref<232xf32, #tpu.memory_space<smem>>
    %1409 = vector.broadcast %1408 : f32 to vector<4x4xf32>
    %1410 = arith.mulf %1407, %1409 : vector<4x4xf32>
    %1411 = arith.addf %1405, %1410 : vector<4x4xf32>
    %c0_709 = arith.constant 0 : index
    %c6_710 = arith.constant 6 : index
    %c0_711 = arith.constant 0 : index
    %c0_712 = arith.constant 0 : index
    %1412 = vector.load %arg2[%c0_709, %c6_710, %c0_711, %c0_712] : memref<1x28x4x4xf32, #tpu.memory_space<vmem>>, vector<1x1x4x4xf32>
    %1413 = vector.shape_cast %1412 : vector<1x1x4x4xf32> to vector<4x4xf32>
    %c23_713 = arith.constant 23 : index
    %1414 = memref.load %arg1[%c23_713] : memref<232xf32, #tpu.memory_space<smem>>
    %1415 = vector.broadcast %1414 : f32 to vector<4x4xf32>
    %1416 = arith.mulf %1413, %1415 : vector<4x4xf32>
    %1417 = arith.addf %1411, %1416 : vector<4x4xf32>
    %c0_714 = arith.constant 0 : index
    %c7_715 = arith.constant 7 : index
    %c0_716 = arith.constant 0 : index
    %c0_717 = arith.constant 0 : index
    %1418 = vector.load %arg2[%c0_714, %c7_715, %c0_716, %c0_717] : memref<1x28x4x4xf32, #tpu.memory_space<vmem>>, vector<1x1x4x4xf32>
    %1419 = vector.shape_cast %1418 : vector<1x1x4x4xf32> to vector<4x4xf32>
    %c31_718 = arith.constant 31 : index
    %1420 = memref.load %arg1[%c31_718] : memref<232xf32, #tpu.memory_space<smem>>
    %1421 = vector.broadcast %1420 : f32 to vector<4x4xf32>
    %1422 = arith.mulf %1419, %1421 : vector<4x4xf32>
    %1423 = arith.addf %1417, %1422 : vector<4x4xf32>
    %c39_719 = arith.constant 39 : index
    %1424 = memref.load %arg1[%c39_719] : memref<232xf32, #tpu.memory_space<smem>>
    %1425 = vector.broadcast %1424 : f32 to vector<4x4xf32>
    %1426 = arith.addf %1423, %1425 : vector<4x4xf32>
    %cst_720 = arith.constant 0.000000e+00 : f32
    %1427 = vector.broadcast %cst_720 : f32 to vector<4x4xf32>
    %1428 = arith.cmpf ogt, %1426, %1427 : vector<4x4xf32>
    %cst_721 = arith.constant 0.000000e+00 : f32
    %1429 = vector.broadcast %cst_721 : f32 to vector<4x4xf32>
    %1430 = arith.minimumf %1426, %1429 : vector<4x4xf32>
    %1431 = math.exp %1430 : vector<4x4xf32>
    %cst_722 = arith.constant 1.000000e+00 : f32
    %1432 = vector.broadcast %cst_722 : f32 to vector<4x4xf32>
    %1433 = arith.subf %1431, %1432 : vector<4x4xf32>
    %1434 = arith.select %1428, %1426, %1433 : vector<4x4xi1>, vector<4x4xf32>
    %c0_723 = arith.constant 0 : index
    %c8_724 = arith.constant 8 : index
    %c0_725 = arith.constant 0 : index
    %c0_726 = arith.constant 0 : index
    %1435 = vector.load %arg2[%c0_723, %c8_724, %c0_725, %c0_726] : memref<1x28x4x4xf32, #tpu.memory_space<vmem>>, vector<1x1x4x4xf32>
    %1436 = vector.shape_cast %1435 : vector<1x1x4x4xf32> to vector<4x4xf32>
    %c7_727 = arith.constant 7 : index
    %1437 = memref.load %arg1[%c7_727] : memref<232xf32, #tpu.memory_space<smem>>
    %1438 = vector.broadcast %1437 : f32 to vector<4x4xf32>
    %1439 = arith.mulf %1436, %1438 : vector<4x4xf32>
    %c0_728 = arith.constant 0 : index
    %c9_729 = arith.constant 9 : index
    %c0_730 = arith.constant 0 : index
    %c0_731 = arith.constant 0 : index
    %1440 = vector.load %arg2[%c0_728, %c9_729, %c0_730, %c0_731] : memref<1x28x4x4xf32, #tpu.memory_space<vmem>>, vector<1x1x4x4xf32>
    %1441 = vector.shape_cast %1440 : vector<1x1x4x4xf32> to vector<4x4xf32>
    %c15_732 = arith.constant 15 : index
    %1442 = memref.load %arg1[%c15_732] : memref<232xf32, #tpu.memory_space<smem>>
    %1443 = vector.broadcast %1442 : f32 to vector<4x4xf32>
    %1444 = arith.mulf %1441, %1443 : vector<4x4xf32>
    %1445 = arith.addf %1439, %1444 : vector<4x4xf32>
    %c0_733 = arith.constant 0 : index
    %c10_734 = arith.constant 10 : index
    %c0_735 = arith.constant 0 : index
    %c0_736 = arith.constant 0 : index
    %1446 = vector.load %arg2[%c0_733, %c10_734, %c0_735, %c0_736] : memref<1x28x4x4xf32, #tpu.memory_space<vmem>>, vector<1x1x4x4xf32>
    %1447 = vector.shape_cast %1446 : vector<1x1x4x4xf32> to vector<4x4xf32>
    %c23_737 = arith.constant 23 : index
    %1448 = memref.load %arg1[%c23_737] : memref<232xf32, #tpu.memory_space<smem>>
    %1449 = vector.broadcast %1448 : f32 to vector<4x4xf32>
    %1450 = arith.mulf %1447, %1449 : vector<4x4xf32>
    %1451 = arith.addf %1445, %1450 : vector<4x4xf32>
    %c0_738 = arith.constant 0 : index
    %c11_739 = arith.constant 11 : index
    %c0_740 = arith.constant 0 : index
    %c0_741 = arith.constant 0 : index
    %1452 = vector.load %arg2[%c0_738, %c11_739, %c0_740, %c0_741] : memref<1x28x4x4xf32, #tpu.memory_space<vmem>>, vector<1x1x4x4xf32>
    %1453 = vector.shape_cast %1452 : vector<1x1x4x4xf32> to vector<4x4xf32>
    %c31_742 = arith.constant 31 : index
    %1454 = memref.load %arg1[%c31_742] : memref<232xf32, #tpu.memory_space<smem>>
    %1455 = vector.broadcast %1454 : f32 to vector<4x4xf32>
    %1456 = arith.mulf %1453, %1455 : vector<4x4xf32>
    %1457 = arith.addf %1451, %1456 : vector<4x4xf32>
    %c39_743 = arith.constant 39 : index
    %1458 = memref.load %arg1[%c39_743] : memref<232xf32, #tpu.memory_space<smem>>
    %1459 = vector.broadcast %1458 : f32 to vector<4x4xf32>
    %1460 = arith.addf %1457, %1459 : vector<4x4xf32>
    %cst_744 = arith.constant 0.000000e+00 : f32
    %1461 = vector.broadcast %cst_744 : f32 to vector<4x4xf32>
    %1462 = arith.cmpf ogt, %1460, %1461 : vector<4x4xf32>
    %cst_745 = arith.constant 0.000000e+00 : f32
    %1463 = vector.broadcast %cst_745 : f32 to vector<4x4xf32>
    %1464 = arith.minimumf %1460, %1463 : vector<4x4xf32>
    %1465 = math.exp %1464 : vector<4x4xf32>
    %cst_746 = arith.constant 1.000000e+00 : f32
    %1466 = vector.broadcast %cst_746 : f32 to vector<4x4xf32>
    %1467 = arith.subf %1465, %1466 : vector<4x4xf32>
    %1468 = arith.select %1462, %1460, %1467 : vector<4x4xi1>, vector<4x4xf32>
    %c0_747 = arith.constant 0 : index
    %c12_748 = arith.constant 12 : index
    %c0_749 = arith.constant 0 : index
    %c0_750 = arith.constant 0 : index
    %1469 = vector.load %arg2[%c0_747, %c12_748, %c0_749, %c0_750] : memref<1x28x4x4xf32, #tpu.memory_space<vmem>>, vector<1x1x4x4xf32>
    %1470 = vector.shape_cast %1469 : vector<1x1x4x4xf32> to vector<4x4xf32>
    %c7_751 = arith.constant 7 : index
    %1471 = memref.load %arg1[%c7_751] : memref<232xf32, #tpu.memory_space<smem>>
    %1472 = vector.broadcast %1471 : f32 to vector<4x4xf32>
    %1473 = arith.mulf %1470, %1472 : vector<4x4xf32>
    %c0_752 = arith.constant 0 : index
    %c13_753 = arith.constant 13 : index
    %c0_754 = arith.constant 0 : index
    %c0_755 = arith.constant 0 : index
    %1474 = vector.load %arg2[%c0_752, %c13_753, %c0_754, %c0_755] : memref<1x28x4x4xf32, #tpu.memory_space<vmem>>, vector<1x1x4x4xf32>
    %1475 = vector.shape_cast %1474 : vector<1x1x4x4xf32> to vector<4x4xf32>
    %c15_756 = arith.constant 15 : index
    %1476 = memref.load %arg1[%c15_756] : memref<232xf32, #tpu.memory_space<smem>>
    %1477 = vector.broadcast %1476 : f32 to vector<4x4xf32>
    %1478 = arith.mulf %1475, %1477 : vector<4x4xf32>
    %1479 = arith.addf %1473, %1478 : vector<4x4xf32>
    %c0_757 = arith.constant 0 : index
    %c14_758 = arith.constant 14 : index
    %c0_759 = arith.constant 0 : index
    %c0_760 = arith.constant 0 : index
    %1480 = vector.load %arg2[%c0_757, %c14_758, %c0_759, %c0_760] : memref<1x28x4x4xf32, #tpu.memory_space<vmem>>, vector<1x1x4x4xf32>
    %1481 = vector.shape_cast %1480 : vector<1x1x4x4xf32> to vector<4x4xf32>
    %c23_761 = arith.constant 23 : index
    %1482 = memref.load %arg1[%c23_761] : memref<232xf32, #tpu.memory_space<smem>>
    %1483 = vector.broadcast %1482 : f32 to vector<4x4xf32>
    %1484 = arith.mulf %1481, %1483 : vector<4x4xf32>
    %1485 = arith.addf %1479, %1484 : vector<4x4xf32>
    %c0_762 = arith.constant 0 : index
    %c15_763 = arith.constant 15 : index
    %c0_764 = arith.constant 0 : index
    %c0_765 = arith.constant 0 : index
    %1486 = vector.load %arg2[%c0_762, %c15_763, %c0_764, %c0_765] : memref<1x28x4x4xf32, #tpu.memory_space<vmem>>, vector<1x1x4x4xf32>
    %1487 = vector.shape_cast %1486 : vector<1x1x4x4xf32> to vector<4x4xf32>
    %c31_766 = arith.constant 31 : index
    %1488 = memref.load %arg1[%c31_766] : memref<232xf32, #tpu.memory_space<smem>>
    %1489 = vector.broadcast %1488 : f32 to vector<4x4xf32>
    %1490 = arith.mulf %1487, %1489 : vector<4x4xf32>
    %1491 = arith.addf %1485, %1490 : vector<4x4xf32>
    %c39_767 = arith.constant 39 : index
    %1492 = memref.load %arg1[%c39_767] : memref<232xf32, #tpu.memory_space<smem>>
    %1493 = vector.broadcast %1492 : f32 to vector<4x4xf32>
    %1494 = arith.addf %1491, %1493 : vector<4x4xf32>
    %cst_768 = arith.constant 0.000000e+00 : f32
    %1495 = vector.broadcast %cst_768 : f32 to vector<4x4xf32>
    %1496 = arith.cmpf ogt, %1494, %1495 : vector<4x4xf32>
    %cst_769 = arith.constant 0.000000e+00 : f32
    %1497 = vector.broadcast %cst_769 : f32 to vector<4x4xf32>
    %1498 = arith.minimumf %1494, %1497 : vector<4x4xf32>
    %1499 = math.exp %1498 : vector<4x4xf32>
    %cst_770 = arith.constant 1.000000e+00 : f32
    %1500 = vector.broadcast %cst_770 : f32 to vector<4x4xf32>
    %1501 = arith.subf %1499, %1500 : vector<4x4xf32>
    %1502 = arith.select %1496, %1494, %1501 : vector<4x4xi1>, vector<4x4xf32>
    %c79 = arith.constant 79 : index
    %1503 = memref.load %arg1[%c79] : memref<232xf32, #tpu.memory_space<smem>>
    %1504 = vector.broadcast %1503 : f32 to vector<4x4xf32>
    %1505 = arith.mulf %1504, %1400 : vector<4x4xf32>
    %c87 = arith.constant 87 : index
    %1506 = memref.load %arg1[%c87] : memref<232xf32, #tpu.memory_space<smem>>
    %1507 = vector.broadcast %1506 : f32 to vector<4x4xf32>
    %1508 = arith.mulf %1507, %1434 : vector<4x4xf32>
    %1509 = arith.addf %1505, %1508 : vector<4x4xf32>
    %c71 = arith.constant 71 : index
    %1510 = memref.load %arg1[%c71] : memref<232xf32, #tpu.memory_space<smem>>
    %1511 = vector.extract_strided_slice %1434 {offsets = [0, 0], sizes = [4, 3], strides = [1, 1]} : vector<4x4xf32> to vector<4x3xf32>
    %1512 = tpu.concatenate %1, %1511 in 1 : vector<4x1xf32>, vector<4x3xf32> -> vector<4x4xf32>
    %1513 = vector.broadcast %1510 : f32 to vector<4x4xf32>
    %1514 = arith.mulf %1513, %1512 : vector<4x4xf32>
    %1515 = arith.addf %1509, %1514 : vector<4x4xf32>
    %c103 = arith.constant 103 : index
    %1516 = memref.load %arg1[%c103] : memref<232xf32, #tpu.memory_space<smem>>
    %1517 = vector.broadcast %1516 : f32 to vector<4x4xf32>
    %1518 = arith.mulf %1517, %1468 : vector<4x4xf32>
    %1519 = arith.addf %1515, %1518 : vector<4x4xf32>
    %c55 = arith.constant 55 : index
    %1520 = memref.load %arg1[%c55] : memref<232xf32, #tpu.memory_space<smem>>
    %1521 = vector.extract_strided_slice %1468 {offsets = [0, 0], sizes = [3, 4], strides = [1, 1]} : vector<4x4xf32> to vector<3x4xf32>
    %1522 = tpu.concatenate %0, %1521 in 0 : vector<1x4xf32>, vector<3x4xf32> -> vector<4x4xf32>
    %1523 = vector.broadcast %1520 : f32 to vector<4x4xf32>
    %1524 = arith.mulf %1523, %1522 : vector<4x4xf32>
    %1525 = arith.addf %1519, %1524 : vector<4x4xf32>
    %c111 = arith.constant 111 : index
    %1526 = memref.load %arg1[%c111] : memref<232xf32, #tpu.memory_space<smem>>
    %1527 = vector.broadcast %1526 : f32 to vector<4x4xf32>
    %1528 = arith.mulf %1527, %1502 : vector<4x4xf32>
    %1529 = arith.addf %1525, %1528 : vector<4x4xf32>
    %c95 = arith.constant 95 : index
    %1530 = memref.load %arg1[%c95] : memref<232xf32, #tpu.memory_space<smem>>
    %1531 = vector.extract_strided_slice %1502 {offsets = [0, 0], sizes = [4, 3], strides = [1, 1]} : vector<4x4xf32> to vector<4x3xf32>
    %1532 = tpu.concatenate %1, %1531 in 1 : vector<4x1xf32>, vector<4x3xf32> -> vector<4x4xf32>
    %1533 = vector.broadcast %1530 : f32 to vector<4x4xf32>
    %1534 = arith.mulf %1533, %1532 : vector<4x4xf32>
    %1535 = arith.addf %1529, %1534 : vector<4x4xf32>
    %1536 = vector.extract_strided_slice %1502 {offsets = [0, 0], sizes = [3, 4], strides = [1, 1]} : vector<4x4xf32> to vector<3x4xf32>
    %1537 = tpu.concatenate %0, %1536 in 0 : vector<1x4xf32>, vector<3x4xf32> -> vector<4x4xf32>
    %c63 = arith.constant 63 : index
    %1538 = memref.load %arg1[%c63] : memref<232xf32, #tpu.memory_space<smem>>
    %1539 = vector.broadcast %1538 : f32 to vector<4x4xf32>
    %1540 = arith.mulf %1539, %1537 : vector<4x4xf32>
    %1541 = arith.addf %1535, %1540 : vector<4x4xf32>
    %c47 = arith.constant 47 : index
    %1542 = memref.load %arg1[%c47] : memref<232xf32, #tpu.memory_space<smem>>
    %1543 = vector.extract_strided_slice %1537 {offsets = [0, 0], sizes = [4, 3], strides = [1, 1]} : vector<4x4xf32> to vector<4x3xf32>
    %1544 = tpu.concatenate %1, %1543 in 1 : vector<4x1xf32>, vector<4x3xf32> -> vector<4x4xf32>
    %1545 = vector.broadcast %1542 : f32 to vector<4x4xf32>
    %1546 = arith.mulf %1545, %1544 : vector<4x4xf32>
    %1547 = arith.addf %1541, %1546 : vector<4x4xf32>
    %c119 = arith.constant 119 : index
    %1548 = memref.load %arg1[%c119] : memref<232xf32, #tpu.memory_space<smem>>
    %1549 = vector.broadcast %1548 : f32 to vector<4x4xf32>
    %1550 = arith.addf %1547, %1549 : vector<4x4xf32>
    %cst_771 = arith.constant 0.000000e+00 : f32
    %1551 = vector.broadcast %cst_771 : f32 to vector<4x4xf32>
    %1552 = arith.cmpf ogt, %1550, %1551 : vector<4x4xf32>
    %cst_772 = arith.constant 0.000000e+00 : f32
    %1553 = vector.broadcast %cst_772 : f32 to vector<4x4xf32>
    %1554 = arith.minimumf %1550, %1553 : vector<4x4xf32>
    %1555 = math.exp %1554 : vector<4x4xf32>
    %cst_773 = arith.constant 1.000000e+00 : f32
    %1556 = vector.broadcast %cst_773 : f32 to vector<4x4xf32>
    %1557 = arith.subf %1555, %1556 : vector<4x4xf32>
    %1558 = arith.select %1552, %1550, %1557 : vector<4x4xi1>, vector<4x4xf32>
    %c7_774 = arith.constant 7 : index
    %c0_775 = arith.constant 0 : index
    %c0_776 = arith.constant 0 : index
    %1559 = vector.load %arg4[%c7_774, %c0_775, %c0_776] : memref<8x4x4xf32, #tpu.memory_space<vmem>>, vector<1x4x4xf32>
    %1560 = vector.shape_cast %1559 : vector<1x4x4xf32> to vector<4x4xf32>
    %1561 = vector.shape_cast %1558 : vector<4x4xf32> to vector<1x4x4xf32>
    tpu.vector_store %arg4[%c7_774, %c0_775, %c0_776], %1561 {strides = array<i32>} : memref<8x4x4xf32, #tpu.memory_space<vmem>>, vector<1x4x4xf32>,
    %c0_777 = arith.constant 0 : index
    %c0_778 = arith.constant 0 : index
    %c0_779 = arith.constant 0 : index
    %c0_780 = arith.constant 0 : index
    %1562 = vector.load %arg2[%c0_777, %c0_778, %c0_779, %c0_780] : memref<1x28x4x4xf32, #tpu.memory_space<vmem>>, vector<1x1x4x4xf32>
    %1563 = vector.shape_cast %1562 : vector<1x1x4x4xf32> to vector<4x4xf32>
    %c0_781 = arith.constant 0 : index
    %c16_782 = arith.constant 16 : index
    %c0_783 = arith.constant 0 : index
    %c0_784 = arith.constant 0 : index
    %1564 = vector.load %arg2[%c0_781, %c16_782, %c0_783, %c0_784] : memref<1x28x4x4xf32, #tpu.memory_space<vmem>>, vector<1x1x4x4xf32>
    %1565 = vector.shape_cast %1564 : vector<1x1x4x4xf32> to vector<4x4xf32>
    %1566 = arith.maximumf %1563, %1565 : vector<4x4xf32>
    %c0_785 = arith.constant 0 : index
    %c20_786 = arith.constant 20 : index
    %c0_787 = arith.constant 0 : index
    %c0_788 = arith.constant 0 : index
    %1567 = vector.load %arg2[%c0_785, %c20_786, %c0_787, %c0_788] : memref<1x28x4x4xf32, #tpu.memory_space<vmem>>, vector<1x1x4x4xf32>
    %1568 = vector.shape_cast %1567 : vector<1x1x4x4xf32> to vector<4x4xf32>
    %c0_789 = arith.constant 0 : index
    %c24_790 = arith.constant 24 : index
    %c0_791 = arith.constant 0 : index
    %c0_792 = arith.constant 0 : index
    %1569 = vector.load %arg2[%c0_789, %c24_790, %c0_791, %c0_792] : memref<1x28x4x4xf32, #tpu.memory_space<vmem>>, vector<1x1x4x4xf32>
    %1570 = vector.shape_cast %1569 : vector<1x1x4x4xf32> to vector<4x4xf32>
    %1571 = arith.maximumf %1568, %1570 : vector<4x4xf32>
    %1572 = arith.maximumf %1566, %1571 : vector<4x4xf32>
    %c0_793 = arith.constant 0 : index
    %c1_794 = arith.constant 1 : index
    %c0_795 = arith.constant 0 : index
    %c0_796 = arith.constant 0 : index
    %1573 = vector.load %arg2[%c0_793, %c1_794, %c0_795, %c0_796] : memref<1x28x4x4xf32, #tpu.memory_space<vmem>>, vector<1x1x4x4xf32>
    %1574 = vector.shape_cast %1573 : vector<1x1x4x4xf32> to vector<4x4xf32>
    %c0_797 = arith.constant 0 : index
    %c17_798 = arith.constant 17 : index
    %c0_799 = arith.constant 0 : index
    %c0_800 = arith.constant 0 : index
    %1575 = vector.load %arg2[%c0_797, %c17_798, %c0_799, %c0_800] : memref<1x28x4x4xf32, #tpu.memory_space<vmem>>, vector<1x1x4x4xf32>
    %1576 = vector.shape_cast %1575 : vector<1x1x4x4xf32> to vector<4x4xf32>
    %1577 = arith.maximumf %1574, %1576 : vector<4x4xf32>
    %c0_801 = arith.constant 0 : index
    %c21_802 = arith.constant 21 : index
    %c0_803 = arith.constant 0 : index
    %c0_804 = arith.constant 0 : index
    %1578 = vector.load %arg2[%c0_801, %c21_802, %c0_803, %c0_804] : memref<1x28x4x4xf32, #tpu.memory_space<vmem>>, vector<1x1x4x4xf32>
    %1579 = vector.shape_cast %1578 : vector<1x1x4x4xf32> to vector<4x4xf32>
    %c0_805 = arith.constant 0 : index
    %c25_806 = arith.constant 25 : index
    %c0_807 = arith.constant 0 : index
    %c0_808 = arith.constant 0 : index
    %1580 = vector.load %arg2[%c0_805, %c25_806, %c0_807, %c0_808] : memref<1x28x4x4xf32, #tpu.memory_space<vmem>>, vector<1x1x4x4xf32>
    %1581 = vector.shape_cast %1580 : vector<1x1x4x4xf32> to vector<4x4xf32>
    %1582 = arith.maximumf %1579, %1581 : vector<4x4xf32>
    %1583 = arith.maximumf %1577, %1582 : vector<4x4xf32>
    %c0_809 = arith.constant 0 : index
    %c2_810 = arith.constant 2 : index
    %c0_811 = arith.constant 0 : index
    %c0_812 = arith.constant 0 : index
    %1584 = vector.load %arg2[%c0_809, %c2_810, %c0_811, %c0_812] : memref<1x28x4x4xf32, #tpu.memory_space<vmem>>, vector<1x1x4x4xf32>
    %1585 = vector.shape_cast %1584 : vector<1x1x4x4xf32> to vector<4x4xf32>
    %c0_813 = arith.constant 0 : index
    %c18_814 = arith.constant 18 : index
    %c0_815 = arith.constant 0 : index
    %c0_816 = arith.constant 0 : index
    %1586 = vector.load %arg2[%c0_813, %c18_814, %c0_815, %c0_816] : memref<1x28x4x4xf32, #tpu.memory_space<vmem>>, vector<1x1x4x4xf32>
    %1587 = vector.shape_cast %1586 : vector<1x1x4x4xf32> to vector<4x4xf32>
    %1588 = arith.maximumf %1585, %1587 : vector<4x4xf32>
    %c0_817 = arith.constant 0 : index
    %c22_818 = arith.constant 22 : index
    %c0_819 = arith.constant 0 : index
    %c0_820 = arith.constant 0 : index
    %1589 = vector.load %arg2[%c0_817, %c22_818, %c0_819, %c0_820] : memref<1x28x4x4xf32, #tpu.memory_space<vmem>>, vector<1x1x4x4xf32>
    %1590 = vector.shape_cast %1589 : vector<1x1x4x4xf32> to vector<4x4xf32>
    %c0_821 = arith.constant 0 : index
    %c26_822 = arith.constant 26 : index
    %c0_823 = arith.constant 0 : index
    %c0_824 = arith.constant 0 : index
    %1591 = vector.load %arg2[%c0_821, %c26_822, %c0_823, %c0_824] : memref<1x28x4x4xf32, #tpu.memory_space<vmem>>, vector<1x1x4x4xf32>
    %1592 = vector.shape_cast %1591 : vector<1x1x4x4xf32> to vector<4x4xf32>
    %1593 = arith.maximumf %1590, %1592 : vector<4x4xf32>
    %1594 = arith.maximumf %1588, %1593 : vector<4x4xf32>
    %c0_825 = arith.constant 0 : index
    %c3_826 = arith.constant 3 : index
    %c0_827 = arith.constant 0 : index
    %c0_828 = arith.constant 0 : index
    %1595 = vector.load %arg2[%c0_825, %c3_826, %c0_827, %c0_828] : memref<1x28x4x4xf32, #tpu.memory_space<vmem>>, vector<1x1x4x4xf32>
    %1596 = vector.shape_cast %1595 : vector<1x1x4x4xf32> to vector<4x4xf32>
    %c0_829 = arith.constant 0 : index
    %c19_830 = arith.constant 19 : index
    %c0_831 = arith.constant 0 : index
    %c0_832 = arith.constant 0 : index
    %1597 = vector.load %arg2[%c0_829, %c19_830, %c0_831, %c0_832] : memref<1x28x4x4xf32, #tpu.memory_space<vmem>>, vector<1x1x4x4xf32>
    %1598 = vector.shape_cast %1597 : vector<1x1x4x4xf32> to vector<4x4xf32>
    %1599 = arith.maximumf %1596, %1598 : vector<4x4xf32>
    %c0_833 = arith.constant 0 : index
    %c23_834 = arith.constant 23 : index
    %c0_835 = arith.constant 0 : index
    %c0_836 = arith.constant 0 : index
    %1600 = vector.load %arg2[%c0_833, %c23_834, %c0_835, %c0_836] : memref<1x28x4x4xf32, #tpu.memory_space<vmem>>, vector<1x1x4x4xf32>
    %1601 = vector.shape_cast %1600 : vector<1x1x4x4xf32> to vector<4x4xf32>
    %c0_837 = arith.constant 0 : index
    %c27_838 = arith.constant 27 : index
    %c0_839 = arith.constant 0 : index
    %c0_840 = arith.constant 0 : index
    %1602 = vector.load %arg2[%c0_837, %c27_838, %c0_839, %c0_840] : memref<1x28x4x4xf32, #tpu.memory_space<vmem>>, vector<1x1x4x4xf32>
    %1603 = vector.shape_cast %1602 : vector<1x1x4x4xf32> to vector<4x4xf32>
    %1604 = arith.maximumf %1601, %1603 : vector<4x4xf32>
    %1605 = arith.maximumf %1599, %1604 : vector<4x4xf32>
    %c0_841 = arith.constant 0 : index
    %c0_842 = arith.constant 0 : index
    %c0_843 = arith.constant 0 : index
    %1606 = vector.load %arg4[%c0_841, %c0_842, %c0_843] : memref<8x4x4xf32, #tpu.memory_space<vmem>>, vector<1x4x4xf32>
    %1607 = vector.shape_cast %1606 : vector<1x4x4xf32> to vector<4x4xf32>
    %c120 = arith.constant 120 : index
    %1608 = memref.load %arg1[%c120] : memref<232xf32, #tpu.memory_space<smem>>
    %1609 = vector.broadcast %1608 : f32 to vector<4x4xf32>
    %1610 = arith.mulf %1607, %1609 : vector<4x4xf32>
    %c1_844 = arith.constant 1 : index
    %c0_845 = arith.constant 0 : index
    %c0_846 = arith.constant 0 : index
    %1611 = vector.load %arg4[%c1_844, %c0_845, %c0_846] : memref<8x4x4xf32, #tpu.memory_space<vmem>>, vector<1x4x4xf32>
    %1612 = vector.shape_cast %1611 : vector<1x4x4xf32> to vector<4x4xf32>
    %c128 = arith.constant 128 : index
    %1613 = memref.load %arg1[%c128] : memref<232xf32, #tpu.memory_space<smem>>
    %1614 = vector.broadcast %1613 : f32 to vector<4x4xf32>
    %1615 = arith.mulf %1612, %1614 : vector<4x4xf32>
    %1616 = arith.addf %1610, %1615 : vector<4x4xf32>
    %c2_847 = arith.constant 2 : index
    %c0_848 = arith.constant 0 : index
    %c0_849 = arith.constant 0 : index
    %1617 = vector.load %arg4[%c2_847, %c0_848, %c0_849] : memref<8x4x4xf32, #tpu.memory_space<vmem>>, vector<1x4x4xf32>
    %1618 = vector.shape_cast %1617 : vector<1x4x4xf32> to vector<4x4xf32>
    %c136 = arith.constant 136 : index
    %1619 = memref.load %arg1[%c136] : memref<232xf32, #tpu.memory_space<smem>>
    %1620 = vector.broadcast %1619 : f32 to vector<4x4xf32>
    %1621 = arith.mulf %1618, %1620 : vector<4x4xf32>
    %1622 = arith.addf %1616, %1621 : vector<4x4xf32>
    %c3_850 = arith.constant 3 : index
    %c0_851 = arith.constant 0 : index
    %c0_852 = arith.constant 0 : index
    %1623 = vector.load %arg4[%c3_850, %c0_851, %c0_852] : memref<8x4x4xf32, #tpu.memory_space<vmem>>, vector<1x4x4xf32>
    %1624 = vector.shape_cast %1623 : vector<1x4x4xf32> to vector<4x4xf32>
    %c144 = arith.constant 144 : index
    %1625 = memref.load %arg1[%c144] : memref<232xf32, #tpu.memory_space<smem>>
    %1626 = vector.broadcast %1625 : f32 to vector<4x4xf32>
    %1627 = arith.mulf %1624, %1626 : vector<4x4xf32>
    %1628 = arith.addf %1622, %1627 : vector<4x4xf32>
    %c4_853 = arith.constant 4 : index
    %c0_854 = arith.constant 0 : index
    %c0_855 = arith.constant 0 : index
    %1629 = vector.load %arg4[%c4_853, %c0_854, %c0_855] : memref<8x4x4xf32, #tpu.memory_space<vmem>>, vector<1x4x4xf32>
    %1630 = vector.shape_cast %1629 : vector<1x4x4xf32> to vector<4x4xf32>
    %c152 = arith.constant 152 : index
    %1631 = memref.load %arg1[%c152] : memref<232xf32, #tpu.memory_space<smem>>
    %1632 = vector.broadcast %1631 : f32 to vector<4x4xf32>
    %1633 = arith.mulf %1630, %1632 : vector<4x4xf32>
    %1634 = arith.addf %1628, %1633 : vector<4x4xf32>
    %c5_856 = arith.constant 5 : index
    %c0_857 = arith.constant 0 : index
    %c0_858 = arith.constant 0 : index
    %1635 = vector.load %arg4[%c5_856, %c0_857, %c0_858] : memref<8x4x4xf32, #tpu.memory_space<vmem>>, vector<1x4x4xf32>
    %1636 = vector.shape_cast %1635 : vector<1x4x4xf32> to vector<4x4xf32>
    %c160 = arith.constant 160 : index
    %1637 = memref.load %arg1[%c160] : memref<232xf32, #tpu.memory_space<smem>>
    %1638 = vector.broadcast %1637 : f32 to vector<4x4xf32>
    %1639 = arith.mulf %1636, %1638 : vector<4x4xf32>
    %1640 = arith.addf %1634, %1639 : vector<4x4xf32>
    %c6_859 = arith.constant 6 : index
    %c0_860 = arith.constant 0 : index
    %c0_861 = arith.constant 0 : index
    %1641 = vector.load %arg4[%c6_859, %c0_860, %c0_861] : memref<8x4x4xf32, #tpu.memory_space<vmem>>, vector<1x4x4xf32>
    %1642 = vector.shape_cast %1641 : vector<1x4x4xf32> to vector<4x4xf32>
    %c168 = arith.constant 168 : index
    %1643 = memref.load %arg1[%c168] : memref<232xf32, #tpu.memory_space<smem>>
    %1644 = vector.broadcast %1643 : f32 to vector<4x4xf32>
    %1645 = arith.mulf %1642, %1644 : vector<4x4xf32>
    %1646 = arith.addf %1640, %1645 : vector<4x4xf32>
    %c7_862 = arith.constant 7 : index
    %c0_863 = arith.constant 0 : index
    %c0_864 = arith.constant 0 : index
    %1647 = vector.load %arg4[%c7_862, %c0_863, %c0_864] : memref<8x4x4xf32, #tpu.memory_space<vmem>>, vector<1x4x4xf32>
    %1648 = vector.shape_cast %1647 : vector<1x4x4xf32> to vector<4x4xf32>
    %c176 = arith.constant 176 : index
    %1649 = memref.load %arg1[%c176] : memref<232xf32, #tpu.memory_space<smem>>
    %1650 = vector.broadcast %1649 : f32 to vector<4x4xf32>
    %1651 = arith.mulf %1648, %1650 : vector<4x4xf32>
    %1652 = arith.addf %1646, %1651 : vector<4x4xf32>
    %c192 = arith.constant 192 : index
    %1653 = memref.load %arg1[%c192] : memref<232xf32, #tpu.memory_space<smem>>
    %1654 = vector.broadcast %1653 : f32 to vector<4x4xf32>
    %1655 = arith.mulf %1572, %1654 : vector<4x4xf32>
    %1656 = arith.addf %1652, %1655 : vector<4x4xf32>
    %c200 = arith.constant 200 : index
    %1657 = memref.load %arg1[%c200] : memref<232xf32, #tpu.memory_space<smem>>
    %1658 = vector.broadcast %1657 : f32 to vector<4x4xf32>
    %1659 = arith.mulf %1583, %1658 : vector<4x4xf32>
    %1660 = arith.addf %1656, %1659 : vector<4x4xf32>
    %c208 = arith.constant 208 : index
    %1661 = memref.load %arg1[%c208] : memref<232xf32, #tpu.memory_space<smem>>
    %1662 = vector.broadcast %1661 : f32 to vector<4x4xf32>
    %1663 = arith.mulf %1594, %1662 : vector<4x4xf32>
    %1664 = arith.addf %1660, %1663 : vector<4x4xf32>
    %c216 = arith.constant 216 : index
    %1665 = memref.load %arg1[%c216] : memref<232xf32, #tpu.memory_space<smem>>
    %1666 = vector.broadcast %1665 : f32 to vector<4x4xf32>
    %1667 = arith.mulf %1605, %1666 : vector<4x4xf32>
    %1668 = arith.addf %1664, %1667 : vector<4x4xf32>
    %c184 = arith.constant 184 : index
    %1669 = memref.load %arg1[%c184] : memref<232xf32, #tpu.memory_space<smem>>
    %c224 = arith.constant 224 : index
    %1670 = memref.load %arg1[%c224] : memref<232xf32, #tpu.memory_space<smem>>
    %1671 = arith.addf %1669, %1670 : f32
    %1672 = vector.broadcast %1671 : f32 to vector<4x4xf32>
    %1673 = arith.addf %1668, %1672 : vector<4x4xf32>
    %cst_865 = arith.constant 0.000000e+00 : f32
    %1674 = vector.broadcast %cst_865 : f32 to vector<4x4xf32>
    %1675 = arith.cmpf ogt, %1673, %1674 : vector<4x4xf32>
    %cst_866 = arith.constant 0.000000e+00 : f32
    %1676 = vector.broadcast %cst_866 : f32 to vector<4x4xf32>
    %1677 = arith.minimumf %1673, %1676 : vector<4x4xf32>
    %1678 = math.exp %1677 : vector<4x4xf32>
    %cst_867 = arith.constant 1.000000e+00 : f32
    %1679 = vector.broadcast %cst_867 : f32 to vector<4x4xf32>
    %1680 = arith.subf %1678, %1679 : vector<4x4xf32>
    %1681 = arith.select %1675, %1673, %1680 : vector<4x4xi1>, vector<4x4xf32>
    %c0_868 = arith.constant 0 : index
    %c0_869 = arith.constant 0 : index
    %c0_870 = arith.constant 0 : index
    %c0_871 = arith.constant 0 : index
    %1682 = vector.load %arg3[%c0_868, %c0_869, %c0_870, %c0_871] : memref<1x8x4x4xf32, #tpu.memory_space<vmem>>, vector<1x1x4x4xf32>
    %1683 = vector.shape_cast %1682 : vector<1x1x4x4xf32> to vector<4x4xf32>
    %1684 = vector.shape_cast %1681 : vector<4x4xf32> to vector<1x1x4x4xf32>
    tpu.vector_store %arg3[%c0_868, %c0_869, %c0_870, %c0_871], %1684 {strides = array<i32>} : memref<1x8x4x4xf32, #tpu.memory_space<vmem>>, vector<1x1x4x4xf32>,
    %c0_872 = arith.constant 0 : index
    %c0_873 = arith.constant 0 : index
    %c0_874 = arith.constant 0 : index
    %1685 = vector.load %arg4[%c0_872, %c0_873, %c0_874] : memref<8x4x4xf32, #tpu.memory_space<vmem>>, vector<1x4x4xf32>
    %1686 = vector.shape_cast %1685 : vector<1x4x4xf32> to vector<4x4xf32>
    %c121 = arith.constant 121 : index
    %1687 = memref.load %arg1[%c121] : memref<232xf32, #tpu.memory_space<smem>>
    %1688 = vector.broadcast %1687 : f32 to vector<4x4xf32>
    %1689 = arith.mulf %1686, %1688 : vector<4x4xf32>
    %c1_875 = arith.constant 1 : index
    %c0_876 = arith.constant 0 : index
    %c0_877 = arith.constant 0 : index
    %1690 = vector.load %arg4[%c1_875, %c0_876, %c0_877] : memref<8x4x4xf32, #tpu.memory_space<vmem>>, vector<1x4x4xf32>
    %1691 = vector.shape_cast %1690 : vector<1x4x4xf32> to vector<4x4xf32>
    %c129 = arith.constant 129 : index
    %1692 = memref.load %arg1[%c129] : memref<232xf32, #tpu.memory_space<smem>>
    %1693 = vector.broadcast %1692 : f32 to vector<4x4xf32>
    %1694 = arith.mulf %1691, %1693 : vector<4x4xf32>
    %1695 = arith.addf %1689, %1694 : vector<4x4xf32>
    %c2_878 = arith.constant 2 : index
    %c0_879 = arith.constant 0 : index
    %c0_880 = arith.constant 0 : index
    %1696 = vector.load %arg4[%c2_878, %c0_879, %c0_880] : memref<8x4x4xf32, #tpu.memory_space<vmem>>, vector<1x4x4xf32>
    %1697 = vector.shape_cast %1696 : vector<1x4x4xf32> to vector<4x4xf32>
    %c137 = arith.constant 137 : index
    %1698 = memref.load %arg1[%c137] : memref<232xf32, #tpu.memory_space<smem>>
    %1699 = vector.broadcast %1698 : f32 to vector<4x4xf32>
    %1700 = arith.mulf %1697, %1699 : vector<4x4xf32>
    %1701 = arith.addf %1695, %1700 : vector<4x4xf32>
    %c3_881 = arith.constant 3 : index
    %c0_882 = arith.constant 0 : index
    %c0_883 = arith.constant 0 : index
    %1702 = vector.load %arg4[%c3_881, %c0_882, %c0_883] : memref<8x4x4xf32, #tpu.memory_space<vmem>>, vector<1x4x4xf32>
    %1703 = vector.shape_cast %1702 : vector<1x4x4xf32> to vector<4x4xf32>
    %c145 = arith.constant 145 : index
    %1704 = memref.load %arg1[%c145] : memref<232xf32, #tpu.memory_space<smem>>
    %1705 = vector.broadcast %1704 : f32 to vector<4x4xf32>
    %1706 = arith.mulf %1703, %1705 : vector<4x4xf32>
    %1707 = arith.addf %1701, %1706 : vector<4x4xf32>
    %c4_884 = arith.constant 4 : index
    %c0_885 = arith.constant 0 : index
    %c0_886 = arith.constant 0 : index
    %1708 = vector.load %arg4[%c4_884, %c0_885, %c0_886] : memref<8x4x4xf32, #tpu.memory_space<vmem>>, vector<1x4x4xf32>
    %1709 = vector.shape_cast %1708 : vector<1x4x4xf32> to vector<4x4xf32>
    %c153 = arith.constant 153 : index
    %1710 = memref.load %arg1[%c153] : memref<232xf32, #tpu.memory_space<smem>>
    %1711 = vector.broadcast %1710 : f32 to vector<4x4xf32>
    %1712 = arith.mulf %1709, %1711 : vector<4x4xf32>
    %1713 = arith.addf %1707, %1712 : vector<4x4xf32>
    %c5_887 = arith.constant 5 : index
    %c0_888 = arith.constant 0 : index
    %c0_889 = arith.constant 0 : index
    %1714 = vector.load %arg4[%c5_887, %c0_888, %c0_889] : memref<8x4x4xf32, #tpu.memory_space<vmem>>, vector<1x4x4xf32>
    %1715 = vector.shape_cast %1714 : vector<1x4x4xf32> to vector<4x4xf32>
    %c161 = arith.constant 161 : index
    %1716 = memref.load %arg1[%c161] : memref<232xf32, #tpu.memory_space<smem>>
    %1717 = vector.broadcast %1716 : f32 to vector<4x4xf32>
    %1718 = arith.mulf %1715, %1717 : vector<4x4xf32>
    %1719 = arith.addf %1713, %1718 : vector<4x4xf32>
    %c6_890 = arith.constant 6 : index
    %c0_891 = arith.constant 0 : index
    %c0_892 = arith.constant 0 : index
    %1720 = vector.load %arg4[%c6_890, %c0_891, %c0_892] : memref<8x4x4xf32, #tpu.memory_space<vmem>>, vector<1x4x4xf32>
    %1721 = vector.shape_cast %1720 : vector<1x4x4xf32> to vector<4x4xf32>
    %c169 = arith.constant 169 : index
    %1722 = memref.load %arg1[%c169] : memref<232xf32, #tpu.memory_space<smem>>
    %1723 = vector.broadcast %1722 : f32 to vector<4x4xf32>
    %1724 = arith.mulf %1721, %1723 : vector<4x4xf32>
    %1725 = arith.addf %1719, %1724 : vector<4x4xf32>
    %c7_893 = arith.constant 7 : index
    %c0_894 = arith.constant 0 : index
    %c0_895 = arith.constant 0 : index
    %1726 = vector.load %arg4[%c7_893, %c0_894, %c0_895] : memref<8x4x4xf32, #tpu.memory_space<vmem>>, vector<1x4x4xf32>
    %1727 = vector.shape_cast %1726 : vector<1x4x4xf32> to vector<4x4xf32>
    %c177 = arith.constant 177 : index
    %1728 = memref.load %arg1[%c177] : memref<232xf32, #tpu.memory_space<smem>>
    %1729 = vector.broadcast %1728 : f32 to vector<4x4xf32>
    %1730 = arith.mulf %1727, %1729 : vector<4x4xf32>
    %1731 = arith.addf %1725, %1730 : vector<4x4xf32>
    %c193 = arith.constant 193 : index
    %1732 = memref.load %arg1[%c193] : memref<232xf32, #tpu.memory_space<smem>>
    %1733 = vector.broadcast %1732 : f32 to vector<4x4xf32>
    %1734 = arith.mulf %1572, %1733 : vector<4x4xf32>
    %1735 = arith.addf %1731, %1734 : vector<4x4xf32>
    %c201 = arith.constant 201 : index
    %1736 = memref.load %arg1[%c201] : memref<232xf32, #tpu.memory_space<smem>>
    %1737 = vector.broadcast %1736 : f32 to vector<4x4xf32>
    %1738 = arith.mulf %1583, %1737 : vector<4x4xf32>
    %1739 = arith.addf %1735, %1738 : vector<4x4xf32>
    %c209 = arith.constant 209 : index
    %1740 = memref.load %arg1[%c209] : memref<232xf32, #tpu.memory_space<smem>>
    %1741 = vector.broadcast %1740 : f32 to vector<4x4xf32>
    %1742 = arith.mulf %1594, %1741 : vector<4x4xf32>
    %1743 = arith.addf %1739, %1742 : vector<4x4xf32>
    %c217 = arith.constant 217 : index
    %1744 = memref.load %arg1[%c217] : memref<232xf32, #tpu.memory_space<smem>>
    %1745 = vector.broadcast %1744 : f32 to vector<4x4xf32>
    %1746 = arith.mulf %1605, %1745 : vector<4x4xf32>
    %1747 = arith.addf %1743, %1746 : vector<4x4xf32>
    %c185 = arith.constant 185 : index
    %1748 = memref.load %arg1[%c185] : memref<232xf32, #tpu.memory_space<smem>>
    %c225 = arith.constant 225 : index
    %1749 = memref.load %arg1[%c225] : memref<232xf32, #tpu.memory_space<smem>>
    %1750 = arith.addf %1748, %1749 : f32
    %1751 = vector.broadcast %1750 : f32 to vector<4x4xf32>
    %1752 = arith.addf %1747, %1751 : vector<4x4xf32>
    %cst_896 = arith.constant 0.000000e+00 : f32
    %1753 = vector.broadcast %cst_896 : f32 to vector<4x4xf32>
    %1754 = arith.cmpf ogt, %1752, %1753 : vector<4x4xf32>
    %cst_897 = arith.constant 0.000000e+00 : f32
    %1755 = vector.broadcast %cst_897 : f32 to vector<4x4xf32>
    %1756 = arith.minimumf %1752, %1755 : vector<4x4xf32>
    %1757 = math.exp %1756 : vector<4x4xf32>
    %cst_898 = arith.constant 1.000000e+00 : f32
    %1758 = vector.broadcast %cst_898 : f32 to vector<4x4xf32>
    %1759 = arith.subf %1757, %1758 : vector<4x4xf32>
    %1760 = arith.select %1754, %1752, %1759 : vector<4x4xi1>, vector<4x4xf32>
    %c0_899 = arith.constant 0 : index
    %c1_900 = arith.constant 1 : index
    %c0_901 = arith.constant 0 : index
    %c0_902 = arith.constant 0 : index
    %1761 = vector.load %arg3[%c0_899, %c1_900, %c0_901, %c0_902] : memref<1x8x4x4xf32, #tpu.memory_space<vmem>>, vector<1x1x4x4xf32>
    %1762 = vector.shape_cast %1761 : vector<1x1x4x4xf32> to vector<4x4xf32>
    %1763 = vector.shape_cast %1760 : vector<4x4xf32> to vector<1x1x4x4xf32>
    tpu.vector_store %arg3[%c0_899, %c1_900, %c0_901, %c0_902], %1763 {strides = array<i32>} : memref<1x8x4x4xf32, #tpu.memory_space<vmem>>, vector<1x1x4x4xf32>,
    %c0_903 = arith.constant 0 : index
    %c0_904 = arith.constant 0 : index
    %c0_905 = arith.constant 0 : index
    %1764 = vector.load %arg4[%c0_903, %c0_904, %c0_905] : memref<8x4x4xf32, #tpu.memory_space<vmem>>, vector<1x4x4xf32>
    %1765 = vector.shape_cast %1764 : vector<1x4x4xf32> to vector<4x4xf32>
    %c122 = arith.constant 122 : index
    %1766 = memref.load %arg1[%c122] : memref<232xf32, #tpu.memory_space<smem>>
    %1767 = vector.broadcast %1766 : f32 to vector<4x4xf32>
    %1768 = arith.mulf %1765, %1767 : vector<4x4xf32>
    %c1_906 = arith.constant 1 : index
    %c0_907 = arith.constant 0 : index
    %c0_908 = arith.constant 0 : index
    %1769 = vector.load %arg4[%c1_906, %c0_907, %c0_908] : memref<8x4x4xf32, #tpu.memory_space<vmem>>, vector<1x4x4xf32>
    %1770 = vector.shape_cast %1769 : vector<1x4x4xf32> to vector<4x4xf32>
    %c130 = arith.constant 130 : index
    %1771 = memref.load %arg1[%c130] : memref<232xf32, #tpu.memory_space<smem>>
    %1772 = vector.broadcast %1771 : f32 to vector<4x4xf32>
    %1773 = arith.mulf %1770, %1772 : vector<4x4xf32>
    %1774 = arith.addf %1768, %1773 : vector<4x4xf32>
    %c2_909 = arith.constant 2 : index
    %c0_910 = arith.constant 0 : index
    %c0_911 = arith.constant 0 : index
    %1775 = vector.load %arg4[%c2_909, %c0_910, %c0_911] : memref<8x4x4xf32, #tpu.memory_space<vmem>>, vector<1x4x4xf32>
    %1776 = vector.shape_cast %1775 : vector<1x4x4xf32> to vector<4x4xf32>
    %c138 = arith.constant 138 : index
    %1777 = memref.load %arg1[%c138] : memref<232xf32, #tpu.memory_space<smem>>
    %1778 = vector.broadcast %1777 : f32 to vector<4x4xf32>
    %1779 = arith.mulf %1776, %1778 : vector<4x4xf32>
    %1780 = arith.addf %1774, %1779 : vector<4x4xf32>
    %c3_912 = arith.constant 3 : index
    %c0_913 = arith.constant 0 : index
    %c0_914 = arith.constant 0 : index
    %1781 = vector.load %arg4[%c3_912, %c0_913, %c0_914] : memref<8x4x4xf32, #tpu.memory_space<vmem>>, vector<1x4x4xf32>
    %1782 = vector.shape_cast %1781 : vector<1x4x4xf32> to vector<4x4xf32>
    %c146 = arith.constant 146 : index
    %1783 = memref.load %arg1[%c146] : memref<232xf32, #tpu.memory_space<smem>>
    %1784 = vector.broadcast %1783 : f32 to vector<4x4xf32>
    %1785 = arith.mulf %1782, %1784 : vector<4x4xf32>
    %1786 = arith.addf %1780, %1785 : vector<4x4xf32>
    %c4_915 = arith.constant 4 : index
    %c0_916 = arith.constant 0 : index
    %c0_917 = arith.constant 0 : index
    %1787 = vector.load %arg4[%c4_915, %c0_916, %c0_917] : memref<8x4x4xf32, #tpu.memory_space<vmem>>, vector<1x4x4xf32>
    %1788 = vector.shape_cast %1787 : vector<1x4x4xf32> to vector<4x4xf32>
    %c154 = arith.constant 154 : index
    %1789 = memref.load %arg1[%c154] : memref<232xf32, #tpu.memory_space<smem>>
    %1790 = vector.broadcast %1789 : f32 to vector<4x4xf32>
    %1791 = arith.mulf %1788, %1790 : vector<4x4xf32>
    %1792 = arith.addf %1786, %1791 : vector<4x4xf32>
    %c5_918 = arith.constant 5 : index
    %c0_919 = arith.constant 0 : index
    %c0_920 = arith.constant 0 : index
    %1793 = vector.load %arg4[%c5_918, %c0_919, %c0_920] : memref<8x4x4xf32, #tpu.memory_space<vmem>>, vector<1x4x4xf32>
    %1794 = vector.shape_cast %1793 : vector<1x4x4xf32> to vector<4x4xf32>
    %c162 = arith.constant 162 : index
    %1795 = memref.load %arg1[%c162] : memref<232xf32, #tpu.memory_space<smem>>
    %1796 = vector.broadcast %1795 : f32 to vector<4x4xf32>
    %1797 = arith.mulf %1794, %1796 : vector<4x4xf32>
    %1798 = arith.addf %1792, %1797 : vector<4x4xf32>
    %c6_921 = arith.constant 6 : index
    %c0_922 = arith.constant 0 : index
    %c0_923 = arith.constant 0 : index
    %1799 = vector.load %arg4[%c6_921, %c0_922, %c0_923] : memref<8x4x4xf32, #tpu.memory_space<vmem>>, vector<1x4x4xf32>
    %1800 = vector.shape_cast %1799 : vector<1x4x4xf32> to vector<4x4xf32>
    %c170 = arith.constant 170 : index
    %1801 = memref.load %arg1[%c170] : memref<232xf32, #tpu.memory_space<smem>>
    %1802 = vector.broadcast %1801 : f32 to vector<4x4xf32>
    %1803 = arith.mulf %1800, %1802 : vector<4x4xf32>
    %1804 = arith.addf %1798, %1803 : vector<4x4xf32>
    %c7_924 = arith.constant 7 : index
    %c0_925 = arith.constant 0 : index
    %c0_926 = arith.constant 0 : index
    %1805 = vector.load %arg4[%c7_924, %c0_925, %c0_926] : memref<8x4x4xf32, #tpu.memory_space<vmem>>, vector<1x4x4xf32>
    %1806 = vector.shape_cast %1805 : vector<1x4x4xf32> to vector<4x4xf32>
    %c178 = arith.constant 178 : index
    %1807 = memref.load %arg1[%c178] : memref<232xf32, #tpu.memory_space<smem>>
    %1808 = vector.broadcast %1807 : f32 to vector<4x4xf32>
    %1809 = arith.mulf %1806, %1808 : vector<4x4xf32>
    %1810 = arith.addf %1804, %1809 : vector<4x4xf32>
    %c194 = arith.constant 194 : index
    %1811 = memref.load %arg1[%c194] : memref<232xf32, #tpu.memory_space<smem>>
    %1812 = vector.broadcast %1811 : f32 to vector<4x4xf32>
    %1813 = arith.mulf %1572, %1812 : vector<4x4xf32>
    %1814 = arith.addf %1810, %1813 : vector<4x4xf32>
    %c202 = arith.constant 202 : index
    %1815 = memref.load %arg1[%c202] : memref<232xf32, #tpu.memory_space<smem>>
    %1816 = vector.broadcast %1815 : f32 to vector<4x4xf32>
    %1817 = arith.mulf %1583, %1816 : vector<4x4xf32>
    %1818 = arith.addf %1814, %1817 : vector<4x4xf32>
    %c210 = arith.constant 210 : index
    %1819 = memref.load %arg1[%c210] : memref<232xf32, #tpu.memory_space<smem>>
    %1820 = vector.broadcast %1819 : f32 to vector<4x4xf32>
    %1821 = arith.mulf %1594, %1820 : vector<4x4xf32>
    %1822 = arith.addf %1818, %1821 : vector<4x4xf32>
    %c218 = arith.constant 218 : index
    %1823 = memref.load %arg1[%c218] : memref<232xf32, #tpu.memory_space<smem>>
    %1824 = vector.broadcast %1823 : f32 to vector<4x4xf32>
    %1825 = arith.mulf %1605, %1824 : vector<4x4xf32>
    %1826 = arith.addf %1822, %1825 : vector<4x4xf32>
    %c186 = arith.constant 186 : index
    %1827 = memref.load %arg1[%c186] : memref<232xf32, #tpu.memory_space<smem>>
    %c226 = arith.constant 226 : index
    %1828 = memref.load %arg1[%c226] : memref<232xf32, #tpu.memory_space<smem>>
    %1829 = arith.addf %1827, %1828 : f32
    %1830 = vector.broadcast %1829 : f32 to vector<4x4xf32>
    %1831 = arith.addf %1826, %1830 : vector<4x4xf32>
    %cst_927 = arith.constant 0.000000e+00 : f32
    %1832 = vector.broadcast %cst_927 : f32 to vector<4x4xf32>
    %1833 = arith.cmpf ogt, %1831, %1832 : vector<4x4xf32>
    %cst_928 = arith.constant 0.000000e+00 : f32
    %1834 = vector.broadcast %cst_928 : f32 to vector<4x4xf32>
    %1835 = arith.minimumf %1831, %1834 : vector<4x4xf32>
    %1836 = math.exp %1835 : vector<4x4xf32>
    %cst_929 = arith.constant 1.000000e+00 : f32
    %1837 = vector.broadcast %cst_929 : f32 to vector<4x4xf32>
    %1838 = arith.subf %1836, %1837 : vector<4x4xf32>
    %1839 = arith.select %1833, %1831, %1838 : vector<4x4xi1>, vector<4x4xf32>
    %c0_930 = arith.constant 0 : index
    %c2_931 = arith.constant 2 : index
    %c0_932 = arith.constant 0 : index
    %c0_933 = arith.constant 0 : index
    %1840 = vector.load %arg3[%c0_930, %c2_931, %c0_932, %c0_933] : memref<1x8x4x4xf32, #tpu.memory_space<vmem>>, vector<1x1x4x4xf32>
    %1841 = vector.shape_cast %1840 : vector<1x1x4x4xf32> to vector<4x4xf32>
    %1842 = vector.shape_cast %1839 : vector<4x4xf32> to vector<1x1x4x4xf32>
    tpu.vector_store %arg3[%c0_930, %c2_931, %c0_932, %c0_933], %1842 {strides = array<i32>} : memref<1x8x4x4xf32, #tpu.memory_space<vmem>>, vector<1x1x4x4xf32>,
    %c0_934 = arith.constant 0 : index
    %c0_935 = arith.constant 0 : index
    %c0_936 = arith.constant 0 : index
    %1843 = vector.load %arg4[%c0_934, %c0_935, %c0_936] : memref<8x4x4xf32, #tpu.memory_space<vmem>>, vector<1x4x4xf32>
    %1844 = vector.shape_cast %1843 : vector<1x4x4xf32> to vector<4x4xf32>
    %c123 = arith.constant 123 : index
    %1845 = memref.load %arg1[%c123] : memref<232xf32, #tpu.memory_space<smem>>
    %1846 = vector.broadcast %1845 : f32 to vector<4x4xf32>
    %1847 = arith.mulf %1844, %1846 : vector<4x4xf32>
    %c1_937 = arith.constant 1 : index
    %c0_938 = arith.constant 0 : index
    %c0_939 = arith.constant 0 : index
    %1848 = vector.load %arg4[%c1_937, %c0_938, %c0_939] : memref<8x4x4xf32, #tpu.memory_space<vmem>>, vector<1x4x4xf32>
    %1849 = vector.shape_cast %1848 : vector<1x4x4xf32> to vector<4x4xf32>
    %c131 = arith.constant 131 : index
    %1850 = memref.load %arg1[%c131] : memref<232xf32, #tpu.memory_space<smem>>
    %1851 = vector.broadcast %1850 : f32 to vector<4x4xf32>
    %1852 = arith.mulf %1849, %1851 : vector<4x4xf32>
    %1853 = arith.addf %1847, %1852 : vector<4x4xf32>
    %c2_940 = arith.constant 2 : index
    %c0_941 = arith.constant 0 : index
    %c0_942 = arith.constant 0 : index
    %1854 = vector.load %arg4[%c2_940, %c0_941, %c0_942] : memref<8x4x4xf32, #tpu.memory_space<vmem>>, vector<1x4x4xf32>
    %1855 = vector.shape_cast %1854 : vector<1x4x4xf32> to vector<4x4xf32>
    %c139 = arith.constant 139 : index
    %1856 = memref.load %arg1[%c139] : memref<232xf32, #tpu.memory_space<smem>>
    %1857 = vector.broadcast %1856 : f32 to vector<4x4xf32>
    %1858 = arith.mulf %1855, %1857 : vector<4x4xf32>
    %1859 = arith.addf %1853, %1858 : vector<4x4xf32>
    %c3_943 = arith.constant 3 : index
    %c0_944 = arith.constant 0 : index
    %c0_945 = arith.constant 0 : index
    %1860 = vector.load %arg4[%c3_943, %c0_944, %c0_945] : memref<8x4x4xf32, #tpu.memory_space<vmem>>, vector<1x4x4xf32>
    %1861 = vector.shape_cast %1860 : vector<1x4x4xf32> to vector<4x4xf32>
    %c147 = arith.constant 147 : index
    %1862 = memref.load %arg1[%c147] : memref<232xf32, #tpu.memory_space<smem>>
    %1863 = vector.broadcast %1862 : f32 to vector<4x4xf32>
    %1864 = arith.mulf %1861, %1863 : vector<4x4xf32>
    %1865 = arith.addf %1859, %1864 : vector<4x4xf32>
    %c4_946 = arith.constant 4 : index
    %c0_947 = arith.constant 0 : index
    %c0_948 = arith.constant 0 : index
    %1866 = vector.load %arg4[%c4_946, %c0_947, %c0_948] : memref<8x4x4xf32, #tpu.memory_space<vmem>>, vector<1x4x4xf32>
    %1867 = vector.shape_cast %1866 : vector<1x4x4xf32> to vector<4x4xf32>
    %c155 = arith.constant 155 : index
    %1868 = memref.load %arg1[%c155] : memref<232xf32, #tpu.memory_space<smem>>
    %1869 = vector.broadcast %1868 : f32 to vector<4x4xf32>
    %1870 = arith.mulf %1867, %1869 : vector<4x4xf32>
    %1871 = arith.addf %1865, %1870 : vector<4x4xf32>
    %c5_949 = arith.constant 5 : index
    %c0_950 = arith.constant 0 : index
    %c0_951 = arith.constant 0 : index
    %1872 = vector.load %arg4[%c5_949, %c0_950, %c0_951] : memref<8x4x4xf32, #tpu.memory_space<vmem>>, vector<1x4x4xf32>
    %1873 = vector.shape_cast %1872 : vector<1x4x4xf32> to vector<4x4xf32>
    %c163 = arith.constant 163 : index
    %1874 = memref.load %arg1[%c163] : memref<232xf32, #tpu.memory_space<smem>>
    %1875 = vector.broadcast %1874 : f32 to vector<4x4xf32>
    %1876 = arith.mulf %1873, %1875 : vector<4x4xf32>
    %1877 = arith.addf %1871, %1876 : vector<4x4xf32>
    %c6_952 = arith.constant 6 : index
    %c0_953 = arith.constant 0 : index
    %c0_954 = arith.constant 0 : index
    %1878 = vector.load %arg4[%c6_952, %c0_953, %c0_954] : memref<8x4x4xf32, #tpu.memory_space<vmem>>, vector<1x4x4xf32>
    %1879 = vector.shape_cast %1878 : vector<1x4x4xf32> to vector<4x4xf32>
    %c171 = arith.constant 171 : index
    %1880 = memref.load %arg1[%c171] : memref<232xf32, #tpu.memory_space<smem>>
    %1881 = vector.broadcast %1880 : f32 to vector<4x4xf32>
    %1882 = arith.mulf %1879, %1881 : vector<4x4xf32>
    %1883 = arith.addf %1877, %1882 : vector<4x4xf32>
    %c7_955 = arith.constant 7 : index
    %c0_956 = arith.constant 0 : index
    %c0_957 = arith.constant 0 : index
    %1884 = vector.load %arg4[%c7_955, %c0_956, %c0_957] : memref<8x4x4xf32, #tpu.memory_space<vmem>>, vector<1x4x4xf32>
    %1885 = vector.shape_cast %1884 : vector<1x4x4xf32> to vector<4x4xf32>
    %c179 = arith.constant 179 : index
    %1886 = memref.load %arg1[%c179] : memref<232xf32, #tpu.memory_space<smem>>
    %1887 = vector.broadcast %1886 : f32 to vector<4x4xf32>
    %1888 = arith.mulf %1885, %1887 : vector<4x4xf32>
    %1889 = arith.addf %1883, %1888 : vector<4x4xf32>
    %c195 = arith.constant 195 : index
    %1890 = memref.load %arg1[%c195] : memref<232xf32, #tpu.memory_space<smem>>
    %1891 = vector.broadcast %1890 : f32 to vector<4x4xf32>
    %1892 = arith.mulf %1572, %1891 : vector<4x4xf32>
    %1893 = arith.addf %1889, %1892 : vector<4x4xf32>
    %c203 = arith.constant 203 : index
    %1894 = memref.load %arg1[%c203] : memref<232xf32, #tpu.memory_space<smem>>
    %1895 = vector.broadcast %1894 : f32 to vector<4x4xf32>
    %1896 = arith.mulf %1583, %1895 : vector<4x4xf32>
    %1897 = arith.addf %1893, %1896 : vector<4x4xf32>
    %c211 = arith.constant 211 : index
    %1898 = memref.load %arg1[%c211] : memref<232xf32, #tpu.memory_space<smem>>
    %1899 = vector.broadcast %1898 : f32 to vector<4x4xf32>
    %1900 = arith.mulf %1594, %1899 : vector<4x4xf32>
    %1901 = arith.addf %1897, %1900 : vector<4x4xf32>
    %c219 = arith.constant 219 : index
    %1902 = memref.load %arg1[%c219] : memref<232xf32, #tpu.memory_space<smem>>
    %1903 = vector.broadcast %1902 : f32 to vector<4x4xf32>
    %1904 = arith.mulf %1605, %1903 : vector<4x4xf32>
    %1905 = arith.addf %1901, %1904 : vector<4x4xf32>
    %c187 = arith.constant 187 : index
    %1906 = memref.load %arg1[%c187] : memref<232xf32, #tpu.memory_space<smem>>
    %c227 = arith.constant 227 : index
    %1907 = memref.load %arg1[%c227] : memref<232xf32, #tpu.memory_space<smem>>
    %1908 = arith.addf %1906, %1907 : f32
    %1909 = vector.broadcast %1908 : f32 to vector<4x4xf32>
    %1910 = arith.addf %1905, %1909 : vector<4x4xf32>
    %cst_958 = arith.constant 0.000000e+00 : f32
    %1911 = vector.broadcast %cst_958 : f32 to vector<4x4xf32>
    %1912 = arith.cmpf ogt, %1910, %1911 : vector<4x4xf32>
    %cst_959 = arith.constant 0.000000e+00 : f32
    %1913 = vector.broadcast %cst_959 : f32 to vector<4x4xf32>
    %1914 = arith.minimumf %1910, %1913 : vector<4x4xf32>
    %1915 = math.exp %1914 : vector<4x4xf32>
    %cst_960 = arith.constant 1.000000e+00 : f32
    %1916 = vector.broadcast %cst_960 : f32 to vector<4x4xf32>
    %1917 = arith.subf %1915, %1916 : vector<4x4xf32>
    %1918 = arith.select %1912, %1910, %1917 : vector<4x4xi1>, vector<4x4xf32>
    %c0_961 = arith.constant 0 : index
    %c3_962 = arith.constant 3 : index
    %c0_963 = arith.constant 0 : index
    %c0_964 = arith.constant 0 : index
    %1919 = vector.load %arg3[%c0_961, %c3_962, %c0_963, %c0_964] : memref<1x8x4x4xf32, #tpu.memory_space<vmem>>, vector<1x1x4x4xf32>
    %1920 = vector.shape_cast %1919 : vector<1x1x4x4xf32> to vector<4x4xf32>
    %1921 = vector.shape_cast %1918 : vector<4x4xf32> to vector<1x1x4x4xf32>
    tpu.vector_store %arg3[%c0_961, %c3_962, %c0_963, %c0_964], %1921 {strides = array<i32>} : memref<1x8x4x4xf32, #tpu.memory_space<vmem>>, vector<1x1x4x4xf32>,
    %c0_965 = arith.constant 0 : index
    %c0_966 = arith.constant 0 : index
    %c0_967 = arith.constant 0 : index
    %1922 = vector.load %arg4[%c0_965, %c0_966, %c0_967] : memref<8x4x4xf32, #tpu.memory_space<vmem>>, vector<1x4x4xf32>
    %1923 = vector.shape_cast %1922 : vector<1x4x4xf32> to vector<4x4xf32>
    %c124 = arith.constant 124 : index
    %1924 = memref.load %arg1[%c124] : memref<232xf32, #tpu.memory_space<smem>>
    %1925 = vector.broadcast %1924 : f32 to vector<4x4xf32>
    %1926 = arith.mulf %1923, %1925 : vector<4x4xf32>
    %c1_968 = arith.constant 1 : index
    %c0_969 = arith.constant 0 : index
    %c0_970 = arith.constant 0 : index
    %1927 = vector.load %arg4[%c1_968, %c0_969, %c0_970] : memref<8x4x4xf32, #tpu.memory_space<vmem>>, vector<1x4x4xf32>
    %1928 = vector.shape_cast %1927 : vector<1x4x4xf32> to vector<4x4xf32>
    %c132 = arith.constant 132 : index
    %1929 = memref.load %arg1[%c132] : memref<232xf32, #tpu.memory_space<smem>>
    %1930 = vector.broadcast %1929 : f32 to vector<4x4xf32>
    %1931 = arith.mulf %1928, %1930 : vector<4x4xf32>
    %1932 = arith.addf %1926, %1931 : vector<4x4xf32>
    %c2_971 = arith.constant 2 : index
    %c0_972 = arith.constant 0 : index
    %c0_973 = arith.constant 0 : index
    %1933 = vector.load %arg4[%c2_971, %c0_972, %c0_973] : memref<8x4x4xf32, #tpu.memory_space<vmem>>, vector<1x4x4xf32>
    %1934 = vector.shape_cast %1933 : vector<1x4x4xf32> to vector<4x4xf32>
    %c140 = arith.constant 140 : index
    %1935 = memref.load %arg1[%c140] : memref<232xf32, #tpu.memory_space<smem>>
    %1936 = vector.broadcast %1935 : f32 to vector<4x4xf32>
    %1937 = arith.mulf %1934, %1936 : vector<4x4xf32>
    %1938 = arith.addf %1932, %1937 : vector<4x4xf32>
    %c3_974 = arith.constant 3 : index
    %c0_975 = arith.constant 0 : index
    %c0_976 = arith.constant 0 : index
    %1939 = vector.load %arg4[%c3_974, %c0_975, %c0_976] : memref<8x4x4xf32, #tpu.memory_space<vmem>>, vector<1x4x4xf32>
    %1940 = vector.shape_cast %1939 : vector<1x4x4xf32> to vector<4x4xf32>
    %c148 = arith.constant 148 : index
    %1941 = memref.load %arg1[%c148] : memref<232xf32, #tpu.memory_space<smem>>
    %1942 = vector.broadcast %1941 : f32 to vector<4x4xf32>
    %1943 = arith.mulf %1940, %1942 : vector<4x4xf32>
    %1944 = arith.addf %1938, %1943 : vector<4x4xf32>
    %c4_977 = arith.constant 4 : index
    %c0_978 = arith.constant 0 : index
    %c0_979 = arith.constant 0 : index
    %1945 = vector.load %arg4[%c4_977, %c0_978, %c0_979] : memref<8x4x4xf32, #tpu.memory_space<vmem>>, vector<1x4x4xf32>
    %1946 = vector.shape_cast %1945 : vector<1x4x4xf32> to vector<4x4xf32>
    %c156 = arith.constant 156 : index
    %1947 = memref.load %arg1[%c156] : memref<232xf32, #tpu.memory_space<smem>>
    %1948 = vector.broadcast %1947 : f32 to vector<4x4xf32>
    %1949 = arith.mulf %1946, %1948 : vector<4x4xf32>
    %1950 = arith.addf %1944, %1949 : vector<4x4xf32>
    %c5_980 = arith.constant 5 : index
    %c0_981 = arith.constant 0 : index
    %c0_982 = arith.constant 0 : index
    %1951 = vector.load %arg4[%c5_980, %c0_981, %c0_982] : memref<8x4x4xf32, #tpu.memory_space<vmem>>, vector<1x4x4xf32>
    %1952 = vector.shape_cast %1951 : vector<1x4x4xf32> to vector<4x4xf32>
    %c164 = arith.constant 164 : index
    %1953 = memref.load %arg1[%c164] : memref<232xf32, #tpu.memory_space<smem>>
    %1954 = vector.broadcast %1953 : f32 to vector<4x4xf32>
    %1955 = arith.mulf %1952, %1954 : vector<4x4xf32>
    %1956 = arith.addf %1950, %1955 : vector<4x4xf32>
    %c6_983 = arith.constant 6 : index
    %c0_984 = arith.constant 0 : index
    %c0_985 = arith.constant 0 : index
    %1957 = vector.load %arg4[%c6_983, %c0_984, %c0_985] : memref<8x4x4xf32, #tpu.memory_space<vmem>>, vector<1x4x4xf32>
    %1958 = vector.shape_cast %1957 : vector<1x4x4xf32> to vector<4x4xf32>
    %c172 = arith.constant 172 : index
    %1959 = memref.load %arg1[%c172] : memref<232xf32, #tpu.memory_space<smem>>
    %1960 = vector.broadcast %1959 : f32 to vector<4x4xf32>
    %1961 = arith.mulf %1958, %1960 : vector<4x4xf32>
    %1962 = arith.addf %1956, %1961 : vector<4x4xf32>
    %c7_986 = arith.constant 7 : index
    %c0_987 = arith.constant 0 : index
    %c0_988 = arith.constant 0 : index
    %1963 = vector.load %arg4[%c7_986, %c0_987, %c0_988] : memref<8x4x4xf32, #tpu.memory_space<vmem>>, vector<1x4x4xf32>
    %1964 = vector.shape_cast %1963 : vector<1x4x4xf32> to vector<4x4xf32>
    %c180 = arith.constant 180 : index
    %1965 = memref.load %arg1[%c180] : memref<232xf32, #tpu.memory_space<smem>>
    %1966 = vector.broadcast %1965 : f32 to vector<4x4xf32>
    %1967 = arith.mulf %1964, %1966 : vector<4x4xf32>
    %1968 = arith.addf %1962, %1967 : vector<4x4xf32>
    %c196 = arith.constant 196 : index
    %1969 = memref.load %arg1[%c196] : memref<232xf32, #tpu.memory_space<smem>>
    %1970 = vector.broadcast %1969 : f32 to vector<4x4xf32>
    %1971 = arith.mulf %1572, %1970 : vector<4x4xf32>
    %1972 = arith.addf %1968, %1971 : vector<4x4xf32>
    %c204 = arith.constant 204 : index
    %1973 = memref.load %arg1[%c204] : memref<232xf32, #tpu.memory_space<smem>>
    %1974 = vector.broadcast %1973 : f32 to vector<4x4xf32>
    %1975 = arith.mulf %1583, %1974 : vector<4x4xf32>
    %1976 = arith.addf %1972, %1975 : vector<4x4xf32>
    %c212 = arith.constant 212 : index
    %1977 = memref.load %arg1[%c212] : memref<232xf32, #tpu.memory_space<smem>>
    %1978 = vector.broadcast %1977 : f32 to vector<4x4xf32>
    %1979 = arith.mulf %1594, %1978 : vector<4x4xf32>
    %1980 = arith.addf %1976, %1979 : vector<4x4xf32>
    %c220 = arith.constant 220 : index
    %1981 = memref.load %arg1[%c220] : memref<232xf32, #tpu.memory_space<smem>>
    %1982 = vector.broadcast %1981 : f32 to vector<4x4xf32>
    %1983 = arith.mulf %1605, %1982 : vector<4x4xf32>
    %1984 = arith.addf %1980, %1983 : vector<4x4xf32>
    %c188 = arith.constant 188 : index
    %1985 = memref.load %arg1[%c188] : memref<232xf32, #tpu.memory_space<smem>>
    %c228 = arith.constant 228 : index
    %1986 = memref.load %arg1[%c228] : memref<232xf32, #tpu.memory_space<smem>>
    %1987 = arith.addf %1985, %1986 : f32
    %1988 = vector.broadcast %1987 : f32 to vector<4x4xf32>
    %1989 = arith.addf %1984, %1988 : vector<4x4xf32>
    %cst_989 = arith.constant 0.000000e+00 : f32
    %1990 = vector.broadcast %cst_989 : f32 to vector<4x4xf32>
    %1991 = arith.cmpf ogt, %1989, %1990 : vector<4x4xf32>
    %cst_990 = arith.constant 0.000000e+00 : f32
    %1992 = vector.broadcast %cst_990 : f32 to vector<4x4xf32>
    %1993 = arith.minimumf %1989, %1992 : vector<4x4xf32>
    %1994 = math.exp %1993 : vector<4x4xf32>
    %cst_991 = arith.constant 1.000000e+00 : f32
    %1995 = vector.broadcast %cst_991 : f32 to vector<4x4xf32>
    %1996 = arith.subf %1994, %1995 : vector<4x4xf32>
    %1997 = arith.select %1991, %1989, %1996 : vector<4x4xi1>, vector<4x4xf32>
    %c0_992 = arith.constant 0 : index
    %c4_993 = arith.constant 4 : index
    %c0_994 = arith.constant 0 : index
    %c0_995 = arith.constant 0 : index
    %1998 = vector.load %arg3[%c0_992, %c4_993, %c0_994, %c0_995] : memref<1x8x4x4xf32, #tpu.memory_space<vmem>>, vector<1x1x4x4xf32>
    %1999 = vector.shape_cast %1998 : vector<1x1x4x4xf32> to vector<4x4xf32>
    %2000 = vector.shape_cast %1997 : vector<4x4xf32> to vector<1x1x4x4xf32>
    tpu.vector_store %arg3[%c0_992, %c4_993, %c0_994, %c0_995], %2000 {strides = array<i32>} : memref<1x8x4x4xf32, #tpu.memory_space<vmem>>, vector<1x1x4x4xf32>,
    %c0_996 = arith.constant 0 : index
    %c0_997 = arith.constant 0 : index
    %c0_998 = arith.constant 0 : index
    %2001 = vector.load %arg4[%c0_996, %c0_997, %c0_998] : memref<8x4x4xf32, #tpu.memory_space<vmem>>, vector<1x4x4xf32>
    %2002 = vector.shape_cast %2001 : vector<1x4x4xf32> to vector<4x4xf32>
    %c125 = arith.constant 125 : index
    %2003 = memref.load %arg1[%c125] : memref<232xf32, #tpu.memory_space<smem>>
    %2004 = vector.broadcast %2003 : f32 to vector<4x4xf32>
    %2005 = arith.mulf %2002, %2004 : vector<4x4xf32>
    %c1_999 = arith.constant 1 : index
    %c0_1000 = arith.constant 0 : index
    %c0_1001 = arith.constant 0 : index
    %2006 = vector.load %arg4[%c1_999, %c0_1000, %c0_1001] : memref<8x4x4xf32, #tpu.memory_space<vmem>>, vector<1x4x4xf32>
    %2007 = vector.shape_cast %2006 : vector<1x4x4xf32> to vector<4x4xf32>
    %c133 = arith.constant 133 : index
    %2008 = memref.load %arg1[%c133] : memref<232xf32, #tpu.memory_space<smem>>
    %2009 = vector.broadcast %2008 : f32 to vector<4x4xf32>
    %2010 = arith.mulf %2007, %2009 : vector<4x4xf32>
    %2011 = arith.addf %2005, %2010 : vector<4x4xf32>
    %c2_1002 = arith.constant 2 : index
    %c0_1003 = arith.constant 0 : index
    %c0_1004 = arith.constant 0 : index
    %2012 = vector.load %arg4[%c2_1002, %c0_1003, %c0_1004] : memref<8x4x4xf32, #tpu.memory_space<vmem>>, vector<1x4x4xf32>
    %2013 = vector.shape_cast %2012 : vector<1x4x4xf32> to vector<4x4xf32>
    %c141 = arith.constant 141 : index
    %2014 = memref.load %arg1[%c141] : memref<232xf32, #tpu.memory_space<smem>>
    %2015 = vector.broadcast %2014 : f32 to vector<4x4xf32>
    %2016 = arith.mulf %2013, %2015 : vector<4x4xf32>
    %2017 = arith.addf %2011, %2016 : vector<4x4xf32>
    %c3_1005 = arith.constant 3 : index
    %c0_1006 = arith.constant 0 : index
    %c0_1007 = arith.constant 0 : index
    %2018 = vector.load %arg4[%c3_1005, %c0_1006, %c0_1007] : memref<8x4x4xf32, #tpu.memory_space<vmem>>, vector<1x4x4xf32>
    %2019 = vector.shape_cast %2018 : vector<1x4x4xf32> to vector<4x4xf32>
    %c149 = arith.constant 149 : index
    %2020 = memref.load %arg1[%c149] : memref<232xf32, #tpu.memory_space<smem>>
    %2021 = vector.broadcast %2020 : f32 to vector<4x4xf32>
    %2022 = arith.mulf %2019, %2021 : vector<4x4xf32>
    %2023 = arith.addf %2017, %2022 : vector<4x4xf32>
    %c4_1008 = arith.constant 4 : index
    %c0_1009 = arith.constant 0 : index
    %c0_1010 = arith.constant 0 : index
    %2024 = vector.load %arg4[%c4_1008, %c0_1009, %c0_1010] : memref<8x4x4xf32, #tpu.memory_space<vmem>>, vector<1x4x4xf32>
    %2025 = vector.shape_cast %2024 : vector<1x4x4xf32> to vector<4x4xf32>
    %c157 = arith.constant 157 : index
    %2026 = memref.load %arg1[%c157] : memref<232xf32, #tpu.memory_space<smem>>
    %2027 = vector.broadcast %2026 : f32 to vector<4x4xf32>
    %2028 = arith.mulf %2025, %2027 : vector<4x4xf32>
    %2029 = arith.addf %2023, %2028 : vector<4x4xf32>
    %c5_1011 = arith.constant 5 : index
    %c0_1012 = arith.constant 0 : index
    %c0_1013 = arith.constant 0 : index
    %2030 = vector.load %arg4[%c5_1011, %c0_1012, %c0_1013] : memref<8x4x4xf32, #tpu.memory_space<vmem>>, vector<1x4x4xf32>
    %2031 = vector.shape_cast %2030 : vector<1x4x4xf32> to vector<4x4xf32>
    %c165 = arith.constant 165 : index
    %2032 = memref.load %arg1[%c165] : memref<232xf32, #tpu.memory_space<smem>>
    %2033 = vector.broadcast %2032 : f32 to vector<4x4xf32>
    %2034 = arith.mulf %2031, %2033 : vector<4x4xf32>
    %2035 = arith.addf %2029, %2034 : vector<4x4xf32>
    %c6_1014 = arith.constant 6 : index
    %c0_1015 = arith.constant 0 : index
    %c0_1016 = arith.constant 0 : index
    %2036 = vector.load %arg4[%c6_1014, %c0_1015, %c0_1016] : memref<8x4x4xf32, #tpu.memory_space<vmem>>, vector<1x4x4xf32>
    %2037 = vector.shape_cast %2036 : vector<1x4x4xf32> to vector<4x4xf32>
    %c173 = arith.constant 173 : index
    %2038 = memref.load %arg1[%c173] : memref<232xf32, #tpu.memory_space<smem>>
    %2039 = vector.broadcast %2038 : f32 to vector<4x4xf32>
    %2040 = arith.mulf %2037, %2039 : vector<4x4xf32>
    %2041 = arith.addf %2035, %2040 : vector<4x4xf32>
    %c7_1017 = arith.constant 7 : index
    %c0_1018 = arith.constant 0 : index
    %c0_1019 = arith.constant 0 : index
    %2042 = vector.load %arg4[%c7_1017, %c0_1018, %c0_1019] : memref<8x4x4xf32, #tpu.memory_space<vmem>>, vector<1x4x4xf32>
    %2043 = vector.shape_cast %2042 : vector<1x4x4xf32> to vector<4x4xf32>
    %c181 = arith.constant 181 : index
    %2044 = memref.load %arg1[%c181] : memref<232xf32, #tpu.memory_space<smem>>
    %2045 = vector.broadcast %2044 : f32 to vector<4x4xf32>
    %2046 = arith.mulf %2043, %2045 : vector<4x4xf32>
    %2047 = arith.addf %2041, %2046 : vector<4x4xf32>
    %c197 = arith.constant 197 : index
    %2048 = memref.load %arg1[%c197] : memref<232xf32, #tpu.memory_space<smem>>
    %2049 = vector.broadcast %2048 : f32 to vector<4x4xf32>
    %2050 = arith.mulf %1572, %2049 : vector<4x4xf32>
    %2051 = arith.addf %2047, %2050 : vector<4x4xf32>
    %c205 = arith.constant 205 : index
    %2052 = memref.load %arg1[%c205] : memref<232xf32, #tpu.memory_space<smem>>
    %2053 = vector.broadcast %2052 : f32 to vector<4x4xf32>
    %2054 = arith.mulf %1583, %2053 : vector<4x4xf32>
    %2055 = arith.addf %2051, %2054 : vector<4x4xf32>
    %c213 = arith.constant 213 : index
    %2056 = memref.load %arg1[%c213] : memref<232xf32, #tpu.memory_space<smem>>
    %2057 = vector.broadcast %2056 : f32 to vector<4x4xf32>
    %2058 = arith.mulf %1594, %2057 : vector<4x4xf32>
    %2059 = arith.addf %2055, %2058 : vector<4x4xf32>
    %c221 = arith.constant 221 : index
    %2060 = memref.load %arg1[%c221] : memref<232xf32, #tpu.memory_space<smem>>
    %2061 = vector.broadcast %2060 : f32 to vector<4x4xf32>
    %2062 = arith.mulf %1605, %2061 : vector<4x4xf32>
    %2063 = arith.addf %2059, %2062 : vector<4x4xf32>
    %c189 = arith.constant 189 : index
    %2064 = memref.load %arg1[%c189] : memref<232xf32, #tpu.memory_space<smem>>
    %c229 = arith.constant 229 : index
    %2065 = memref.load %arg1[%c229] : memref<232xf32, #tpu.memory_space<smem>>
    %2066 = arith.addf %2064, %2065 : f32
    %2067 = vector.broadcast %2066 : f32 to vector<4x4xf32>
    %2068 = arith.addf %2063, %2067 : vector<4x4xf32>
    %cst_1020 = arith.constant 0.000000e+00 : f32
    %2069 = vector.broadcast %cst_1020 : f32 to vector<4x4xf32>
    %2070 = arith.cmpf ogt, %2068, %2069 : vector<4x4xf32>
    %cst_1021 = arith.constant 0.000000e+00 : f32
    %2071 = vector.broadcast %cst_1021 : f32 to vector<4x4xf32>
    %2072 = arith.minimumf %2068, %2071 : vector<4x4xf32>
    %2073 = math.exp %2072 : vector<4x4xf32>
    %cst_1022 = arith.constant 1.000000e+00 : f32
    %2074 = vector.broadcast %cst_1022 : f32 to vector<4x4xf32>
    %2075 = arith.subf %2073, %2074 : vector<4x4xf32>
    %2076 = arith.select %2070, %2068, %2075 : vector<4x4xi1>, vector<4x4xf32>
    %c0_1023 = arith.constant 0 : index
    %c5_1024 = arith.constant 5 : index
    %c0_1025 = arith.constant 0 : index
    %c0_1026 = arith.constant 0 : index
    %2077 = vector.load %arg3[%c0_1023, %c5_1024, %c0_1025, %c0_1026] : memref<1x8x4x4xf32, #tpu.memory_space<vmem>>, vector<1x1x4x4xf32>
    %2078 = vector.shape_cast %2077 : vector<1x1x4x4xf32> to vector<4x4xf32>
    %2079 = vector.shape_cast %2076 : vector<4x4xf32> to vector<1x1x4x4xf32>
    tpu.vector_store %arg3[%c0_1023, %c5_1024, %c0_1025, %c0_1026], %2079 {strides = array<i32>} : memref<1x8x4x4xf32, #tpu.memory_space<vmem>>, vector<1x1x4x4xf32>,
    %c0_1027 = arith.constant 0 : index
    %c0_1028 = arith.constant 0 : index
    %c0_1029 = arith.constant 0 : index
    %2080 = vector.load %arg4[%c0_1027, %c0_1028, %c0_1029] : memref<8x4x4xf32, #tpu.memory_space<vmem>>, vector<1x4x4xf32>
    %2081 = vector.shape_cast %2080 : vector<1x4x4xf32> to vector<4x4xf32>
    %c126 = arith.constant 126 : index
    %2082 = memref.load %arg1[%c126] : memref<232xf32, #tpu.memory_space<smem>>
    %2083 = vector.broadcast %2082 : f32 to vector<4x4xf32>
    %2084 = arith.mulf %2081, %2083 : vector<4x4xf32>
    %c1_1030 = arith.constant 1 : index
    %c0_1031 = arith.constant 0 : index
    %c0_1032 = arith.constant 0 : index
    %2085 = vector.load %arg4[%c1_1030, %c0_1031, %c0_1032] : memref<8x4x4xf32, #tpu.memory_space<vmem>>, vector<1x4x4xf32>
    %2086 = vector.shape_cast %2085 : vector<1x4x4xf32> to vector<4x4xf32>
    %c134 = arith.constant 134 : index
    %2087 = memref.load %arg1[%c134] : memref<232xf32, #tpu.memory_space<smem>>
    %2088 = vector.broadcast %2087 : f32 to vector<4x4xf32>
    %2089 = arith.mulf %2086, %2088 : vector<4x4xf32>
    %2090 = arith.addf %2084, %2089 : vector<4x4xf32>
    %c2_1033 = arith.constant 2 : index
    %c0_1034 = arith.constant 0 : index
    %c0_1035 = arith.constant 0 : index
    %2091 = vector.load %arg4[%c2_1033, %c0_1034, %c0_1035] : memref<8x4x4xf32, #tpu.memory_space<vmem>>, vector<1x4x4xf32>
    %2092 = vector.shape_cast %2091 : vector<1x4x4xf32> to vector<4x4xf32>
    %c142 = arith.constant 142 : index
    %2093 = memref.load %arg1[%c142] : memref<232xf32, #tpu.memory_space<smem>>
    %2094 = vector.broadcast %2093 : f32 to vector<4x4xf32>
    %2095 = arith.mulf %2092, %2094 : vector<4x4xf32>
    %2096 = arith.addf %2090, %2095 : vector<4x4xf32>
    %c3_1036 = arith.constant 3 : index
    %c0_1037 = arith.constant 0 : index
    %c0_1038 = arith.constant 0 : index
    %2097 = vector.load %arg4[%c3_1036, %c0_1037, %c0_1038] : memref<8x4x4xf32, #tpu.memory_space<vmem>>, vector<1x4x4xf32>
    %2098 = vector.shape_cast %2097 : vector<1x4x4xf32> to vector<4x4xf32>
    %c150 = arith.constant 150 : index
    %2099 = memref.load %arg1[%c150] : memref<232xf32, #tpu.memory_space<smem>>
    %2100 = vector.broadcast %2099 : f32 to vector<4x4xf32>
    %2101 = arith.mulf %2098, %2100 : vector<4x4xf32>
    %2102 = arith.addf %2096, %2101 : vector<4x4xf32>
    %c4_1039 = arith.constant 4 : index
    %c0_1040 = arith.constant 0 : index
    %c0_1041 = arith.constant 0 : index
    %2103 = vector.load %arg4[%c4_1039, %c0_1040, %c0_1041] : memref<8x4x4xf32, #tpu.memory_space<vmem>>, vector<1x4x4xf32>
    %2104 = vector.shape_cast %2103 : vector<1x4x4xf32> to vector<4x4xf32>
    %c158 = arith.constant 158 : index
    %2105 = memref.load %arg1[%c158] : memref<232xf32, #tpu.memory_space<smem>>
    %2106 = vector.broadcast %2105 : f32 to vector<4x4xf32>
    %2107 = arith.mulf %2104, %2106 : vector<4x4xf32>
    %2108 = arith.addf %2102, %2107 : vector<4x4xf32>
    %c5_1042 = arith.constant 5 : index
    %c0_1043 = arith.constant 0 : index
    %c0_1044 = arith.constant 0 : index
    %2109 = vector.load %arg4[%c5_1042, %c0_1043, %c0_1044] : memref<8x4x4xf32, #tpu.memory_space<vmem>>, vector<1x4x4xf32>
    %2110 = vector.shape_cast %2109 : vector<1x4x4xf32> to vector<4x4xf32>
    %c166 = arith.constant 166 : index
    %2111 = memref.load %arg1[%c166] : memref<232xf32, #tpu.memory_space<smem>>
    %2112 = vector.broadcast %2111 : f32 to vector<4x4xf32>
    %2113 = arith.mulf %2110, %2112 : vector<4x4xf32>
    %2114 = arith.addf %2108, %2113 : vector<4x4xf32>
    %c6_1045 = arith.constant 6 : index
    %c0_1046 = arith.constant 0 : index
    %c0_1047 = arith.constant 0 : index
    %2115 = vector.load %arg4[%c6_1045, %c0_1046, %c0_1047] : memref<8x4x4xf32, #tpu.memory_space<vmem>>, vector<1x4x4xf32>
    %2116 = vector.shape_cast %2115 : vector<1x4x4xf32> to vector<4x4xf32>
    %c174 = arith.constant 174 : index
    %2117 = memref.load %arg1[%c174] : memref<232xf32, #tpu.memory_space<smem>>
    %2118 = vector.broadcast %2117 : f32 to vector<4x4xf32>
    %2119 = arith.mulf %2116, %2118 : vector<4x4xf32>
    %2120 = arith.addf %2114, %2119 : vector<4x4xf32>
    %c7_1048 = arith.constant 7 : index
    %c0_1049 = arith.constant 0 : index
    %c0_1050 = arith.constant 0 : index
    %2121 = vector.load %arg4[%c7_1048, %c0_1049, %c0_1050] : memref<8x4x4xf32, #tpu.memory_space<vmem>>, vector<1x4x4xf32>
    %2122 = vector.shape_cast %2121 : vector<1x4x4xf32> to vector<4x4xf32>
    %c182 = arith.constant 182 : index
    %2123 = memref.load %arg1[%c182] : memref<232xf32, #tpu.memory_space<smem>>
    %2124 = vector.broadcast %2123 : f32 to vector<4x4xf32>
    %2125 = arith.mulf %2122, %2124 : vector<4x4xf32>
    %2126 = arith.addf %2120, %2125 : vector<4x4xf32>
    %c198 = arith.constant 198 : index
    %2127 = memref.load %arg1[%c198] : memref<232xf32, #tpu.memory_space<smem>>
    %2128 = vector.broadcast %2127 : f32 to vector<4x4xf32>
    %2129 = arith.mulf %1572, %2128 : vector<4x4xf32>
    %2130 = arith.addf %2126, %2129 : vector<4x4xf32>
    %c206 = arith.constant 206 : index
    %2131 = memref.load %arg1[%c206] : memref<232xf32, #tpu.memory_space<smem>>
    %2132 = vector.broadcast %2131 : f32 to vector<4x4xf32>
    %2133 = arith.mulf %1583, %2132 : vector<4x4xf32>
    %2134 = arith.addf %2130, %2133 : vector<4x4xf32>
    %c214 = arith.constant 214 : index
    %2135 = memref.load %arg1[%c214] : memref<232xf32, #tpu.memory_space<smem>>
    %2136 = vector.broadcast %2135 : f32 to vector<4x4xf32>
    %2137 = arith.mulf %1594, %2136 : vector<4x4xf32>
    %2138 = arith.addf %2134, %2137 : vector<4x4xf32>
    %c222 = arith.constant 222 : index
    %2139 = memref.load %arg1[%c222] : memref<232xf32, #tpu.memory_space<smem>>
    %2140 = vector.broadcast %2139 : f32 to vector<4x4xf32>
    %2141 = arith.mulf %1605, %2140 : vector<4x4xf32>
    %2142 = arith.addf %2138, %2141 : vector<4x4xf32>
    %c190 = arith.constant 190 : index
    %2143 = memref.load %arg1[%c190] : memref<232xf32, #tpu.memory_space<smem>>
    %c230 = arith.constant 230 : index
    %2144 = memref.load %arg1[%c230] : memref<232xf32, #tpu.memory_space<smem>>
    %2145 = arith.addf %2143, %2144 : f32
    %2146 = vector.broadcast %2145 : f32 to vector<4x4xf32>
    %2147 = arith.addf %2142, %2146 : vector<4x4xf32>
    %cst_1051 = arith.constant 0.000000e+00 : f32
    %2148 = vector.broadcast %cst_1051 : f32 to vector<4x4xf32>
    %2149 = arith.cmpf ogt, %2147, %2148 : vector<4x4xf32>
    %cst_1052 = arith.constant 0.000000e+00 : f32
    %2150 = vector.broadcast %cst_1052 : f32 to vector<4x4xf32>
    %2151 = arith.minimumf %2147, %2150 : vector<4x4xf32>
    %2152 = math.exp %2151 : vector<4x4xf32>
    %cst_1053 = arith.constant 1.000000e+00 : f32
    %2153 = vector.broadcast %cst_1053 : f32 to vector<4x4xf32>
    %2154 = arith.subf %2152, %2153 : vector<4x4xf32>
    %2155 = arith.select %2149, %2147, %2154 : vector<4x4xi1>, vector<4x4xf32>
    %c0_1054 = arith.constant 0 : index
    %c6_1055 = arith.constant 6 : index
    %c0_1056 = arith.constant 0 : index
    %c0_1057 = arith.constant 0 : index
    %2156 = vector.load %arg3[%c0_1054, %c6_1055, %c0_1056, %c0_1057] : memref<1x8x4x4xf32, #tpu.memory_space<vmem>>, vector<1x1x4x4xf32>
    %2157 = vector.shape_cast %2156 : vector<1x1x4x4xf32> to vector<4x4xf32>
    %2158 = vector.shape_cast %2155 : vector<4x4xf32> to vector<1x1x4x4xf32>
    tpu.vector_store %arg3[%c0_1054, %c6_1055, %c0_1056, %c0_1057], %2158 {strides = array<i32>} : memref<1x8x4x4xf32, #tpu.memory_space<vmem>>, vector<1x1x4x4xf32>,
    %c0_1058 = arith.constant 0 : index
    %c0_1059 = arith.constant 0 : index
    %c0_1060 = arith.constant 0 : index
    %2159 = vector.load %arg4[%c0_1058, %c0_1059, %c0_1060] : memref<8x4x4xf32, #tpu.memory_space<vmem>>, vector<1x4x4xf32>
    %2160 = vector.shape_cast %2159 : vector<1x4x4xf32> to vector<4x4xf32>
    %c127 = arith.constant 127 : index
    %2161 = memref.load %arg1[%c127] : memref<232xf32, #tpu.memory_space<smem>>
    %2162 = vector.broadcast %2161 : f32 to vector<4x4xf32>
    %2163 = arith.mulf %2160, %2162 : vector<4x4xf32>
    %c1_1061 = arith.constant 1 : index
    %c0_1062 = arith.constant 0 : index
    %c0_1063 = arith.constant 0 : index
    %2164 = vector.load %arg4[%c1_1061, %c0_1062, %c0_1063] : memref<8x4x4xf32, #tpu.memory_space<vmem>>, vector<1x4x4xf32>
    %2165 = vector.shape_cast %2164 : vector<1x4x4xf32> to vector<4x4xf32>
    %c135 = arith.constant 135 : index
    %2166 = memref.load %arg1[%c135] : memref<232xf32, #tpu.memory_space<smem>>
    %2167 = vector.broadcast %2166 : f32 to vector<4x4xf32>
    %2168 = arith.mulf %2165, %2167 : vector<4x4xf32>
    %2169 = arith.addf %2163, %2168 : vector<4x4xf32>
    %c2_1064 = arith.constant 2 : index
    %c0_1065 = arith.constant 0 : index
    %c0_1066 = arith.constant 0 : index
    %2170 = vector.load %arg4[%c2_1064, %c0_1065, %c0_1066] : memref<8x4x4xf32, #tpu.memory_space<vmem>>, vector<1x4x4xf32>
    %2171 = vector.shape_cast %2170 : vector<1x4x4xf32> to vector<4x4xf32>
    %c143 = arith.constant 143 : index
    %2172 = memref.load %arg1[%c143] : memref<232xf32, #tpu.memory_space<smem>>
    %2173 = vector.broadcast %2172 : f32 to vector<4x4xf32>
    %2174 = arith.mulf %2171, %2173 : vector<4x4xf32>
    %2175 = arith.addf %2169, %2174 : vector<4x4xf32>
    %c3_1067 = arith.constant 3 : index
    %c0_1068 = arith.constant 0 : index
    %c0_1069 = arith.constant 0 : index
    %2176 = vector.load %arg4[%c3_1067, %c0_1068, %c0_1069] : memref<8x4x4xf32, #tpu.memory_space<vmem>>, vector<1x4x4xf32>
    %2177 = vector.shape_cast %2176 : vector<1x4x4xf32> to vector<4x4xf32>
    %c151 = arith.constant 151 : index
    %2178 = memref.load %arg1[%c151] : memref<232xf32, #tpu.memory_space<smem>>
    %2179 = vector.broadcast %2178 : f32 to vector<4x4xf32>
    %2180 = arith.mulf %2177, %2179 : vector<4x4xf32>
    %2181 = arith.addf %2175, %2180 : vector<4x4xf32>
    %c4_1070 = arith.constant 4 : index
    %c0_1071 = arith.constant 0 : index
    %c0_1072 = arith.constant 0 : index
    %2182 = vector.load %arg4[%c4_1070, %c0_1071, %c0_1072] : memref<8x4x4xf32, #tpu.memory_space<vmem>>, vector<1x4x4xf32>
    %2183 = vector.shape_cast %2182 : vector<1x4x4xf32> to vector<4x4xf32>
    %c159 = arith.constant 159 : index
    %2184 = memref.load %arg1[%c159] : memref<232xf32, #tpu.memory_space<smem>>
    %2185 = vector.broadcast %2184 : f32 to vector<4x4xf32>
    %2186 = arith.mulf %2183, %2185 : vector<4x4xf32>
    %2187 = arith.addf %2181, %2186 : vector<4x4xf32>
    %c5_1073 = arith.constant 5 : index
    %c0_1074 = arith.constant 0 : index
    %c0_1075 = arith.constant 0 : index
    %2188 = vector.load %arg4[%c5_1073, %c0_1074, %c0_1075] : memref<8x4x4xf32, #tpu.memory_space<vmem>>, vector<1x4x4xf32>
    %2189 = vector.shape_cast %2188 : vector<1x4x4xf32> to vector<4x4xf32>
    %c167 = arith.constant 167 : index
    %2190 = memref.load %arg1[%c167] : memref<232xf32, #tpu.memory_space<smem>>
    %2191 = vector.broadcast %2190 : f32 to vector<4x4xf32>
    %2192 = arith.mulf %2189, %2191 : vector<4x4xf32>
    %2193 = arith.addf %2187, %2192 : vector<4x4xf32>
    %c6_1076 = arith.constant 6 : index
    %c0_1077 = arith.constant 0 : index
    %c0_1078 = arith.constant 0 : index
    %2194 = vector.load %arg4[%c6_1076, %c0_1077, %c0_1078] : memref<8x4x4xf32, #tpu.memory_space<vmem>>, vector<1x4x4xf32>
    %2195 = vector.shape_cast %2194 : vector<1x4x4xf32> to vector<4x4xf32>
    %c175 = arith.constant 175 : index
    %2196 = memref.load %arg1[%c175] : memref<232xf32, #tpu.memory_space<smem>>
    %2197 = vector.broadcast %2196 : f32 to vector<4x4xf32>
    %2198 = arith.mulf %2195, %2197 : vector<4x4xf32>
    %2199 = arith.addf %2193, %2198 : vector<4x4xf32>
    %c7_1079 = arith.constant 7 : index
    %c0_1080 = arith.constant 0 : index
    %c0_1081 = arith.constant 0 : index
    %2200 = vector.load %arg4[%c7_1079, %c0_1080, %c0_1081] : memref<8x4x4xf32, #tpu.memory_space<vmem>>, vector<1x4x4xf32>
    %2201 = vector.shape_cast %2200 : vector<1x4x4xf32> to vector<4x4xf32>
    %c183 = arith.constant 183 : index
    %2202 = memref.load %arg1[%c183] : memref<232xf32, #tpu.memory_space<smem>>
    %2203 = vector.broadcast %2202 : f32 to vector<4x4xf32>
    %2204 = arith.mulf %2201, %2203 : vector<4x4xf32>
    %2205 = arith.addf %2199, %2204 : vector<4x4xf32>
    %c199 = arith.constant 199 : index
    %2206 = memref.load %arg1[%c199] : memref<232xf32, #tpu.memory_space<smem>>
    %2207 = vector.broadcast %2206 : f32 to vector<4x4xf32>
    %2208 = arith.mulf %1572, %2207 : vector<4x4xf32>
    %2209 = arith.addf %2205, %2208 : vector<4x4xf32>
    %c207 = arith.constant 207 : index
    %2210 = memref.load %arg1[%c207] : memref<232xf32, #tpu.memory_space<smem>>
    %2211 = vector.broadcast %2210 : f32 to vector<4x4xf32>
    %2212 = arith.mulf %1583, %2211 : vector<4x4xf32>
    %2213 = arith.addf %2209, %2212 : vector<4x4xf32>
    %c215 = arith.constant 215 : index
    %2214 = memref.load %arg1[%c215] : memref<232xf32, #tpu.memory_space<smem>>
    %2215 = vector.broadcast %2214 : f32 to vector<4x4xf32>
    %2216 = arith.mulf %1594, %2215 : vector<4x4xf32>
    %2217 = arith.addf %2213, %2216 : vector<4x4xf32>
    %c223 = arith.constant 223 : index
    %2218 = memref.load %arg1[%c223] : memref<232xf32, #tpu.memory_space<smem>>
    %2219 = vector.broadcast %2218 : f32 to vector<4x4xf32>
    %2220 = arith.mulf %1605, %2219 : vector<4x4xf32>
    %2221 = arith.addf %2217, %2220 : vector<4x4xf32>
    %c191 = arith.constant 191 : index
    %2222 = memref.load %arg1[%c191] : memref<232xf32, #tpu.memory_space<smem>>
    %c231 = arith.constant 231 : index
    %2223 = memref.load %arg1[%c231] : memref<232xf32, #tpu.memory_space<smem>>
    %2224 = arith.addf %2222, %2223 : f32
    %2225 = vector.broadcast %2224 : f32 to vector<4x4xf32>
    %2226 = arith.addf %2221, %2225 : vector<4x4xf32>
    %cst_1082 = arith.constant 0.000000e+00 : f32
    %2227 = vector.broadcast %cst_1082 : f32 to vector<4x4xf32>
    %2228 = arith.cmpf ogt, %2226, %2227 : vector<4x4xf32>
    %cst_1083 = arith.constant 0.000000e+00 : f32
    %2229 = vector.broadcast %cst_1083 : f32 to vector<4x4xf32>
    %2230 = arith.minimumf %2226, %2229 : vector<4x4xf32>
    %2231 = math.exp %2230 : vector<4x4xf32>
    %cst_1084 = arith.constant 1.000000e+00 : f32
    %2232 = vector.broadcast %cst_1084 : f32 to vector<4x4xf32>
    %2233 = arith.subf %2231, %2232 : vector<4x4xf32>
    %2234 = arith.select %2228, %2226, %2233 : vector<4x4xi1>, vector<4x4xf32>
    %c0_1085 = arith.constant 0 : index
    %c7_1086 = arith.constant 7 : index
    %c0_1087 = arith.constant 0 : index
    %c0_1088 = arith.constant 0 : index
    %2235 = vector.load %arg3[%c0_1085, %c7_1086, %c0_1087, %c0_1088] : memref<1x8x4x4xf32, #tpu.memory_space<vmem>>, vector<1x1x4x4xf32>
    %2236 = vector.shape_cast %2235 : vector<1x1x4x4xf32> to vector<4x4xf32>
    %2237 = vector.shape_cast %2234 : vector<4x4xf32> to vector<1x1x4x4xf32>
    tpu.vector_store %arg3[%c0_1085, %c7_1086, %c0_1087, %c0_1088], %2237 {strides = array<i32>} : memref<1x8x4x4xf32, #tpu.memory_space<vmem>>, vector<1x1x4x4xf32>,
    return
  }
  func.func @transform_0(%arg0: i32) -> i32 {
    %c0_i32 = arith.constant 0 : i32
    %c0_i32_0 = arith.constant 0 : i32
    return %c0_i32 : i32
  }
  func.func @transform_1(%arg0: i32) -> (i32, i32, i32, i32) {
    %c0_i32 = arith.constant 0 : i32
    %c0_i32_0 = arith.constant 0 : i32
    %c0_i32_1 = arith.constant 0 : i32
    %c0_i32_2 = arith.constant 0 : i32
    return %arg0, %c0_i32, %c0_i32_0, %c0_i32_1 : i32, i32, i32, i32
  }
  func.func @transform_2(%arg0: i32) -> (i32, i32, i32, i32) {
    %c0_i32 = arith.constant 0 : i32
    %c0_i32_0 = arith.constant 0 : i32
    %c0_i32_1 = arith.constant 0 : i32
    %c0_i32_2 = arith.constant 0 : i32
    return %arg0, %c0_i32, %c0_i32_0, %c0_i32_1 : i32, i32, i32, i32
  }
}

</mosaic_0001>

<llo_original>
// kernel: tpu_custom_call.1
$region0: #{tpu_custom_call.1}
  #allocation0 [shape = 'u32[]', space=smem, size = 0x4, offset = 0x4, fixed_abs, tag = 'smem constant byte address 0x4 - core index']
  #allocation1 [shape = 'u32[144,128]{1,0:T(1,128)}', space=vmem, size = 0x12000, scoped, tag = 'internal scratch']
  #allocation2 [shape = 'f32[8,4,4]{2,1,0:T(4,128)}', space=vmem, size = 0x4000, scoped, tag = 'scratch operand']
  %s0 = inlined_call_operand.vmem [shape: f32[232], index: 0, kind: input, shape index: {}]
  %s1 = inlined_call_operand.vmem [shape: f32[2,28,4,4], index: 1, kind: input, shape index: {}]
  %s2 = inlined_call_operand.vmem [shape: f32[2,8,4,4], index: 2, kind: output, shape index: {}]
  %s3 = sld [smem:[#allocation0]]
  $region45: #{tpu_custom_call.1} parent=0
    _
  %s5 = ssub.s32 1, %s3
  %s6 = scalar_select 0, %s5, %s3
  $region1: #{tpu_custom_call.1} parent=0
    #allocation3 [shape = 'u8[1024]{0}', space=smem, size = 0x400, scoped, tag = 'input window, operand 0, single buffered']
    #allocation4 [shape = 's32[2]{0}', space=sflag, size = 0x8, scoped, tag = 'scoped memory for tpu_custom_call.1']
    %7 = vsyncpa [#allocation4], 0
    loop: start=0, step=1, limit=4
    $region2: #{tpu_custom_call.1} parent=1 // loop_pre_header
      _
    $region3: #{tpu_custom_call.1} parent=1 // loop_header
      %s9 = sphi 0, %s13
      %p10 = scmp.ge.s32.totalorder %s9, 4
      %s17 = sphi 0, %s17
      %s19 = sphi 0, %s17
      %s20 = sphi 0, %s19
      %s34 = sphi 0, %s20
      %s40 = sphi 0, %s42
      %s43 = sphi 0, %s40
      %s44 = sphi 0, %s43
      %s60 = sphi 0, %s44
      %s66 = sphi 0, %s68
      %s69 = sphi 0, %s66
      %s70 = sphi 0, %s69
      %s86 = sphi 0, %s70
    $region4: #{tpu_custom_call.1} parent=1 // loop_header_branch
      %12 = sbr.rel (%p10) target = $region8
    $region5: #{tpu_custom_call.1} parent=1 // loop_body
      %s14 = ssub.s32 %s9, 1
      %s15 = ssub.s32 %s9, 2
      %s16 = sadd.s32 %s9, 1
      %s18 = sadd.s32 %s17, 1
      %p21 = scmp.eq.s32.totalorder %s9, 1
      %p22 = scmp.ne.s32.totalorder %s17, %s19
      %p23 = scmp.eq.s32.totalorder %s9, 0
      %p24 = por %p22, %p23
      %p25 = scmp.ne.s32.totalorder %s17, %s19
      %p26 = scmp.eq.s32.totalorder %s14, 1
      %p27 = por %p25, %p26
      %p28 = scmp.ne.s32.totalorder %s19, %s20
      %p29 = scmp.eq.s32.totalorder %s14, 0
      %p30 = por %p28, %p29
      %p31 = scmp.ne.s32.totalorder %s19, %s20
      %p32 = scmp.eq.s32.totalorder %s15, 1
      %p33 = por %p31, %p32
      %p35 = scmp.ne.s32.totalorder %s20, %s34
      %p36 = scmp.eq.s32.totalorder %s15, 0
      %p37 = por %p35, %p36
      %s38 = ssub.s32 %s9, %s16
      %p39 = scmp.eq.s32.totalorder %s38, 0
      %s41 = sadd.s32 %s40, 1
      %s42 = scalar_select %p39, %s40, %s41
      %p45 = pneg %p39
      %p46 = scmp.eq.s32.totalorder %s9, 1
      %p47 = por %p45, %p46
      %p48 = scmp.ne.s32.totalorder %s40, %s43
      %p49 = scmp.eq.s32.totalorder %s9, 0
      %p50 = por %p48, %p49
      %p51 = scmp.ne.s32.totalorder %s40, %s43
      %p52 = scmp.eq.s32.totalorder %s14, 1
      %p53 = por %p51, %p52
      %p54 = scmp.ne.s32.totalorder %s43, %s44
      %p55 = scmp.eq.s32.totalorder %s14, 0
      %p56 = por %p54, %p55
      %p57 = scmp.ne.s32.totalorder %s43, %s44
      %p58 = scmp.eq.s32.totalorder %s15, 1
      %p59 = por %p57, %p58
      %p61 = scmp.ne.s32.totalorder %s44, %s60
      %p62 = scmp.eq.s32.totalorder %s15, 0
      %p63 = por %p61, %p62
      %s64 = ssub.s32 %s9, %s16
      %p65 = scmp.eq.s32.totalorder %s64, 0
      %s67 = sadd.s32 %s66, 1
      %s68 = scalar_select %p65, %s66, %s67
      %p71 = pneg %p65
      %p72 = scmp.eq.s32.totalorder %s9, 1
      %p73 = por %p71, %p72
      %p74 = scmp.ne.s32.totalorder %s66, %s69
      %p75 = scmp.eq.s32.totalorder %s9, 0
      %p76 = por %p74, %p75
      %p77 = scmp.ne.s32.totalorder %s66, %s69
      %p78 = scmp.eq.s32.totalorder %s14, 1
      %p79 = por %p77, %p78
      %p80 = scmp.ne.s32.totalorder %s69, %s70
      %p81 = scmp.eq.s32.totalorder %s14, 0
      %p82 = por %p80, %p81
      %p83 = scmp.ne.s32.totalorder %s69, %s70
      %p84 = scmp.eq.s32.totalorder %s15, 1
      %p85 = por %p83, %p84
      %p87 = scmp.ne.s32.totalorder %s70, %s86
      %p88 = scmp.eq.s32.totalorder %s15, 0
      %p89 = por %p87, %p88
      %p90 = scmp.le.s32.totalorder 1, %s9
      %p91 = scmp.lt.s32.totalorder %s9, 3
      %p92 = pnand %p90, %p91
      %p93 = pneg %p92
      // Predicated region
      $region9: #{tpu_custom_call.1} parent=5 // pred_check
        _
      $region10: #{tpu_custom_call.1} parent=5 // pred_check_branch
        %95 = sbr.rel (%p92) target = $region12
      $region11: #{tpu_custom_call.1} parent=5 // pred_region
        %s96 = ssub.s32 %s9, 1
        // Predicated region
        $region13: #{tpu_custom_call.1} parent=11 // pred_check
          %p97 = pneg %p30
        $region14: #{tpu_custom_call.1} parent=11 // pred_check_branch
          %99 = sbr.rel (%p97) target = $region16
        $region15: #{tpu_custom_call.1} parent=11 // pred_region
          %s101 = ssub.s32 32, 32
          %102 = vsyncadd [#allocation4], %s101
          %s104 = sshll.u32 %s0, 4
          %s105 = int_to_ptr.vmem [resolvable:$true] %s104
          %107 = dma.vmem_to_smem %s105, 32, [#allocation3], [#allocation4]
        $region16: #{tpu_custom_call.1} parent=11 // pred_fallthru
          _
      $region12: #{tpu_custom_call.1} parent=5 // pred_fallthru
        _
      %p108 = scmp.lt.s32.totalorder %s9, 2
      // Predicated region
      $region17: #{tpu_custom_call.1} parent=5 // pred_check
        %p109 = pneg %p108
      $region18: #{tpu_custom_call.1} parent=5 // pred_check_branch
        %111 = sbr.rel (%p109) target = $region20
      $region19: #{tpu_custom_call.1} parent=5 // pred_region
        // Predicated region
        $region21: #{tpu_custom_call.1} parent=19 // pred_check
          %p112 = pneg %p50
        $region22: #{tpu_custom_call.1} parent=19 // pred_check_branch
          %114 = sbr.rel (%p112) target = $region24
        $region23: #{tpu_custom_call.1} parent=19 // pred_region
          %p115 = scmp.lt.s32.totalorder %s9, 1
          %s116 = scalar_select %p115, %s9, 1
          %s117 = smul.addr %s116, 28
          %s118 = smul.addr %s117, 4
          %s119 = scalar_lea.vmem %s1, %s118
        $region24: #{tpu_custom_call.1} parent=19 // pred_fallthru
          _
      $region20: #{tpu_custom_call.1} parent=5 // pred_fallthru
        _
      %p120 = scmp.le.s32.totalorder 1, %s9
      %p121 = scmp.lt.s32.totalorder %s9, 3
      %p122 = pnand %p120, %p121
      %p123 = pneg %p122
      // Predicated region
      $region25: #{tpu_custom_call.1} parent=5 // pred_check
        _
      $region26: #{tpu_custom_call.1} parent=5 // pred_check_branch
        %125 = sbr.rel (%p122) target = $region28
      $region27: #{tpu_custom_call.1} parent=5 // pred_region
        %s126 = ssub.s32 %s9, 1
        // Predicated region
        $region29: #{tpu_custom_call.1} parent=27 // pred_check
          %p127 = pneg %p30
        $region30: #{tpu_custom_call.1} parent=27 // pred_check_branch
          %129 = sbr.rel (%p127) target = $region32
        $region31: #{tpu_custom_call.1} parent=27 // pred_region
          %130 = dma.done [#allocation4], 32
        $region32: #{tpu_custom_call.1} parent=27 // pred_fallthru
          _
        %131 = sfence
        %p132 = pneg %p30
        %p133 = pneg %p27
        %p134 = scmp.lt.s32.totalorder %s14, 1
        %s135 = scalar_select %p134, %s14, 1
        %s136 = smul.addr %s135, 28
        %s137 = smul.addr %s136, 4
        %s138 = scalar_lea.vmem %s1, %s137
        %p139 = pneg %p56
        %p140 = pneg %p53
        %p141 = pneg %p82
        %p142 = pneg %p79
        %p143 = scmp.lt.s32.totalorder %s14, 1
        %s144 = scalar_select %p143, %s14, 1
        %s145 = smul.addr %s144, 8
        %s146 = smul.addr %s145, 4
        %s147 = scalar_lea.vmem %s2, %s146
        %p148 = scmp.lt.s32.totalorder %s14, 1
        %s149 = scalar_select %p148, %s14, 1
        %s150 = smul.addr %s149, 28
        %s151 = smul.addr %s150, 4
        %s152 = scalar_lea.vmem %s1, %s151
        %p153 = scmp.lt.s32.totalorder %s14, 1
        %s154 = scalar_select %p153, %s14, 1
        %s155 = smul.addr %s154, 8
        %s156 = smul.addr %s155, 4
        %s157 = scalar_lea.vmem %s2, %s156
        %v158 = vld [vmem:[%s152] sm:$0xf]
        %s159 = sld [smem:[#allocation3]]
        %v160 = vstv %s159
        %v161 = vmul.f32 %v158, %v160
        %s162 = scalar_lea.vmem %s152, 4
        %v163 = vld [vmem:[%s162] sm:$0xf]
        %s164 = sld [smem:[#allocation3 + $0x8]]
        %v165 = vstv %s164
        %v166 = vmul.f32 %v163, %v165
        %v167 = vadd.f32 %v161, %v166
        %s168 = scalar_lea.vmem %s152, 8
        %v169 = vld [vmem:[%s168] sm:$0xf]
        %s170 = sld [smem:[#allocation3 + $0x10]]
        %v171 = vstv %s170
        %v172 = vmul.f32 %v169, %v171
        %v173 = vadd.f32 %v167, %v172
        %s174 = scalar_lea.vmem %s152, 12
        %v175 = vld [vmem:[%s174] sm:$0xf]
        %s176 = sld [smem:[#allocation3 + $0x18]]
        %v177 = vstv %s176
        %v178 = vmul.f32 %v175, %v177
        %v179 = vadd.f32 %v173, %v178
        %s180 = sld [smem:[#allocation3 + $0x20]]
        %v181 = vstv %s180
        %v182 = vadd.f32 %v179, %v181
        %vm183 = vcmp.gt.f32.partialorder %v182, 0.0
        %v184 = vmin.f32 %v182, 0.0
        %v185 = vmul.f32 %v184, 1.442695
        %v186 = vpow.pop %v185
        %v187 = vsub.f32 %v186, 1.0
        %v188 = vsel %vm183, %v182, %v187
        %s189 = scalar_lea.vmem %s152, 16
        %v190 = vld [vmem:[%s189] sm:$0xf]
        %v191 = vmul.f32 %v190, %v160
        %s192 = scalar_lea.vmem %s152, 20
        %v193 = vld [vmem:[%s192] sm:$0xf]
        %v194 = vmul.f32 %v193, %v165
        %v195 = vadd.f32 %v191, %v194
        %s196 = scalar_lea.vmem %s152, 24
        %v197 = vld [vmem:[%s196] sm:$0xf]
        %v198 = vmul.f32 %v197, %v171
        %v199 = vadd.f32 %v195, %v198
        %s200 = scalar_lea.vmem %s152, 28
        %v201 = vld [vmem:[%s200] sm:$0xf]
        %v202 = vmul.f32 %v201, %v177
        %v203 = vadd.f32 %v199, %v202
        %v204 = vadd.f32 %v203, %v181
        %vm205 = vcmp.gt.f32.partialorder %v204, 0.0
        %v206 = vmin.f32 %v204, 0.0
        %v207 = vmul.f32 %v206, 1.442695
        %v208 = vpow.pop %v207
        %v209 = vsub.f32 %v208, 1.0
        %v210 = vsel %vm205, %v204, %v209
        %s211 = scalar_lea.vmem %s152, 32
        %v212 = vld [vmem:[%s211] sm:$0xf]
        %v213 = vmul.f32 %v212, %v160
        %s214 = scalar_lea.vmem %s152, 36
        %v215 = vld [vmem:[%s214] sm:$0xf]
        %v216 = vmul.f32 %v215, %v165
        %v217 = vadd.f32 %v213, %v216
        %s218 = scalar_lea.vmem %s152, 40
        %v219 = vld [vmem:[%s218] sm:$0xf]
        %v220 = vmul.f32 %v219, %v171
        %v221 = vadd.f32 %v217, %v220
        %s222 = scalar_lea.vmem %s152, 44
        %v223 = vld [vmem:[%s222] sm:$0xf]
        %v224 = vmul.f32 %v223, %v177
        %v225 = vadd.f32 %v221, %v224
        %v226 = vadd.f32 %v225, %v181
        %vm227 = vcmp.gt.f32.partialorder %v226, 0.0
        %v228 = vmin.f32 %v226, 0.0
        %v229 = vmul.f32 %v228, 1.442695
        %v230 = vpow.pop %v229
        %v231 = vsub.f32 %v230, 1.0
        %v232 = vsel %vm227, %v226, %v231
        %s233 = scalar_lea.vmem %s152, 48
        %v234 = vld [vmem:[%s233] sm:$0xf]
        %v235 = vmul.f32 %v234, %v160
        %s236 = scalar_lea.vmem %s152, 52
        %v237 = vld [vmem:[%s236] sm:$0xf]
        %v238 = vmul.f32 %v237, %v165
        %v239 = vadd.f32 %v235, %v238
        %s240 = scalar_lea.vmem %s152, 56
        %v241 = vld [vmem:[%s240] sm:$0xf]
        %v242 = vmul.f32 %v241, %v171
        %v243 = vadd.f32 %v239, %v242
        %s244 = scalar_lea.vmem %s152, 60
        %v245 = vld [vmem:[%s244] sm:$0xf]
        %v246 = vmul.f32 %v245, %v177
        %v247 = vadd.f32 %v243, %v246
        %v248 = vadd.f32 %v247, %v181
        %vm249 = vcmp.gt.f32.partialorder %v248, 0.0
        %v250 = vmin.f32 %v248, 0.0
        %v251 = vmul.f32 %v250, 1.442695
        %v252 = vpow.pop %v251
        %v253 = vsub.f32 %v252, 1.0
        %v254 = vsel %vm249, %v248, %v253
        %s255 = sld [smem:[#allocation3 + $0x48]]
        %v256 = vstv %s255
        %v257 = vmul.f32 %v256, %v188
        %s258 = sld [smem:[#allocation3 + $0x50]]
        %v259 = vstv %s258
        %v260 = vmul.f32 %v259, %v210
        %v261 = vadd.f32 %v257, %v260
        %s262 = sld [smem:[#allocation3 + $0x40]]
        %264 = vrot.lane.b32.xlu0 %v210, 1
        %v265 = vpop.permute.xlu0 %264
        %vm267 = vcmask 7168
        %v268 = vsel %vm267, 0.0, %v265
        %v269 = vstv %s262
        %v270 = vmul.f32 %v269, %v268
        %v271 = vadd.f32 %v261, %v270
        %s272 = sld [smem:[#allocation3 + $0x60]]
        %v273 = vstv %s272
        %v274 = vmul.f32 %v273, %v232
        %v275 = vadd.f32 %v271, %v274
        %s276 = sld [smem:[#allocation3 + $0x30]]
        %v278 = vrot.slane %v232, 7
        %vm280 = vcmask 1040384
        %v281 = vsel %vm280, 0.0, %v278
        %v282 = vstv %s276
        %v283 = vmul.f32 %v282, %v281
        %v284 = vadd.f32 %v275, %v283
        %s285 = sld [smem:[#allocation3 + $0x68]]
        %v286 = vstv %s285
        %v287 = vmul.f32 %v286, %v254
        %v288 = vadd.f32 %v284, %v287
        %s289 = sld [smem:[#allocation3 + $0x58]]
        %291 = vrot.lane.b32.xlu0 %v254, 1
        %v292 = vpop.permute.xlu0 %291
        %v294 = vsel %vm267, 0.0, %v292
        %v295 = vstv %s289
        %v296 = vmul.f32 %v295, %v294
        %v297 = vadd.f32 %v288, %v296
        %v298 = vrot.slane %v254, 7
        %v300 = vsel %vm280, 0.0, %v298
        %s301 = sld [smem:[#allocation3 + $0x38]]
        %v302 = vstv %s301
        %v303 = vmul.f32 %v302, %v300
        %v304 = vadd.f32 %v297, %v303
        %s305 = sld [smem:[#allocation3 + $0x28]]
        %307 = vrot.lane.b32.xlu0 %v300, 1
        %v308 = vpop.permute.xlu0 %307
        %v310 = vsel %vm267, 0.0, %v308
        %v311 = vstv %s305
        %v312 = vmul.f32 %v311, %v310
        %v313 = vadd.f32 %v304, %v312
        %s314 = sld [smem:[#allocation3 + $0x70]]
        %v315 = vstv %s314
        %v316 = vadd.f32 %v313, %v315
        %vm317 = vcmp.gt.f32.partialorder %v316, 0.0
        %v318 = vmin.f32 %v316, 0.0
        %v319 = vmul.f32 %v318, 1.442695
        %v320 = vpow.pop %v319
        %v321 = vsub.f32 %v320, 1.0
        %v322 = vsel %vm317, %v316, %v321
        %vm323 = vcmask 27648
        %324 = vst.msk [vmem:[#allocation2] sm:$0xf] %vm323, %v322
        %v325 = vld [vmem:[%s152] sm:$0xf]
        %s326 = sld [smem:[#allocation3 + $0x1]]
        %v327 = vstv %s326
        %v328 = vmul.f32 %v325, %v327
        %v329 = vld [vmem:[%s162] sm:$0xf]
        %s330 = sld [smem:[#allocation3 + $0x9]]
        %v331 = vstv %s330
        %v332 = vmul.f32 %v329, %v331
        %v333 = vadd.f32 %v328, %v332
        %v334 = vld [vmem:[%s168] sm:$0xf]
        %s335 = sld [smem:[#allocation3 + $0x11]]
        %v336 = vstv %s335
        %v337 = vmul.f32 %v334, %v336
        %v338 = vadd.f32 %v333, %v337
        %v339 = vld [vmem:[%s174] sm:$0xf]
        %s340 = sld [smem:[#allocation3 + $0x19]]
        %v341 = vstv %s340
        %v342 = vmul.f32 %v339, %v341
        %v343 = vadd.f32 %v338, %v342
        %s344 = sld [smem:[#allocation3 + $0x21]]
        %v345 = vstv %s344
        %v346 = vadd.f32 %v343, %v345
        %vm347 = vcmp.gt.f32.partialorder %v346, 0.0
        %v348 = vmin.f32 %v346, 0.0
        %v349 = vmul.f32 %v348, 1.442695
        %v350 = vpow.pop %v349
        %v351 = vsub.f32 %v350, 1.0
        %v352 = vsel %vm347, %v346, %v351
        %v353 = vld [vmem:[%s189] sm:$0xf]
        %v354 = vmul.f32 %v353, %v327
        %v355 = vld [vmem:[%s192] sm:$0xf]
        %v356 = vmul.f32 %v355, %v331
        %v357 = vadd.f32 %v354, %v356
        %v358 = vld [vmem:[%s196] sm:$0xf]
        %v359 = vmul.f32 %v358, %v336
        %v360 = vadd.f32 %v357, %v359
        %v361 = vld [vmem:[%s200] sm:$0xf]
        %v362 = vmul.f32 %v361, %v341
        %v363 = vadd.f32 %v360, %v362
        %v364 = vadd.f32 %v363, %v345
        %vm365 = vcmp.gt.f32.partialorder %v364, 0.0
        %v366 = vmin.f32 %v364, 0.0
        %v367 = vmul.f32 %v366, 1.442695
        %v368 = vpow.pop %v367
        %v369 = vsub.f32 %v368, 1.0
        %v370 = vsel %vm365, %v364, %v369
        %v371 = vld [vmem:[%s211] sm:$0xf]
        %v372 = vmul.f32 %v371, %v327
        %v373 = vld [vmem:[%s214] sm:$0xf]
        %v374 = vmul.f32 %v373, %v331
        %v375 = vadd.f32 %v372, %v374
        %v376 = vld [vmem:[%s218] sm:$0xf]
        %v377 = vmul.f32 %v376, %v336
        %v378 = vadd.f32 %v375, %v377
        %v379 = vld [vmem:[%s222] sm:$0xf]
        %v380 = vmul.f32 %v379, %v341
        %v381 = vadd.f32 %v378, %v380
        %v382 = vadd.f32 %v381, %v345
        %vm383 = vcmp.gt.f32.partialorder %v382, 0.0
        %v384 = vmin.f32 %v382, 0.0
        %v385 = vmul.f32 %v384, 1.442695
        %v386 = vpow.pop %v385
        %v387 = vsub.f32 %v386, 1.0
        %v388 = vsel %vm383, %v382, %v387
        %v389 = vld [vmem:[%s233] sm:$0xf]
        %v390 = vmul.f32 %v389, %v327
        %v391 = vld [vmem:[%s236] sm:$0xf]
        %v392 = vmul.f32 %v391, %v331
        %v393 = vadd.f32 %v390, %v392
        %v394 = vld [vmem:[%s240] sm:$0xf]
        %v395 = vmul.f32 %v394, %v336
        %v396 = vadd.f32 %v393, %v395
        %v397 = vld [vmem:[%s244] sm:$0xf]
        %v398 = vmul.f32 %v397, %v341
        %v399 = vadd.f32 %v396, %v398
        %v400 = vadd.f32 %v399, %v345
        %vm401 = vcmp.gt.f32.partialorder %v400, 0.0
        %v402 = vmin.f32 %v400, 0.0
        %v403 = vmul.f32 %v402, 1.442695
        %v404 = vpow.pop %v403
        %v405 = vsub.f32 %v404, 1.0
        %v406 = vsel %vm401, %v400, %v405
        %s407 = sld [smem:[#allocation3 + $0x49]]
        %v408 = vstv %s407
        %v409 = vmul.f32 %v408, %v352
        %s410 = sld [smem:[#allocation3 + $0x51]]
        %v411 = vstv %s410
        %v412 = vmul.f32 %v411, %v370
        %v413 = vadd.f32 %v409, %v412
        %s414 = sld [smem:[#allocation3 + $0x41]]
        %416 = vrot.lane.b32.xlu0 %v370, 1
        %v417 = vpop.permute.xlu0 %416
        %v419 = vsel %vm267, 0.0, %v417
        %v420 = vstv %s414
        %v421 = vmul.f32 %v420, %v419
        %v422 = vadd.f32 %v413, %v421
        %s423 = sld [smem:[#allocation3 + $0x61]]
        %v424 = vstv %s423
        %v425 = vmul.f32 %v424, %v388
        %v426 = vadd.f32 %v422, %v425
        %s427 = sld [smem:[#allocation3 + $0x31]]
        %v429 = vrot.slane %v388, 7
        %v431 = vsel %vm280, 0.0, %v429
        %v432 = vstv %s427
        %v433 = vmul.f32 %v432, %v431
        %v434 = vadd.f32 %v426, %v433
        %s435 = sld [smem:[#allocation3 + $0x69]]
        %v436 = vstv %s435
        %v437 = vmul.f32 %v436, %v406
        %v438 = vadd.f32 %v434, %v437
        %s439 = sld [smem:[#allocation3 + $0x59]]
        %441 = vrot.lane.b32.xlu0 %v406, 1
        %v442 = vpop.permute.xlu0 %441
        %v444 = vsel %vm267, 0.0, %v442
        %v445 = vstv %s439
        %v446 = vmul.f32 %v445, %v444
        %v447 = vadd.f32 %v438, %v446
        %v448 = vrot.slane %v406, 7
        %v450 = vsel %vm280, 0.0, %v448
        %s451 = sld [smem:[#allocation3 + $0x39]]
        %v452 = vstv %s451
        %v453 = vmul.f32 %v452, %v450
        %v454 = vadd.f32 %v447, %v453
        %s455 = sld [smem:[#allocation3 + $0x29]]
        %457 = vrot.lane.b32.xlu0 %v450, 1
        %v458 = vpop.permute.xlu0 %457
        %v460 = vsel %vm267, 0.0, %v458
        %v461 = vstv %s455
        %v462 = vmul.f32 %v461, %v460
        %v463 = vadd.f32 %v454, %v462
        %s464 = sld [smem:[#allocation3 + $0x71]]
        %v465 = vstv %s464
        %v466 = vadd.f32 %v463, %v465
        %vm467 = vcmp.gt.f32.partialorder %v466, 0.0
        %v468 = vmin.f32 %v466, 0.0
        %v469 = vmul.f32 %v468, 1.442695
        %v470 = vpow.pop %v469
        %v471 = vsub.f32 %v470, 1.0
        %v472 = vsel %vm467, %v466, %v471
        %s473 = scalar_lea.vmem [#allocation2], 4
        %474 = vst.msk [vmem:[%s473] sm:$0xf] %vm323, %v472
        %v475 = vld [vmem:[%s152] sm:$0xf]
        %s476 = sld [smem:[#allocation3 + $0x2]]
        %v477 = vstv %s476
        %v478 = vmul.f32 %v475, %v477
        %v479 = vld [vmem:[%s162] sm:$0xf]
        %s480 = sld [smem:[#allocation3 + $0xa]]
        %v481 = vstv %s480
        %v482 = vmul.f32 %v479, %v481
        %v483 = vadd.f32 %v478, %v482
        %v484 = vld [vmem:[%s168] sm:$0xf]
        %s485 = sld [smem:[#allocation3 + $0x12]]
        %v486 = vstv %s485
        %v487 = vmul.f32 %v484, %v486
        %v488 = vadd.f32 %v483, %v487
        %v489 = vld [vmem:[%s174] sm:$0xf]
        %s490 = sld [smem:[#allocation3 + $0x1a]]
        %v491 = vstv %s490
        %v492 = vmul.f32 %v489, %v491
        %v493 = vadd.f32 %v488, %v492
        %s494 = sld [smem:[#allocation3 + $0x22]]
        %v495 = vstv %s494
        %v496 = vadd.f32 %v493, %v495
        %vm497 = vcmp.gt.f32.partialorder %v496, 0.0
        %v498 = vmin.f32 %v496, 0.0
        %v499 = vmul.f32 %v498, 1.442695
        %v500 = vpow.pop %v499
        %v501 = vsub.f32 %v500, 1.0
        %v502 = vsel %vm497, %v496, %v501
        %v503 = vld [vmem:[%s189] sm:$0xf]
        %v504 = vmul.f32 %v503, %v477
        %v505 = vld [vmem:[%s192] sm:$0xf]
        %v506 = vmul.f32 %v505, %v481
        %v507 = vadd.f32 %v504, %v506
        %v508 = vld [vmem:[%s196] sm:$0xf]
        %v509 = vmul.f32 %v508, %v486
        %v510 = vadd.f32 %v507, %v509
        %v511 = vld [vmem:[%s200] sm:$0xf]
        %v512 = vmul.f32 %v511, %v491
        %v513 = vadd.f32 %v510, %v512
        %v514 = vadd.f32 %v513, %v495
        %vm515 = vcmp.gt.f32.partialorder %v514, 0.0
        %v516 = vmin.f32 %v514, 0.0
        %v517 = vmul.f32 %v516, 1.442695
        %v518 = vpow.pop %v517
        %v519 = vsub.f32 %v518, 1.0
        %v520 = vsel %vm515, %v514, %v519
        %v521 = vld [vmem:[%s211] sm:$0xf]
        %v522 = vmul.f32 %v521, %v477
        %v523 = vld [vmem:[%s214] sm:$0xf]
        %v524 = vmul.f32 %v523, %v481
        %v525 = vadd.f32 %v522, %v524
        %v526 = vld [vmem:[%s218] sm:$0xf]
        %v527 = vmul.f32 %v526, %v486
        %v528 = vadd.f32 %v525, %v527
        %v529 = vld [vmem:[%s222] sm:$0xf]
        %v530 = vmul.f32 %v529, %v491
        %v531 = vadd.f32 %v528, %v530
        %v532 = vadd.f32 %v531, %v495
        %vm533 = vcmp.gt.f32.partialorder %v532, 0.0
        %v534 = vmin.f32 %v532, 0.0
        %v535 = vmul.f32 %v534, 1.442695
        %v536 = vpow.pop %v535
        %v537 = vsub.f32 %v536, 1.0
        %v538 = vsel %vm533, %v532, %v537
        %v539 = vld [vmem:[%s233] sm:$0xf]
        %v540 = vmul.f32 %v539, %v477
        %v541 = vld [vmem:[%s236] sm:$0xf]
        %v542 = vmul.f32 %v541, %v481
        %v543 = vadd.f32 %v540, %v542
        %v544 = vld [vmem:[%s240] sm:$0xf]
        %v545 = vmul.f32 %v544, %v486
        %v546 = vadd.f32 %v543, %v545
        %v547 = vld [vmem:[%s244] sm:$0xf]
        %v548 = vmul.f32 %v547, %v491
        %v549 = vadd.f32 %v546, %v548
        %v550 = vadd.f32 %v549, %v495
        %vm551 = vcmp.gt.f32.partialorder %v550, 0.0
        %v552 = vmin.f32 %v550, 0.0
        %v553 = vmul.f32 %v552, 1.442695
        %v554 = vpow.pop %v553
        %v555 = vsub.f32 %v554, 1.0
        %v556 = vsel %vm551, %v550, %v555
        %s557 = sld [smem:[#allocation3 + $0x4a]]
        %v558 = vstv %s557
        %v559 = vmul.f32 %v558, %v502
        %s560 = sld [smem:[#allocation3 + $0x52]]
        %v561 = vstv %s560
        %v562 = vmul.f32 %v561, %v520
        %v563 = vadd.f32 %v559, %v562
        %s564 = sld [smem:[#allocation3 + $0x42]]
        %566 = vrot.lane.b32.xlu0 %v520, 1
        %v567 = vpop.permute.xlu0 %566
        %v569 = vsel %vm267, 0.0, %v567
        %v570 = vstv %s564
        %v571 = vmul.f32 %v570, %v569
        %v572 = vadd.f32 %v563, %v571
        %s573 = sld [smem:[#allocation3 + $0x62]]
        %v574 = vstv %s573
        %v575 = vmul.f32 %v574, %v538
        %v576 = vadd.f32 %v572, %v575
        %s577 = sld [smem:[#allocation3 + $0x32]]
        %v579 = vrot.slane %v538, 7
        %v581 = vsel %vm280, 0.0, %v579
        %v582 = vstv %s577
        %v583 = vmul.f32 %v582, %v581
        %v584 = vadd.f32 %v576, %v583
        %s585 = sld [smem:[#allocation3 + $0x6a]]
        %v586 = vstv %s585
        %v587 = vmul.f32 %v586, %v556
        %v588 = vadd.f32 %v584, %v587
        %s589 = sld [smem:[#allocation3 + $0x5a]]
        %591 = vrot.lane.b32.xlu0 %v556, 1
        %v592 = vpop.permute.xlu0 %591
        %v594 = vsel %vm267, 0.0, %v592
        %v595 = vstv %s589
        %v596 = vmul.f32 %v595, %v594
        %v597 = vadd.f32 %v588, %v596
        %v598 = vrot.slane %v556, 7
        %v600 = vsel %vm280, 0.0, %v598
        %s601 = sld [smem:[#allocation3 + $0x3a]]
        %v602 = vstv %s601
        %v603 = vmul.f32 %v602, %v600
        %v604 = vadd.f32 %v597, %v603
        %s605 = sld [smem:[#allocation3 + $0x2a]]
        %607 = vrot.lane.b32.xlu0 %v600, 1
        %v608 = vpop.permute.xlu0 %607
        %v610 = vsel %vm267, 0.0, %v608
        %v611 = vstv %s605
        %v612 = vmul.f32 %v611, %v610
        %v613 = vadd.f32 %v604, %v612
        %s614 = sld [smem:[#allocation3 + $0x72]]
        %v615 = vstv %s614
        %v616 = vadd.f32 %v613, %v615
        %vm617 = vcmp.gt.f32.partialorder %v616, 0.0
        %v618 = vmin.f32 %v616, 0.0
        %v619 = vmul.f32 %v618, 1.442695
        %v620 = vpow.pop %v619
        %v621 = vsub.f32 %v620, 1.0
        %v622 = vsel %vm617, %v616, %v621
        %s623 = scalar_lea.vmem [#allocation2], 8
        %624 = vst.msk [vmem:[%s623] sm:$0xf] %vm323, %v622
        %v625 = vld [vmem:[%s152] sm:$0xf]
        %s626 = sld [smem:[#allocation3 + $0x3]]
        %v627 = vstv %s626
        %v628 = vmul.f32 %v625, %v627
        %v629 = vld [vmem:[%s162] sm:$0xf]
        %s630 = sld [smem:[#allocation3 + $0xb]]
        %v631 = vstv %s630
        %v632 = vmul.f32 %v629, %v631
        %v633 = vadd.f32 %v628, %v632
        %v634 = vld [vmem:[%s168] sm:$0xf]
        %s635 = sld [smem:[#allocation3 + $0x13]]
        %v636 = vstv %s635
        %v637 = vmul.f32 %v634, %v636
        %v638 = vadd.f32 %v633, %v637
        %v639 = vld [vmem:[%s174] sm:$0xf]
        %s640 = sld [smem:[#allocation3 + $0x1b]]
        %v641 = vstv %s640
        %v642 = vmul.f32 %v639, %v641
        %v643 = vadd.f32 %v638, %v642
        %s644 = sld [smem:[#allocation3 + $0x23]]
        %v645 = vstv %s644
        %v646 = vadd.f32 %v643, %v645
        %vm647 = vcmp.gt.f32.partialorder %v646, 0.0
        %v648 = vmin.f32 %v646, 0.0
        %v649 = vmul.f32 %v648, 1.442695
        %v650 = vpow.pop %v649
        %v651 = vsub.f32 %v650, 1.0
        %v652 = vsel %vm647, %v646, %v651
        %v653 = vld [vmem:[%s189] sm:$0xf]
        %v654 = vmul.f32 %v653, %v627
        %v655 = vld [vmem:[%s192] sm:$0xf]
        %v656 = vmul.f32 %v655, %v631
        %v657 = vadd.f32 %v654, %v656
        %v658 = vld [vmem:[%s196] sm:$0xf]
        %v659 = vmul.f32 %v658, %v636
        %v660 = vadd.f32 %v657, %v659
        %v661 = vld [vmem:[%s200] sm:$0xf]
        %v662 = vmul.f32 %v661, %v641
        %v663 = vadd.f32 %v660, %v662
        %v664 = vadd.f32 %v663, %v645
        %vm665 = vcmp.gt.f32.partialorder %v664, 0.0
        %v666 = vmin.f32 %v664, 0.0
        %v667 = vmul.f32 %v666, 1.442695
        %v668 = vpow.pop %v667
        %v669 = vsub.f32 %v668, 1.0
        %v670 = vsel %vm665, %v664, %v669
        %v671 = vld [vmem:[%s211] sm:$0xf]
        %v672 = vmul.f32 %v671, %v627
        %v673 = vld [vmem:[%s214] sm:$0xf]
        %v674 = vmul.f32 %v673, %v631
        %v675 = vadd.f32 %v672, %v674
        %v676 = vld [vmem:[%s218] sm:$0xf]
        %v677 = vmul.f32 %v676, %v636
        %v678 = vadd.f32 %v675, %v677
        %v679 = vld [vmem:[%s222] sm:$0xf]
        %v680 = vmul.f32 %v679, %v641
        %v681 = vadd.f32 %v678, %v680
        %v682 = vadd.f32 %v681, %v645
        %vm683 = vcmp.gt.f32.partialorder %v682, 0.0
        %v684 = vmin.f32 %v682, 0.0
        %v685 = vmul.f32 %v684, 1.442695
        %v686 = vpow.pop %v685
        %v687 = vsub.f32 %v686, 1.0
        %v688 = vsel %vm683, %v682, %v687
        %v689 = vld [vmem:[%s233] sm:$0xf]
        %v690 = vmul.f32 %v689, %v627
        %v691 = vld [vmem:[%s236] sm:$0xf]
        %v692 = vmul.f32 %v691, %v631
        %v693 = vadd.f32 %v690, %v692
        %v694 = vld [vmem:[%s240] sm:$0xf]
        %v695 = vmul.f32 %v694, %v636
        %v696 = vadd.f32 %v693, %v695
        %v697 = vld [vmem:[%s244] sm:$0xf]
        %v698 = vmul.f32 %v697, %v641
        %v699 = vadd.f32 %v696, %v698
        %v700 = vadd.f32 %v699, %v645
        %vm701 = vcmp.gt.f32.partialorder %v700, 0.0
        %v702 = vmin.f32 %v700, 0.0
        %v703 = vmul.f32 %v702, 1.442695
        %v704 = vpow.pop %v703
        %v705 = vsub.f32 %v704, 1.0
        %v706 = vsel %vm701, %v700, %v705
        %s707 = sld [smem:[#allocation3 + $0x4b]]
        %v708 = vstv %s707
        %v709 = vmul.f32 %v708, %v652
        %s710 = sld [smem:[#allocation3 + $0x53]]
        %v711 = vstv %s710
        %v712 = vmul.f32 %v711, %v670
        %v713 = vadd.f32 %v709, %v712
        %s714 = sld [smem:[#allocation3 + $0x43]]
        %716 = vrot.lane.b32.xlu0 %v670, 1
        %v717 = vpop.permute.xlu0 %716
        %v719 = vsel %vm267, 0.0, %v717
        %v720 = vstv %s714
        %v721 = vmul.f32 %v720, %v719
        %v722 = vadd.f32 %v713, %v721
        %s723 = sld [smem:[#allocation3 + $0x63]]
        %v724 = vstv %s723
        %v725 = vmul.f32 %v724, %v688
        %v726 = vadd.f32 %v722, %v725
        %s727 = sld [smem:[#allocation3 + $0x33]]
        %v729 = vrot.slane %v688, 7
        %v731 = vsel %vm280, 0.0, %v729
        %v732 = vstv %s727
        %v733 = vmul.f32 %v732, %v731
        %v734 = vadd.f32 %v726, %v733
        %s735 = sld [smem:[#allocation3 + $0x6b]]
        %v736 = vstv %s735
        %v737 = vmul.f32 %v736, %v706
        %v738 = vadd.f32 %v734, %v737
        %s739 = sld [smem:[#allocation3 + $0x5b]]
        %741 = vrot.lane.b32.xlu0 %v706, 1
        %v742 = vpop.permute.xlu0 %741
        %v744 = vsel %vm267, 0.0, %v742
        %v745 = vstv %s739
        %v746 = vmul.f32 %v745, %v744
        %v747 = vadd.f32 %v738, %v746
        %v748 = vrot.slane %v706, 7
        %v750 = vsel %vm280, 0.0, %v748
        %s751 = sld [smem:[#allocation3 + $0x3b]]
        %v752 = vstv %s751
        %v753 = vmul.f32 %v752, %v750
        %v754 = vadd.f32 %v747, %v753
        %s755 = sld [smem:[#allocation3 + $0x2b]]
        %757 = vrot.lane.b32.xlu0 %v750, 1
        %v758 = vpop.permute.xlu0 %757
        %v760 = vsel %vm267, 0.0, %v758
        %v761 = vstv %s755
        %v762 = vmul.f32 %v761, %v760
        %v763 = vadd.f32 %v754, %v762
        %s764 = sld [smem:[#allocation3 + $0x73]]
        %v765 = vstv %s764
        %v766 = vadd.f32 %v763, %v765
        %vm767 = vcmp.gt.f32.partialorder %v766, 0.0
        %v768 = vmin.f32 %v766, 0.0
        %v769 = vmul.f32 %v768, 1.442695
        %v770 = vpow.pop %v769
        %v771 = vsub.f32 %v770, 1.0
        %v772 = vsel %vm767, %v766, %v771
        %s773 = scalar_lea.vmem [#allocation2], 12
        %774 = vst.msk [vmem:[%s773] sm:$0xf] %vm323, %v772
        %v775 = vld [vmem:[%s152] sm:$0xf]
        %s776 = sld [smem:[#allocation3 + $0x4]]
        %v777 = vstv %s776
        %v778 = vmul.f32 %v775, %v777
        %v779 = vld [vmem:[%s162] sm:$0xf]
        %s780 = sld [smem:[#allocation3 + $0xc]]
        %v781 = vstv %s780
        %v782 = vmul.f32 %v779, %v781
        %v783 = vadd.f32 %v778, %v782
        %v784 = vld [vmem:[%s168] sm:$0xf]
        %s785 = sld [smem:[#allocation3 + $0x14]]
        %v786 = vstv %s785
        %v787 = vmul.f32 %v784, %v786
        %v788 = vadd.f32 %v783, %v787
        %v789 = vld [vmem:[%s174] sm:$0xf]
        %s790 = sld [smem:[#allocation3 + $0x1c]]
        %v791 = vstv %s790
        %v792 = vmul.f32 %v789, %v791
        %v793 = vadd.f32 %v788, %v792
        %s794 = sld [smem:[#allocation3 + $0x24]]
        %v795 = vstv %s794
        %v796 = vadd.f32 %v793, %v795
        %vm797 = vcmp.gt.f32.partialorder %v796, 0.0
        %v798 = vmin.f32 %v796, 0.0
        %v799 = vmul.f32 %v798, 1.442695
        %v800 = vpow.pop %v799
        %v801 = vsub.f32 %v800, 1.0
        %v802 = vsel %vm797, %v796, %v801
        %v803 = vld [vmem:[%s189] sm:$0xf]
        %v804 = vmul.f32 %v803, %v777
        %v805 = vld [vmem:[%s192] sm:$0xf]
        %v806 = vmul.f32 %v805, %v781
        %v807 = vadd.f32 %v804, %v806
        %v808 = vld [vmem:[%s196] sm:$0xf]
        %v809 = vmul.f32 %v808, %v786
        %v810 = vadd.f32 %v807, %v809
        %v811 = vld [vmem:[%s200] sm:$0xf]
        %v812 = vmul.f32 %v811, %v791
        %v813 = vadd.f32 %v810, %v812
        %v814 = vadd.f32 %v813, %v795
        %vm815 = vcmp.gt.f32.partialorder %v814, 0.0
        %v816 = vmin.f32 %v814, 0.0
        %v817 = vmul.f32 %v816, 1.442695
        %v818 = vpow.pop %v817
        %v819 = vsub.f32 %v818, 1.0
        %v820 = vsel %vm815, %v814, %v819
        %v821 = vld [vmem:[%s211] sm:$0xf]
        %v822 = vmul.f32 %v821, %v777
        %v823 = vld [vmem:[%s214] sm:$0xf]
        %v824 = vmul.f32 %v823, %v781
        %v825 = vadd.f32 %v822, %v824
        %v826 = vld [vmem:[%s218] sm:$0xf]
        %v827 = vmul.f32 %v826, %v786
        %v828 = vadd.f32 %v825, %v827
        %v829 = vld [vmem:[%s222] sm:$0xf]
        %v830 = vmul.f32 %v829, %v791
        %v831 = vadd.f32 %v828, %v830
        %v832 = vadd.f32 %v831, %v795
        %vm833 = vcmp.gt.f32.partialorder %v832, 0.0
        %v834 = vmin.f32 %v832, 0.0
        %v835 = vmul.f32 %v834, 1.442695
        %v836 = vpow.pop %v835
        %v837 = vsub.f32 %v836, 1.0
        %v838 = vsel %vm833, %v832, %v837
        %v839 = vld [vmem:[%s233] sm:$0xf]
        %v840 = vmul.f32 %v839, %v777
        %v841 = vld [vmem:[%s236] sm:$0xf]
        %v842 = vmul.f32 %v841, %v781
        %v843 = vadd.f32 %v840, %v842
        %v844 = vld [vmem:[%s240] sm:$0xf]
        %v845 = vmul.f32 %v844, %v786
        %v846 = vadd.f32 %v843, %v845
        %v847 = vld [vmem:[%s244] sm:$0xf]
        %v848 = vmul.f32 %v847, %v791
        %v849 = vadd.f32 %v846, %v848
        %v850 = vadd.f32 %v849, %v795
        %vm851 = vcmp.gt.f32.partialorder %v850, 0.0
        %v852 = vmin.f32 %v850, 0.0
        %v853 = vmul.f32 %v852, 1.442695
        %v854 = vpow.pop %v853
        %v855 = vsub.f32 %v854, 1.0
        %v856 = vsel %vm851, %v850, %v855
        %s857 = sld [smem:[#allocation3 + $0x4c]]
        %v858 = vstv %s857
        %v859 = vmul.f32 %v858, %v802
        %s860 = sld [smem:[#allocation3 + $0x54]]
        %v861 = vstv %s860
        %v862 = vmul.f32 %v861, %v820
        %v863 = vadd.f32 %v859, %v862
        %s864 = sld [smem:[#allocation3 + $0x44]]
        %866 = vrot.lane.b32.xlu0 %v820, 1
        %v867 = vpop.permute.xlu0 %866
        %v869 = vsel %vm267, 0.0, %v867
        %v870 = vstv %s864
        %v871 = vmul.f32 %v870, %v869
        %v872 = vadd.f32 %v863, %v871
        %s873 = sld [smem:[#allocation3 + $0x64]]
        %v874 = vstv %s873
        %v875 = vmul.f32 %v874, %v838
        %v876 = vadd.f32 %v872, %v875
        %s877 = sld [smem:[#allocation3 + $0x34]]
        %v879 = vrot.slane %v838, 7
        %v881 = vsel %vm280, 0.0, %v879
        %v882 = vstv %s877
        %v883 = vmul.f32 %v882, %v881
        %v884 = vadd.f32 %v876, %v883
        %s885 = sld [smem:[#allocation3 + $0x6c]]
        %v886 = vstv %s885
        %v887 = vmul.f32 %v886, %v856
        %v888 = vadd.f32 %v884, %v887
        %s889 = sld [smem:[#allocation3 + $0x5c]]
        %891 = vrot.lane.b32.xlu0 %v856, 1
        %v892 = vpop.permute.xlu0 %891
        %v894 = vsel %vm267, 0.0, %v892
        %v895 = vstv %s889
        %v896 = vmul.f32 %v895, %v894
        %v897 = vadd.f32 %v888, %v896
        %v898 = vrot.slane %v856, 7
        %v900 = vsel %vm280, 0.0, %v898
        %s901 = sld [smem:[#allocation3 + $0x3c]]
        %v902 = vstv %s901
        %v903 = vmul.f32 %v902, %v900
        %v904 = vadd.f32 %v897, %v903
        %s905 = sld [smem:[#allocation3 + $0x2c]]
        %907 = vrot.lane.b32.xlu0 %v900, 1
        %v908 = vpop.permute.xlu0 %907
        %v910 = vsel %vm267, 0.0, %v908
        %v911 = vstv %s905
        %v912 = vmul.f32 %v911, %v910
        %v913 = vadd.f32 %v904, %v912
        %s914 = sld [smem:[#allocation3 + $0x74]]
        %v915 = vstv %s914
        %v916 = vadd.f32 %v913, %v915
        %vm917 = vcmp.gt.f32.partialorder %v916, 0.0
        %v918 = vmin.f32 %v916, 0.0
        %v919 = vmul.f32 %v918, 1.442695
        %v920 = vpow.pop %v919
        %v921 = vsub.f32 %v920, 1.0
        %v922 = vsel %vm917, %v916, %v921
        %s923 = scalar_lea.vmem [#allocation2], 16
        %924 = vst.msk [vmem:[%s923] sm:$0xf] %vm323, %v922
        %v925 = vld [vmem:[%s152] sm:$0xf]
        %s926 = sld [smem:[#allocation3 + $0x5]]
        %v927 = vstv %s926
        %v928 = vmul.f32 %v925, %v927
        %v929 = vld [vmem:[%s162] sm:$0xf]
        %s930 = sld [smem:[#allocation3 + $0xd]]
        %v931 = vstv %s930
        %v932 = vmul.f32 %v929, %v931
        %v933 = vadd.f32 %v928, %v932
        %v934 = vld [vmem:[%s168] sm:$0xf]
        %s935 = sld [smem:[#allocation3 + $0x15]]
        %v936 = vstv %s935
        %v937 = vmul.f32 %v934, %v936
        %v938 = vadd.f32 %v933, %v937
        %v939 = vld [vmem:[%s174] sm:$0xf]
        %s940 = sld [smem:[#allocation3 + $0x1d]]
        %v941 = vstv %s940
        %v942 = vmul.f32 %v939, %v941
        %v943 = vadd.f32 %v938, %v942
        %s944 = sld [smem:[#allocation3 + $0x25]]
        %v945 = vstv %s944
        %v946 = vadd.f32 %v943, %v945
        %vm947 = vcmp.gt.f32.partialorder %v946, 0.0
        %v948 = vmin.f32 %v946, 0.0
        %v949 = vmul.f32 %v948, 1.442695
        %v950 = vpow.pop %v949
        %v951 = vsub.f32 %v950, 1.0
        %v952 = vsel %vm947, %v946, %v951
        %v953 = vld [vmem:[%s189] sm:$0xf]
        %v954 = vmul.f32 %v953, %v927
        %v955 = vld [vmem:[%s192] sm:$0xf]
        %v956 = vmul.f32 %v955, %v931
        %v957 = vadd.f32 %v954, %v956
        %v958 = vld [vmem:[%s196] sm:$0xf]
        %v959 = vmul.f32 %v958, %v936
        %v960 = vadd.f32 %v957, %v959
        %v961 = vld [vmem:[%s200] sm:$0xf]
        %v962 = vmul.f32 %v961, %v941
        %v963 = vadd.f32 %v960, %v962
        %v964 = vadd.f32 %v963, %v945
        %vm965 = vcmp.gt.f32.partialorder %v964, 0.0
        %v966 = vmin.f32 %v964, 0.0
        %v967 = vmul.f32 %v966, 1.442695
        %v968 = vpow.pop %v967
        %v969 = vsub.f32 %v968, 1.0
        %v970 = vsel %vm965, %v964, %v969
        %v971 = vld [vmem:[%s211] sm:$0xf]
        %v972 = vmul.f32 %v971, %v927
        %v973 = vld [vmem:[%s214] sm:$0xf]
        %v974 = vmul.f32 %v973, %v931
        %v975 = vadd.f32 %v972, %v974
        %v976 = vld [vmem:[%s218] sm:$0xf]
        %v977 = vmul.f32 %v976, %v936
        %v978 = vadd.f32 %v975, %v977
        %v979 = vld [vmem:[%s222] sm:$0xf]
        %v980 = vmul.f32 %v979, %v941
        %v981 = vadd.f32 %v978, %v980
        %v982 = vadd.f32 %v981, %v945
        %vm983 = vcmp.gt.f32.partialorder %v982, 0.0
        %v984 = vmin.f32 %v982, 0.0
        %v985 = vmul.f32 %v984, 1.442695
        %v986 = vpow.pop %v985
        %v987 = vsub.f32 %v986, 1.0
        %v988 = vsel %vm983, %v982, %v987
        %v989 = vld [vmem:[%s233] sm:$0xf]
        %v990 = vmul.f32 %v989, %v927
        %v991 = vld [vmem:[%s236] sm:$0xf]
        %v992 = vmul.f32 %v991, %v931
        %v993 = vadd.f32 %v990, %v992
        %v994 = vld [vmem:[%s240] sm:$0xf]
        %v995 = vmul.f32 %v994, %v936
        %v996 = vadd.f32 %v993, %v995
        %v997 = vld [vmem:[%s244] sm:$0xf]
        %v998 = vmul.f32 %v997, %v941
        %v999 = vadd.f32 %v996, %v998
        %v1000 = vadd.f32 %v999, %v945
        %vm1001 = vcmp.gt.f32.partialorder %v1000, 0.0
        %v1002 = vmin.f32 %v1000, 0.0
        %v1003 = vmul.f32 %v1002, 1.442695
        %v1004 = vpow.pop %v1003
        %v1005 = vsub.f32 %v1004, 1.0
        %v1006 = vsel %vm1001, %v1000, %v1005
        %s1007 = sld [smem:[#allocation3 + $0x4d]]
        %v1008 = vstv %s1007
        %v1009 = vmul.f32 %v1008, %v952
        %s1010 = sld [smem:[#allocation3 + $0x55]]
        %v1011 = vstv %s1010
        %v1012 = vmul.f32 %v1011, %v970
        %v1013 = vadd.f32 %v1009, %v1012
        %s1014 = sld [smem:[#allocation3 + $0x45]]
        %1016 = vrot.lane.b32.xlu0 %v970, 1
        %v1017 = vpop.permute.xlu0 %1016
        %v1019 = vsel %vm267, 0.0, %v1017
        %v1020 = vstv %s1014
        %v1021 = vmul.f32 %v1020, %v1019
        %v1022 = vadd.f32 %v1013, %v1021
        %s1023 = sld [smem:[#allocation3 + $0x65]]
        %v1024 = vstv %s1023
        %v1025 = vmul.f32 %v1024, %v988
        %v1026 = vadd.f32 %v1022, %v1025
        %s1027 = sld [smem:[#allocation3 + $0x35]]
        %v1029 = vrot.slane %v988, 7
        %v1031 = vsel %vm280, 0.0, %v1029
        %v1032 = vstv %s1027
        %v1033 = vmul.f32 %v1032, %v1031
        %v1034 = vadd.f32 %v1026, %v1033
        %s1035 = sld [smem:[#allocation3 + $0x6d]]
        %v1036 = vstv %s1035
        %v1037 = vmul.f32 %v1036, %v1006
        %v1038 = vadd.f32 %v1034, %v1037
        %s1039 = sld [smem:[#allocation3 + $0x5d]]
        %1041 = vrot.lane.b32.xlu0 %v1006, 1
        %v1042 = vpop.permute.xlu0 %1041
        %v1044 = vsel %vm267, 0.0, %v1042
        %v1045 = vstv %s1039
        %v1046 = vmul.f32 %v1045, %v1044
        %v1047 = vadd.f32 %v1038, %v1046
        %v1048 = vrot.slane %v1006, 7
        %v1050 = vsel %vm280, 0.0, %v1048
        %s1051 = sld [smem:[#allocation3 + $0x3d]]
        %v1052 = vstv %s1051
        %v1053 = vmul.f32 %v1052, %v1050
        %v1054 = vadd.f32 %v1047, %v1053
        %s1055 = sld [smem:[#allocation3 + $0x2d]]
        %1057 = vrot.lane.b32.xlu0 %v1050, 1
        %v1058 = vpop.permute.xlu0 %1057
        %v1060 = vsel %vm267, 0.0, %v1058
        %v1061 = vstv %s1055
        %v1062 = vmul.f32 %v1061, %v1060
        %v1063 = vadd.f32 %v1054, %v1062
        %s1064 = sld [smem:[#allocation3 + $0x75]]
        %v1065 = vstv %s1064
        %v1066 = vadd.f32 %v1063, %v1065
        %vm1067 = vcmp.gt.f32.partialorder %v1066, 0.0
        %v1068 = vmin.f32 %v1066, 0.0
        %v1069 = vmul.f32 %v1068, 1.442695
        %v1070 = vpow.pop %v1069
        %v1071 = vsub.f32 %v1070, 1.0
        %v1072 = vsel %vm1067, %v1066, %v1071
        %s1073 = scalar_lea.vmem [#allocation2], 20
        %1074 = vst.msk [vmem:[%s1073] sm:$0xf] %vm323, %v1072
        %v1075 = vld [vmem:[%s152] sm:$0xf]
        %s1076 = sld [smem:[#allocation3 + $0x6]]
        %v1077 = vstv %s1076
        %v1078 = vmul.f32 %v1075, %v1077
        %v1079 = vld [vmem:[%s162] sm:$0xf]
        %s1080 = sld [smem:[#allocation3 + $0xe]]
        %v1081 = vstv %s1080
        %v1082 = vmul.f32 %v1079, %v1081
        %v1083 = vadd.f32 %v1078, %v1082
        %v1084 = vld [vmem:[%s168] sm:$0xf]
        %s1085 = sld [smem:[#allocation3 + $0x16]]
        %v1086 = vstv %s1085
        %v1087 = vmul.f32 %v1084, %v1086
        %v1088 = vadd.f32 %v1083, %v1087
        %v1089 = vld [vmem:[%s174] sm:$0xf]
        %s1090 = sld [smem:[#allocation3 + $0x1e]]
        %v1091 = vstv %s1090
        %v1092 = vmul.f32 %v1089, %v1091
        %v1093 = vadd.f32 %v1088, %v1092
        %s1094 = sld [smem:[#allocation3 + $0x26]]
        %v1095 = vstv %s1094
        %v1096 = vadd.f32 %v1093, %v1095
        %vm1097 = vcmp.gt.f32.partialorder %v1096, 0.0
        %v1098 = vmin.f32 %v1096, 0.0
        %v1099 = vmul.f32 %v1098, 1.442695
        %v1100 = vpow.pop %v1099
        %v1101 = vsub.f32 %v1100, 1.0
        %v1102 = vsel %vm1097, %v1096, %v1101
        %v1103 = vld [vmem:[%s189] sm:$0xf]
        %v1104 = vmul.f32 %v1103, %v1077
        %v1105 = vld [vmem:[%s192] sm:$0xf]
        %v1106 = vmul.f32 %v1105, %v1081
        %v1107 = vadd.f32 %v1104, %v1106
        %v1108 = vld [vmem:[%s196] sm:$0xf]
        %v1109 = vmul.f32 %v1108, %v1086
        %v1110 = vadd.f32 %v1107, %v1109
        %v1111 = vld [vmem:[%s200] sm:$0xf]
        %v1112 = vmul.f32 %v1111, %v1091
        %v1113 = vadd.f32 %v1110, %v1112
        %v1114 = vadd.f32 %v1113, %v1095
        %vm1115 = vcmp.gt.f32.partialorder %v1114, 0.0
        %v1116 = vmin.f32 %v1114, 0.0
        %v1117 = vmul.f32 %v1116, 1.442695
        %v1118 = vpow.pop %v1117
        %v1119 = vsub.f32 %v1118, 1.0
        %v1120 = vsel %vm1115, %v1114, %v1119
        %v1121 = vld [vmem:[%s211] sm:$0xf]
        %v1122 = vmul.f32 %v1121, %v1077
        %v1123 = vld [vmem:[%s214] sm:$0xf]
        %v1124 = vmul.f32 %v1123, %v1081
        %v1125 = vadd.f32 %v1122, %v1124
        %v1126 = vld [vmem:[%s218] sm:$0xf]
        %v1127 = vmul.f32 %v1126, %v1086
        %v1128 = vadd.f32 %v1125, %v1127
        %v1129 = vld [vmem:[%s222] sm:$0xf]
        %v1130 = vmul.f32 %v1129, %v1091
        %v1131 = vadd.f32 %v1128, %v1130
        %v1132 = vadd.f32 %v1131, %v1095
        %vm1133 = vcmp.gt.f32.partialorder %v1132, 0.0
        %v1134 = vmin.f32 %v1132, 0.0
        %v1135 = vmul.f32 %v1134, 1.442695
        %v1136 = vpow.pop %v1135
        %v1137 = vsub.f32 %v1136, 1.0
        %v1138 = vsel %vm1133, %v1132, %v1137
        %v1139 = vld [vmem:[%s233] sm:$0xf]
        %v1140 = vmul.f32 %v1139, %v1077
        %v1141 = vld [vmem:[%s236] sm:$0xf]
        %v1142 = vmul.f32 %v1141, %v1081
        %v1143 = vadd.f32 %v1140, %v1142
        %v1144 = vld [vmem:[%s240] sm:$0xf]
        %v1145 = vmul.f32 %v1144, %v1086
        %v1146 = vadd.f32 %v1143, %v1145
        %v1147 = vld [vmem:[%s244] sm:$0xf]
        %v1148 = vmul.f32 %v1147, %v1091
        %v1149 = vadd.f32 %v1146, %v1148
        %v1150 = vadd.f32 %v1149, %v1095
        %vm1151 = vcmp.gt.f32.partialorder %v1150, 0.0
        %v1152 = vmin.f32 %v1150, 0.0
        %v1153 = vmul.f32 %v1152, 1.442695
        %v1154 = vpow.pop %v1153
        %v1155 = vsub.f32 %v1154, 1.0
        %v1156 = vsel %vm1151, %v1150, %v1155
        %s1157 = sld [smem:[#allocation3 + $0x4e]]
        %v1158 = vstv %s1157
        %v1159 = vmul.f32 %v1158, %v1102
        %s1160 = sld [smem:[#allocation3 + $0x56]]
        %v1161 = vstv %s1160
        %v1162 = vmul.f32 %v1161, %v1120
        %v1163 = vadd.f32 %v1159, %v1162
        %s1164 = sld [smem:[#allocation3 + $0x46]]
        %1166 = vrot.lane.b32.xlu0 %v1120, 1
        %v1167 = vpop.permute.xlu0 %1166
        %v1169 = vsel %vm267, 0.0, %v1167
        %v1170 = vstv %s1164
        %v1171 = vmul.f32 %v1170, %v1169
        %v1172 = vadd.f32 %v1163, %v1171
        %s1173 = sld [smem:[#allocation3 + $0x66]]
        %v1174 = vstv %s1173
        %v1175 = vmul.f32 %v1174, %v1138
        %v1176 = vadd.f32 %v1172, %v1175
        %s1177 = sld [smem:[#allocation3 + $0x36]]
        %v1179 = vrot.slane %v1138, 7
        %v1181 = vsel %vm280, 0.0, %v1179
        %v1182 = vstv %s1177
        %v1183 = vmul.f32 %v1182, %v1181
        %v1184 = vadd.f32 %v1176, %v1183
        %s1185 = sld [smem:[#allocation3 + $0x6e]]
        %v1186 = vstv %s1185
        %v1187 = vmul.f32 %v1186, %v1156
        %v1188 = vadd.f32 %v1184, %v1187
        %s1189 = sld [smem:[#allocation3 + $0x5e]]
        %1191 = vrot.lane.b32.xlu0 %v1156, 1
        %v1192 = vpop.permute.xlu0 %1191
        %v1194 = vsel %vm267, 0.0, %v1192
        %v1195 = vstv %s1189
        %v1196 = vmul.f32 %v1195, %v1194
        %v1197 = vadd.f32 %v1188, %v1196
        %v1198 = vrot.slane %v1156, 7
        %v1200 = vsel %vm280, 0.0, %v1198
        %s1201 = sld [smem:[#allocation3 + $0x3e]]
        %v1202 = vstv %s1201
        %v1203 = vmul.f32 %v1202, %v1200
        %v1204 = vadd.f32 %v1197, %v1203
        %s1205 = sld [smem:[#allocation3 + $0x2e]]
        %1207 = vrot.lane.b32.xlu0 %v1200, 1
        %v1208 = vpop.permute.xlu0 %1207
        %v1210 = vsel %vm267, 0.0, %v1208
        %v1211 = vstv %s1205
        %v1212 = vmul.f32 %v1211, %v1210
        %v1213 = vadd.f32 %v1204, %v1212
        %s1214 = sld [smem:[#allocation3 + $0x76]]
        %v1215 = vstv %s1214
        %v1216 = vadd.f32 %v1213, %v1215
        %vm1217 = vcmp.gt.f32.partialorder %v1216, 0.0
        %v1218 = vmin.f32 %v1216, 0.0
        %v1219 = vmul.f32 %v1218, 1.442695
        %v1220 = vpow.pop %v1219
        %v1221 = vsub.f32 %v1220, 1.0
        %v1222 = vsel %vm1217, %v1216, %v1221
        %s1223 = scalar_lea.vmem [#allocation2], 24
        %1224 = vst.msk [vmem:[%s1223] sm:$0xf] %vm323, %v1222
        %v1225 = vld [vmem:[%s152] sm:$0xf]
        %s1226 = sld [smem:[#allocation3 + $0x7]]
        %v1227 = vstv %s1226
        %v1228 = vmul.f32 %v1225, %v1227
        %v1229 = vld [vmem:[%s162] sm:$0xf]
        %s1230 = sld [smem:[#allocation3 + $0xf]]
        %v1231 = vstv %s1230
        %v1232 = vmul.f32 %v1229, %v1231
        %v1233 = vadd.f32 %v1228, %v1232
        %v1234 = vld [vmem:[%s168] sm:$0xf]
        %s1235 = sld [smem:[#allocation3 + $0x17]]
        %v1236 = vstv %s1235
        %v1237 = vmul.f32 %v1234, %v1236
        %v1238 = vadd.f32 %v1233, %v1237
        %v1239 = vld [vmem:[%s174] sm:$0xf]
        %s1240 = sld [smem:[#allocation3 + $0x1f]]
        %v1241 = vstv %s1240
        %v1242 = vmul.f32 %v1239, %v1241
        %v1243 = vadd.f32 %v1238, %v1242
        %s1244 = sld [smem:[#allocation3 + $0x27]]
        %v1245 = vstv %s1244
        %v1246 = vadd.f32 %v1243, %v1245
        %vm1247 = vcmp.gt.f32.partialorder %v1246, 0.0
        %v1248 = vmin.f32 %v1246, 0.0
        %v1249 = vmul.f32 %v1248, 1.442695
        %v1250 = vpow.pop %v1249
        %v1251 = vsub.f32 %v1250, 1.0
        %v1252 = vsel %vm1247, %v1246, %v1251
        %v1253 = vld [vmem:[%s189] sm:$0xf]
        %v1254 = vmul.f32 %v1253, %v1227
        %v1255 = vld [vmem:[%s192] sm:$0xf]
        %v1256 = vmul.f32 %v1255, %v1231
        %v1257 = vadd.f32 %v1254, %v1256
        %v1258 = vld [vmem:[%s196] sm:$0xf]
        %v1259 = vmul.f32 %v1258, %v1236
        %v1260 = vadd.f32 %v1257, %v1259
        %v1261 = vld [vmem:[%s200] sm:$0xf]
        %v1262 = vmul.f32 %v1261, %v1241
        %v1263 = vadd.f32 %v1260, %v1262
        %v1264 = vadd.f32 %v1263, %v1245
        %vm1265 = vcmp.gt.f32.partialorder %v1264, 0.0
        %v1266 = vmin.f32 %v1264, 0.0
        %v1267 = vmul.f32 %v1266, 1.442695
        %v1268 = vpow.pop %v1267
        %v1269 = vsub.f32 %v1268, 1.0
        %v1270 = vsel %vm1265, %v1264, %v1269
        %v1271 = vld [vmem:[%s211] sm:$0xf]
        %v1272 = vmul.f32 %v1271, %v1227
        %v1273 = vld [vmem:[%s214] sm:$0xf]
        %v1274 = vmul.f32 %v1273, %v1231
        %v1275 = vadd.f32 %v1272, %v1274
        %v1276 = vld [vmem:[%s218] sm:$0xf]
        %v1277 = vmul.f32 %v1276, %v1236
        %v1278 = vadd.f32 %v1275, %v1277
        %v1279 = vld [vmem:[%s222] sm:$0xf]
        %v1280 = vmul.f32 %v1279, %v1241
        %v1281 = vadd.f32 %v1278, %v1280
        %v1282 = vadd.f32 %v1281, %v1245
        %vm1283 = vcmp.gt.f32.partialorder %v1282, 0.0
        %v1284 = vmin.f32 %v1282, 0.0
        %v1285 = vmul.f32 %v1284, 1.442695
        %v1286 = vpow.pop %v1285
        %v1287 = vsub.f32 %v1286, 1.0
        %v1288 = vsel %vm1283, %v1282, %v1287
        %v1289 = vld [vmem:[%s233] sm:$0xf]
        %v1290 = vmul.f32 %v1289, %v1227
        %v1291 = vld [vmem:[%s236] sm:$0xf]
        %v1292 = vmul.f32 %v1291, %v1231
        %v1293 = vadd.f32 %v1290, %v1292
        %v1294 = vld [vmem:[%s240] sm:$0xf]
        %v1295 = vmul.f32 %v1294, %v1236
        %v1296 = vadd.f32 %v1293, %v1295
        %v1297 = vld [vmem:[%s244] sm:$0xf]
        %v1298 = vmul.f32 %v1297, %v1241
        %v1299 = vadd.f32 %v1296, %v1298
        %v1300 = vadd.f32 %v1299, %v1245
        %vm1301 = vcmp.gt.f32.partialorder %v1300, 0.0
        %v1302 = vmin.f32 %v1300, 0.0
        %v1303 = vmul.f32 %v1302, 1.442695
        %v1304 = vpow.pop %v1303
        %v1305 = vsub.f32 %v1304, 1.0
        %v1306 = vsel %vm1301, %v1300, %v1305
        %s1307 = sld [smem:[#allocation3 + $0x4f]]
        %v1308 = vstv %s1307
        %v1309 = vmul.f32 %v1308, %v1252
        %s1310 = sld [smem:[#allocation3 + $0x57]]
        %v1311 = vstv %s1310
        %v1312 = vmul.f32 %v1311, %v1270
        %v1313 = vadd.f32 %v1309, %v1312
        %s1314 = sld [smem:[#allocation3 + $0x47]]
        %1316 = vrot.lane.b32.xlu0 %v1270, 1
        %v1317 = vpop.permute.xlu0 %1316
        %v1319 = vsel %vm267, 0.0, %v1317
        %v1320 = vstv %s1314
        %v1321 = vmul.f32 %v1320, %v1319
        %v1322 = vadd.f32 %v1313, %v1321
        %s1323 = sld [smem:[#allocation3 + $0x67]]
        %v1324 = vstv %s1323
        %v1325 = vmul.f32 %v1324, %v1288
        %v1326 = vadd.f32 %v1322, %v1325
        %s1327 = sld [smem:[#allocation3 + $0x37]]
        %v1329 = vrot.slane %v1288, 7
        %v1331 = vsel %vm280, 0.0, %v1329
        %v1332 = vstv %s1327
        %v1333 = vmul.f32 %v1332, %v1331
        %v1334 = vadd.f32 %v1326, %v1333
        %s1335 = sld [smem:[#allocation3 + $0x6f]]
        %v1336 = vstv %s1335
        %v1337 = vmul.f32 %v1336, %v1306
        %v1338 = vadd.f32 %v1334, %v1337
        %s1339 = sld [smem:[#allocation3 + $0x5f]]
        %1341 = vrot.lane.b32.xlu0 %v1306, 1
        %v1342 = vpop.permute.xlu0 %1341
        %v1344 = vsel %vm267, 0.0, %v1342
        %v1345 = vstv %s1339
        %v1346 = vmul.f32 %v1345, %v1344
        %v1347 = vadd.f32 %v1338, %v1346
        %v1348 = vrot.slane %v1306, 7
        %v1350 = vsel %vm280, 0.0, %v1348
        %s1351 = sld [smem:[#allocation3 + $0x3f]]
        %v1352 = vstv %s1351
        %v1353 = vmul.f32 %v1352, %v1350
        %v1354 = vadd.f32 %v1347, %v1353
        %s1355 = sld [smem:[#allocation3 + $0x2f]]
        %1357 = vrot.lane.b32.xlu0 %v1350, 1
        %v1358 = vpop.permute.xlu0 %1357
        %v1360 = vsel %vm267, 0.0, %v1358
        %v1361 = vstv %s1355
        %v1362 = vmul.f32 %v1361, %v1360
        %v1363 = vadd.f32 %v1354, %v1362
        %s1364 = sld [smem:[#allocation3 + $0x77]]
        %v1365 = vstv %s1364
        %v1366 = vadd.f32 %v1363, %v1365
        %vm1367 = vcmp.gt.f32.partialorder %v1366, 0.0
        %v1368 = vmin.f32 %v1366, 0.0
        %v1369 = vmul.f32 %v1368, 1.442695
        %v1370 = vpow.pop %v1369
        %v1371 = vsub.f32 %v1370, 1.0
        %v1372 = vsel %vm1367, %v1366, %v1371
        %s1373 = scalar_lea.vmem [#allocation2], 28
        %1374 = vst.msk [vmem:[%s1373] sm:$0xf] %vm323, %v1372
        %v1375 = vld [vmem:[%s152] sm:$0xf]
        %s1376 = scalar_lea.vmem %s152, 64
        %v1377 = vld [vmem:[%s1376] sm:$0xf]
        %v1378 = vmax.f32 %v1375, %v1377
        %s1379 = scalar_lea.vmem %s152, 80
        %v1380 = vld [vmem:[%s1379] sm:$0xf]
        %s1381 = scalar_lea.vmem %s152, 96
        %v1382 = vld [vmem:[%s1381] sm:$0xf]
        %v1383 = vmax.f32 %v1380, %v1382
        %v1384 = vmax.f32 %v1378, %v1383
        %v1385 = vld [vmem:[%s162] sm:$0xf]
        %s1386 = scalar_lea.vmem %s152, 68
        %v1387 = vld [vmem:[%s1386] sm:$0xf]
        %v1388 = vmax.f32 %v1385, %v1387
        %s1389 = scalar_lea.vmem %s152, 84
        %v1390 = vld [vmem:[%s1389] sm:$0xf]
        %s1391 = scalar_lea.vmem %s152, 100
        %v1392 = vld [vmem:[%s1391] sm:$0xf]
        %v1393 = vmax.f32 %v1390, %v1392
        %v1394 = vmax.f32 %v1388, %v1393
        %v1395 = vld [vmem:[%s168] sm:$0xf]
        %s1396 = scalar_lea.vmem %s152, 72
        %v1397 = vld [vmem:[%s1396] sm:$0xf]
        %v1398 = vmax.f32 %v1395, %v1397
        %s1399 = scalar_lea.vmem %s152, 88
        %v1400 = vld [vmem:[%s1399] sm:$0xf]
        %s1401 = scalar_lea.vmem %s152, 104
        %v1402 = vld [vmem:[%s1401] sm:$0xf]
        %v1403 = vmax.f32 %v1400, %v1402
        %v1404 = vmax.f32 %v1398, %v1403
        %v1405 = vld [vmem:[%s174] sm:$0xf]
        %s1406 = scalar_lea.vmem %s152, 76
        %v1407 = vld [vmem:[%s1406] sm:$0xf]
        %v1408 = vmax.f32 %v1405, %v1407
        %s1409 = scalar_lea.vmem %s152, 92
        %v1410 = vld [vmem:[%s1409] sm:$0xf]
        %s1411 = scalar_lea.vmem %s152, 108
        %v1412 = vld [vmem:[%s1411] sm:$0xf]
        %v1413 = vmax.f32 %v1410, %v1412
        %v1414 = vmax.f32 %v1408, %v1413
        %v1415 = vld [vmem:[#allocation2] sm:$0xf]
        %s1416 = sld [smem:[#allocation3 + $0x78]]
        %v1417 = vstv %s1416
        %v1418 = vmul.f32 %v1415, %v1417
        %v1419 = vld [vmem:[%s473] sm:$0xf]
        %s1420 = sld [smem:[#allocation3 + $0x80]]
        %v1421 = vstv %s1420
        %v1422 = vmul.f32 %v1419, %v1421
        %v1423 = vadd.f32 %v1418, %v1422
        %v1424 = vld [vmem:[%s623] sm:$0xf]
        %s1425 = sld [smem:[#allocation3 + $0x88]]
        %v1426 = vstv %s1425
        %v1427 = vmul.f32 %v1424, %v1426
        %v1428 = vadd.f32 %v1423, %v1427
        %v1429 = vld [vmem:[%s773] sm:$0xf]
        %s1430 = sld [smem:[#allocation3 + $0x90]]
        %v1431 = vstv %s1430
        %v1432 = vmul.f32 %v1429, %v1431
        %v1433 = vadd.f32 %v1428, %v1432
        %v1434 = vld [vmem:[%s923] sm:$0xf]
        %s1435 = sld [smem:[#allocation3 + $0x98]]
        %v1436 = vstv %s1435
        %v1437 = vmul.f32 %v1434, %v1436
        %v1438 = vadd.f32 %v1433, %v1437
        %v1439 = vld [vmem:[%s1073] sm:$0xf]
        %s1440 = sld [smem:[#allocation3 + $0xa0]]
        %v1441 = vstv %s1440
        %v1442 = vmul.f32 %v1439, %v1441
        %v1443 = vadd.f32 %v1438, %v1442
        %v1444 = vld [vmem:[%s1223] sm:$0xf]
        %s1445 = sld [smem:[#allocation3 + $0xa8]]
        %v1446 = vstv %s1445
        %v1447 = vmul.f32 %v1444, %v1446
        %v1448 = vadd.f32 %v1443, %v1447
        %v1449 = vld [vmem:[%s1373] sm:$0xf]
        %s1450 = sld [smem:[#allocation3 + $0xb0]]
        %v1451 = vstv %s1450
        %v1452 = vmul.f32 %v1449, %v1451
        %v1453 = vadd.f32 %v1448, %v1452
        %s1454 = sld [smem:[#allocation3 + $0xc0]]
        %v1455 = vstv %s1454
        %v1456 = vmul.f32 %v1384, %v1455
        %v1457 = vadd.f32 %v1453, %v1456
        %s1458 = sld [smem:[#allocation3 + $0xc8]]
        %v1459 = vstv %s1458
        %v1460 = vmul.f32 %v1394, %v1459
        %v1461 = vadd.f32 %v1457, %v1460
        %s1462 = sld [smem:[#allocation3 + $0xd0]]
        %v1463 = vstv %s1462
        %v1464 = vmul.f32 %v1404, %v1463
        %v1465 = vadd.f32 %v1461, %v1464
        %s1466 = sld [smem:[#allocation3 + $0xd8]]
        %v1467 = vstv %s1466
        %v1468 = vmul.f32 %v1414, %v1467
        %v1469 = vadd.f32 %v1465, %v1468
        %s1470 = sld [smem:[#allocation3 + $0xb8]]
        %s1471 = sld [smem:[#allocation3 + $0xe0]]
        %s1472 = sadd.f32 %s1470, %s1471
        %v1473 = vstv %s1472
        %v1474 = vadd.f32 %v1469, %v1473
        %vm1475 = vcmp.gt.f32.partialorder %v1474, 0.0
        %v1476 = vmin.f32 %v1474, 0.0
        %v1477 = vmul.f32 %v1476, 1.442695
        %v1478 = vpow.pop %v1477
        %v1479 = vsub.f32 %v1478, 1.0
        %v1480 = vsel %vm1475, %v1474, %v1479
        %1481 = vst.msk [vmem:[%s157] sm:$0xf] %vm323, %v1480
        %v1482 = vld [vmem:[#allocation2] sm:$0xf]
        %s1483 = sld [smem:[#allocation3 + $0x79]]
        %v1484 = vstv %s1483
        %v1485 = vmul.f32 %v1482, %v1484
        %v1486 = vld [vmem:[%s473] sm:$0xf]
        %s1487 = sld [smem:[#allocation3 + $0x81]]
        %v1488 = vstv %s1487
        %v1489 = vmul.f32 %v1486, %v1488
        %v1490 = vadd.f32 %v1485, %v1489
        %v1491 = vld [vmem:[%s623] sm:$0xf]
        %s1492 = sld [smem:[#allocation3 + $0x89]]
        %v1493 = vstv %s1492
        %v1494 = vmul.f32 %v1491, %v1493
        %v1495 = vadd.f32 %v1490, %v1494
        %v1496 = vld [vmem:[%s773] sm:$0xf]
        %s1497 = sld [smem:[#allocation3 + $0x91]]
        %v1498 = vstv %s1497
        %v1499 = vmul.f32 %v1496, %v1498
        %v1500 = vadd.f32 %v1495, %v1499
        %v1501 = vld [vmem:[%s923] sm:$0xf]
        %s1502 = sld [smem:[#allocation3 + $0x99]]
        %v1503 = vstv %s1502
        %v1504 = vmul.f32 %v1501, %v1503
        %v1505 = vadd.f32 %v1500, %v1504
        %v1506 = vld [vmem:[%s1073] sm:$0xf]
        %s1507 = sld [smem:[#allocation3 + $0xa1]]
        %v1508 = vstv %s1507
        %v1509 = vmul.f32 %v1506, %v1508
        %v1510 = vadd.f32 %v1505, %v1509
        %v1511 = vld [vmem:[%s1223] sm:$0xf]
        %s1512 = sld [smem:[#allocation3 + $0xa9]]
        %v1513 = vstv %s1512
        %v1514 = vmul.f32 %v1511, %v1513
        %v1515 = vadd.f32 %v1510, %v1514
        %v1516 = vld [vmem:[%s1373] sm:$0xf]
        %s1517 = sld [smem:[#allocation3 + $0xb1]]
        %v1518 = vstv %s1517
        %v1519 = vmul.f32 %v1516, %v1518
        %v1520 = vadd.f32 %v1515, %v1519
        %s1521 = sld [smem:[#allocation3 + $0xc1]]
        %v1522 = vstv %s1521
        %v1523 = vmul.f32 %v1384, %v1522
        %v1524 = vadd.f32 %v1520, %v1523
        %s1525 = sld [smem:[#allocation3 + $0xc9]]
        %v1526 = vstv %s1525
        %v1527 = vmul.f32 %v1394, %v1526
        %v1528 = vadd.f32 %v1524, %v1527
        %s1529 = sld [smem:[#allocation3 + $0xd1]]
        %v1530 = vstv %s1529
        %v1531 = vmul.f32 %v1404, %v1530
        %v1532 = vadd.f32 %v1528, %v1531
        %s1533 = sld [smem:[#allocation3 + $0xd9]]
        %v1534 = vstv %s1533
        %v1535 = vmul.f32 %v1414, %v1534
        %v1536 = vadd.f32 %v1532, %v1535
        %s1537 = sld [smem:[#allocation3 + $0xb9]]
        %s1538 = sld [smem:[#allocation3 + $0xe1]]
        %s1539 = sadd.f32 %s1537, %s1538
        %v1540 = vstv %s1539
        %v1541 = vadd.f32 %v1536, %v1540
        %vm1542 = vcmp.gt.f32.partialorder %v1541, 0.0
        %v1543 = vmin.f32 %v1541, 0.0
        %v1544 = vmul.f32 %v1543, 1.442695
        %v1545 = vpow.pop %v1544
        %v1546 = vsub.f32 %v1545, 1.0
        %v1547 = vsel %vm1542, %v1541, %v1546
        %s1548 = scalar_lea.vmem %s157, 4
        %1549 = vst.msk [vmem:[%s1548] sm:$0xf] %vm323, %v1547
        %v1550 = vld [vmem:[#allocation2] sm:$0xf]
        %s1551 = sld [smem:[#allocation3 + $0x7a]]
        %v1552 = vstv %s1551
        %v1553 = vmul.f32 %v1550, %v1552
        %v1554 = vld [vmem:[%s473] sm:$0xf]
        %s1555 = sld [smem:[#allocation3 + $0x82]]
        %v1556 = vstv %s1555
        %v1557 = vmul.f32 %v1554, %v1556
        %v1558 = vadd.f32 %v1553, %v1557
        %v1559 = vld [vmem:[%s623] sm:$0xf]
        %s1560 = sld [smem:[#allocation3 + $0x8a]]
        %v1561 = vstv %s1560
        %v1562 = vmul.f32 %v1559, %v1561
        %v1563 = vadd.f32 %v1558, %v1562
        %v1564 = vld [vmem:[%s773] sm:$0xf]
        %s1565 = sld [smem:[#allocation3 + $0x92]]
        %v1566 = vstv %s1565
        %v1567 = vmul.f32 %v1564, %v1566
        %v1568 = vadd.f32 %v1563, %v1567
        %v1569 = vld [vmem:[%s923] sm:$0xf]
        %s1570 = sld [smem:[#allocation3 + $0x9a]]
        %v1571 = vstv %s1570
        %v1572 = vmul.f32 %v1569, %v1571
        %v1573 = vadd.f32 %v1568, %v1572
        %v1574 = vld [vmem:[%s1073] sm:$0xf]
        %s1575 = sld [smem:[#allocation3 + $0xa2]]
        %v1576 = vstv %s1575
        %v1577 = vmul.f32 %v1574, %v1576
        %v1578 = vadd.f32 %v1573, %v1577
        %v1579 = vld [vmem:[%s1223] sm:$0xf]
        %s1580 = sld [smem:[#allocation3 + $0xaa]]
        %v1581 = vstv %s1580
        %v1582 = vmul.f32 %v1579, %v1581
        %v1583 = vadd.f32 %v1578, %v1582
        %v1584 = vld [vmem:[%s1373] sm:$0xf]
        %s1585 = sld [smem:[#allocation3 + $0xb2]]
        %v1586 = vstv %s1585
        %v1587 = vmul.f32 %v1584, %v1586
        %v1588 = vadd.f32 %v1583, %v1587
        %s1589 = sld [smem:[#allocation3 + $0xc2]]
        %v1590 = vstv %s1589
        %v1591 = vmul.f32 %v1384, %v1590
        %v1592 = vadd.f32 %v1588, %v1591
        %s1593 = sld [smem:[#allocation3 + $0xca]]
        %v1594 = vstv %s1593
        %v1595 = vmul.f32 %v1394, %v1594
        %v1596 = vadd.f32 %v1592, %v1595
        %s1597 = sld [smem:[#allocation3 + $0xd2]]
        %v1598 = vstv %s1597
        %v1599 = vmul.f32 %v1404, %v1598
        %v1600 = vadd.f32 %v1596, %v1599
        %s1601 = sld [smem:[#allocation3 + $0xda]]
        %v1602 = vstv %s1601
        %v1603 = vmul.f32 %v1414, %v1602
        %v1604 = vadd.f32 %v1600, %v1603
        %s1605 = sld [smem:[#allocation3 + $0xba]]
        %s1606 = sld [smem:[#allocation3 + $0xe2]]
        %s1607 = sadd.f32 %s1605, %s1606
        %v1608 = vstv %s1607
        %v1609 = vadd.f32 %v1604, %v1608
        %vm1610 = vcmp.gt.f32.partialorder %v1609, 0.0
        %v1611 = vmin.f32 %v1609, 0.0
        %v1612 = vmul.f32 %v1611, 1.442695
        %v1613 = vpow.pop %v1612
        %v1614 = vsub.f32 %v1613, 1.0
        %v1615 = vsel %vm1610, %v1609, %v1614
        %s1616 = scalar_lea.vmem %s157, 8
        %1617 = vst.msk [vmem:[%s1616] sm:$0xf] %vm323, %v1615
        %v1618 = vld [vmem:[#allocation2] sm:$0xf]
        %s1619 = sld [smem:[#allocation3 + $0x7b]]
        %v1620 = vstv %s1619
        %v1621 = vmul.f32 %v1618, %v1620
        %v1622 = vld [vmem:[%s473] sm:$0xf]
        %s1623 = sld [smem:[#allocation3 + $0x83]]
        %v1624 = vstv %s1623
        %v1625 = vmul.f32 %v1622, %v1624
        %v1626 = vadd.f32 %v1621, %v1625
        %v1627 = vld [vmem:[%s623] sm:$0xf]
        %s1628 = sld [smem:[#allocation3 + $0x8b]]
        %v1629 = vstv %s1628
        %v1630 = vmul.f32 %v1627, %v1629
        %v1631 = vadd.f32 %v1626, %v1630
        %v1632 = vld [vmem:[%s773] sm:$0xf]
        %s1633 = sld [smem:[#allocation3 + $0x93]]
        %v1634 = vstv %s1633
        %v1635 = vmul.f32 %v1632, %v1634
        %v1636 = vadd.f32 %v1631, %v1635
        %v1637 = vld [vmem:[%s923] sm:$0xf]
        %s1638 = sld [smem:[#allocation3 + $0x9b]]
        %v1639 = vstv %s1638
        %v1640 = vmul.f32 %v1637, %v1639
        %v1641 = vadd.f32 %v1636, %v1640
        %v1642 = vld [vmem:[%s1073] sm:$0xf]
        %s1643 = sld [smem:[#allocation3 + $0xa3]]
        %v1644 = vstv %s1643
        %v1645 = vmul.f32 %v1642, %v1644
        %v1646 = vadd.f32 %v1641, %v1645
        %v1647 = vld [vmem:[%s1223] sm:$0xf]
        %s1648 = sld [smem:[#allocation3 + $0xab]]
        %v1649 = vstv %s1648
        %v1650 = vmul.f32 %v1647, %v1649
        %v1651 = vadd.f32 %v1646, %v1650
        %v1652 = vld [vmem:[%s1373] sm:$0xf]
        %s1653 = sld [smem:[#allocation3 + $0xb3]]
        %v1654 = vstv %s1653
        %v1655 = vmul.f32 %v1652, %v1654
        %v1656 = vadd.f32 %v1651, %v1655
        %s1657 = sld [smem:[#allocation3 + $0xc3]]
        %v1658 = vstv %s1657
        %v1659 = vmul.f32 %v1384, %v1658
        %v1660 = vadd.f32 %v1656, %v1659
        %s1661 = sld [smem:[#allocation3 + $0xcb]]
        %v1662 = vstv %s1661
        %v1663 = vmul.f32 %v1394, %v1662
        %v1664 = vadd.f32 %v1660, %v1663
        %s1665 = sld [smem:[#allocation3 + $0xd3]]
        %v1666 = vstv %s1665
        %v1667 = vmul.f32 %v1404, %v1666
        %v1668 = vadd.f32 %v1664, %v1667
        %s1669 = sld [smem:[#allocation3 + $0xdb]]
        %v1670 = vstv %s1669
        %v1671 = vmul.f32 %v1414, %v1670
        %v1672 = vadd.f32 %v1668, %v1671
        %s1673 = sld [smem:[#allocation3 + $0xbb]]
        %s1674 = sld [smem:[#allocation3 + $0xe3]]
        %s1675 = sadd.f32 %s1673, %s1674
        %v1676 = vstv %s1675
        %v1677 = vadd.f32 %v1672, %v1676
        %vm1678 = vcmp.gt.f32.partialorder %v1677, 0.0
        %v1679 = vmin.f32 %v1677, 0.0
        %v1680 = vmul.f32 %v1679, 1.442695
        %v1681 = vpow.pop %v1680
        %v1682 = vsub.f32 %v1681, 1.0
        %v1683 = vsel %vm1678, %v1677, %v1682
        %s1684 = scalar_lea.vmem %s157, 12
        %1685 = vst.msk [vmem:[%s1684] sm:$0xf] %vm323, %v1683
        %v1686 = vld [vmem:[#allocation2] sm:$0xf]
        %s1687 = sld [smem:[#allocation3 + $0x7c]]
        %v1688 = vstv %s1687
        %v1689 = vmul.f32 %v1686, %v1688
        %v1690 = vld [vmem:[%s473] sm:$0xf]
        %s1691 = sld [smem:[#allocation3 + $0x84]]
        %v1692 = vstv %s1691
        %v1693 = vmul.f32 %v1690, %v1692
        %v1694 = vadd.f32 %v1689, %v1693
        %v1695 = vld [vmem:[%s623] sm:$0xf]
        %s1696 = sld [smem:[#allocation3 + $0x8c]]
        %v1697 = vstv %s1696
        %v1698 = vmul.f32 %v1695, %v1697
        %v1699 = vadd.f32 %v1694, %v1698
        %v1700 = vld [vmem:[%s773] sm:$0xf]
        %s1701 = sld [smem:[#allocation3 + $0x94]]
        %v1702 = vstv %s1701
        %v1703 = vmul.f32 %v1700, %v1702
        %v1704 = vadd.f32 %v1699, %v1703
        %v1705 = vld [vmem:[%s923] sm:$0xf]
        %s1706 = sld [smem:[#allocation3 + $0x9c]]
        %v1707 = vstv %s1706
        %v1708 = vmul.f32 %v1705, %v1707
        %v1709 = vadd.f32 %v1704, %v1708
        %v1710 = vld [vmem:[%s1073] sm:$0xf]
        %s1711 = sld [smem:[#allocation3 + $0xa4]]
        %v1712 = vstv %s1711
        %v1713 = vmul.f32 %v1710, %v1712
        %v1714 = vadd.f32 %v1709, %v1713
        %v1715 = vld [vmem:[%s1223] sm:$0xf]
        %s1716 = sld [smem:[#allocation3 + $0xac]]
        %v1717 = vstv %s1716
        %v1718 = vmul.f32 %v1715, %v1717
        %v1719 = vadd.f32 %v1714, %v1718
        %v1720 = vld [vmem:[%s1373] sm:$0xf]
        %s1721 = sld [smem:[#allocation3 + $0xb4]]
        %v1722 = vstv %s1721
        %v1723 = vmul.f32 %v1720, %v1722
        %v1724 = vadd.f32 %v1719, %v1723
        %s1725 = sld [smem:[#allocation3 + $0xc4]]
        %v1726 = vstv %s1725
        %v1727 = vmul.f32 %v1384, %v1726
        %v1728 = vadd.f32 %v1724, %v1727
        %s1729 = sld [smem:[#allocation3 + $0xcc]]
        %v1730 = vstv %s1729
        %v1731 = vmul.f32 %v1394, %v1730
        %v1732 = vadd.f32 %v1728, %v1731
        %s1733 = sld [smem:[#allocation3 + $0xd4]]
        %v1734 = vstv %s1733
        %v1735 = vmul.f32 %v1404, %v1734
        %v1736 = vadd.f32 %v1732, %v1735
        %s1737 = sld [smem:[#allocation3 + $0xdc]]
        %v1738 = vstv %s1737
        %v1739 = vmul.f32 %v1414, %v1738
        %v1740 = vadd.f32 %v1736, %v1739
        %s1741 = sld [smem:[#allocation3 + $0xbc]]
        %s1742 = sld [smem:[#allocation3 + $0xe4]]
        %s1743 = sadd.f32 %s1741, %s1742
        %v1744 = vstv %s1743
        %v1745 = vadd.f32 %v1740, %v1744
        %vm1746 = vcmp.gt.f32.partialorder %v1745, 0.0
        %v1747 = vmin.f32 %v1745, 0.0
        %v1748 = vmul.f32 %v1747, 1.442695
        %v1749 = vpow.pop %v1748
        %v1750 = vsub.f32 %v1749, 1.0
        %v1751 = vsel %vm1746, %v1745, %v1750
        %s1752 = scalar_lea.vmem %s157, 16
        %1753 = vst.msk [vmem:[%s1752] sm:$0xf] %vm323, %v1751
        %v1754 = vld [vmem:[#allocation2] sm:$0xf]
        %s1755 = sld [smem:[#allocation3 + $0x7d]]
        %v1756 = vstv %s1755
        %v1757 = vmul.f32 %v1754, %v1756
        %v1758 = vld [vmem:[%s473] sm:$0xf]
        %s1759 = sld [smem:[#allocation3 + $0x85]]
        %v1760 = vstv %s1759
        %v1761 = vmul.f32 %v1758, %v1760
        %v1762 = vadd.f32 %v1757, %v1761
        %v1763 = vld [vmem:[%s623] sm:$0xf]
        %s1764 = sld [smem:[#allocation3 + $0x8d]]
        %v1765 = vstv %s1764
        %v1766 = vmul.f32 %v1763, %v1765
        %v1767 = vadd.f32 %v1762, %v1766
        %v1768 = vld [vmem:[%s773] sm:$0xf]
        %s1769 = sld [smem:[#allocation3 + $0x95]]
        %v1770 = vstv %s1769
        %v1771 = vmul.f32 %v1768, %v1770
        %v1772 = vadd.f32 %v1767, %v1771
        %v1773 = vld [vmem:[%s923] sm:$0xf]
        %s1774 = sld [smem:[#allocation3 + $0x9d]]
        %v1775 = vstv %s1774
        %v1776 = vmul.f32 %v1773, %v1775
        %v1777 = vadd.f32 %v1772, %v1776
        %v1778 = vld [vmem:[%s1073] sm:$0xf]
        %s1779 = sld [smem:[#allocation3 + $0xa5]]
        %v1780 = vstv %s1779
        %v1781 = vmul.f32 %v1778, %v1780
        %v1782 = vadd.f32 %v1777, %v1781
        %v1783 = vld [vmem:[%s1223] sm:$0xf]
        %s1784 = sld [smem:[#allocation3 + $0xad]]
        %v1785 = vstv %s1784
        %v1786 = vmul.f32 %v1783, %v1785
        %v1787 = vadd.f32 %v1782, %v1786
        %v1788 = vld [vmem:[%s1373] sm:$0xf]
        %s1789 = sld [smem:[#allocation3 + $0xb5]]
        %v1790 = vstv %s1789
        %v1791 = vmul.f32 %v1788, %v1790
        %v1792 = vadd.f32 %v1787, %v1791
        %s1793 = sld [smem:[#allocation3 + $0xc5]]
        %v1794 = vstv %s1793
        %v1795 = vmul.f32 %v1384, %v1794
        %v1796 = vadd.f32 %v1792, %v1795
        %s1797 = sld [smem:[#allocation3 + $0xcd]]
        %v1798 = vstv %s1797
        %v1799 = vmul.f32 %v1394, %v1798
        %v1800 = vadd.f32 %v1796, %v1799
        %s1801 = sld [smem:[#allocation3 + $0xd5]]
        %v1802 = vstv %s1801
        %v1803 = vmul.f32 %v1404, %v1802
        %v1804 = vadd.f32 %v1800, %v1803
        %s1805 = sld [smem:[#allocation3 + $0xdd]]
        %v1806 = vstv %s1805
        %v1807 = vmul.f32 %v1414, %v1806
        %v1808 = vadd.f32 %v1804, %v1807
        %s1809 = sld [smem:[#allocation3 + $0xbd]]
        %s1810 = sld [smem:[#allocation3 + $0xe5]]
        %s1811 = sadd.f32 %s1809, %s1810
        %v1812 = vstv %s1811
        %v1813 = vadd.f32 %v1808, %v1812
        %vm1814 = vcmp.gt.f32.partialorder %v1813, 0.0
        %v1815 = vmin.f32 %v1813, 0.0
        %v1816 = vmul.f32 %v1815, 1.442695
        %v1817 = vpow.pop %v1816
        %v1818 = vsub.f32 %v1817, 1.0
        %v1819 = vsel %vm1814, %v1813, %v1818
        %s1820 = scalar_lea.vmem %s157, 20
        %1821 = vst.msk [vmem:[%s1820] sm:$0xf] %vm323, %v1819
        %v1822 = vld [vmem:[#allocation2] sm:$0xf]
        %s1823 = sld [smem:[#allocation3 + $0x7e]]
        %v1824 = vstv %s1823
        %v1825 = vmul.f32 %v1822, %v1824
        %v1826 = vld [vmem:[%s473] sm:$0xf]
        %s1827 = sld [smem:[#allocation3 + $0x86]]
        %v1828 = vstv %s1827
        %v1829 = vmul.f32 %v1826, %v1828
        %v1830 = vadd.f32 %v1825, %v1829
        %v1831 = vld [vmem:[%s623] sm:$0xf]
        %s1832 = sld [smem:[#allocation3 + $0x8e]]
        %v1833 = vstv %s1832
        %v1834 = vmul.f32 %v1831, %v1833
        %v1835 = vadd.f32 %v1830, %v1834
        %v1836 = vld [vmem:[%s773] sm:$0xf]
        %s1837 = sld [smem:[#allocation3 + $0x96]]
        %v1838 = vstv %s1837
        %v1839 = vmul.f32 %v1836, %v1838
        %v1840 = vadd.f32 %v1835, %v1839
        %v1841 = vld [vmem:[%s923] sm:$0xf]
        %s1842 = sld [smem:[#allocation3 + $0x9e]]
        %v1843 = vstv %s1842
        %v1844 = vmul.f32 %v1841, %v1843
        %v1845 = vadd.f32 %v1840, %v1844
        %v1846 = vld [vmem:[%s1073] sm:$0xf]
        %s1847 = sld [smem:[#allocation3 + $0xa6]]
        %v1848 = vstv %s1847
        %v1849 = vmul.f32 %v1846, %v1848
        %v1850 = vadd.f32 %v1845, %v1849
        %v1851 = vld [vmem:[%s1223] sm:$0xf]
        %s1852 = sld [smem:[#allocation3 + $0xae]]
        %v1853 = vstv %s1852
        %v1854 = vmul.f32 %v1851, %v1853
        %v1855 = vadd.f32 %v1850, %v1854
        %v1856 = vld [vmem:[%s1373] sm:$0xf]
        %s1857 = sld [smem:[#allocation3 + $0xb6]]
        %v1858 = vstv %s1857
        %v1859 = vmul.f32 %v1856, %v1858
        %v1860 = vadd.f32 %v1855, %v1859
        %s1861 = sld [smem:[#allocation3 + $0xc6]]
        %v1862 = vstv %s1861
        %v1863 = vmul.f32 %v1384, %v1862
        %v1864 = vadd.f32 %v1860, %v1863
        %s1865 = sld [smem:[#allocation3 + $0xce]]
        %v1866 = vstv %s1865
        %v1867 = vmul.f32 %v1394, %v1866
        %v1868 = vadd.f32 %v1864, %v1867
        %s1869 = sld [smem:[#allocation3 + $0xd6]]
        %v1870 = vstv %s1869
        %v1871 = vmul.f32 %v1404, %v1870
        %v1872 = vadd.f32 %v1868, %v1871
        %s1873 = sld [smem:[#allocation3 + $0xde]]
        %v1874 = vstv %s1873
        %v1875 = vmul.f32 %v1414, %v1874
        %v1876 = vadd.f32 %v1872, %v1875
        %s1877 = sld [smem:[#allocation3 + $0xbe]]
        %s1878 = sld [smem:[#allocation3 + $0xe6]]
        %s1879 = sadd.f32 %s1877, %s1878
        %v1880 = vstv %s1879
        %v1881 = vadd.f32 %v1876, %v1880
        %vm1882 = vcmp.gt.f32.partialorder %v1881, 0.0
        %v1883 = vmin.f32 %v1881, 0.0
        %v1884 = vmul.f32 %v1883, 1.442695
        %v1885 = vpow.pop %v1884
        %v1886 = vsub.f32 %v1885, 1.0
        %v1887 = vsel %vm1882, %v1881, %v1886
        %s1888 = scalar_lea.vmem %s157, 24
        %1889 = vst.msk [vmem:[%s1888] sm:$0xf] %vm323, %v1887
        %v1890 = vld [vmem:[#allocation2] sm:$0xf]
        %s1891 = sld [smem:[#allocation3 + $0x7f]]
        %v1892 = vstv %s1891
        %v1893 = vmul.f32 %v1890, %v1892
        %v1894 = vld [vmem:[%s473] sm:$0xf]
        %s1895 = sld [smem:[#allocation3 + $0x87]]
        %v1896 = vstv %s1895
        %v1897 = vmul.f32 %v1894, %v1896
        %v1898 = vadd.f32 %v1893, %v1897
        %v1899 = vld [vmem:[%s623] sm:$0xf]
        %s1900 = sld [smem:[#allocation3 + $0x8f]]
        %v1901 = vstv %s1900
        %v1902 = vmul.f32 %v1899, %v1901
        %v1903 = vadd.f32 %v1898, %v1902
        %v1904 = vld [vmem:[%s773] sm:$0xf]
        %s1905 = sld [smem:[#allocation3 + $0x97]]
        %v1906 = vstv %s1905
        %v1907 = vmul.f32 %v1904, %v1906
        %v1908 = vadd.f32 %v1903, %v1907
        %v1909 = vld [vmem:[%s923] sm:$0xf]
        %s1910 = sld [smem:[#allocation3 + $0x9f]]
        %v1911 = vstv %s1910
        %v1912 = vmul.f32 %v1909, %v1911
        %v1913 = vadd.f32 %v1908, %v1912
        %v1914 = vld [vmem:[%s1073] sm:$0xf]
        %s1915 = sld [smem:[#allocation3 + $0xa7]]
        %v1916 = vstv %s1915
        %v1917 = vmul.f32 %v1914, %v1916
        %v1918 = vadd.f32 %v1913, %v1917
        %v1919 = vld [vmem:[%s1223] sm:$0xf]
        %s1920 = sld [smem:[#allocation3 + $0xaf]]
        %v1921 = vstv %s1920
        %v1922 = vmul.f32 %v1919, %v1921
        %v1923 = vadd.f32 %v1918, %v1922
        %v1924 = vld [vmem:[%s1373] sm:$0xf]
        %s1925 = sld [smem:[#allocation3 + $0xb7]]
        %v1926 = vstv %s1925
        %v1927 = vmul.f32 %v1924, %v1926
        %v1928 = vadd.f32 %v1923, %v1927
        %s1929 = sld [smem:[#allocation3 + $0xc7]]
        %v1930 = vstv %s1929
        %v1931 = vmul.f32 %v1384, %v1930
        %v1932 = vadd.f32 %v1928, %v1931
        %s1933 = sld [smem:[#allocation3 + $0xcf]]
        %v1934 = vstv %s1933
        %v1935 = vmul.f32 %v1394, %v1934
        %v1936 = vadd.f32 %v1932, %v1935
        %s1937 = sld [smem:[#allocation3 + $0xd7]]
        %v1938 = vstv %s1937
        %v1939 = vmul.f32 %v1404, %v1938
        %v1940 = vadd.f32 %v1936, %v1939
        %s1941 = sld [smem:[#allocation3 + $0xdf]]
        %v1942 = vstv %s1941
        %v1943 = vmul.f32 %v1414, %v1942
        %v1944 = vadd.f32 %v1940, %v1943
        %s1945 = sld [smem:[#allocation3 + $0xbf]]
        %s1946 = sld [smem:[#allocation3 + $0xe7]]
        %s1947 = sadd.f32 %s1945, %s1946
        %v1948 = vstv %s1947
        %v1949 = vadd.f32 %v1944, %v1948
        %vm1950 = vcmp.gt.f32.partialorder %v1949, 0.0
        %v1951 = vmin.f32 %v1949, 0.0
        %v1952 = vmul.f32 %v1951, 1.442695
        %v1953 = vpow.pop %v1952
        %v1954 = vsub.f32 %v1953, 1.0
        %v1955 = vsel %vm1950, %v1949, %v1954
        %s1956 = scalar_lea.vmem %s157, 28
        %1957 = vst.msk [vmem:[%s1956] sm:$0xf] %vm323, %v1955
        %p1958 = scmp.lt.s32.totalorder %s14, 1
        %s1959 = scalar_select %p1958, %s14, 1
        %s1960 = smul.addr %s1959, 8
        %s1961 = smul.addr %s1960, 4
        %s1962 = scalar_lea.vmem %s2, %s1961
        // Predicated region
        $region33: #{tpu_custom_call.1} parent=27 // pred_check
          %p1963 = pneg %p79
        $region34: #{tpu_custom_call.1} parent=27 // pred_check_branch
          %1965 = sbr.rel (%p1963) target = $region36
        $region35: #{tpu_custom_call.1} parent=27 // pred_region
          _
        $region36: #{tpu_custom_call.1} parent=27 // pred_fallthru
          _
      $region28: #{tpu_custom_call.1} parent=5 // pred_fallthru
        _
      %p1966 = scmp.le.s32.totalorder 2, %s9
      // Predicated region
      $region37: #{tpu_custom_call.1} parent=5 // pred_check
        %p1967 = pneg %p1966
      $region38: #{tpu_custom_call.1} parent=5 // pred_check_branch
        %1969 = sbr.rel (%p1967) target = $region40
      $region39: #{tpu_custom_call.1} parent=5 // pred_region
        %s1970 = ssub.s32 %s9, 2
        // Predicated region
        $region41: #{tpu_custom_call.1} parent=39 // pred_check
          %p1971 = pneg %p85
        $region42: #{tpu_custom_call.1} parent=39 // pred_check_branch
          %1973 = sbr.rel (%p1971) target = $region44
        $region43: #{tpu_custom_call.1} parent=39 // pred_region
          %p1974 = scmp.lt.s32.totalorder %s15, 1
          %s1975 = scalar_select %p1974, %s15, 1
          %s1976 = smul.addr %s1975, 8
          %s1977 = smul.addr %s1976, 4
          %s1978 = scalar_lea.vmem %s2, %s1977
        $region44: #{tpu_custom_call.1} parent=39 // pred_fallthru
          _
      $region40: #{tpu_custom_call.1} parent=5 // pred_fallthru
        _
    $region6: #{tpu_custom_call.1} parent=1 // loop_footer
      %s13 = sadd.s32 1, %s9
    $region7: #{tpu_custom_call.1} parent=1 // loop_footer_branch
      %8 = sbr.rel target = $region3
    $region8: #{tpu_custom_call.1} parent=1 // loop_exit
      _
    %1979 = vsyncpa [#allocation4], 1
    %s1980 = scalar_lea.sflag [#allocation4], 1
    %1981 = vsyncpa %s1980, 1

</llo_original>
